<compile_context>
chip_gen: v6e
topology: v6e:2x2x1
jax: 0.10.0
libtpu: 0.0.40
codegen_flags: <defaults>
</compile_context>

<pallas_src>
import functools

import jax
import jax.numpy as jnp
from jax import lax
from jax.experimental import pallas as pl
from jax.experimental.pallas import tpu as pltpu

VMEM_LIMIT_BYTES = 32 * 1024 * 1024


# ---------------------------------------------------------------------------
# Tap helpers: shifted views of the (F, T) feature map, zero-padded at edges.
# ---------------------------------------------------------------------------

def _ltap(f, d, Fm, T):
    # value of f at time t-d (zero where t < d)
    return jnp.concatenate(
        [jnp.zeros((Fm, d), jnp.float32), f[:, :T - d]], axis=1)


def _rtap(f, d, Fm, T):
    # value of f at time t+d (zero where t >= T-d)
    return jnp.concatenate(
        [f[:, d:], jnp.zeros((Fm, d), jnp.float32)], axis=1)


# ---------------------------------------------------------------------------
# Pallas kernels (one per network stage)
# ---------------------------------------------------------------------------

def pg_stage_kernel(*refs, dils, T, Fm):
    """Full Prediction_Generation stack.

    refs = [x (dim,T), w_in (F,dim), b_in (F,1),
            (w_comb (F,6F), b_comb (F,1)) * L,
            w_out (C,F), b_out (C,1), o (C,T)]
    Each layer's two dilated 3-tap convs + the 1x1 fusion conv are folded into
    one (F,6F) weight (no nonlinearity sits between them in the original net).
    """
    nL = len(dils)
    x_ref, w_in, b_in = refs[0], refs[1], refs[2]
    lrefs = refs[3:3 + 2 * nL]
    w_out, b_out = refs[3 + 2 * nL], refs[4 + 2 * nL]
    o_ref = refs[5 + 2 * nL]

    f = jnp.dot(w_in[...], x_ref[...],
                preferred_element_type=jnp.float32) + b_in[...]
    for i in range(nL):
        w_comb, b_comb = lrefs[2 * i], lrefs[2 * i + 1]
        d1, d2 = dils[i]
        slab = jnp.concatenate(
            [_ltap(f, d1, Fm, T), f, _rtap(f, d1, Fm, T),
             _ltap(f, d2, Fm, T), f, _rtap(f, d2, Fm, T)], axis=0)   # (6F, T)
        y = jnp.dot(w_comb[...], slab,
                    preferred_element_type=jnp.float32) + b_comb[...]
        # TODO(synk): nn.Dropout is identity here (eval-mode semantics).
        f = jnp.maximum(y, 0.0) + f
    o_ref[...] = jnp.dot(w_out[...], f,
                         preferred_element_type=jnp.float32) + b_out[...]


def refine_stage_kernel(*refs, dils, T, Fm):
    """Full Refinement stack with the channel softmax fused at the input.

    refs = [x (C,T), w_in (F,C), b_in (F,1),
            (wdf (F,3F), bd (F,1), w1 (F,F), b1 (F,1)) * L,
            w_out (C,F), b_out (C,1), o (C,T)]
    """
    nL = len(dils)
    x_ref, w_in, b_in = refs[0], refs[1], refs[2]
    lrefs = refs[3:3 + 4 * nL]
    w_out, b_out = refs[3 + 4 * nL], refs[4 + 4 * nL]
    o_ref = refs[5 + 4 * nL]

    # softmax over the channel axis (axis 0)
    x = x_ref[...]
    m = jnp.max(x, axis=0, keepdims=True)
    e = jnp.exp(x - m)
    sm = e / jnp.sum(e, axis=0, keepdims=True)

    f = jnp.dot(w_in[...], sm, preferred_element_type=jnp.float32) + b_in[...]
    for i in range(nL):
        wdf, bd, w1, b1 = lrefs[4 * i:4 * i + 4]
        d = dils[i]
        slab = jnp.concatenate(
            [_ltap(f, d, Fm, T), f, _rtap(f, d, Fm, T)], axis=0)     # (3F, T)
        y = jnp.maximum(
            jnp.dot(wdf[...], slab,
                    preferred_element_type=jnp.float32) + bd[...], 0.0)
        # TODO(synk): nn.Dropout is identity here (eval-mode semantics).
        f = f + jnp.dot(w1[...], y,
                        preferred_element_type=jnp.float32) + b1[...]
    o_ref[...] = jnp.dot(w_out[...], f,
                         preferred_element_type=jnp.float32) + b_out[...]


def gru_stage_kernel(*refs, Tp, H, num_layers):
    """Channel softmax + 3-layer bidirectional GRU + hidden_to_label, fused.

    refs = [x_ds_t (Tp,C) (already nearest-down-sampled, pre-softmax),
            (wih_t, whh_t, bih, bhh) fwd then bwd, per layer,
            h2l_w (C,2H), h2l_b (C,1), o (C,Tp),
            xgf_scr (Tp,3H), xgb_scr (Tp,3H), seq_scr (Tp,2H)]
    Forward and backward directions of each layer share ONE fori_loop over
    time (carry = both hidden states), halving the sequential step count.
    """
    x_ref = refs[0]
    grefs = refs[1:1 + 8 * num_layers]
    h2l_w = refs[1 + 8 * num_layers]
    h2l_b = refs[2 + 8 * num_layers]
    o_ref = refs[3 + 8 * num_layers]
    xgf_scr = refs[4 + 8 * num_layers]
    xgb_scr = refs[5 + 8 * num_layers]
    seq_scr = refs[6 + 8 * num_layers]

    # channel softmax on the (Tp, C) view (channels on lanes)
    xt = x_ref[...]
    m = jnp.max(xt, axis=1, keepdims=True)
    e = jnp.exp(xt - m)
    inp = e / jnp.sum(e, axis=1, keepdims=True)                      # (Tp, C)

    unroll = min(8, max(Tp, 1))

    for layer in range(num_layers):
        (wih_f, whh_f, bih_f, bhh_f,
         wih_b, whh_b, bih_b, bhh_b) = grefs[8 * layer:8 * layer + 8]

        # all Tp input-gate projections for both directions, one MXU pass each
        xgf_scr[...] = jnp.dot(inp, wih_f[...],
                               preferred_element_type=jnp.float32) + bih_f[...]
        xgb_scr[...] = jnp.dot(inp, wih_b[...],
                               preferred_element_type=jnp.float32) + bih_b[...]
        whhf = whh_f[...]
        whhb = whh_b[...]
        bhhf = bhh_f[...]
        bhhb = bhh_b[...]

        def step(s, carry, whhf=whhf, whhb=whhb, bhhf=bhhf, bhhb=bhhb):
            h_f, h_b = carry
            tb = Tp - 1 - s
            xf = xgf_scr[pl.ds(s, 1), :]                              # (1, 3H)
            xb = xgb_scr[pl.ds(tb, 1), :]                             # (1, 3H)
            hgf = jnp.dot(h_f, whhf,
                          preferred_element_type=jnp.float32) + bhhf
            hgb = jnp.dot(h_b, whhb,
                          preferred_element_type=jnp.float32) + bhhb
            rf = jax.nn.sigmoid(xf[:, 0:H] + hgf[:, 0:H])
            zf = jax.nn.sigmoid(xf[:, H:2 * H] + hgf[:, H:2 * H])
            nf = jnp.tanh(xf[:, 2 * H:3 * H] + rf * hgf[:, 2 * H:3 * H])
            h_f = (1.0 - zf) * nf + zf * h_f
            rb = jax.nn.sigmoid(xb[:, 0:H] + hgb[:, 0:H])
            zb = jax.nn.sigmoid(xb[:, H:2 * H] + hgb[:, H:2 * H])
            nb = jnp.tanh(xb[:, 2 * H:3 * H] + rb * hgb[:, 2 * H:3 * H])
            h_b = (1.0 - zb) * nb + zb * h_b
            # TODO(synk): batch these 1-row stores into 8-row tiles for long Tp.
            seq_scr[pl.ds(s, 1), 0:H] = h_f
            seq_scr[pl.ds(tb, 1), H:2 * H] = h_b
            return h_f, h_b

        h0 = jnp.zeros((1, H), dtype=jnp.float32)
        lax.fori_loop(0, Tp, step, (h0, h0), unroll=unroll)
        # TODO(synk): inter-layer GRU dropout (p=0.1) is identity (eval mode).
        inp = seq_scr[...]                                            # (Tp, 2H)

    # lane-dense label head: (C,2H) @ (2H,Tp) -> (C,Tp)
    o_ref[...] = jnp.dot(h2l_w[...], inp.T,
                         preferred_element_type=jnp.float32) + h2l_b[...]


# ---------------------------------------------------------------------------
# pallas_call wrappers (one launch per stage)
# ---------------------------------------------------------------------------

def prediction_generation_call(x, p):
    Fm = p['conv_in_w'].shape[0]
    dim, T = x.shape
    C = p['conv_out_w'].shape[0]
    nL = len(p['layers'])
    dils = tuple((2 ** (nL - 1 - i), 2 ** i) for i in range(nL))
    args = [x, p['conv_in_w'], p['conv_in_b']]
    for lp in p['layers']:
        args += [lp['w_comb'], lp['b_comb']]
    args += [p['conv_out_w'], p['conv_out_b']]
    flops = 2 * Fm * dim * T + nL * 2 * Fm * 6 * Fm * T + 2 * C * Fm * T
    bytes_acc = 4 * (dim * T + 2 * C * T + Fm * dim
                     + nL * (Fm * 6 * Fm + Fm) + C * Fm + C)
    return pl.pallas_call(
        functools.partial(pg_stage_kernel, dils=dils, T=T, Fm=Fm),
        out_shape=jax.ShapeDtypeStruct((C, T), jnp.float32),
        compiler_params=pltpu.CompilerParams(vmem_limit_bytes=VMEM_LIMIT_BYTES),
        cost_estimate=pl.CostEstimate(flops=flops, transcendentals=0,
                                      bytes_accessed=bytes_acc),
    )(*args)


def refinement_call(x, p):
    Fm = p['conv_in_w'].shape[0]
    C, T = x.shape
    nL = len(p['layers'])
    dils = tuple(2 ** i for i in range(nL))
    args = [x, p['conv_in_w'], p['conv_in_b']]
    for lp in p['layers']:
        args += [lp['wdf'], lp['bd'], lp['w1'], lp['b1']]
    args += [p['conv_out_w'], p['conv_out_b']]
    flops = (2 * Fm * C * T + nL * (2 * Fm * 3 * Fm * T + 2 * Fm * Fm * T)
             + 2 * C * Fm * T)
    bytes_acc = 4 * (2 * C * T + Fm * C
                     + nL * (Fm * 3 * Fm + Fm * Fm + 2 * Fm) + C * Fm + C)
    return pl.pallas_call(
        functools.partial(refine_stage_kernel, dils=dils, T=T, Fm=Fm),
        out_shape=jax.ShapeDtypeStruct((C, T), jnp.float32),
        compiler_params=pltpu.CompilerParams(vmem_limit_bytes=VMEM_LIMIT_BYTES),
        cost_estimate=pl.CostEstimate(flops=flops, transcendentals=C * T,
                                      bytes_accessed=bytes_acc),
    )(*args)


def gru_stage_call(out_ct, gparams, h2l_w, h2l_b, sample_size):
    C, T = out_ct.shape
    # PyTorch: F.interpolate(..., int(T / sample_size)) then interpolate back to T.
    # The exact repeat-based up-sample below requires divisibility.
    assert T % sample_size == 0, "T must be divisible by sample_size"
    Tp = T // sample_size
    H = gparams[0][0]['whh_t'].shape[0]
    num_layers = len(gparams)

    # nearest-neighbour down-sample == strided time selection (index i*ss);
    # it commutes with the per-frame channel softmax, so slice before the call.
    x_ds_t = out_ct[:, ::sample_size].T                               # (Tp, C)

    args = [x_ds_t]
    for layer in gparams:
        for d in layer:
            args += [d['wih_t'], d['whh_t'], d['bih'], d['bhh']]
    args += [h2l_w, h2l_b]

    flops = 2 * C * 2 * H * Tp
    wbytes = C * 2 * H + C
    for li in range(num_layers):
        in_dim = C if li == 0 else 2 * H
        flops += 2 * (2 * Tp * in_dim * 3 * H + Tp * 2 * H * 3 * H)
        wbytes += 2 * (in_dim * 3 * H + H * 3 * H + 6 * H)
    transc = C * Tp + num_layers * 2 * Tp * 3 * H
    bytes_acc = 4 * (2 * C * Tp + wbytes)

    lbl = pl.pallas_call(
        functools.partial(gru_stage_kernel, Tp=Tp, H=H, num_layers=num_layers),
        out_shape=jax.ShapeDtypeStruct((C, Tp), jnp.float32),
        scratch_shapes=[pltpu.VMEM((Tp, 3 * H), jnp.float32),
                        pltpu.VMEM((Tp, 3 * H), jnp.float32),
                        pltpu.VMEM((Tp, 2 * H), jnp.float32)],
        compiler_params=pltpu.CompilerParams(vmem_limit_bytes=VMEM_LIMIT_BYTES),
        cost_estimate=pl.CostEstimate(flops=flops, transcendentals=transc,
                                      bytes_accessed=bytes_acc),
    )(*args)
    # nearest up-sample Tp -> T is an exact per-column repeat (T = Tp * ss).
    return jnp.repeat(lbl, sample_size, axis=-1)                      # (C, T)


# ---------------------------------------------------------------------------
# Module forward
# ---------------------------------------------------------------------------

def ms_tcn2_gru_forward(x, params, sample_size=5):
    # x: (1, dim, T)  (PyTorch Conv1d NCT layout, N must be 1)
    xb = x[0]
    out = prediction_generation_call(xb, params['PG'])                # (C, T)
    outputs = [out]
    for rp in params['Rs']:
        out = refinement_call(out, rp)                                # softmax fused
        outputs.append(out)
    lbl_up = gru_stage_call(out, params['gru'], params['h2l_w'],
                            params['h2l_b'], sample_size)             # (C, T)
    outputs.append(lbl_up)
    return jnp.stack(outputs, axis=0)[:, None, :, :]                  # (num_R+2,1,C,T)


# ---------------------------------------------------------------------------
# Parameters: PyTorch-layout init + one-time kernel-layout preparation
# ---------------------------------------------------------------------------

def init_params(key, num_layers_PG, num_layers_R, num_R, num_f_maps, dim,
                num_classes):
    keys = iter(jax.random.split(key, 256))

    def nrm(shape, scale=0.1):
        return scale * jax.random.normal(next(keys), shape, dtype=jnp.float32)

    F, C, H = num_f_maps, num_classes, 64
    PG = dict(conv_in_w=nrm((F, dim, 1)), conv_in_b=nrm((F,)),
              conv_out_w=nrm((C, F, 1)), conv_out_b=nrm((C,)),
              layers=[dict(w1=nrm((F, F, 3)), b1=nrm((F,)),
                           w2=nrm((F, F, 3)), b2=nrm((F,)),
                           wf=nrm((F, 2 * F, 1)), bf=nrm((F,)))
                      for _ in range(num_layers_PG)])
    Rs = [dict(conv_in_w=nrm((F, C, 1)), conv_in_b=nrm((F,)),
               conv_out_w=nrm((C, F, 1)), conv_out_b=nrm((C,)),
               layers=[dict(wd=nrm((F, F, 3)), bd=nrm((F,)),
                            w1=nrm((F, F, 1)), b1=nrm((F,)))
                       for _ in range(num_layers_R)])
          for _ in range(num_R)]
    gru = [[dict(Wih=nrm((3 * H, 6 if l == 0 else 2 * H)),
                 Whh=nrm((3 * H, H)), bih=nrm((3 * H,)), bhh=nrm((3 * H,)))
            for _ in range(2)] for l in range(3)]
    return dict(PG=PG, Rs=Rs, gru=gru, h2l_w=nrm((6, 2 * H)), h2l_b=nrm((6,)))


def prepare_params(p):
    """One-time reshape / algebraic folding into kernel layout."""
    def col(b): return b.reshape(-1, 1)
    def row(b): return b.reshape(1, -1)

    def flat_taps(w):   # (F_out, F_in, 3) -> (F_out, 3*F_in), taps [t-d, t, t+d]
        return jnp.concatenate([w[:, :, 0], w[:, :, 1], w[:, :, 2]], axis=1)

    PG = p['PG']
    F = PG['conv_in_w'].shape[0]
    pg_layers = []
    for l in PG['layers']:
        f1 = flat_taps(l['w1'])                       # (F, 3F)
        f2 = flat_taps(l['w2'])                       # (F, 3F)
        wf = l['wf'][:, :, 0]                         # (F, 2F)
        # fuse conv_fusion @ [conv_dilated_1; conv_dilated_2] (no nonlinearity
        # between them) into one (F, 6F) weight + one bias column.
        w_comb = jnp.concatenate([wf[:, :F] @ f1, wf[:, F:] @ f2], axis=1)
        b_comb = wf[:, :F] @ col(l['b1']) + wf[:, F:] @ col(l['b2']) + col(l['bf'])
        pg_layers.append(dict(w_comb=w_comb, b_comb=b_comb))
    pg = dict(conv_in_w=PG['conv_in_w'][:, :, 0], conv_in_b=col(PG['conv_in_b']),
              conv_out_w=PG['conv_out_w'][:, :, 0],
              conv_out_b=col(PG['conv_out_b']),
              layers=pg_layers)
    Rs = [dict(conv_in_w=R['conv_in_w'][:, :, 0], conv_in_b=col(R['conv_in_b']),
               conv_out_w=R['conv_out_w'][:, :, 0],
               conv_out_b=col(R['conv_out_b']),
               layers=[dict(wdf=flat_taps(l['wd']), bd=col(l['bd']),
                            w1=l['w1'][:, :, 0], b1=col(l['b1']))
                       for l in R['layers']])
          for R in p['Rs']]
    gru = [[dict(wih_t=d['Wih'].T, whh_t=d['Whh'].T,
                 bih=row(d['bih']), bhh=row(d['bhh']))
            for d in layer] for layer in p['gru']]
    return dict(PG=pg, Rs=Rs, gru=gru,
                h2l_w=p['h2l_w'],                     # (C, 2H) used as-is
                h2l_b=col(p['h2l_b']))                # (C, 1)


if __name__ == "__main__":
    num_layers_PG, num_layers_R, num_R = 4, 3, 2
    num_f_maps, dim, num_classes = 32, 16, 6   # GRU input_size=6 forces C=6
    T = 40                                     # divisible by sample_size=5

    key = jax.random.PRNGKey(0)
    kx, kp = jax.random.split(key)
    x = jax.random.normal(kx, (1, dim, T), dtype=jnp.float32)
    raw_params = init_params(kp, num_layers_PG, num_layers_R, num_R,
                             num_f_maps, dim, num_classes)
    params = prepare_params(raw_params)

    fwd = jax.jit(functools.partial(ms_tcn2_gru_forward, sample_size=5))
    out = jax.block_until_ready(fwd(x, params))

    assert out.shape == (num_R + 2, 1, num_classes, T), out.shape
    assert bool(jnp.all(jnp.isfinite(out)))
    print("KERNEL_OK")
</pallas_src>

<mosaic_0001>
module attributes {stable_mosaic.version = 11 : i64} {
  func.func @pg_stage_kernel(%arg0: memref<16x40xf32, #tpu.memory_space<vmem>>, %arg1: memref<32x16xf32, #tpu.memory_space<vmem>>, %arg2: memref<32x1xf32, #tpu.memory_space<vmem>>, %arg3: memref<32x192xf32, #tpu.memory_space<vmem>>, %arg4: memref<32x1xf32, #tpu.memory_space<vmem>>, %arg5: memref<32x192xf32, #tpu.memory_space<vmem>>, %arg6: memref<32x1xf32, #tpu.memory_space<vmem>>, %arg7: memref<32x192xf32, #tpu.memory_space<vmem>>, %arg8: memref<32x1xf32, #tpu.memory_space<vmem>>, %arg9: memref<32x192xf32, #tpu.memory_space<vmem>>, %arg10: memref<32x1xf32, #tpu.memory_space<vmem>>, %arg11: memref<6x32xf32, #tpu.memory_space<vmem>>, %arg12: memref<6x1xf32, #tpu.memory_space<vmem>>, %arg13: memref<6x40xf32, #tpu.memory_space<vmem>>) attributes {dimension_semantics = [], scalar_prefetch = 0 : i64, scratch_operands = 0 : i64, tpu.core_type = #tpu.core_type<tc>} {
    %c0 = arith.constant 0 : index
    %c0_0 = arith.constant 0 : index
    %0 = vector.load %arg1[%c0, %c0_0] : memref<32x16xf32, #tpu.memory_space<vmem>>, vector<32x16xf32>
    %c0_1 = arith.constant 0 : index
    %c0_2 = arith.constant 0 : index
    %1 = vector.load %arg0[%c0_1, %c0_2] : memref<16x40xf32, #tpu.memory_space<vmem>>, vector<16x40xf32>
    %cst = arith.constant dense<0.000000e+00> : vector<32x40xf32>
    %2 = tpu.matmul %0, %1, %cst {dimension_numbers = #tpu.dot_dimension_numbers<[1], [0], [0], [1], [0, 0, 1, 1], [], []>} : vector<32x16xf32>, vector<16x40xf32>, vector<32x40xf32> -> vector<32x40xf32>
    %c0_3 = arith.constant 0 : index
    %c0_4 = arith.constant 0 : index
    %3 = vector.load %arg2[%c0_3, %c0_4] : memref<32x1xf32, #tpu.memory_space<vmem>>, vector<32x1xf32>
    %4 = vector.broadcast %3 : vector<32x1xf32> to vector<32x40xf32>
    %5 = arith.addf %2, %4 : vector<32x40xf32>
    %cst_5 = arith.constant 0.000000e+00 : f32
    %6 = vector.broadcast %cst_5 : f32 to vector<32x8xf32>
    %7 = vector.extract_strided_slice %5 {offsets = [0, 0], sizes = [32, 32], strides = [1, 1]} : vector<32x40xf32> to vector<32x32xf32>
    %8 = tpu.concatenate %6, %7 in 1 : vector<32x8xf32>, vector<32x32xf32> -> vector<32x40xf32>
    %9 = vector.extract_strided_slice %5 {offsets = [0, 8], sizes = [32, 32], strides = [1, 1]} : vector<32x40xf32> to vector<32x32xf32>
    %cst_6 = arith.constant 0.000000e+00 : f32
    %10 = vector.broadcast %cst_6 : f32 to vector<32x8xf32>
    %11 = tpu.concatenate %9, %10 in 1 : vector<32x32xf32>, vector<32x8xf32> -> vector<32x40xf32>
    %cst_7 = arith.constant 0.000000e+00 : f32
    %12 = vector.broadcast %cst_7 : f32 to vector<32x1xf32>
    %13 = vector.extract_strided_slice %5 {offsets = [0, 0], sizes = [32, 39], strides = [1, 1]} : vector<32x40xf32> to vector<32x39xf32>
    %14 = tpu.concatenate %12, %13 in 1 : vector<32x1xf32>, vector<32x39xf32> -> vector<32x40xf32>
    %15 = vector.extract_strided_slice %5 {offsets = [0, 1], sizes = [32, 39], strides = [1, 1]} : vector<32x40xf32> to vector<32x39xf32>
    %cst_8 = arith.constant 0.000000e+00 : f32
    %16 = vector.broadcast %cst_8 : f32 to vector<32x1xf32>
    %17 = tpu.concatenate %15, %16 in 1 : vector<32x39xf32>, vector<32x1xf32> -> vector<32x40xf32>
    %18 = tpu.concatenate %8, %5, %11, %14, %5, %17 in 0 : vector<32x40xf32>, vector<32x40xf32>, vector<32x40xf32>, vector<32x40xf32>, vector<32x40xf32>, vector<32x40xf32> -> vector<192x40xf32>
    %c0_9 = arith.constant 0 : index
    %c0_10 = arith.constant 0 : index
    %19 = vector.load %arg3[%c0_9, %c0_10] : memref<32x192xf32, #tpu.memory_space<vmem>>, vector<32x192xf32>
    %cst_11 = arith.constant dense<0.000000e+00> : vector<32x40xf32>
    %20 = tpu.matmul %19, %18, %cst_11 {dimension_numbers = #tpu.dot_dimension_numbers<[1], [0], [0], [1], [0, 0, 1, 1], [], []>} : vector<32x192xf32>, vector<192x40xf32>, vector<32x40xf32> -> vector<32x40xf32>
    %c0_12 = arith.constant 0 : index
    %c0_13 = arith.constant 0 : index
    %21 = vector.load %arg4[%c0_12, %c0_13] : memref<32x1xf32, #tpu.memory_space<vmem>>, vector<32x1xf32>
    %22 = vector.broadcast %21 : vector<32x1xf32> to vector<32x40xf32>
    %23 = arith.addf %20, %22 : vector<32x40xf32>
    %cst_14 = arith.constant 0.000000e+00 : f32
    %24 = vector.broadcast %cst_14 : f32 to vector<32x40xf32>
    %25 = arith.maximumf %23, %24 : vector<32x40xf32>
    %26 = arith.addf %25, %5 : vector<32x40xf32>
    %cst_15 = arith.constant 0.000000e+00 : f32
    %27 = vector.broadcast %cst_15 : f32 to vector<32x4xf32>
    %28 = vector.extract_strided_slice %26 {offsets = [0, 0], sizes = [32, 36], strides = [1, 1]} : vector<32x40xf32> to vector<32x36xf32>
    %29 = tpu.concatenate %27, %28 in 1 : vector<32x4xf32>, vector<32x36xf32> -> vector<32x40xf32>
    %30 = vector.extract_strided_slice %26 {offsets = [0, 4], sizes = [32, 36], strides = [1, 1]} : vector<32x40xf32> to vector<32x36xf32>
    %cst_16 = arith.constant 0.000000e+00 : f32
    %31 = vector.broadcast %cst_16 : f32 to vector<32x4xf32>
    %32 = tpu.concatenate %30, %31 in 1 : vector<32x36xf32>, vector<32x4xf32> -> vector<32x40xf32>
    %cst_17 = arith.constant 0.000000e+00 : f32
    %33 = vector.broadcast %cst_17 : f32 to vector<32x2xf32>
    %34 = vector.extract_strided_slice %26 {offsets = [0, 0], sizes = [32, 38], strides = [1, 1]} : vector<32x40xf32> to vector<32x38xf32>
    %35 = tpu.concatenate %33, %34 in 1 : vector<32x2xf32>, vector<32x38xf32> -> vector<32x40xf32>
    %36 = vector.extract_strided_slice %26 {offsets = [0, 2], sizes = [32, 38], strides = [1, 1]} : vector<32x40xf32> to vector<32x38xf32>
    %cst_18 = arith.constant 0.000000e+00 : f32
    %37 = vector.broadcast %cst_18 : f32 to vector<32x2xf32>
    %38 = tpu.concatenate %36, %37 in 1 : vector<32x38xf32>, vector<32x2xf32> -> vector<32x40xf32>
    %39 = tpu.concatenate %29, %26, %32, %35, %26, %38 in 0 : vector<32x40xf32>, vector<32x40xf32>, vector<32x40xf32>, vector<32x40xf32>, vector<32x40xf32>, vector<32x40xf32> -> vector<192x40xf32>
    %c0_19 = arith.constant 0 : index
    %c0_20 = arith.constant 0 : index
    %40 = vector.load %arg5[%c0_19, %c0_20] : memref<32x192xf32, #tpu.memory_space<vmem>>, vector<32x192xf32>
    %cst_21 = arith.constant dense<0.000000e+00> : vector<32x40xf32>
    %41 = tpu.matmul %40, %39, %cst_21 {dimension_numbers = #tpu.dot_dimension_numbers<[1], [0], [0], [1], [0, 0, 1, 1], [], []>} : vector<32x192xf32>, vector<192x40xf32>, vector<32x40xf32> -> vector<32x40xf32>
    %c0_22 = arith.constant 0 : index
    %c0_23 = arith.constant 0 : index
    %42 = vector.load %arg6[%c0_22, %c0_23] : memref<32x1xf32, #tpu.memory_space<vmem>>, vector<32x1xf32>
    %43 = vector.broadcast %42 : vector<32x1xf32> to vector<32x40xf32>
    %44 = arith.addf %41, %43 : vector<32x40xf32>
    %cst_24 = arith.constant 0.000000e+00 : f32
    %45 = vector.broadcast %cst_24 : f32 to vector<32x40xf32>
    %46 = arith.maximumf %44, %45 : vector<32x40xf32>
    %47 = arith.addf %46, %26 : vector<32x40xf32>
    %cst_25 = arith.constant 0.000000e+00 : f32
    %48 = vector.broadcast %cst_25 : f32 to vector<32x2xf32>
    %49 = vector.extract_strided_slice %47 {offsets = [0, 0], sizes = [32, 38], strides = [1, 1]} : vector<32x40xf32> to vector<32x38xf32>
    %50 = tpu.concatenate %48, %49 in 1 : vector<32x2xf32>, vector<32x38xf32> -> vector<32x40xf32>
    %51 = vector.extract_strided_slice %47 {offsets = [0, 2], sizes = [32, 38], strides = [1, 1]} : vector<32x40xf32> to vector<32x38xf32>
    %cst_26 = arith.constant 0.000000e+00 : f32
    %52 = vector.broadcast %cst_26 : f32 to vector<32x2xf32>
    %53 = tpu.concatenate %51, %52 in 1 : vector<32x38xf32>, vector<32x2xf32> -> vector<32x40xf32>
    %cst_27 = arith.constant 0.000000e+00 : f32
    %54 = vector.broadcast %cst_27 : f32 to vector<32x4xf32>
    %55 = vector.extract_strided_slice %47 {offsets = [0, 0], sizes = [32, 36], strides = [1, 1]} : vector<32x40xf32> to vector<32x36xf32>
    %56 = tpu.concatenate %54, %55 in 1 : vector<32x4xf32>, vector<32x36xf32> -> vector<32x40xf32>
    %57 = vector.extract_strided_slice %47 {offsets = [0, 4], sizes = [32, 36], strides = [1, 1]} : vector<32x40xf32> to vector<32x36xf32>
    %cst_28 = arith.constant 0.000000e+00 : f32
    %58 = vector.broadcast %cst_28 : f32 to vector<32x4xf32>
    %59 = tpu.concatenate %57, %58 in 1 : vector<32x36xf32>, vector<32x4xf32> -> vector<32x40xf32>
    %60 = tpu.concatenate %50, %47, %53, %56, %47, %59 in 0 : vector<32x40xf32>, vector<32x40xf32>, vector<32x40xf32>, vector<32x40xf32>, vector<32x40xf32>, vector<32x40xf32> -> vector<192x40xf32>
    %c0_29 = arith.constant 0 : index
    %c0_30 = arith.constant 0 : index
    %61 = vector.load %arg7[%c0_29, %c0_30] : memref<32x192xf32, #tpu.memory_space<vmem>>, vector<32x192xf32>
    %cst_31 = arith.constant dense<0.000000e+00> : vector<32x40xf32>
    %62 = tpu.matmul %61, %60, %cst_31 {dimension_numbers = #tpu.dot_dimension_numbers<[1], [0], [0], [1], [0, 0, 1, 1], [], []>} : vector<32x192xf32>, vector<192x40xf32>, vector<32x40xf32> -> vector<32x40xf32>
    %c0_32 = arith.constant 0 : index
    %c0_33 = arith.constant 0 : index
    %63 = vector.load %arg8[%c0_32, %c0_33] : memref<32x1xf32, #tpu.memory_space<vmem>>, vector<32x1xf32>
    %64 = vector.broadcast %63 : vector<32x1xf32> to vector<32x40xf32>
    %65 = arith.addf %62, %64 : vector<32x40xf32>
    %cst_34 = arith.constant 0.000000e+00 : f32
    %66 = vector.broadcast %cst_34 : f32 to vector<32x40xf32>
    %67 = arith.maximumf %65, %66 : vector<32x40xf32>
    %68 = arith.addf %67, %47 : vector<32x40xf32>
    %cst_35 = arith.constant 0.000000e+00 : f32
    %69 = vector.broadcast %cst_35 : f32 to vector<32x1xf32>
    %70 = vector.extract_strided_slice %68 {offsets = [0, 0], sizes = [32, 39], strides = [1, 1]} : vector<32x40xf32> to vector<32x39xf32>
    %71 = tpu.concatenate %69, %70 in 1 : vector<32x1xf32>, vector<32x39xf32> -> vector<32x40xf32>
    %72 = vector.extract_strided_slice %68 {offsets = [0, 1], sizes = [32, 39], strides = [1, 1]} : vector<32x40xf32> to vector<32x39xf32>
    %cst_36 = arith.constant 0.000000e+00 : f32
    %73 = vector.broadcast %cst_36 : f32 to vector<32x1xf32>
    %74 = tpu.concatenate %72, %73 in 1 : vector<32x39xf32>, vector<32x1xf32> -> vector<32x40xf32>
    %cst_37 = arith.constant 0.000000e+00 : f32
    %75 = vector.broadcast %cst_37 : f32 to vector<32x8xf32>
    %76 = vector.extract_strided_slice %68 {offsets = [0, 0], sizes = [32, 32], strides = [1, 1]} : vector<32x40xf32> to vector<32x32xf32>
    %77 = tpu.concatenate %75, %76 in 1 : vector<32x8xf32>, vector<32x32xf32> -> vector<32x40xf32>
    %78 = vector.extract_strided_slice %68 {offsets = [0, 8], sizes = [32, 32], strides = [1, 1]} : vector<32x40xf32> to vector<32x32xf32>
    %cst_38 = arith.constant 0.000000e+00 : f32
    %79 = vector.broadcast %cst_38 : f32 to vector<32x8xf32>
    %80 = tpu.concatenate %78, %79 in 1 : vector<32x32xf32>, vector<32x8xf32> -> vector<32x40xf32>
    %81 = tpu.concatenate %71, %68, %74, %77, %68, %80 in 0 : vector<32x40xf32>, vector<32x40xf32>, vector<32x40xf32>, vector<32x40xf32>, vector<32x40xf32>, vector<32x40xf32> -> vector<192x40xf32>
    %c0_39 = arith.constant 0 : index
    %c0_40 = arith.constant 0 : index
    %82 = vector.load %arg9[%c0_39, %c0_40] : memref<32x192xf32, #tpu.memory_space<vmem>>, vector<32x192xf32>
    %cst_41 = arith.constant dense<0.000000e+00> : vector<32x40xf32>
    %83 = tpu.matmul %82, %81, %cst_41 {dimension_numbers = #tpu.dot_dimension_numbers<[1], [0], [0], [1], [0, 0, 1, 1], [], []>} : vector<32x192xf32>, vector<192x40xf32>, vector<32x40xf32> -> vector<32x40xf32>
    %c0_42 = arith.constant 0 : index
    %c0_43 = arith.constant 0 : index
    %84 = vector.load %arg10[%c0_42, %c0_43] : memref<32x1xf32, #tpu.memory_space<vmem>>, vector<32x1xf32>
    %85 = vector.broadcast %84 : vector<32x1xf32> to vector<32x40xf32>
    %86 = arith.addf %83, %85 : vector<32x40xf32>
    %cst_44 = arith.constant 0.000000e+00 : f32
    %87 = vector.broadcast %cst_44 : f32 to vector<32x40xf32>
    %88 = arith.maximumf %86, %87 : vector<32x40xf32>
    %89 = arith.addf %88, %68 : vector<32x40xf32>
    %c0_45 = arith.constant 0 : index
    %c0_46 = arith.constant 0 : index
    %90 = vector.load %arg11[%c0_45, %c0_46] : memref<6x32xf32, #tpu.memory_space<vmem>>, vector<6x32xf32>
    %cst_47 = arith.constant dense<0.000000e+00> : vector<6x40xf32>
    %91 = tpu.matmul %90, %89, %cst_47 {dimension_numbers = #tpu.dot_dimension_numbers<[1], [0], [0], [1], [0, 0, 1, 1], [], []>} : vector<6x32xf32>, vector<32x40xf32>, vector<6x40xf32> -> vector<6x40xf32>
    %c0_48 = arith.constant 0 : index
    %c0_49 = arith.constant 0 : index
    %92 = vector.load %arg12[%c0_48, %c0_49] : memref<6x1xf32, #tpu.memory_space<vmem>>, vector<6x1xf32>
    %93 = vector.broadcast %92 : vector<6x1xf32> to vector<6x40xf32>
    %94 = arith.addf %91, %93 : vector<6x40xf32>
    %c0_50 = arith.constant 0 : index
    %c0_51 = arith.constant 0 : index
    %95 = vector.load %arg13[%c0_50, %c0_51] : memref<6x40xf32, #tpu.memory_space<vmem>>, vector<6x40xf32>
    tpu.vector_store %arg13[%c0_50, %c0_51], %94 {strides = array<i32>} : memref<6x40xf32, #tpu.memory_space<vmem>>, vector<6x40xf32>,
    return
  }
}

module attributes {stable_mosaic.version = 11 : i64} {
  func.func @refine_stage_kernel(%arg0: memref<6x40xf32, #tpu.memory_space<vmem>>, %arg1: memref<32x6xf32, #tpu.memory_space<vmem>>, %arg2: memref<32x1xf32, #tpu.memory_space<vmem>>, %arg3: memref<32x96xf32, #tpu.memory_space<vmem>>, %arg4: memref<32x1xf32, #tpu.memory_space<vmem>>, %arg5: memref<32x32xf32, #tpu.memory_space<vmem>>, %arg6: memref<32x1xf32, #tpu.memory_space<vmem>>, %arg7: memref<32x96xf32, #tpu.memory_space<vmem>>, %arg8: memref<32x1xf32, #tpu.memory_space<vmem>>, %arg9: memref<32x32xf32, #tpu.memory_space<vmem>>, %arg10: memref<32x1xf32, #tpu.memory_space<vmem>>, %arg11: memref<32x96xf32, #tpu.memory_space<vmem>>, %arg12: memref<32x1xf32, #tpu.memory_space<vmem>>, %arg13: memref<32x32xf32, #tpu.memory_space<vmem>>, %arg14: memref<32x1xf32, #tpu.memory_space<vmem>>, %arg15: memref<6x32xf32, #tpu.memory_space<vmem>>, %arg16: memref<6x1xf32, #tpu.memory_space<vmem>>, %arg17: memref<6x40xf32, #tpu.memory_space<vmem>>) attributes {dimension_semantics = [], scalar_prefetch = 0 : i64, scratch_operands = 0 : i64, tpu.core_type = #tpu.core_type<tc>} {
    %c0 = arith.constant 0 : index
    %c0_0 = arith.constant 0 : index
    %0 = vector.load %arg0[%c0, %c0_0] : memref<6x40xf32, #tpu.memory_space<vmem>>, vector<6x40xf32>
    %cst = arith.constant dense<0xFF800000> : vector<40xf32>
    %1 = vector.multi_reduction <maximumf>, %0, %cst [0] : vector<6x40xf32> to vector<40xf32>
    %2 = vector.shape_cast %1 : vector<40xf32> to vector<1x40xf32>
    %3 = vector.broadcast %2 : vector<1x40xf32> to vector<6x40xf32>
    %4 = arith.subf %0, %3 : vector<6x40xf32>
    %5 = math.exp %4 : vector<6x40xf32>
    %cst_1 = arith.constant dense<0.000000e+00> : vector<40xf32>
    %6 = vector.multi_reduction <add>, %5, %cst_1 [0] : vector<6x40xf32> to vector<40xf32>
    %7 = vector.shape_cast %6 : vector<40xf32> to vector<1x40xf32>
    %8 = vector.broadcast %7 : vector<1x40xf32> to vector<6x40xf32>
    %9 = arith.divf %5, %8 : vector<6x40xf32>
    %c0_2 = arith.constant 0 : index
    %c0_3 = arith.constant 0 : index
    %10 = vector.load %arg1[%c0_2, %c0_3] : memref<32x6xf32, #tpu.memory_space<vmem>>, vector<32x6xf32>
    %cst_4 = arith.constant dense<0.000000e+00> : vector<32x40xf32>
    %11 = tpu.matmul %10, %9, %cst_4 {dimension_numbers = #tpu.dot_dimension_numbers<[1], [0], [0], [1], [0, 0, 1, 1], [], []>} : vector<32x6xf32>, vector<6x40xf32>, vector<32x40xf32> -> vector<32x40xf32>
    %c0_5 = arith.constant 0 : index
    %c0_6 = arith.constant 0 : index
    %12 = vector.load %arg2[%c0_5, %c0_6] : memref<32x1xf32, #tpu.memory_space<vmem>>, vector<32x1xf32>
    %13 = vector.broadcast %12 : vector<32x1xf32> to vector<32x40xf32>
    %14 = arith.addf %11, %13 : vector<32x40xf32>
    %cst_7 = arith.constant 0.000000e+00 : f32
    %15 = vector.broadcast %cst_7 : f32 to vector<32x1xf32>
    %16 = vector.extract_strided_slice %14 {offsets = [0, 0], sizes = [32, 39], strides = [1, 1]} : vector<32x40xf32> to vector<32x39xf32>
    %17 = tpu.concatenate %15, %16 in 1 : vector<32x1xf32>, vector<32x39xf32> -> vector<32x40xf32>
    %18 = vector.extract_strided_slice %14 {offsets = [0, 1], sizes = [32, 39], strides = [1, 1]} : vector<32x40xf32> to vector<32x39xf32>
    %cst_8 = arith.constant 0.000000e+00 : f32
    %19 = vector.broadcast %cst_8 : f32 to vector<32x1xf32>
    %20 = tpu.concatenate %18, %19 in 1 : vector<32x39xf32>, vector<32x1xf32> -> vector<32x40xf32>
    %21 = tpu.concatenate %17, %14, %20 in 0 : vector<32x40xf32>, vector<32x40xf32>, vector<32x40xf32> -> vector<96x40xf32>
    %c0_9 = arith.constant 0 : index
    %c0_10 = arith.constant 0 : index
    %22 = vector.load %arg3[%c0_9, %c0_10] : memref<32x96xf32, #tpu.memory_space<vmem>>, vector<32x96xf32>
    %cst_11 = arith.constant dense<0.000000e+00> : vector<32x40xf32>
    %23 = tpu.matmul %22, %21, %cst_11 {dimension_numbers = #tpu.dot_dimension_numbers<[1], [0], [0], [1], [0, 0, 1, 1], [], []>} : vector<32x96xf32>, vector<96x40xf32>, vector<32x40xf32> -> vector<32x40xf32>
    %c0_12 = arith.constant 0 : index
    %c0_13 = arith.constant 0 : index
    %24 = vector.load %arg4[%c0_12, %c0_13] : memref<32x1xf32, #tpu.memory_space<vmem>>, vector<32x1xf32>
    %25 = vector.broadcast %24 : vector<32x1xf32> to vector<32x40xf32>
    %26 = arith.addf %23, %25 : vector<32x40xf32>
    %cst_14 = arith.constant 0.000000e+00 : f32
    %27 = vector.broadcast %cst_14 : f32 to vector<32x40xf32>
    %28 = arith.maximumf %26, %27 : vector<32x40xf32>
    %c0_15 = arith.constant 0 : index
    %c0_16 = arith.constant 0 : index
    %29 = vector.load %arg5[%c0_15, %c0_16] : memref<32x32xf32, #tpu.memory_space<vmem>>, vector<32x32xf32>
    %cst_17 = arith.constant dense<0.000000e+00> : vector<32x40xf32>
    %30 = tpu.matmul %29, %28, %cst_17 {dimension_numbers = #tpu.dot_dimension_numbers<[1], [0], [0], [1], [0, 0, 1, 1], [], []>} : vector<32x32xf32>, vector<32x40xf32>, vector<32x40xf32> -> vector<32x40xf32>
    %31 = arith.addf %14, %30 : vector<32x40xf32>
    %c0_18 = arith.constant 0 : index
    %c0_19 = arith.constant 0 : index
    %32 = vector.load %arg6[%c0_18, %c0_19] : memref<32x1xf32, #tpu.memory_space<vmem>>, vector<32x1xf32>
    %33 = vector.broadcast %32 : vector<32x1xf32> to vector<32x40xf32>
    %34 = arith.addf %31, %33 : vector<32x40xf32>
    %cst_20 = arith.constant 0.000000e+00 : f32
    %35 = vector.broadcast %cst_20 : f32 to vector<32x2xf32>
    %36 = vector.extract_strided_slice %34 {offsets = [0, 0], sizes = [32, 38], strides = [1, 1]} : vector<32x40xf32> to vector<32x38xf32>
    %37 = tpu.concatenate %35, %36 in 1 : vector<32x2xf32>, vector<32x38xf32> -> vector<32x40xf32>
    %38 = vector.extract_strided_slice %34 {offsets = [0, 2], sizes = [32, 38], strides = [1, 1]} : vector<32x40xf32> to vector<32x38xf32>
    %cst_21 = arith.constant 0.000000e+00 : f32
    %39 = vector.broadcast %cst_21 : f32 to vector<32x2xf32>
    %40 = tpu.concatenate %38, %39 in 1 : vector<32x38xf32>, vector<32x2xf32> -> vector<32x40xf32>
    %41 = tpu.concatenate %37, %34, %40 in 0 : vector<32x40xf32>, vector<32x40xf32>, vector<32x40xf32> -> vector<96x40xf32>
    %c0_22 = arith.constant 0 : index
    %c0_23 = arith.constant 0 : index
    %42 = vector.load %arg7[%c0_22, %c0_23] : memref<32x96xf32, #tpu.memory_space<vmem>>, vector<32x96xf32>
    %cst_24 = arith.constant dense<0.000000e+00> : vector<32x40xf32>
    %43 = tpu.matmul %42, %41, %cst_24 {dimension_numbers = #tpu.dot_dimension_numbers<[1], [0], [0], [1], [0, 0, 1, 1], [], []>} : vector<32x96xf32>, vector<96x40xf32>, vector<32x40xf32> -> vector<32x40xf32>
    %c0_25 = arith.constant 0 : index
    %c0_26 = arith.constant 0 : index
    %44 = vector.load %arg8[%c0_25, %c0_26] : memref<32x1xf32, #tpu.memory_space<vmem>>, vector<32x1xf32>
    %45 = vector.broadcast %44 : vector<32x1xf32> to vector<32x40xf32>
    %46 = arith.addf %43, %45 : vector<32x40xf32>
    %cst_27 = arith.constant 0.000000e+00 : f32
    %47 = vector.broadcast %cst_27 : f32 to vector<32x40xf32>
    %48 = arith.maximumf %46, %47 : vector<32x40xf32>
    %c0_28 = arith.constant 0 : index
    %c0_29 = arith.constant 0 : index
    %49 = vector.load %arg9[%c0_28, %c0_29] : memref<32x32xf32, #tpu.memory_space<vmem>>, vector<32x32xf32>
    %cst_30 = arith.constant dense<0.000000e+00> : vector<32x40xf32>
    %50 = tpu.matmul %49, %48, %cst_30 {dimension_numbers = #tpu.dot_dimension_numbers<[1], [0], [0], [1], [0, 0, 1, 1], [], []>} : vector<32x32xf32>, vector<32x40xf32>, vector<32x40xf32> -> vector<32x40xf32>
    %51 = arith.addf %34, %50 : vector<32x40xf32>
    %c0_31 = arith.constant 0 : index
    %c0_32 = arith.constant 0 : index
    %52 = vector.load %arg10[%c0_31, %c0_32] : memref<32x1xf32, #tpu.memory_space<vmem>>, vector<32x1xf32>
    %53 = vector.broadcast %52 : vector<32x1xf32> to vector<32x40xf32>
    %54 = arith.addf %51, %53 : vector<32x40xf32>
    %cst_33 = arith.constant 0.000000e+00 : f32
    %55 = vector.broadcast %cst_33 : f32 to vector<32x4xf32>
    %56 = vector.extract_strided_slice %54 {offsets = [0, 0], sizes = [32, 36], strides = [1, 1]} : vector<32x40xf32> to vector<32x36xf32>
    %57 = tpu.concatenate %55, %56 in 1 : vector<32x4xf32>, vector<32x36xf32> -> vector<32x40xf32>
    %58 = vector.extract_strided_slice %54 {offsets = [0, 4], sizes = [32, 36], strides = [1, 1]} : vector<32x40xf32> to vector<32x36xf32>
    %cst_34 = arith.constant 0.000000e+00 : f32
    %59 = vector.broadcast %cst_34 : f32 to vector<32x4xf32>
    %60 = tpu.concatenate %58, %59 in 1 : vector<32x36xf32>, vector<32x4xf32> -> vector<32x40xf32>
    %61 = tpu.concatenate %57, %54, %60 in 0 : vector<32x40xf32>, vector<32x40xf32>, vector<32x40xf32> -> vector<96x40xf32>
    %c0_35 = arith.constant 0 : index
    %c0_36 = arith.constant 0 : index
    %62 = vector.load %arg11[%c0_35, %c0_36] : memref<32x96xf32, #tpu.memory_space<vmem>>, vector<32x96xf32>
    %cst_37 = arith.constant dense<0.000000e+00> : vector<32x40xf32>
    %63 = tpu.matmul %62, %61, %cst_37 {dimension_numbers = #tpu.dot_dimension_numbers<[1], [0], [0], [1], [0, 0, 1, 1], [], []>} : vector<32x96xf32>, vector<96x40xf32>, vector<32x40xf32> -> vector<32x40xf32>
    %c0_38 = arith.constant 0 : index
    %c0_39 = arith.constant 0 : index
    %64 = vector.load %arg12[%c0_38, %c0_39] : memref<32x1xf32, #tpu.memory_space<vmem>>, vector<32x1xf32>
    %65 = vector.broadcast %64 : vector<32x1xf32> to vector<32x40xf32>
    %66 = arith.addf %63, %65 : vector<32x40xf32>
    %cst_40 = arith.constant 0.000000e+00 : f32
    %67 = vector.broadcast %cst_40 : f32 to vector<32x40xf32>
    %68 = arith.maximumf %66, %67 : vector<32x40xf32>
    %c0_41 = arith.constant 0 : index
    %c0_42 = arith.constant 0 : index
    %69 = vector.load %arg13[%c0_41, %c0_42] : memref<32x32xf32, #tpu.memory_space<vmem>>, vector<32x32xf32>
    %cst_43 = arith.constant dense<0.000000e+00> : vector<32x40xf32>
    %70 = tpu.matmul %69, %68, %cst_43 {dimension_numbers = #tpu.dot_dimension_numbers<[1], [0], [0], [1], [0, 0, 1, 1], [], []>} : vector<32x32xf32>, vector<32x40xf32>, vector<32x40xf32> -> vector<32x40xf32>
    %71 = arith.addf %54, %70 : vector<32x40xf32>
    %c0_44 = arith.constant 0 : index
    %c0_45 = arith.constant 0 : index
    %72 = vector.load %arg14[%c0_44, %c0_45] : memref<32x1xf32, #tpu.memory_space<vmem>>, vector<32x1xf32>
    %73 = vector.broadcast %72 : vector<32x1xf32> to vector<32x40xf32>
    %74 = arith.addf %71, %73 : vector<32x40xf32>
    %c0_46 = arith.constant 0 : index
    %c0_47 = arith.constant 0 : index
    %75 = vector.load %arg15[%c0_46, %c0_47] : memref<6x32xf32, #tpu.memory_space<vmem>>, vector<6x32xf32>
    %cst_48 = arith.constant dense<0.000000e+00> : vector<6x40xf32>
    %76 = tpu.matmul %75, %74, %cst_48 {dimension_numbers = #tpu.dot_dimension_numbers<[1], [0], [0], [1], [0, 0, 1, 1], [], []>} : vector<6x32xf32>, vector<32x40xf32>, vector<6x40xf32> -> vector<6x40xf32>
    %c0_49 = arith.constant 0 : index
    %c0_50 = arith.constant 0 : index
    %77 = vector.load %arg16[%c0_49, %c0_50] : memref<6x1xf32, #tpu.memory_space<vmem>>, vector<6x1xf32>
    %78 = vector.broadcast %77 : vector<6x1xf32> to vector<6x40xf32>
    %79 = arith.addf %76, %78 : vector<6x40xf32>
    %c0_51 = arith.constant 0 : index
    %c0_52 = arith.constant 0 : index
    %80 = vector.load %arg17[%c0_51, %c0_52] : memref<6x40xf32, #tpu.memory_space<vmem>>, vector<6x40xf32>
    tpu.vector_store %arg17[%c0_51, %c0_52], %79 {strides = array<i32>} : memref<6x40xf32, #tpu.memory_space<vmem>>, vector<6x40xf32>,
    return
  }
}

module attributes {stable_mosaic.version = 11 : i64} {
  func.func @gru_stage_kernel(%arg0: memref<8x6xf32, #tpu.memory_space<vmem>>, %arg1: memref<6x192xf32, #tpu.memory_space<vmem>>, %arg2: memref<64x192xf32, #tpu.memory_space<vmem>>, %arg3: memref<1x192xf32, #tpu.memory_space<vmem>>, %arg4: memref<1x192xf32, #tpu.memory_space<vmem>>, %arg5: memref<6x192xf32, #tpu.memory_space<vmem>>, %arg6: memref<64x192xf32, #tpu.memory_space<vmem>>, %arg7: memref<1x192xf32, #tpu.memory_space<vmem>>, %arg8: memref<1x192xf32, #tpu.memory_space<vmem>>, %arg9: memref<128x192xf32, #tpu.memory_space<vmem>>, %arg10: memref<64x192xf32, #tpu.memory_space<vmem>>, %arg11: memref<1x192xf32, #tpu.memory_space<vmem>>, %arg12: memref<1x192xf32, #tpu.memory_space<vmem>>, %arg13: memref<128x192xf32, #tpu.memory_space<vmem>>, %arg14: memref<64x192xf32, #tpu.memory_space<vmem>>, %arg15: memref<1x192xf32, #tpu.memory_space<vmem>>, %arg16: memref<1x192xf32, #tpu.memory_space<vmem>>, %arg17: memref<128x192xf32, #tpu.memory_space<vmem>>, %arg18: memref<64x192xf32, #tpu.memory_space<vmem>>, %arg19: memref<1x192xf32, #tpu.memory_space<vmem>>, %arg20: memref<1x192xf32, #tpu.memory_space<vmem>>, %arg21: memref<128x192xf32, #tpu.memory_space<vmem>>, %arg22: memref<64x192xf32, #tpu.memory_space<vmem>>, %arg23: memref<1x192xf32, #tpu.memory_space<vmem>>, %arg24: memref<1x192xf32, #tpu.memory_space<vmem>>, %arg25: memref<6x128xf32, #tpu.memory_space<vmem>>, %arg26: memref<6x1xf32, #tpu.memory_space<vmem>>, %arg27: memref<6x8xf32, #tpu.memory_space<vmem>>, %arg28: memref<8x192xf32, #tpu.memory_space<vmem>>, %arg29: memref<8x192xf32, #tpu.memory_space<vmem>>, %arg30: memref<8x128xf32, #tpu.memory_space<vmem>>) attributes {dimension_semantics = [], scalar_prefetch = 0 : i64, scratch_operands = 3 : i64, tpu.core_type = #tpu.core_type<tc>} {
    %c0 = arith.constant 0 : index
    %c0_0 = arith.constant 0 : index
    %0 = vector.load %arg0[%c0, %c0_0] : memref<8x6xf32, #tpu.memory_space<vmem>>, vector<8x6xf32>
    %cst = arith.constant dense<0xFF800000> : vector<8xf32>
    %1 = vector.multi_reduction <maximumf>, %0, %cst [1] : vector<8x6xf32> to vector<8xf32>
    %2 = vector.shape_cast %1 : vector<8xf32> to vector<8x1xf32>
    %3 = vector.broadcast %2 : vector<8x1xf32> to vector<8x6xf32>
    %4 = arith.subf %0, %3 : vector<8x6xf32>
    %5 = math.exp %4 : vector<8x6xf32>
    %cst_1 = arith.constant dense<0.000000e+00> : vector<8xf32>
    %6 = vector.multi_reduction <add>, %5, %cst_1 [1] : vector<8x6xf32> to vector<8xf32>
    %7 = vector.shape_cast %6 : vector<8xf32> to vector<8x1xf32>
    %8 = vector.broadcast %7 : vector<8x1xf32> to vector<8x6xf32>
    %9 = arith.divf %5, %8 : vector<8x6xf32>
    %c0_2 = arith.constant 0 : index
    %c0_3 = arith.constant 0 : index
    %10 = vector.load %arg1[%c0_2, %c0_3] : memref<6x192xf32, #tpu.memory_space<vmem>>, vector<6x192xf32>
    %cst_4 = arith.constant dense<0.000000e+00> : vector<8x192xf32>
    %11 = tpu.matmul %9, %10, %cst_4 {dimension_numbers = #tpu.dot_dimension_numbers<[1], [0], [0], [1], [0, 0, 1, 1], [], []>} : vector<8x6xf32>, vector<6x192xf32>, vector<8x192xf32> -> vector<8x192xf32>
    %c0_5 = arith.constant 0 : index
    %c0_6 = arith.constant 0 : index
    %12 = vector.load %arg3[%c0_5, %c0_6] : memref<1x192xf32, #tpu.memory_space<vmem>>, vector<1x192xf32>
    %13 = vector.broadcast %12 : vector<1x192xf32> to vector<8x192xf32>
    %14 = arith.addf %11, %13 : vector<8x192xf32>
    %c0_7 = arith.constant 0 : index
    %c0_8 = arith.constant 0 : index
    %15 = vector.load %arg28[%c0_7, %c0_8] : memref<8x192xf32, #tpu.memory_space<vmem>>, vector<8x192xf32>
    tpu.vector_store %arg28[%c0_7, %c0_8], %14 {strides = array<i32>} : memref<8x192xf32, #tpu.memory_space<vmem>>, vector<8x192xf32>,
    %c0_9 = arith.constant 0 : index
    %c0_10 = arith.constant 0 : index
    %16 = vector.load %arg5[%c0_9, %c0_10] : memref<6x192xf32, #tpu.memory_space<vmem>>, vector<6x192xf32>
    %cst_11 = arith.constant dense<0.000000e+00> : vector<8x192xf32>
    %17 = tpu.matmul %9, %16, %cst_11 {dimension_numbers = #tpu.dot_dimension_numbers<[1], [0], [0], [1], [0, 0, 1, 1], [], []>} : vector<8x6xf32>, vector<6x192xf32>, vector<8x192xf32> -> vector<8x192xf32>
    %c0_12 = arith.constant 0 : index
    %c0_13 = arith.constant 0 : index
    %18 = vector.load %arg7[%c0_12, %c0_13] : memref<1x192xf32, #tpu.memory_space<vmem>>, vector<1x192xf32>
    %19 = vector.broadcast %18 : vector<1x192xf32> to vector<8x192xf32>
    %20 = arith.addf %17, %19 : vector<8x192xf32>
    %c0_14 = arith.constant 0 : index
    %c0_15 = arith.constant 0 : index
    %21 = vector.load %arg29[%c0_14, %c0_15] : memref<8x192xf32, #tpu.memory_space<vmem>>, vector<8x192xf32>
    tpu.vector_store %arg29[%c0_14, %c0_15], %20 {strides = array<i32>} : memref<8x192xf32, #tpu.memory_space<vmem>>, vector<8x192xf32>,
    %c0_16 = arith.constant 0 : index
    %c0_17 = arith.constant 0 : index
    %22 = vector.load %arg2[%c0_16, %c0_17] : memref<64x192xf32, #tpu.memory_space<vmem>>, vector<64x192xf32>
    %c0_18 = arith.constant 0 : index
    %c0_19 = arith.constant 0 : index
    %23 = vector.load %arg6[%c0_18, %c0_19] : memref<64x192xf32, #tpu.memory_space<vmem>>, vector<64x192xf32>
    %c0_20 = arith.constant 0 : index
    %c0_21 = arith.constant 0 : index
    %24 = vector.load %arg4[%c0_20, %c0_21] : memref<1x192xf32, #tpu.memory_space<vmem>>, vector<1x192xf32>
    %c0_22 = arith.constant 0 : index
    %c0_23 = arith.constant 0 : index
    %25 = vector.load %arg8[%c0_22, %c0_23] : memref<1x192xf32, #tpu.memory_space<vmem>>, vector<1x192xf32>
    %cst_24 = arith.constant 0.000000e+00 : f32
    %26 = vector.broadcast %cst_24 : f32 to vector<1x64xf32>
    %c0_i32 = arith.constant 0 : i32
    %c7_i32 = arith.constant 7 : i32
    %27 = arith.subi %c7_i32, %c0_i32 : i32
    %28 = arith.index_cast %c0_i32 : i32 to index
    %c0_25 = arith.constant 0 : index
    %29 = vector.load %arg28[%28, %c0_25] : memref<8x192xf32, #tpu.memory_space<vmem>>, vector<1x192xf32>
    %30 = arith.index_cast %27 : i32 to index
    %c0_26 = arith.constant 0 : index
    %31 = vector.load %arg29[%30, %c0_26] : memref<8x192xf32, #tpu.memory_space<vmem>>, vector<1x192xf32>
    %cst_27 = arith.constant dense<0.000000e+00> : vector<1x192xf32>
    %32 = tpu.matmul %26, %22, %cst_27 {dimension_numbers = #tpu.dot_dimension_numbers<[1], [0], [0], [1], [0, 0, 1, 1], [], []>} : vector<1x64xf32>, vector<64x192xf32>, vector<1x192xf32> -> vector<1x192xf32>
    %33 = arith.addf %32, %24 : vector<1x192xf32>
    %cst_28 = arith.constant dense<0.000000e+00> : vector<1x192xf32>
    %34 = tpu.matmul %26, %23, %cst_28 {dimension_numbers = #tpu.dot_dimension_numbers<[1], [0], [0], [1], [0, 0, 1, 1], [], []>} : vector<1x64xf32>, vector<64x192xf32>, vector<1x192xf32> -> vector<1x192xf32>
    %35 = arith.addf %34, %25 : vector<1x192xf32>
    %36 = vector.extract_strided_slice %29 {offsets = [0, 0], sizes = [1, 64], strides = [1, 1]} : vector<1x192xf32> to vector<1x64xf32>
    %37 = vector.extract_strided_slice %33 {offsets = [0, 0], sizes = [1, 64], strides = [1, 1]} : vector<1x192xf32> to vector<1x64xf32>
    %38 = arith.addf %36, %37 : vector<1x64xf32>
    %39 = arith.negf %38 : vector<1x64xf32>
    %40 = math.exp %39 : vector<1x64xf32>
    %cst_29 = arith.constant 1.000000e+00 : f32
    %41 = vector.broadcast %cst_29 : f32 to vector<1x64xf32>
    %42 = arith.addf %41, %40 : vector<1x64xf32>
    %43 = arith.divf %41, %42 : vector<1x64xf32>
    %44 = vector.extract_strided_slice %29 {offsets = [0, 64], sizes = [1, 64], strides = [1, 1]} : vector<1x192xf32> to vector<1x64xf32>
    %45 = vector.extract_strided_slice %33 {offsets = [0, 64], sizes = [1, 64], strides = [1, 1]} : vector<1x192xf32> to vector<1x64xf32>
    %46 = arith.addf %44, %45 : vector<1x64xf32>
    %47 = arith.negf %46 : vector<1x64xf32>
    %48 = math.exp %47 : vector<1x64xf32>
    %cst_30 = arith.constant 1.000000e+00 : f32
    %49 = vector.broadcast %cst_30 : f32 to vector<1x64xf32>
    %50 = arith.addf %49, %48 : vector<1x64xf32>
    %51 = arith.divf %49, %50 : vector<1x64xf32>
    %52 = vector.extract_strided_slice %29 {offsets = [0, 128], sizes = [1, 64], strides = [1, 1]} : vector<1x192xf32> to vector<1x64xf32>
    %53 = vector.extract_strided_slice %33 {offsets = [0, 128], sizes = [1, 64], strides = [1, 1]} : vector<1x192xf32> to vector<1x64xf32>
    %54 = arith.mulf %43, %53 : vector<1x64xf32>
    %55 = arith.addf %52, %54 : vector<1x64xf32>
    %56 = math.tanh %55 : vector<1x64xf32>
    %cst_31 = arith.constant 1.000000e+00 : f32
    %57 = vector.broadcast %cst_31 : f32 to vector<1x64xf32>
    %58 = arith.subf %57, %51 : vector<1x64xf32>
    %59 = arith.mulf %58, %56 : vector<1x64xf32>
    %60 = arith.mulf %51, %26 : vector<1x64xf32>
    %61 = arith.addf %59, %60 : vector<1x64xf32>
    %62 = vector.extract_strided_slice %31 {offsets = [0, 0], sizes = [1, 64], strides = [1, 1]} : vector<1x192xf32> to vector<1x64xf32>
    %63 = vector.extract_strided_slice %35 {offsets = [0, 0], sizes = [1, 64], strides = [1, 1]} : vector<1x192xf32> to vector<1x64xf32>
    %64 = arith.addf %62, %63 : vector<1x64xf32>
    %65 = arith.negf %64 : vector<1x64xf32>
    %66 = math.exp %65 : vector<1x64xf32>
    %cst_32 = arith.constant 1.000000e+00 : f32
    %67 = vector.broadcast %cst_32 : f32 to vector<1x64xf32>
    %68 = arith.addf %67, %66 : vector<1x64xf32>
    %69 = arith.divf %67, %68 : vector<1x64xf32>
    %70 = vector.extract_strided_slice %31 {offsets = [0, 64], sizes = [1, 64], strides = [1, 1]} : vector<1x192xf32> to vector<1x64xf32>
    %71 = vector.extract_strided_slice %35 {offsets = [0, 64], sizes = [1, 64], strides = [1, 1]} : vector<1x192xf32> to vector<1x64xf32>
    %72 = arith.addf %70, %71 : vector<1x64xf32>
    %73 = arith.negf %72 : vector<1x64xf32>
    %74 = math.exp %73 : vector<1x64xf32>
    %cst_33 = arith.constant 1.000000e+00 : f32
    %75 = vector.broadcast %cst_33 : f32 to vector<1x64xf32>
    %76 = arith.addf %75, %74 : vector<1x64xf32>
    %77 = arith.divf %75, %76 : vector<1x64xf32>
    %78 = vector.extract_strided_slice %31 {offsets = [0, 128], sizes = [1, 64], strides = [1, 1]} : vector<1x192xf32> to vector<1x64xf32>
    %79 = vector.extract_strided_slice %35 {offsets = [0, 128], sizes = [1, 64], strides = [1, 1]} : vector<1x192xf32> to vector<1x64xf32>
    %80 = arith.mulf %69, %79 : vector<1x64xf32>
    %81 = arith.addf %78, %80 : vector<1x64xf32>
    %82 = math.tanh %81 : vector<1x64xf32>
    %cst_34 = arith.constant 1.000000e+00 : f32
    %83 = vector.broadcast %cst_34 : f32 to vector<1x64xf32>
    %84 = arith.subf %83, %77 : vector<1x64xf32>
    %85 = arith.mulf %84, %82 : vector<1x64xf32>
    %86 = arith.mulf %77, %26 : vector<1x64xf32>
    %87 = arith.addf %85, %86 : vector<1x64xf32>
    %88 = arith.index_cast %c0_i32 : i32 to index
    %c0_35 = arith.constant 0 : index
    %89 = vector.load %arg30[%88, %c0_35] : memref<8x128xf32, #tpu.memory_space<vmem>>, vector<1x64xf32>
    tpu.vector_store %arg30[%88, %c0_35], %61 {strides = array<i32>} : memref<8x128xf32, #tpu.memory_space<vmem>>, vector<1x64xf32>,
    %90 = arith.index_cast %27 : i32 to index
    %c64 = arith.constant 64 : index
    %91 = vector.load %arg30[%90, %c64] : memref<8x128xf32, #tpu.memory_space<vmem>>, vector<1x64xf32>
    tpu.vector_store %arg30[%90, %c64], %87 {strides = array<i32>} : memref<8x128xf32, #tpu.memory_space<vmem>>, vector<1x64xf32>,
    %c1_i32 = arith.constant 1 : i32
    %c7_i32_36 = arith.constant 7 : i32
    %92 = arith.subi %c7_i32_36, %c1_i32 : i32
    %93 = arith.index_cast %c1_i32 : i32 to index
    %c0_37 = arith.constant 0 : index
    %94 = vector.load %arg28[%93, %c0_37] : memref<8x192xf32, #tpu.memory_space<vmem>>, vector<1x192xf32>
    %95 = arith.index_cast %92 : i32 to index
    %c0_38 = arith.constant 0 : index
    %96 = vector.load %arg29[%95, %c0_38] : memref<8x192xf32, #tpu.memory_space<vmem>>, vector<1x192xf32>
    %cst_39 = arith.constant dense<0.000000e+00> : vector<1x192xf32>
    %97 = tpu.matmul %61, %22, %cst_39 {dimension_numbers = #tpu.dot_dimension_numbers<[1], [0], [0], [1], [0, 0, 1, 1], [], []>} : vector<1x64xf32>, vector<64x192xf32>, vector<1x192xf32> -> vector<1x192xf32>
    %98 = arith.addf %97, %24 : vector<1x192xf32>
    %cst_40 = arith.constant dense<0.000000e+00> : vector<1x192xf32>
    %99 = tpu.matmul %87, %23, %cst_40 {dimension_numbers = #tpu.dot_dimension_numbers<[1], [0], [0], [1], [0, 0, 1, 1], [], []>} : vector<1x64xf32>, vector<64x192xf32>, vector<1x192xf32> -> vector<1x192xf32>
    %100 = arith.addf %99, %25 : vector<1x192xf32>
    %101 = vector.extract_strided_slice %94 {offsets = [0, 0], sizes = [1, 64], strides = [1, 1]} : vector<1x192xf32> to vector<1x64xf32>
    %102 = vector.extract_strided_slice %98 {offsets = [0, 0], sizes = [1, 64], strides = [1, 1]} : vector<1x192xf32> to vector<1x64xf32>
    %103 = arith.addf %101, %102 : vector<1x64xf32>
    %104 = arith.negf %103 : vector<1x64xf32>
    %105 = math.exp %104 : vector<1x64xf32>
    %cst_41 = arith.constant 1.000000e+00 : f32
    %106 = vector.broadcast %cst_41 : f32 to vector<1x64xf32>
    %107 = arith.addf %106, %105 : vector<1x64xf32>
    %108 = arith.divf %106, %107 : vector<1x64xf32>
    %109 = vector.extract_strided_slice %94 {offsets = [0, 64], sizes = [1, 64], strides = [1, 1]} : vector<1x192xf32> to vector<1x64xf32>
    %110 = vector.extract_strided_slice %98 {offsets = [0, 64], sizes = [1, 64], strides = [1, 1]} : vector<1x192xf32> to vector<1x64xf32>
    %111 = arith.addf %109, %110 : vector<1x64xf32>
    %112 = arith.negf %111 : vector<1x64xf32>
    %113 = math.exp %112 : vector<1x64xf32>
    %cst_42 = arith.constant 1.000000e+00 : f32
    %114 = vector.broadcast %cst_42 : f32 to vector<1x64xf32>
    %115 = arith.addf %114, %113 : vector<1x64xf32>
    %116 = arith.divf %114, %115 : vector<1x64xf32>
    %117 = vector.extract_strided_slice %94 {offsets = [0, 128], sizes = [1, 64], strides = [1, 1]} : vector<1x192xf32> to vector<1x64xf32>
    %118 = vector.extract_strided_slice %98 {offsets = [0, 128], sizes = [1, 64], strides = [1, 1]} : vector<1x192xf32> to vector<1x64xf32>
    %119 = arith.mulf %108, %118 : vector<1x64xf32>
    %120 = arith.addf %117, %119 : vector<1x64xf32>
    %121 = math.tanh %120 : vector<1x64xf32>
    %cst_43 = arith.constant 1.000000e+00 : f32
    %122 = vector.broadcast %cst_43 : f32 to vector<1x64xf32>
    %123 = arith.subf %122, %116 : vector<1x64xf32>
    %124 = arith.mulf %123, %121 : vector<1x64xf32>
    %125 = arith.mulf %116, %61 : vector<1x64xf32>
    %126 = arith.addf %124, %125 : vector<1x64xf32>
    %127 = vector.extract_strided_slice %96 {offsets = [0, 0], sizes = [1, 64], strides = [1, 1]} : vector<1x192xf32> to vector<1x64xf32>
    %128 = vector.extract_strided_slice %100 {offsets = [0, 0], sizes = [1, 64], strides = [1, 1]} : vector<1x192xf32> to vector<1x64xf32>
    %129 = arith.addf %127, %128 : vector<1x64xf32>
    %130 = arith.negf %129 : vector<1x64xf32>
    %131 = math.exp %130 : vector<1x64xf32>
    %cst_44 = arith.constant 1.000000e+00 : f32
    %132 = vector.broadcast %cst_44 : f32 to vector<1x64xf32>
    %133 = arith.addf %132, %131 : vector<1x64xf32>
    %134 = arith.divf %132, %133 : vector<1x64xf32>
    %135 = vector.extract_strided_slice %96 {offsets = [0, 64], sizes = [1, 64], strides = [1, 1]} : vector<1x192xf32> to vector<1x64xf32>
    %136 = vector.extract_strided_slice %100 {offsets = [0, 64], sizes = [1, 64], strides = [1, 1]} : vector<1x192xf32> to vector<1x64xf32>
    %137 = arith.addf %135, %136 : vector<1x64xf32>
    %138 = arith.negf %137 : vector<1x64xf32>
    %139 = math.exp %138 : vector<1x64xf32>
    %cst_45 = arith.constant 1.000000e+00 : f32
    %140 = vector.broadcast %cst_45 : f32 to vector<1x64xf32>
    %141 = arith.addf %140, %139 : vector<1x64xf32>
    %142 = arith.divf %140, %141 : vector<1x64xf32>
    %143 = vector.extract_strided_slice %96 {offsets = [0, 128], sizes = [1, 64], strides = [1, 1]} : vector<1x192xf32> to vector<1x64xf32>
    %144 = vector.extract_strided_slice %100 {offsets = [0, 128], sizes = [1, 64], strides = [1, 1]} : vector<1x192xf32> to vector<1x64xf32>
    %145 = arith.mulf %134, %144 : vector<1x64xf32>
    %146 = arith.addf %143, %145 : vector<1x64xf32>
    %147 = math.tanh %146 : vector<1x64xf32>
    %cst_46 = arith.constant 1.000000e+00 : f32
    %148 = vector.broadcast %cst_46 : f32 to vector<1x64xf32>
    %149 = arith.subf %148, %142 : vector<1x64xf32>
    %150 = arith.mulf %149, %147 : vector<1x64xf32>
    %151 = arith.mulf %142, %87 : vector<1x64xf32>
    %152 = arith.addf %150, %151 : vector<1x64xf32>
    %153 = arith.index_cast %c1_i32 : i32 to index
    %c0_47 = arith.constant 0 : index
    %154 = vector.load %arg30[%153, %c0_47] : memref<8x128xf32, #tpu.memory_space<vmem>>, vector<1x64xf32>
    tpu.vector_store %arg30[%153, %c0_47], %126 {strides = array<i32>} : memref<8x128xf32, #tpu.memory_space<vmem>>, vector<1x64xf32>,
    %155 = arith.index_cast %92 : i32 to index
    %c64_48 = arith.constant 64 : index
    %156 = vector.load %arg30[%155, %c64_48] : memref<8x128xf32, #tpu.memory_space<vmem>>, vector<1x64xf32>
    tpu.vector_store %arg30[%155, %c64_48], %152 {strides = array<i32>} : memref<8x128xf32, #tpu.memory_space<vmem>>, vector<1x64xf32>,
    %c2_i32 = arith.constant 2 : i32
    %c7_i32_49 = arith.constant 7 : i32
    %157 = arith.subi %c7_i32_49, %c2_i32 : i32
    %158 = arith.index_cast %c2_i32 : i32 to index
    %c0_50 = arith.constant 0 : index
    %159 = vector.load %arg28[%158, %c0_50] : memref<8x192xf32, #tpu.memory_space<vmem>>, vector<1x192xf32>
    %160 = arith.index_cast %157 : i32 to index
    %c0_51 = arith.constant 0 : index
    %161 = vector.load %arg29[%160, %c0_51] : memref<8x192xf32, #tpu.memory_space<vmem>>, vector<1x192xf32>
    %cst_52 = arith.constant dense<0.000000e+00> : vector<1x192xf32>
    %162 = tpu.matmul %126, %22, %cst_52 {dimension_numbers = #tpu.dot_dimension_numbers<[1], [0], [0], [1], [0, 0, 1, 1], [], []>} : vector<1x64xf32>, vector<64x192xf32>, vector<1x192xf32> -> vector<1x192xf32>
    %163 = arith.addf %162, %24 : vector<1x192xf32>
    %cst_53 = arith.constant dense<0.000000e+00> : vector<1x192xf32>
    %164 = tpu.matmul %152, %23, %cst_53 {dimension_numbers = #tpu.dot_dimension_numbers<[1], [0], [0], [1], [0, 0, 1, 1], [], []>} : vector<1x64xf32>, vector<64x192xf32>, vector<1x192xf32> -> vector<1x192xf32>
    %165 = arith.addf %164, %25 : vector<1x192xf32>
    %166 = vector.extract_strided_slice %159 {offsets = [0, 0], sizes = [1, 64], strides = [1, 1]} : vector<1x192xf32> to vector<1x64xf32>
    %167 = vector.extract_strided_slice %163 {offsets = [0, 0], sizes = [1, 64], strides = [1, 1]} : vector<1x192xf32> to vector<1x64xf32>
    %168 = arith.addf %166, %167 : vector<1x64xf32>
    %169 = arith.negf %168 : vector<1x64xf32>
    %170 = math.exp %169 : vector<1x64xf32>
    %cst_54 = arith.constant 1.000000e+00 : f32
    %171 = vector.broadcast %cst_54 : f32 to vector<1x64xf32>
    %172 = arith.addf %171, %170 : vector<1x64xf32>
    %173 = arith.divf %171, %172 : vector<1x64xf32>
    %174 = vector.extract_strided_slice %159 {offsets = [0, 64], sizes = [1, 64], strides = [1, 1]} : vector<1x192xf32> to vector<1x64xf32>
    %175 = vector.extract_strided_slice %163 {offsets = [0, 64], sizes = [1, 64], strides = [1, 1]} : vector<1x192xf32> to vector<1x64xf32>
    %176 = arith.addf %174, %175 : vector<1x64xf32>
    %177 = arith.negf %176 : vector<1x64xf32>
    %178 = math.exp %177 : vector<1x64xf32>
    %cst_55 = arith.constant 1.000000e+00 : f32
    %179 = vector.broadcast %cst_55 : f32 to vector<1x64xf32>
    %180 = arith.addf %179, %178 : vector<1x64xf32>
    %181 = arith.divf %179, %180 : vector<1x64xf32>
    %182 = vector.extract_strided_slice %159 {offsets = [0, 128], sizes = [1, 64], strides = [1, 1]} : vector<1x192xf32> to vector<1x64xf32>
    %183 = vector.extract_strided_slice %163 {offsets = [0, 128], sizes = [1, 64], strides = [1, 1]} : vector<1x192xf32> to vector<1x64xf32>
    %184 = arith.mulf %173, %183 : vector<1x64xf32>
    %185 = arith.addf %182, %184 : vector<1x64xf32>
    %186 = math.tanh %185 : vector<1x64xf32>
    %cst_56 = arith.constant 1.000000e+00 : f32
    %187 = vector.broadcast %cst_56 : f32 to vector<1x64xf32>
    %188 = arith.subf %187, %181 : vector<1x64xf32>
    %189 = arith.mulf %188, %186 : vector<1x64xf32>
    %190 = arith.mulf %181, %126 : vector<1x64xf32>
    %191 = arith.addf %189, %190 : vector<1x64xf32>
    %192 = vector.extract_strided_slice %161 {offsets = [0, 0], sizes = [1, 64], strides = [1, 1]} : vector<1x192xf32> to vector<1x64xf32>
    %193 = vector.extract_strided_slice %165 {offsets = [0, 0], sizes = [1, 64], strides = [1, 1]} : vector<1x192xf32> to vector<1x64xf32>
    %194 = arith.addf %192, %193 : vector<1x64xf32>
    %195 = arith.negf %194 : vector<1x64xf32>
    %196 = math.exp %195 : vector<1x64xf32>
    %cst_57 = arith.constant 1.000000e+00 : f32
    %197 = vector.broadcast %cst_57 : f32 to vector<1x64xf32>
    %198 = arith.addf %197, %196 : vector<1x64xf32>
    %199 = arith.divf %197, %198 : vector<1x64xf32>
    %200 = vector.extract_strided_slice %161 {offsets = [0, 64], sizes = [1, 64], strides = [1, 1]} : vector<1x192xf32> to vector<1x64xf32>
    %201 = vector.extract_strided_slice %165 {offsets = [0, 64], sizes = [1, 64], strides = [1, 1]} : vector<1x192xf32> to vector<1x64xf32>
    %202 = arith.addf %200, %201 : vector<1x64xf32>
    %203 = arith.negf %202 : vector<1x64xf32>
    %204 = math.exp %203 : vector<1x64xf32>
    %cst_58 = arith.constant 1.000000e+00 : f32
    %205 = vector.broadcast %cst_58 : f32 to vector<1x64xf32>
    %206 = arith.addf %205, %204 : vector<1x64xf32>
    %207 = arith.divf %205, %206 : vector<1x64xf32>
    %208 = vector.extract_strided_slice %161 {offsets = [0, 128], sizes = [1, 64], strides = [1, 1]} : vector<1x192xf32> to vector<1x64xf32>
    %209 = vector.extract_strided_slice %165 {offsets = [0, 128], sizes = [1, 64], strides = [1, 1]} : vector<1x192xf32> to vector<1x64xf32>
    %210 = arith.mulf %199, %209 : vector<1x64xf32>
    %211 = arith.addf %208, %210 : vector<1x64xf32>
    %212 = math.tanh %211 : vector<1x64xf32>
    %cst_59 = arith.constant 1.000000e+00 : f32
    %213 = vector.broadcast %cst_59 : f32 to vector<1x64xf32>
    %214 = arith.subf %213, %207 : vector<1x64xf32>
    %215 = arith.mulf %214, %212 : vector<1x64xf32>
    %216 = arith.mulf %207, %152 : vector<1x64xf32>
    %217 = arith.addf %215, %216 : vector<1x64xf32>
    %218 = arith.index_cast %c2_i32 : i32 to index
    %c0_60 = arith.constant 0 : index
    %219 = vector.load %arg30[%218, %c0_60] : memref<8x128xf32, #tpu.memory_space<vmem>>, vector<1x64xf32>
    tpu.vector_store %arg30[%218, %c0_60], %191 {strides = array<i32>} : memref<8x128xf32, #tpu.memory_space<vmem>>, vector<1x64xf32>,
    %220 = arith.index_cast %157 : i32 to index
    %c64_61 = arith.constant 64 : index
    %221 = vector.load %arg30[%220, %c64_61] : memref<8x128xf32, #tpu.memory_space<vmem>>, vector<1x64xf32>
    tpu.vector_store %arg30[%220, %c64_61], %217 {strides = array<i32>} : memref<8x128xf32, #tpu.memory_space<vmem>>, vector<1x64xf32>,
    %c3_i32 = arith.constant 3 : i32
    %c7_i32_62 = arith.constant 7 : i32
    %222 = arith.subi %c7_i32_62, %c3_i32 : i32
    %223 = arith.index_cast %c3_i32 : i32 to index
    %c0_63 = arith.constant 0 : index
    %224 = vector.load %arg28[%223, %c0_63] : memref<8x192xf32, #tpu.memory_space<vmem>>, vector<1x192xf32>
    %225 = arith.index_cast %222 : i32 to index
    %c0_64 = arith.constant 0 : index
    %226 = vector.load %arg29[%225, %c0_64] : memref<8x192xf32, #tpu.memory_space<vmem>>, vector<1x192xf32>
    %cst_65 = arith.constant dense<0.000000e+00> : vector<1x192xf32>
    %227 = tpu.matmul %191, %22, %cst_65 {dimension_numbers = #tpu.dot_dimension_numbers<[1], [0], [0], [1], [0, 0, 1, 1], [], []>} : vector<1x64xf32>, vector<64x192xf32>, vector<1x192xf32> -> vector<1x192xf32>
    %228 = arith.addf %227, %24 : vector<1x192xf32>
    %cst_66 = arith.constant dense<0.000000e+00> : vector<1x192xf32>
    %229 = tpu.matmul %217, %23, %cst_66 {dimension_numbers = #tpu.dot_dimension_numbers<[1], [0], [0], [1], [0, 0, 1, 1], [], []>} : vector<1x64xf32>, vector<64x192xf32>, vector<1x192xf32> -> vector<1x192xf32>
    %230 = arith.addf %229, %25 : vector<1x192xf32>
    %231 = vector.extract_strided_slice %224 {offsets = [0, 0], sizes = [1, 64], strides = [1, 1]} : vector<1x192xf32> to vector<1x64xf32>
    %232 = vector.extract_strided_slice %228 {offsets = [0, 0], sizes = [1, 64], strides = [1, 1]} : vector<1x192xf32> to vector<1x64xf32>
    %233 = arith.addf %231, %232 : vector<1x64xf32>
    %234 = arith.negf %233 : vector<1x64xf32>
    %235 = math.exp %234 : vector<1x64xf32>
    %cst_67 = arith.constant 1.000000e+00 : f32
    %236 = vector.broadcast %cst_67 : f32 to vector<1x64xf32>
    %237 = arith.addf %236, %235 : vector<1x64xf32>
    %238 = arith.divf %236, %237 : vector<1x64xf32>
    %239 = vector.extract_strided_slice %224 {offsets = [0, 64], sizes = [1, 64], strides = [1, 1]} : vector<1x192xf32> to vector<1x64xf32>
    %240 = vector.extract_strided_slice %228 {offsets = [0, 64], sizes = [1, 64], strides = [1, 1]} : vector<1x192xf32> to vector<1x64xf32>
    %241 = arith.addf %239, %240 : vector<1x64xf32>
    %242 = arith.negf %241 : vector<1x64xf32>
    %243 = math.exp %242 : vector<1x64xf32>
    %cst_68 = arith.constant 1.000000e+00 : f32
    %244 = vector.broadcast %cst_68 : f32 to vector<1x64xf32>
    %245 = arith.addf %244, %243 : vector<1x64xf32>
    %246 = arith.divf %244, %245 : vector<1x64xf32>
    %247 = vector.extract_strided_slice %224 {offsets = [0, 128], sizes = [1, 64], strides = [1, 1]} : vector<1x192xf32> to vector<1x64xf32>
    %248 = vector.extract_strided_slice %228 {offsets = [0, 128], sizes = [1, 64], strides = [1, 1]} : vector<1x192xf32> to vector<1x64xf32>
    %249 = arith.mulf %238, %248 : vector<1x64xf32>
    %250 = arith.addf %247, %249 : vector<1x64xf32>
    %251 = math.tanh %250 : vector<1x64xf32>
    %cst_69 = arith.constant 1.000000e+00 : f32
    %252 = vector.broadcast %cst_69 : f32 to vector<1x64xf32>
    %253 = arith.subf %252, %246 : vector<1x64xf32>
    %254 = arith.mulf %253, %251 : vector<1x64xf32>
    %255 = arith.mulf %246, %191 : vector<1x64xf32>
    %256 = arith.addf %254, %255 : vector<1x64xf32>
    %257 = vector.extract_strided_slice %226 {offsets = [0, 0], sizes = [1, 64], strides = [1, 1]} : vector<1x192xf32> to vector<1x64xf32>
    %258 = vector.extract_strided_slice %230 {offsets = [0, 0], sizes = [1, 64], strides = [1, 1]} : vector<1x192xf32> to vector<1x64xf32>
    %259 = arith.addf %257, %258 : vector<1x64xf32>
    %260 = arith.negf %259 : vector<1x64xf32>
    %261 = math.exp %260 : vector<1x64xf32>
    %cst_70 = arith.constant 1.000000e+00 : f32
    %262 = vector.broadcast %cst_70 : f32 to vector<1x64xf32>
    %263 = arith.addf %262, %261 : vector<1x64xf32>
    %264 = arith.divf %262, %263 : vector<1x64xf32>
    %265 = vector.extract_strided_slice %226 {offsets = [0, 64], sizes = [1, 64], strides = [1, 1]} : vector<1x192xf32> to vector<1x64xf32>
    %266 = vector.extract_strided_slice %230 {offsets = [0, 64], sizes = [1, 64], strides = [1, 1]} : vector<1x192xf32> to vector<1x64xf32>
    %267 = arith.addf %265, %266 : vector<1x64xf32>
    %268 = arith.negf %267 : vector<1x64xf32>
    %269 = math.exp %268 : vector<1x64xf32>
    %cst_71 = arith.constant 1.000000e+00 : f32
    %270 = vector.broadcast %cst_71 : f32 to vector<1x64xf32>
    %271 = arith.addf %270, %269 : vector<1x64xf32>
    %272 = arith.divf %270, %271 : vector<1x64xf32>
    %273 = vector.extract_strided_slice %226 {offsets = [0, 128], sizes = [1, 64], strides = [1, 1]} : vector<1x192xf32> to vector<1x64xf32>
    %274 = vector.extract_strided_slice %230 {offsets = [0, 128], sizes = [1, 64], strides = [1, 1]} : vector<1x192xf32> to vector<1x64xf32>
    %275 = arith.mulf %264, %274 : vector<1x64xf32>
    %276 = arith.addf %273, %275 : vector<1x64xf32>
    %277 = math.tanh %276 : vector<1x64xf32>
    %cst_72 = arith.constant 1.000000e+00 : f32
    %278 = vector.broadcast %cst_72 : f32 to vector<1x64xf32>
    %279 = arith.subf %278, %272 : vector<1x64xf32>
    %280 = arith.mulf %279, %277 : vector<1x64xf32>
    %281 = arith.mulf %272, %217 : vector<1x64xf32>
    %282 = arith.addf %280, %281 : vector<1x64xf32>
    %283 = arith.index_cast %c3_i32 : i32 to index
    %c0_73 = arith.constant 0 : index
    %284 = vector.load %arg30[%283, %c0_73] : memref<8x128xf32, #tpu.memory_space<vmem>>, vector<1x64xf32>
    tpu.vector_store %arg30[%283, %c0_73], %256 {strides = array<i32>} : memref<8x128xf32, #tpu.memory_space<vmem>>, vector<1x64xf32>,
    %285 = arith.index_cast %222 : i32 to index
    %c64_74 = arith.constant 64 : index
    %286 = vector.load %arg30[%285, %c64_74] : memref<8x128xf32, #tpu.memory_space<vmem>>, vector<1x64xf32>
    tpu.vector_store %arg30[%285, %c64_74], %282 {strides = array<i32>} : memref<8x128xf32, #tpu.memory_space<vmem>>, vector<1x64xf32>,
    %c4_i32 = arith.constant 4 : i32
    %c7_i32_75 = arith.constant 7 : i32
    %287 = arith.subi %c7_i32_75, %c4_i32 : i32
    %288 = arith.index_cast %c4_i32 : i32 to index
    %c0_76 = arith.constant 0 : index
    %289 = vector.load %arg28[%288, %c0_76] : memref<8x192xf32, #tpu.memory_space<vmem>>, vector<1x192xf32>
    %290 = arith.index_cast %287 : i32 to index
    %c0_77 = arith.constant 0 : index
    %291 = vector.load %arg29[%290, %c0_77] : memref<8x192xf32, #tpu.memory_space<vmem>>, vector<1x192xf32>
    %cst_78 = arith.constant dense<0.000000e+00> : vector<1x192xf32>
    %292 = tpu.matmul %256, %22, %cst_78 {dimension_numbers = #tpu.dot_dimension_numbers<[1], [0], [0], [1], [0, 0, 1, 1], [], []>} : vector<1x64xf32>, vector<64x192xf32>, vector<1x192xf32> -> vector<1x192xf32>
    %293 = arith.addf %292, %24 : vector<1x192xf32>
    %cst_79 = arith.constant dense<0.000000e+00> : vector<1x192xf32>
    %294 = tpu.matmul %282, %23, %cst_79 {dimension_numbers = #tpu.dot_dimension_numbers<[1], [0], [0], [1], [0, 0, 1, 1], [], []>} : vector<1x64xf32>, vector<64x192xf32>, vector<1x192xf32> -> vector<1x192xf32>
    %295 = arith.addf %294, %25 : vector<1x192xf32>
    %296 = vector.extract_strided_slice %289 {offsets = [0, 0], sizes = [1, 64], strides = [1, 1]} : vector<1x192xf32> to vector<1x64xf32>
    %297 = vector.extract_strided_slice %293 {offsets = [0, 0], sizes = [1, 64], strides = [1, 1]} : vector<1x192xf32> to vector<1x64xf32>
    %298 = arith.addf %296, %297 : vector<1x64xf32>
    %299 = arith.negf %298 : vector<1x64xf32>
    %300 = math.exp %299 : vector<1x64xf32>
    %cst_80 = arith.constant 1.000000e+00 : f32
    %301 = vector.broadcast %cst_80 : f32 to vector<1x64xf32>
    %302 = arith.addf %301, %300 : vector<1x64xf32>
    %303 = arith.divf %301, %302 : vector<1x64xf32>
    %304 = vector.extract_strided_slice %289 {offsets = [0, 64], sizes = [1, 64], strides = [1, 1]} : vector<1x192xf32> to vector<1x64xf32>
    %305 = vector.extract_strided_slice %293 {offsets = [0, 64], sizes = [1, 64], strides = [1, 1]} : vector<1x192xf32> to vector<1x64xf32>
    %306 = arith.addf %304, %305 : vector<1x64xf32>
    %307 = arith.negf %306 : vector<1x64xf32>
    %308 = math.exp %307 : vector<1x64xf32>
    %cst_81 = arith.constant 1.000000e+00 : f32
    %309 = vector.broadcast %cst_81 : f32 to vector<1x64xf32>
    %310 = arith.addf %309, %308 : vector<1x64xf32>
    %311 = arith.divf %309, %310 : vector<1x64xf32>
    %312 = vector.extract_strided_slice %289 {offsets = [0, 128], sizes = [1, 64], strides = [1, 1]} : vector<1x192xf32> to vector<1x64xf32>
    %313 = vector.extract_strided_slice %293 {offsets = [0, 128], sizes = [1, 64], strides = [1, 1]} : vector<1x192xf32> to vector<1x64xf32>
    %314 = arith.mulf %303, %313 : vector<1x64xf32>
    %315 = arith.addf %312, %314 : vector<1x64xf32>
    %316 = math.tanh %315 : vector<1x64xf32>
    %cst_82 = arith.constant 1.000000e+00 : f32
    %317 = vector.broadcast %cst_82 : f32 to vector<1x64xf32>
    %318 = arith.subf %317, %311 : vector<1x64xf32>
    %319 = arith.mulf %318, %316 : vector<1x64xf32>
    %320 = arith.mulf %311, %256 : vector<1x64xf32>
    %321 = arith.addf %319, %320 : vector<1x64xf32>
    %322 = vector.extract_strided_slice %291 {offsets = [0, 0], sizes = [1, 64], strides = [1, 1]} : vector<1x192xf32> to vector<1x64xf32>
    %323 = vector.extract_strided_slice %295 {offsets = [0, 0], sizes = [1, 64], strides = [1, 1]} : vector<1x192xf32> to vector<1x64xf32>
    %324 = arith.addf %322, %323 : vector<1x64xf32>
    %325 = arith.negf %324 : vector<1x64xf32>
    %326 = math.exp %325 : vector<1x64xf32>
    %cst_83 = arith.constant 1.000000e+00 : f32
    %327 = vector.broadcast %cst_83 : f32 to vector<1x64xf32>
    %328 = arith.addf %327, %326 : vector<1x64xf32>
    %329 = arith.divf %327, %328 : vector<1x64xf32>
    %330 = vector.extract_strided_slice %291 {offsets = [0, 64], sizes = [1, 64], strides = [1, 1]} : vector<1x192xf32> to vector<1x64xf32>
    %331 = vector.extract_strided_slice %295 {offsets = [0, 64], sizes = [1, 64], strides = [1, 1]} : vector<1x192xf32> to vector<1x64xf32>
    %332 = arith.addf %330, %331 : vector<1x64xf32>
    %333 = arith.negf %332 : vector<1x64xf32>
    %334 = math.exp %333 : vector<1x64xf32>
    %cst_84 = arith.constant 1.000000e+00 : f32
    %335 = vector.broadcast %cst_84 : f32 to vector<1x64xf32>
    %336 = arith.addf %335, %334 : vector<1x64xf32>
    %337 = arith.divf %335, %336 : vector<1x64xf32>
    %338 = vector.extract_strided_slice %291 {offsets = [0, 128], sizes = [1, 64], strides = [1, 1]} : vector<1x192xf32> to vector<1x64xf32>
    %339 = vector.extract_strided_slice %295 {offsets = [0, 128], sizes = [1, 64], strides = [1, 1]} : vector<1x192xf32> to vector<1x64xf32>
    %340 = arith.mulf %329, %339 : vector<1x64xf32>
    %341 = arith.addf %338, %340 : vector<1x64xf32>
    %342 = math.tanh %341 : vector<1x64xf32>
    %cst_85 = arith.constant 1.000000e+00 : f32
    %343 = vector.broadcast %cst_85 : f32 to vector<1x64xf32>
    %344 = arith.subf %343, %337 : vector<1x64xf32>
    %345 = arith.mulf %344, %342 : vector<1x64xf32>
    %346 = arith.mulf %337, %282 : vector<1x64xf32>
    %347 = arith.addf %345, %346 : vector<1x64xf32>
    %348 = arith.index_cast %c4_i32 : i32 to index
    %c0_86 = arith.constant 0 : index
    %349 = vector.load %arg30[%348, %c0_86] : memref<8x128xf32, #tpu.memory_space<vmem>>, vector<1x64xf32>
    tpu.vector_store %arg30[%348, %c0_86], %321 {strides = array<i32>} : memref<8x128xf32, #tpu.memory_space<vmem>>, vector<1x64xf32>,
    %350 = arith.index_cast %287 : i32 to index
    %c64_87 = arith.constant 64 : index
    %351 = vector.load %arg30[%350, %c64_87] : memref<8x128xf32, #tpu.memory_space<vmem>>, vector<1x64xf32>
    tpu.vector_store %arg30[%350, %c64_87], %347 {strides = array<i32>} : memref<8x128xf32, #tpu.memory_space<vmem>>, vector<1x64xf32>,
    %c5_i32 = arith.constant 5 : i32
    %c7_i32_88 = arith.constant 7 : i32
    %352 = arith.subi %c7_i32_88, %c5_i32 : i32
    %353 = arith.index_cast %c5_i32 : i32 to index
    %c0_89 = arith.constant 0 : index
    %354 = vector.load %arg28[%353, %c0_89] : memref<8x192xf32, #tpu.memory_space<vmem>>, vector<1x192xf32>
    %355 = arith.index_cast %352 : i32 to index
    %c0_90 = arith.constant 0 : index
    %356 = vector.load %arg29[%355, %c0_90] : memref<8x192xf32, #tpu.memory_space<vmem>>, vector<1x192xf32>
    %cst_91 = arith.constant dense<0.000000e+00> : vector<1x192xf32>
    %357 = tpu.matmul %321, %22, %cst_91 {dimension_numbers = #tpu.dot_dimension_numbers<[1], [0], [0], [1], [0, 0, 1, 1], [], []>} : vector<1x64xf32>, vector<64x192xf32>, vector<1x192xf32> -> vector<1x192xf32>
    %358 = arith.addf %357, %24 : vector<1x192xf32>
    %cst_92 = arith.constant dense<0.000000e+00> : vector<1x192xf32>
    %359 = tpu.matmul %347, %23, %cst_92 {dimension_numbers = #tpu.dot_dimension_numbers<[1], [0], [0], [1], [0, 0, 1, 1], [], []>} : vector<1x64xf32>, vector<64x192xf32>, vector<1x192xf32> -> vector<1x192xf32>
    %360 = arith.addf %359, %25 : vector<1x192xf32>
    %361 = vector.extract_strided_slice %354 {offsets = [0, 0], sizes = [1, 64], strides = [1, 1]} : vector<1x192xf32> to vector<1x64xf32>
    %362 = vector.extract_strided_slice %358 {offsets = [0, 0], sizes = [1, 64], strides = [1, 1]} : vector<1x192xf32> to vector<1x64xf32>
    %363 = arith.addf %361, %362 : vector<1x64xf32>
    %364 = arith.negf %363 : vector<1x64xf32>
    %365 = math.exp %364 : vector<1x64xf32>
    %cst_93 = arith.constant 1.000000e+00 : f32
    %366 = vector.broadcast %cst_93 : f32 to vector<1x64xf32>
    %367 = arith.addf %366, %365 : vector<1x64xf32>
    %368 = arith.divf %366, %367 : vector<1x64xf32>
    %369 = vector.extract_strided_slice %354 {offsets = [0, 64], sizes = [1, 64], strides = [1, 1]} : vector<1x192xf32> to vector<1x64xf32>
    %370 = vector.extract_strided_slice %358 {offsets = [0, 64], sizes = [1, 64], strides = [1, 1]} : vector<1x192xf32> to vector<1x64xf32>
    %371 = arith.addf %369, %370 : vector<1x64xf32>
    %372 = arith.negf %371 : vector<1x64xf32>
    %373 = math.exp %372 : vector<1x64xf32>
    %cst_94 = arith.constant 1.000000e+00 : f32
    %374 = vector.broadcast %cst_94 : f32 to vector<1x64xf32>
    %375 = arith.addf %374, %373 : vector<1x64xf32>
    %376 = arith.divf %374, %375 : vector<1x64xf32>
    %377 = vector.extract_strided_slice %354 {offsets = [0, 128], sizes = [1, 64], strides = [1, 1]} : vector<1x192xf32> to vector<1x64xf32>
    %378 = vector.extract_strided_slice %358 {offsets = [0, 128], sizes = [1, 64], strides = [1, 1]} : vector<1x192xf32> to vector<1x64xf32>
    %379 = arith.mulf %368, %378 : vector<1x64xf32>
    %380 = arith.addf %377, %379 : vector<1x64xf32>
    %381 = math.tanh %380 : vector<1x64xf32>
    %cst_95 = arith.constant 1.000000e+00 : f32
    %382 = vector.broadcast %cst_95 : f32 to vector<1x64xf32>
    %383 = arith.subf %382, %376 : vector<1x64xf32>
    %384 = arith.mulf %383, %381 : vector<1x64xf32>
    %385 = arith.mulf %376, %321 : vector<1x64xf32>
    %386 = arith.addf %384, %385 : vector<1x64xf32>
    %387 = vector.extract_strided_slice %356 {offsets = [0, 0], sizes = [1, 64], strides = [1, 1]} : vector<1x192xf32> to vector<1x64xf32>
    %388 = vector.extract_strided_slice %360 {offsets = [0, 0], sizes = [1, 64], strides = [1, 1]} : vector<1x192xf32> to vector<1x64xf32>
    %389 = arith.addf %387, %388 : vector<1x64xf32>
    %390 = arith.negf %389 : vector<1x64xf32>
    %391 = math.exp %390 : vector<1x64xf32>
    %cst_96 = arith.constant 1.000000e+00 : f32
    %392 = vector.broadcast %cst_96 : f32 to vector<1x64xf32>
    %393 = arith.addf %392, %391 : vector<1x64xf32>
    %394 = arith.divf %392, %393 : vector<1x64xf32>
    %395 = vector.extract_strided_slice %356 {offsets = [0, 64], sizes = [1, 64], strides = [1, 1]} : vector<1x192xf32> to vector<1x64xf32>
    %396 = vector.extract_strided_slice %360 {offsets = [0, 64], sizes = [1, 64], strides = [1, 1]} : vector<1x192xf32> to vector<1x64xf32>
    %397 = arith.addf %395, %396 : vector<1x64xf32>
    %398 = arith.negf %397 : vector<1x64xf32>
    %399 = math.exp %398 : vector<1x64xf32>
    %cst_97 = arith.constant 1.000000e+00 : f32
    %400 = vector.broadcast %cst_97 : f32 to vector<1x64xf32>
    %401 = arith.addf %400, %399 : vector<1x64xf32>
    %402 = arith.divf %400, %401 : vector<1x64xf32>
    %403 = vector.extract_strided_slice %356 {offsets = [0, 128], sizes = [1, 64], strides = [1, 1]} : vector<1x192xf32> to vector<1x64xf32>
    %404 = vector.extract_strided_slice %360 {offsets = [0, 128], sizes = [1, 64], strides = [1, 1]} : vector<1x192xf32> to vector<1x64xf32>
    %405 = arith.mulf %394, %404 : vector<1x64xf32>
    %406 = arith.addf %403, %405 : vector<1x64xf32>
    %407 = math.tanh %406 : vector<1x64xf32>
    %cst_98 = arith.constant 1.000000e+00 : f32
    %408 = vector.broadcast %cst_98 : f32 to vector<1x64xf32>
    %409 = arith.subf %408, %402 : vector<1x64xf32>
    %410 = arith.mulf %409, %407 : vector<1x64xf32>
    %411 = arith.mulf %402, %347 : vector<1x64xf32>
    %412 = arith.addf %410, %411 : vector<1x64xf32>
    %413 = arith.index_cast %c5_i32 : i32 to index
    %c0_99 = arith.constant 0 : index
    %414 = vector.load %arg30[%413, %c0_99] : memref<8x128xf32, #tpu.memory_space<vmem>>, vector<1x64xf32>
    tpu.vector_store %arg30[%413, %c0_99], %386 {strides = array<i32>} : memref<8x128xf32, #tpu.memory_space<vmem>>, vector<1x64xf32>,
    %415 = arith.index_cast %352 : i32 to index
    %c64_100 = arith.constant 64 : index
    %416 = vector.load %arg30[%415, %c64_100] : memref<8x128xf32, #tpu.memory_space<vmem>>, vector<1x64xf32>
    tpu.vector_store %arg30[%415, %c64_100], %412 {strides = array<i32>} : memref<8x128xf32, #tpu.memory_space<vmem>>, vector<1x64xf32>,
    %c6_i32 = arith.constant 6 : i32
    %c7_i32_101 = arith.constant 7 : i32
    %417 = arith.subi %c7_i32_101, %c6_i32 : i32
    %418 = arith.index_cast %c6_i32 : i32 to index
    %c0_102 = arith.constant 0 : index
    %419 = vector.load %arg28[%418, %c0_102] : memref<8x192xf32, #tpu.memory_space<vmem>>, vector<1x192xf32>
    %420 = arith.index_cast %417 : i32 to index
    %c0_103 = arith.constant 0 : index
    %421 = vector.load %arg29[%420, %c0_103] : memref<8x192xf32, #tpu.memory_space<vmem>>, vector<1x192xf32>
    %cst_104 = arith.constant dense<0.000000e+00> : vector<1x192xf32>
    %422 = tpu.matmul %386, %22, %cst_104 {dimension_numbers = #tpu.dot_dimension_numbers<[1], [0], [0], [1], [0, 0, 1, 1], [], []>} : vector<1x64xf32>, vector<64x192xf32>, vector<1x192xf32> -> vector<1x192xf32>
    %423 = arith.addf %422, %24 : vector<1x192xf32>
    %cst_105 = arith.constant dense<0.000000e+00> : vector<1x192xf32>
    %424 = tpu.matmul %412, %23, %cst_105 {dimension_numbers = #tpu.dot_dimension_numbers<[1], [0], [0], [1], [0, 0, 1, 1], [], []>} : vector<1x64xf32>, vector<64x192xf32>, vector<1x192xf32> -> vector<1x192xf32>
    %425 = arith.addf %424, %25 : vector<1x192xf32>
    %426 = vector.extract_strided_slice %419 {offsets = [0, 0], sizes = [1, 64], strides = [1, 1]} : vector<1x192xf32> to vector<1x64xf32>
    %427 = vector.extract_strided_slice %423 {offsets = [0, 0], sizes = [1, 64], strides = [1, 1]} : vector<1x192xf32> to vector<1x64xf32>
    %428 = arith.addf %426, %427 : vector<1x64xf32>
    %429 = arith.negf %428 : vector<1x64xf32>
    %430 = math.exp %429 : vector<1x64xf32>
    %cst_106 = arith.constant 1.000000e+00 : f32
    %431 = vector.broadcast %cst_106 : f32 to vector<1x64xf32>
    %432 = arith.addf %431, %430 : vector<1x64xf32>
    %433 = arith.divf %431, %432 : vector<1x64xf32>
    %434 = vector.extract_strided_slice %419 {offsets = [0, 64], sizes = [1, 64], strides = [1, 1]} : vector<1x192xf32> to vector<1x64xf32>
    %435 = vector.extract_strided_slice %423 {offsets = [0, 64], sizes = [1, 64], strides = [1, 1]} : vector<1x192xf32> to vector<1x64xf32>
    %436 = arith.addf %434, %435 : vector<1x64xf32>
    %437 = arith.negf %436 : vector<1x64xf32>
    %438 = math.exp %437 : vector<1x64xf32>
    %cst_107 = arith.constant 1.000000e+00 : f32
    %439 = vector.broadcast %cst_107 : f32 to vector<1x64xf32>
    %440 = arith.addf %439, %438 : vector<1x64xf32>
    %441 = arith.divf %439, %440 : vector<1x64xf32>
    %442 = vector.extract_strided_slice %419 {offsets = [0, 128], sizes = [1, 64], strides = [1, 1]} : vector<1x192xf32> to vector<1x64xf32>
    %443 = vector.extract_strided_slice %423 {offsets = [0, 128], sizes = [1, 64], strides = [1, 1]} : vector<1x192xf32> to vector<1x64xf32>
    %444 = arith.mulf %433, %443 : vector<1x64xf32>
    %445 = arith.addf %442, %444 : vector<1x64xf32>
    %446 = math.tanh %445 : vector<1x64xf32>
    %cst_108 = arith.constant 1.000000e+00 : f32
    %447 = vector.broadcast %cst_108 : f32 to vector<1x64xf32>
    %448 = arith.subf %447, %441 : vector<1x64xf32>
    %449 = arith.mulf %448, %446 : vector<1x64xf32>
    %450 = arith.mulf %441, %386 : vector<1x64xf32>
    %451 = arith.addf %449, %450 : vector<1x64xf32>
    %452 = vector.extract_strided_slice %421 {offsets = [0, 0], sizes = [1, 64], strides = [1, 1]} : vector<1x192xf32> to vector<1x64xf32>
    %453 = vector.extract_strided_slice %425 {offsets = [0, 0], sizes = [1, 64], strides = [1, 1]} : vector<1x192xf32> to vector<1x64xf32>
    %454 = arith.addf %452, %453 : vector<1x64xf32>
    %455 = arith.negf %454 : vector<1x64xf32>
    %456 = math.exp %455 : vector<1x64xf32>
    %cst_109 = arith.constant 1.000000e+00 : f32
    %457 = vector.broadcast %cst_109 : f32 to vector<1x64xf32>
    %458 = arith.addf %457, %456 : vector<1x64xf32>
    %459 = arith.divf %457, %458 : vector<1x64xf32>
    %460 = vector.extract_strided_slice %421 {offsets = [0, 64], sizes = [1, 64], strides = [1, 1]} : vector<1x192xf32> to vector<1x64xf32>
    %461 = vector.extract_strided_slice %425 {offsets = [0, 64], sizes = [1, 64], strides = [1, 1]} : vector<1x192xf32> to vector<1x64xf32>
    %462 = arith.addf %460, %461 : vector<1x64xf32>
    %463 = arith.negf %462 : vector<1x64xf32>
    %464 = math.exp %463 : vector<1x64xf32>
    %cst_110 = arith.constant 1.000000e+00 : f32
    %465 = vector.broadcast %cst_110 : f32 to vector<1x64xf32>
    %466 = arith.addf %465, %464 : vector<1x64xf32>
    %467 = arith.divf %465, %466 : vector<1x64xf32>
    %468 = vector.extract_strided_slice %421 {offsets = [0, 128], sizes = [1, 64], strides = [1, 1]} : vector<1x192xf32> to vector<1x64xf32>
    %469 = vector.extract_strided_slice %425 {offsets = [0, 128], sizes = [1, 64], strides = [1, 1]} : vector<1x192xf32> to vector<1x64xf32>
    %470 = arith.mulf %459, %469 : vector<1x64xf32>
    %471 = arith.addf %468, %470 : vector<1x64xf32>
    %472 = math.tanh %471 : vector<1x64xf32>
    %cst_111 = arith.constant 1.000000e+00 : f32
    %473 = vector.broadcast %cst_111 : f32 to vector<1x64xf32>
    %474 = arith.subf %473, %467 : vector<1x64xf32>
    %475 = arith.mulf %474, %472 : vector<1x64xf32>
    %476 = arith.mulf %467, %412 : vector<1x64xf32>
    %477 = arith.addf %475, %476 : vector<1x64xf32>
    %478 = arith.index_cast %c6_i32 : i32 to index
    %c0_112 = arith.constant 0 : index
    %479 = vector.load %arg30[%478, %c0_112] : memref<8x128xf32, #tpu.memory_space<vmem>>, vector<1x64xf32>
    tpu.vector_store %arg30[%478, %c0_112], %451 {strides = array<i32>} : memref<8x128xf32, #tpu.memory_space<vmem>>, vector<1x64xf32>,
    %480 = arith.index_cast %417 : i32 to index
    %c64_113 = arith.constant 64 : index
    %481 = vector.load %arg30[%480, %c64_113] : memref<8x128xf32, #tpu.memory_space<vmem>>, vector<1x64xf32>
    tpu.vector_store %arg30[%480, %c64_113], %477 {strides = array<i32>} : memref<8x128xf32, #tpu.memory_space<vmem>>, vector<1x64xf32>,
    %c7_i32_114 = arith.constant 7 : i32
    %c7_i32_115 = arith.constant 7 : i32
    %482 = arith.subi %c7_i32_115, %c7_i32_114 : i32
    %483 = arith.index_cast %c7_i32_114 : i32 to index
    %c0_116 = arith.constant 0 : index
    %484 = vector.load %arg28[%483, %c0_116] : memref<8x192xf32, #tpu.memory_space<vmem>>, vector<1x192xf32>
    %485 = arith.index_cast %482 : i32 to index
    %c0_117 = arith.constant 0 : index
    %486 = vector.load %arg29[%485, %c0_117] : memref<8x192xf32, #tpu.memory_space<vmem>>, vector<1x192xf32>
    %cst_118 = arith.constant dense<0.000000e+00> : vector<1x192xf32>
    %487 = tpu.matmul %451, %22, %cst_118 {dimension_numbers = #tpu.dot_dimension_numbers<[1], [0], [0], [1], [0, 0, 1, 1], [], []>} : vector<1x64xf32>, vector<64x192xf32>, vector<1x192xf32> -> vector<1x192xf32>
    %488 = arith.addf %487, %24 : vector<1x192xf32>
    %cst_119 = arith.constant dense<0.000000e+00> : vector<1x192xf32>
    %489 = tpu.matmul %477, %23, %cst_119 {dimension_numbers = #tpu.dot_dimension_numbers<[1], [0], [0], [1], [0, 0, 1, 1], [], []>} : vector<1x64xf32>, vector<64x192xf32>, vector<1x192xf32> -> vector<1x192xf32>
    %490 = arith.addf %489, %25 : vector<1x192xf32>
    %491 = vector.extract_strided_slice %484 {offsets = [0, 0], sizes = [1, 64], strides = [1, 1]} : vector<1x192xf32> to vector<1x64xf32>
    %492 = vector.extract_strided_slice %488 {offsets = [0, 0], sizes = [1, 64], strides = [1, 1]} : vector<1x192xf32> to vector<1x64xf32>
    %493 = arith.addf %491, %492 : vector<1x64xf32>
    %494 = arith.negf %493 : vector<1x64xf32>
    %495 = math.exp %494 : vector<1x64xf32>
    %cst_120 = arith.constant 1.000000e+00 : f32
    %496 = vector.broadcast %cst_120 : f32 to vector<1x64xf32>
    %497 = arith.addf %496, %495 : vector<1x64xf32>
    %498 = arith.divf %496, %497 : vector<1x64xf32>
    %499 = vector.extract_strided_slice %484 {offsets = [0, 64], sizes = [1, 64], strides = [1, 1]} : vector<1x192xf32> to vector<1x64xf32>
    %500 = vector.extract_strided_slice %488 {offsets = [0, 64], sizes = [1, 64], strides = [1, 1]} : vector<1x192xf32> to vector<1x64xf32>
    %501 = arith.addf %499, %500 : vector<1x64xf32>
    %502 = arith.negf %501 : vector<1x64xf32>
    %503 = math.exp %502 : vector<1x64xf32>
    %cst_121 = arith.constant 1.000000e+00 : f32
    %504 = vector.broadcast %cst_121 : f32 to vector<1x64xf32>
    %505 = arith.addf %504, %503 : vector<1x64xf32>
    %506 = arith.divf %504, %505 : vector<1x64xf32>
    %507 = vector.extract_strided_slice %484 {offsets = [0, 128], sizes = [1, 64], strides = [1, 1]} : vector<1x192xf32> to vector<1x64xf32>
    %508 = vector.extract_strided_slice %488 {offsets = [0, 128], sizes = [1, 64], strides = [1, 1]} : vector<1x192xf32> to vector<1x64xf32>
    %509 = arith.mulf %498, %508 : vector<1x64xf32>
    %510 = arith.addf %507, %509 : vector<1x64xf32>
    %511 = math.tanh %510 : vector<1x64xf32>
    %cst_122 = arith.constant 1.000000e+00 : f32
    %512 = vector.broadcast %cst_122 : f32 to vector<1x64xf32>
    %513 = arith.subf %512, %506 : vector<1x64xf32>
    %514 = arith.mulf %513, %511 : vector<1x64xf32>
    %515 = arith.mulf %506, %451 : vector<1x64xf32>
    %516 = arith.addf %514, %515 : vector<1x64xf32>
    %517 = vector.extract_strided_slice %486 {offsets = [0, 0], sizes = [1, 64], strides = [1, 1]} : vector<1x192xf32> to vector<1x64xf32>
    %518 = vector.extract_strided_slice %490 {offsets = [0, 0], sizes = [1, 64], strides = [1, 1]} : vector<1x192xf32> to vector<1x64xf32>
    %519 = arith.addf %517, %518 : vector<1x64xf32>
    %520 = arith.negf %519 : vector<1x64xf32>
    %521 = math.exp %520 : vector<1x64xf32>
    %cst_123 = arith.constant 1.000000e+00 : f32
    %522 = vector.broadcast %cst_123 : f32 to vector<1x64xf32>
    %523 = arith.addf %522, %521 : vector<1x64xf32>
    %524 = arith.divf %522, %523 : vector<1x64xf32>
    %525 = vector.extract_strided_slice %486 {offsets = [0, 64], sizes = [1, 64], strides = [1, 1]} : vector<1x192xf32> to vector<1x64xf32>
    %526 = vector.extract_strided_slice %490 {offsets = [0, 64], sizes = [1, 64], strides = [1, 1]} : vector<1x192xf32> to vector<1x64xf32>
    %527 = arith.addf %525, %526 : vector<1x64xf32>
    %528 = arith.negf %527 : vector<1x64xf32>
    %529 = math.exp %528 : vector<1x64xf32>
    %cst_124 = arith.constant 1.000000e+00 : f32
    %530 = vector.broadcast %cst_124 : f32 to vector<1x64xf32>
    %531 = arith.addf %530, %529 : vector<1x64xf32>
    %532 = arith.divf %530, %531 : vector<1x64xf32>
    %533 = vector.extract_strided_slice %486 {offsets = [0, 128], sizes = [1, 64], strides = [1, 1]} : vector<1x192xf32> to vector<1x64xf32>
    %534 = vector.extract_strided_slice %490 {offsets = [0, 128], sizes = [1, 64], strides = [1, 1]} : vector<1x192xf32> to vector<1x64xf32>
    %535 = arith.mulf %524, %534 : vector<1x64xf32>
    %536 = arith.addf %533, %535 : vector<1x64xf32>
    %537 = math.tanh %536 : vector<1x64xf32>
    %cst_125 = arith.constant 1.000000e+00 : f32
    %538 = vector.broadcast %cst_125 : f32 to vector<1x64xf32>
    %539 = arith.subf %538, %532 : vector<1x64xf32>
    %540 = arith.mulf %539, %537 : vector<1x64xf32>
    %541 = arith.mulf %532, %477 : vector<1x64xf32>
    %542 = arith.addf %540, %541 : vector<1x64xf32>
    %543 = arith.index_cast %c7_i32_114 : i32 to index
    %c0_126 = arith.constant 0 : index
    %544 = vector.load %arg30[%543, %c0_126] : memref<8x128xf32, #tpu.memory_space<vmem>>, vector<1x64xf32>
    tpu.vector_store %arg30[%543, %c0_126], %516 {strides = array<i32>} : memref<8x128xf32, #tpu.memory_space<vmem>>, vector<1x64xf32>,
    %545 = arith.index_cast %482 : i32 to index
    %c64_127 = arith.constant 64 : index
    %546 = vector.load %arg30[%545, %c64_127] : memref<8x128xf32, #tpu.memory_space<vmem>>, vector<1x64xf32>
    tpu.vector_store %arg30[%545, %c64_127], %542 {strides = array<i32>} : memref<8x128xf32, #tpu.memory_space<vmem>>, vector<1x64xf32>,
    %c8_i32 = arith.constant 8 : i32
    %c0_128 = arith.constant 0 : index
    %c0_129 = arith.constant 0 : index
    %547 = vector.load %arg30[%c0_128, %c0_129] : memref<8x128xf32, #tpu.memory_space<vmem>>, vector<8x128xf32>
    %c0_130 = arith.constant 0 : index
    %c0_131 = arith.constant 0 : index
    %548 = vector.load %arg9[%c0_130, %c0_131] : memref<128x192xf32, #tpu.memory_space<vmem>>, vector<128x192xf32>
    %cst_132 = arith.constant dense<0.000000e+00> : vector<8x192xf32>
    %549 = tpu.matmul %547, %548, %cst_132 {dimension_numbers = #tpu.dot_dimension_numbers<[1], [0], [0], [1], [0, 0, 1, 1], [], []>} : vector<8x128xf32>, vector<128x192xf32>, vector<8x192xf32> -> vector<8x192xf32>
    %c0_133 = arith.constant 0 : index
    %c0_134 = arith.constant 0 : index
    %550 = vector.load %arg11[%c0_133, %c0_134] : memref<1x192xf32, #tpu.memory_space<vmem>>, vector<1x192xf32>
    %551 = vector.broadcast %550 : vector<1x192xf32> to vector<8x192xf32>
    %552 = arith.addf %549, %551 : vector<8x192xf32>
    %c0_135 = arith.constant 0 : index
    %c0_136 = arith.constant 0 : index
    %553 = vector.load %arg28[%c0_135, %c0_136] : memref<8x192xf32, #tpu.memory_space<vmem>>, vector<8x192xf32>
    tpu.vector_store %arg28[%c0_135, %c0_136], %552 {strides = array<i32>} : memref<8x192xf32, #tpu.memory_space<vmem>>, vector<8x192xf32>,
    %c0_137 = arith.constant 0 : index
    %c0_138 = arith.constant 0 : index
    %554 = vector.load %arg13[%c0_137, %c0_138] : memref<128x192xf32, #tpu.memory_space<vmem>>, vector<128x192xf32>
    %cst_139 = arith.constant dense<0.000000e+00> : vector<8x192xf32>
    %555 = tpu.matmul %547, %554, %cst_139 {dimension_numbers = #tpu.dot_dimension_numbers<[1], [0], [0], [1], [0, 0, 1, 1], [], []>} : vector<8x128xf32>, vector<128x192xf32>, vector<8x192xf32> -> vector<8x192xf32>
    %c0_140 = arith.constant 0 : index
    %c0_141 = arith.constant 0 : index
    %556 = vector.load %arg15[%c0_140, %c0_141] : memref<1x192xf32, #tpu.memory_space<vmem>>, vector<1x192xf32>
    %557 = vector.broadcast %556 : vector<1x192xf32> to vector<8x192xf32>
    %558 = arith.addf %555, %557 : vector<8x192xf32>
    %c0_142 = arith.constant 0 : index
    %c0_143 = arith.constant 0 : index
    %559 = vector.load %arg29[%c0_142, %c0_143] : memref<8x192xf32, #tpu.memory_space<vmem>>, vector<8x192xf32>
    tpu.vector_store %arg29[%c0_142, %c0_143], %558 {strides = array<i32>} : memref<8x192xf32, #tpu.memory_space<vmem>>, vector<8x192xf32>,
    %c0_144 = arith.constant 0 : index
    %c0_145 = arith.constant 0 : index
    %560 = vector.load %arg10[%c0_144, %c0_145] : memref<64x192xf32, #tpu.memory_space<vmem>>, vector<64x192xf32>
    %c0_146 = arith.constant 0 : index
    %c0_147 = arith.constant 0 : index
    %561 = vector.load %arg14[%c0_146, %c0_147] : memref<64x192xf32, #tpu.memory_space<vmem>>, vector<64x192xf32>
    %c0_148 = arith.constant 0 : index
    %c0_149 = arith.constant 0 : index
    %562 = vector.load %arg12[%c0_148, %c0_149] : memref<1x192xf32, #tpu.memory_space<vmem>>, vector<1x192xf32>
    %c0_150 = arith.constant 0 : index
    %c0_151 = arith.constant 0 : index
    %563 = vector.load %arg16[%c0_150, %c0_151] : memref<1x192xf32, #tpu.memory_space<vmem>>, vector<1x192xf32>
    %cst_152 = arith.constant 0.000000e+00 : f32
    %564 = vector.broadcast %cst_152 : f32 to vector<1x64xf32>
    %c0_i32_153 = arith.constant 0 : i32
    %c7_i32_154 = arith.constant 7 : i32
    %565 = arith.subi %c7_i32_154, %c0_i32_153 : i32
    %566 = arith.index_cast %c0_i32_153 : i32 to index
    %c0_155 = arith.constant 0 : index
    %567 = vector.load %arg28[%566, %c0_155] : memref<8x192xf32, #tpu.memory_space<vmem>>, vector<1x192xf32>
    %568 = arith.index_cast %565 : i32 to index
    %c0_156 = arith.constant 0 : index
    %569 = vector.load %arg29[%568, %c0_156] : memref<8x192xf32, #tpu.memory_space<vmem>>, vector<1x192xf32>
    %cst_157 = arith.constant dense<0.000000e+00> : vector<1x192xf32>
    %570 = tpu.matmul %564, %560, %cst_157 {dimension_numbers = #tpu.dot_dimension_numbers<[1], [0], [0], [1], [0, 0, 1, 1], [], []>} : vector<1x64xf32>, vector<64x192xf32>, vector<1x192xf32> -> vector<1x192xf32>
    %571 = arith.addf %570, %562 : vector<1x192xf32>
    %cst_158 = arith.constant dense<0.000000e+00> : vector<1x192xf32>
    %572 = tpu.matmul %564, %561, %cst_158 {dimension_numbers = #tpu.dot_dimension_numbers<[1], [0], [0], [1], [0, 0, 1, 1], [], []>} : vector<1x64xf32>, vector<64x192xf32>, vector<1x192xf32> -> vector<1x192xf32>
    %573 = arith.addf %572, %563 : vector<1x192xf32>
    %574 = vector.extract_strided_slice %567 {offsets = [0, 0], sizes = [1, 64], strides = [1, 1]} : vector<1x192xf32> to vector<1x64xf32>
    %575 = vector.extract_strided_slice %571 {offsets = [0, 0], sizes = [1, 64], strides = [1, 1]} : vector<1x192xf32> to vector<1x64xf32>
    %576 = arith.addf %574, %575 : vector<1x64xf32>
    %577 = arith.negf %576 : vector<1x64xf32>
    %578 = math.exp %577 : vector<1x64xf32>
    %cst_159 = arith.constant 1.000000e+00 : f32
    %579 = vector.broadcast %cst_159 : f32 to vector<1x64xf32>
    %580 = arith.addf %579, %578 : vector<1x64xf32>
    %581 = arith.divf %579, %580 : vector<1x64xf32>
    %582 = vector.extract_strided_slice %567 {offsets = [0, 64], sizes = [1, 64], strides = [1, 1]} : vector<1x192xf32> to vector<1x64xf32>
    %583 = vector.extract_strided_slice %571 {offsets = [0, 64], sizes = [1, 64], strides = [1, 1]} : vector<1x192xf32> to vector<1x64xf32>
    %584 = arith.addf %582, %583 : vector<1x64xf32>
    %585 = arith.negf %584 : vector<1x64xf32>
    %586 = math.exp %585 : vector<1x64xf32>
    %cst_160 = arith.constant 1.000000e+00 : f32
    %587 = vector.broadcast %cst_160 : f32 to vector<1x64xf32>
    %588 = arith.addf %587, %586 : vector<1x64xf32>
    %589 = arith.divf %587, %588 : vector<1x64xf32>
    %590 = vector.extract_strided_slice %567 {offsets = [0, 128], sizes = [1, 64], strides = [1, 1]} : vector<1x192xf32> to vector<1x64xf32>
    %591 = vector.extract_strided_slice %571 {offsets = [0, 128], sizes = [1, 64], strides = [1, 1]} : vector<1x192xf32> to vector<1x64xf32>
    %592 = arith.mulf %581, %591 : vector<1x64xf32>
    %593 = arith.addf %590, %592 : vector<1x64xf32>
    %594 = math.tanh %593 : vector<1x64xf32>
    %cst_161 = arith.constant 1.000000e+00 : f32
    %595 = vector.broadcast %cst_161 : f32 to vector<1x64xf32>
    %596 = arith.subf %595, %589 : vector<1x64xf32>
    %597 = arith.mulf %596, %594 : vector<1x64xf32>
    %598 = arith.mulf %589, %564 : vector<1x64xf32>
    %599 = arith.addf %597, %598 : vector<1x64xf32>
    %600 = vector.extract_strided_slice %569 {offsets = [0, 0], sizes = [1, 64], strides = [1, 1]} : vector<1x192xf32> to vector<1x64xf32>
    %601 = vector.extract_strided_slice %573 {offsets = [0, 0], sizes = [1, 64], strides = [1, 1]} : vector<1x192xf32> to vector<1x64xf32>
    %602 = arith.addf %600, %601 : vector<1x64xf32>
    %603 = arith.negf %602 : vector<1x64xf32>
    %604 = math.exp %603 : vector<1x64xf32>
    %cst_162 = arith.constant 1.000000e+00 : f32
    %605 = vector.broadcast %cst_162 : f32 to vector<1x64xf32>
    %606 = arith.addf %605, %604 : vector<1x64xf32>
    %607 = arith.divf %605, %606 : vector<1x64xf32>
    %608 = vector.extract_strided_slice %569 {offsets = [0, 64], sizes = [1, 64], strides = [1, 1]} : vector<1x192xf32> to vector<1x64xf32>
    %609 = vector.extract_strided_slice %573 {offsets = [0, 64], sizes = [1, 64], strides = [1, 1]} : vector<1x192xf32> to vector<1x64xf32>
    %610 = arith.addf %608, %609 : vector<1x64xf32>
    %611 = arith.negf %610 : vector<1x64xf32>
    %612 = math.exp %611 : vector<1x64xf32>
    %cst_163 = arith.constant 1.000000e+00 : f32
    %613 = vector.broadcast %cst_163 : f32 to vector<1x64xf32>
    %614 = arith.addf %613, %612 : vector<1x64xf32>
    %615 = arith.divf %613, %614 : vector<1x64xf32>
    %616 = vector.extract_strided_slice %569 {offsets = [0, 128], sizes = [1, 64], strides = [1, 1]} : vector<1x192xf32> to vector<1x64xf32>
    %617 = vector.extract_strided_slice %573 {offsets = [0, 128], sizes = [1, 64], strides = [1, 1]} : vector<1x192xf32> to vector<1x64xf32>
    %618 = arith.mulf %607, %617 : vector<1x64xf32>
    %619 = arith.addf %616, %618 : vector<1x64xf32>
    %620 = math.tanh %619 : vector<1x64xf32>
    %cst_164 = arith.constant 1.000000e+00 : f32
    %621 = vector.broadcast %cst_164 : f32 to vector<1x64xf32>
    %622 = arith.subf %621, %615 : vector<1x64xf32>
    %623 = arith.mulf %622, %620 : vector<1x64xf32>
    %624 = arith.mulf %615, %564 : vector<1x64xf32>
    %625 = arith.addf %623, %624 : vector<1x64xf32>
    %626 = arith.index_cast %c0_i32_153 : i32 to index
    %c0_165 = arith.constant 0 : index
    %627 = vector.load %arg30[%626, %c0_165] : memref<8x128xf32, #tpu.memory_space<vmem>>, vector<1x64xf32>
    tpu.vector_store %arg30[%626, %c0_165], %599 {strides = array<i32>} : memref<8x128xf32, #tpu.memory_space<vmem>>, vector<1x64xf32>,
    %628 = arith.index_cast %565 : i32 to index
    %c64_166 = arith.constant 64 : index
    %629 = vector.load %arg30[%628, %c64_166] : memref<8x128xf32, #tpu.memory_space<vmem>>, vector<1x64xf32>
    tpu.vector_store %arg30[%628, %c64_166], %625 {strides = array<i32>} : memref<8x128xf32, #tpu.memory_space<vmem>>, vector<1x64xf32>,
    %c1_i32_167 = arith.constant 1 : i32
    %c7_i32_168 = arith.constant 7 : i32
    %630 = arith.subi %c7_i32_168, %c1_i32_167 : i32
    %631 = arith.index_cast %c1_i32_167 : i32 to index
    %c0_169 = arith.constant 0 : index
    %632 = vector.load %arg28[%631, %c0_169] : memref<8x192xf32, #tpu.memory_space<vmem>>, vector<1x192xf32>
    %633 = arith.index_cast %630 : i32 to index
    %c0_170 = arith.constant 0 : index
    %634 = vector.load %arg29[%633, %c0_170] : memref<8x192xf32, #tpu.memory_space<vmem>>, vector<1x192xf32>
    %cst_171 = arith.constant dense<0.000000e+00> : vector<1x192xf32>
    %635 = tpu.matmul %599, %560, %cst_171 {dimension_numbers = #tpu.dot_dimension_numbers<[1], [0], [0], [1], [0, 0, 1, 1], [], []>} : vector<1x64xf32>, vector<64x192xf32>, vector<1x192xf32> -> vector<1x192xf32>
    %636 = arith.addf %635, %562 : vector<1x192xf32>
    %cst_172 = arith.constant dense<0.000000e+00> : vector<1x192xf32>
    %637 = tpu.matmul %625, %561, %cst_172 {dimension_numbers = #tpu.dot_dimension_numbers<[1], [0], [0], [1], [0, 0, 1, 1], [], []>} : vector<1x64xf32>, vector<64x192xf32>, vector<1x192xf32> -> vector<1x192xf32>
    %638 = arith.addf %637, %563 : vector<1x192xf32>
    %639 = vector.extract_strided_slice %632 {offsets = [0, 0], sizes = [1, 64], strides = [1, 1]} : vector<1x192xf32> to vector<1x64xf32>
    %640 = vector.extract_strided_slice %636 {offsets = [0, 0], sizes = [1, 64], strides = [1, 1]} : vector<1x192xf32> to vector<1x64xf32>
    %641 = arith.addf %639, %640 : vector<1x64xf32>
    %642 = arith.negf %641 : vector<1x64xf32>
    %643 = math.exp %642 : vector<1x64xf32>
    %cst_173 = arith.constant 1.000000e+00 : f32
    %644 = vector.broadcast %cst_173 : f32 to vector<1x64xf32>
    %645 = arith.addf %644, %643 : vector<1x64xf32>
    %646 = arith.divf %644, %645 : vector<1x64xf32>
    %647 = vector.extract_strided_slice %632 {offsets = [0, 64], sizes = [1, 64], strides = [1, 1]} : vector<1x192xf32> to vector<1x64xf32>
    %648 = vector.extract_strided_slice %636 {offsets = [0, 64], sizes = [1, 64], strides = [1, 1]} : vector<1x192xf32> to vector<1x64xf32>
    %649 = arith.addf %647, %648 : vector<1x64xf32>
    %650 = arith.negf %649 : vector<1x64xf32>
    %651 = math.exp %650 : vector<1x64xf32>
    %cst_174 = arith.constant 1.000000e+00 : f32
    %652 = vector.broadcast %cst_174 : f32 to vector<1x64xf32>
    %653 = arith.addf %652, %651 : vector<1x64xf32>
    %654 = arith.divf %652, %653 : vector<1x64xf32>
    %655 = vector.extract_strided_slice %632 {offsets = [0, 128], sizes = [1, 64], strides = [1, 1]} : vector<1x192xf32> to vector<1x64xf32>
    %656 = vector.extract_strided_slice %636 {offsets = [0, 128], sizes = [1, 64], strides = [1, 1]} : vector<1x192xf32> to vector<1x64xf32>
    %657 = arith.mulf %646, %656 : vector<1x64xf32>
    %658 = arith.addf %655, %657 : vector<1x64xf32>
    %659 = math.tanh %658 : vector<1x64xf32>
    %cst_175 = arith.constant 1.000000e+00 : f32
    %660 = vector.broadcast %cst_175 : f32 to vector<1x64xf32>
    %661 = arith.subf %660, %654 : vector<1x64xf32>
    %662 = arith.mulf %661, %659 : vector<1x64xf32>
    %663 = arith.mulf %654, %599 : vector<1x64xf32>
    %664 = arith.addf %662, %663 : vector<1x64xf32>
    %665 = vector.extract_strided_slice %634 {offsets = [0, 0], sizes = [1, 64], strides = [1, 1]} : vector<1x192xf32> to vector<1x64xf32>
    %666 = vector.extract_strided_slice %638 {offsets = [0, 0], sizes = [1, 64], strides = [1, 1]} : vector<1x192xf32> to vector<1x64xf32>
    %667 = arith.addf %665, %666 : vector<1x64xf32>
    %668 = arith.negf %667 : vector<1x64xf32>
    %669 = math.exp %668 : vector<1x64xf32>
    %cst_176 = arith.constant 1.000000e+00 : f32
    %670 = vector.broadcast %cst_176 : f32 to vector<1x64xf32>
    %671 = arith.addf %670, %669 : vector<1x64xf32>
    %672 = arith.divf %670, %671 : vector<1x64xf32>
    %673 = vector.extract_strided_slice %634 {offsets = [0, 64], sizes = [1, 64], strides = [1, 1]} : vector<1x192xf32> to vector<1x64xf32>
    %674 = vector.extract_strided_slice %638 {offsets = [0, 64], sizes = [1, 64], strides = [1, 1]} : vector<1x192xf32> to vector<1x64xf32>
    %675 = arith.addf %673, %674 : vector<1x64xf32>
    %676 = arith.negf %675 : vector<1x64xf32>
    %677 = math.exp %676 : vector<1x64xf32>
    %cst_177 = arith.constant 1.000000e+00 : f32
    %678 = vector.broadcast %cst_177 : f32 to vector<1x64xf32>
    %679 = arith.addf %678, %677 : vector<1x64xf32>
    %680 = arith.divf %678, %679 : vector<1x64xf32>
    %681 = vector.extract_strided_slice %634 {offsets = [0, 128], sizes = [1, 64], strides = [1, 1]} : vector<1x192xf32> to vector<1x64xf32>
    %682 = vector.extract_strided_slice %638 {offsets = [0, 128], sizes = [1, 64], strides = [1, 1]} : vector<1x192xf32> to vector<1x64xf32>
    %683 = arith.mulf %672, %682 : vector<1x64xf32>
    %684 = arith.addf %681, %683 : vector<1x64xf32>
    %685 = math.tanh %684 : vector<1x64xf32>
    %cst_178 = arith.constant 1.000000e+00 : f32
    %686 = vector.broadcast %cst_178 : f32 to vector<1x64xf32>
    %687 = arith.subf %686, %680 : vector<1x64xf32>
    %688 = arith.mulf %687, %685 : vector<1x64xf32>
    %689 = arith.mulf %680, %625 : vector<1x64xf32>
    %690 = arith.addf %688, %689 : vector<1x64xf32>
    %691 = arith.index_cast %c1_i32_167 : i32 to index
    %c0_179 = arith.constant 0 : index
    %692 = vector.load %arg30[%691, %c0_179] : memref<8x128xf32, #tpu.memory_space<vmem>>, vector<1x64xf32>
    tpu.vector_store %arg30[%691, %c0_179], %664 {strides = array<i32>} : memref<8x128xf32, #tpu.memory_space<vmem>>, vector<1x64xf32>,
    %693 = arith.index_cast %630 : i32 to index
    %c64_180 = arith.constant 64 : index
    %694 = vector.load %arg30[%693, %c64_180] : memref<8x128xf32, #tpu.memory_space<vmem>>, vector<1x64xf32>
    tpu.vector_store %arg30[%693, %c64_180], %690 {strides = array<i32>} : memref<8x128xf32, #tpu.memory_space<vmem>>, vector<1x64xf32>,
    %c2_i32_181 = arith.constant 2 : i32
    %c7_i32_182 = arith.constant 7 : i32
    %695 = arith.subi %c7_i32_182, %c2_i32_181 : i32
    %696 = arith.index_cast %c2_i32_181 : i32 to index
    %c0_183 = arith.constant 0 : index
    %697 = vector.load %arg28[%696, %c0_183] : memref<8x192xf32, #tpu.memory_space<vmem>>, vector<1x192xf32>
    %698 = arith.index_cast %695 : i32 to index
    %c0_184 = arith.constant 0 : index
    %699 = vector.load %arg29[%698, %c0_184] : memref<8x192xf32, #tpu.memory_space<vmem>>, vector<1x192xf32>
    %cst_185 = arith.constant dense<0.000000e+00> : vector<1x192xf32>
    %700 = tpu.matmul %664, %560, %cst_185 {dimension_numbers = #tpu.dot_dimension_numbers<[1], [0], [0], [1], [0, 0, 1, 1], [], []>} : vector<1x64xf32>, vector<64x192xf32>, vector<1x192xf32> -> vector<1x192xf32>
    %701 = arith.addf %700, %562 : vector<1x192xf32>
    %cst_186 = arith.constant dense<0.000000e+00> : vector<1x192xf32>
    %702 = tpu.matmul %690, %561, %cst_186 {dimension_numbers = #tpu.dot_dimension_numbers<[1], [0], [0], [1], [0, 0, 1, 1], [], []>} : vector<1x64xf32>, vector<64x192xf32>, vector<1x192xf32> -> vector<1x192xf32>
    %703 = arith.addf %702, %563 : vector<1x192xf32>
    %704 = vector.extract_strided_slice %697 {offsets = [0, 0], sizes = [1, 64], strides = [1, 1]} : vector<1x192xf32> to vector<1x64xf32>
    %705 = vector.extract_strided_slice %701 {offsets = [0, 0], sizes = [1, 64], strides = [1, 1]} : vector<1x192xf32> to vector<1x64xf32>
    %706 = arith.addf %704, %705 : vector<1x64xf32>
    %707 = arith.negf %706 : vector<1x64xf32>
    %708 = math.exp %707 : vector<1x64xf32>
    %cst_187 = arith.constant 1.000000e+00 : f32
    %709 = vector.broadcast %cst_187 : f32 to vector<1x64xf32>
    %710 = arith.addf %709, %708 : vector<1x64xf32>
    %711 = arith.divf %709, %710 : vector<1x64xf32>
    %712 = vector.extract_strided_slice %697 {offsets = [0, 64], sizes = [1, 64], strides = [1, 1]} : vector<1x192xf32> to vector<1x64xf32>
    %713 = vector.extract_strided_slice %701 {offsets = [0, 64], sizes = [1, 64], strides = [1, 1]} : vector<1x192xf32> to vector<1x64xf32>
    %714 = arith.addf %712, %713 : vector<1x64xf32>
    %715 = arith.negf %714 : vector<1x64xf32>
    %716 = math.exp %715 : vector<1x64xf32>
    %cst_188 = arith.constant 1.000000e+00 : f32
    %717 = vector.broadcast %cst_188 : f32 to vector<1x64xf32>
    %718 = arith.addf %717, %716 : vector<1x64xf32>
    %719 = arith.divf %717, %718 : vector<1x64xf32>
    %720 = vector.extract_strided_slice %697 {offsets = [0, 128], sizes = [1, 64], strides = [1, 1]} : vector<1x192xf32> to vector<1x64xf32>
    %721 = vector.extract_strided_slice %701 {offsets = [0, 128], sizes = [1, 64], strides = [1, 1]} : vector<1x192xf32> to vector<1x64xf32>
    %722 = arith.mulf %711, %721 : vector<1x64xf32>
    %723 = arith.addf %720, %722 : vector<1x64xf32>
    %724 = math.tanh %723 : vector<1x64xf32>
    %cst_189 = arith.constant 1.000000e+00 : f32
    %725 = vector.broadcast %cst_189 : f32 to vector<1x64xf32>
    %726 = arith.subf %725, %719 : vector<1x64xf32>
    %727 = arith.mulf %726, %724 : vector<1x64xf32>
    %728 = arith.mulf %719, %664 : vector<1x64xf32>
    %729 = arith.addf %727, %728 : vector<1x64xf32>
    %730 = vector.extract_strided_slice %699 {offsets = [0, 0], sizes = [1, 64], strides = [1, 1]} : vector<1x192xf32> to vector<1x64xf32>
    %731 = vector.extract_strided_slice %703 {offsets = [0, 0], sizes = [1, 64], strides = [1, 1]} : vector<1x192xf32> to vector<1x64xf32>
    %732 = arith.addf %730, %731 : vector<1x64xf32>
    %733 = arith.negf %732 : vector<1x64xf32>
    %734 = math.exp %733 : vector<1x64xf32>
    %cst_190 = arith.constant 1.000000e+00 : f32
    %735 = vector.broadcast %cst_190 : f32 to vector<1x64xf32>
    %736 = arith.addf %735, %734 : vector<1x64xf32>
    %737 = arith.divf %735, %736 : vector<1x64xf32>
    %738 = vector.extract_strided_slice %699 {offsets = [0, 64], sizes = [1, 64], strides = [1, 1]} : vector<1x192xf32> to vector<1x64xf32>
    %739 = vector.extract_strided_slice %703 {offsets = [0, 64], sizes = [1, 64], strides = [1, 1]} : vector<1x192xf32> to vector<1x64xf32>
    %740 = arith.addf %738, %739 : vector<1x64xf32>
    %741 = arith.negf %740 : vector<1x64xf32>
    %742 = math.exp %741 : vector<1x64xf32>
    %cst_191 = arith.constant 1.000000e+00 : f32
    %743 = vector.broadcast %cst_191 : f32 to vector<1x64xf32>
    %744 = arith.addf %743, %742 : vector<1x64xf32>
    %745 = arith.divf %743, %744 : vector<1x64xf32>
    %746 = vector.extract_strided_slice %699 {offsets = [0, 128], sizes = [1, 64], strides = [1, 1]} : vector<1x192xf32> to vector<1x64xf32>
    %747 = vector.extract_strided_slice %703 {offsets = [0, 128], sizes = [1, 64], strides = [1, 1]} : vector<1x192xf32> to vector<1x64xf32>
    %748 = arith.mulf %737, %747 : vector<1x64xf32>
    %749 = arith.addf %746, %748 : vector<1x64xf32>
    %750 = math.tanh %749 : vector<1x64xf32>
    %cst_192 = arith.constant 1.000000e+00 : f32
    %751 = vector.broadcast %cst_192 : f32 to vector<1x64xf32>
    %752 = arith.subf %751, %745 : vector<1x64xf32>
    %753 = arith.mulf %752, %750 : vector<1x64xf32>
    %754 = arith.mulf %745, %690 : vector<1x64xf32>
    %755 = arith.addf %753, %754 : vector<1x64xf32>
    %756 = arith.index_cast %c2_i32_181 : i32 to index
    %c0_193 = arith.constant 0 : index
    %757 = vector.load %arg30[%756, %c0_193] : memref<8x128xf32, #tpu.memory_space<vmem>>, vector<1x64xf32>
    tpu.vector_store %arg30[%756, %c0_193], %729 {strides = array<i32>} : memref<8x128xf32, #tpu.memory_space<vmem>>, vector<1x64xf32>,
    %758 = arith.index_cast %695 : i32 to index
    %c64_194 = arith.constant 64 : index
    %759 = vector.load %arg30[%758, %c64_194] : memref<8x128xf32, #tpu.memory_space<vmem>>, vector<1x64xf32>
    tpu.vector_store %arg30[%758, %c64_194], %755 {strides = array<i32>} : memref<8x128xf32, #tpu.memory_space<vmem>>, vector<1x64xf32>,
    %c3_i32_195 = arith.constant 3 : i32
    %c7_i32_196 = arith.constant 7 : i32
    %760 = arith.subi %c7_i32_196, %c3_i32_195 : i32
    %761 = arith.index_cast %c3_i32_195 : i32 to index
    %c0_197 = arith.constant 0 : index
    %762 = vector.load %arg28[%761, %c0_197] : memref<8x192xf32, #tpu.memory_space<vmem>>, vector<1x192xf32>
    %763 = arith.index_cast %760 : i32 to index
    %c0_198 = arith.constant 0 : index
    %764 = vector.load %arg29[%763, %c0_198] : memref<8x192xf32, #tpu.memory_space<vmem>>, vector<1x192xf32>
    %cst_199 = arith.constant dense<0.000000e+00> : vector<1x192xf32>
    %765 = tpu.matmul %729, %560, %cst_199 {dimension_numbers = #tpu.dot_dimension_numbers<[1], [0], [0], [1], [0, 0, 1, 1], [], []>} : vector<1x64xf32>, vector<64x192xf32>, vector<1x192xf32> -> vector<1x192xf32>
    %766 = arith.addf %765, %562 : vector<1x192xf32>
    %cst_200 = arith.constant dense<0.000000e+00> : vector<1x192xf32>
    %767 = tpu.matmul %755, %561, %cst_200 {dimension_numbers = #tpu.dot_dimension_numbers<[1], [0], [0], [1], [0, 0, 1, 1], [], []>} : vector<1x64xf32>, vector<64x192xf32>, vector<1x192xf32> -> vector<1x192xf32>
    %768 = arith.addf %767, %563 : vector<1x192xf32>
    %769 = vector.extract_strided_slice %762 {offsets = [0, 0], sizes = [1, 64], strides = [1, 1]} : vector<1x192xf32> to vector<1x64xf32>
    %770 = vector.extract_strided_slice %766 {offsets = [0, 0], sizes = [1, 64], strides = [1, 1]} : vector<1x192xf32> to vector<1x64xf32>
    %771 = arith.addf %769, %770 : vector<1x64xf32>
    %772 = arith.negf %771 : vector<1x64xf32>
    %773 = math.exp %772 : vector<1x64xf32>
    %cst_201 = arith.constant 1.000000e+00 : f32
    %774 = vector.broadcast %cst_201 : f32 to vector<1x64xf32>
    %775 = arith.addf %774, %773 : vector<1x64xf32>
    %776 = arith.divf %774, %775 : vector<1x64xf32>
    %777 = vector.extract_strided_slice %762 {offsets = [0, 64], sizes = [1, 64], strides = [1, 1]} : vector<1x192xf32> to vector<1x64xf32>
    %778 = vector.extract_strided_slice %766 {offsets = [0, 64], sizes = [1, 64], strides = [1, 1]} : vector<1x192xf32> to vector<1x64xf32>
    %779 = arith.addf %777, %778 : vector<1x64xf32>
    %780 = arith.negf %779 : vector<1x64xf32>
    %781 = math.exp %780 : vector<1x64xf32>
    %cst_202 = arith.constant 1.000000e+00 : f32
    %782 = vector.broadcast %cst_202 : f32 to vector<1x64xf32>
    %783 = arith.addf %782, %781 : vector<1x64xf32>
    %784 = arith.divf %782, %783 : vector<1x64xf32>
    %785 = vector.extract_strided_slice %762 {offsets = [0, 128], sizes = [1, 64], strides = [1, 1]} : vector<1x192xf32> to vector<1x64xf32>
    %786 = vector.extract_strided_slice %766 {offsets = [0, 128], sizes = [1, 64], strides = [1, 1]} : vector<1x192xf32> to vector<1x64xf32>
    %787 = arith.mulf %776, %786 : vector<1x64xf32>
    %788 = arith.addf %785, %787 : vector<1x64xf32>
    %789 = math.tanh %788 : vector<1x64xf32>
    %cst_203 = arith.constant 1.000000e+00 : f32
    %790 = vector.broadcast %cst_203 : f32 to vector<1x64xf32>
    %791 = arith.subf %790, %784 : vector<1x64xf32>
    %792 = arith.mulf %791, %789 : vector<1x64xf32>
    %793 = arith.mulf %784, %729 : vector<1x64xf32>
    %794 = arith.addf %792, %793 : vector<1x64xf32>
    %795 = vector.extract_strided_slice %764 {offsets = [0, 0], sizes = [1, 64], strides = [1, 1]} : vector<1x192xf32> to vector<1x64xf32>
    %796 = vector.extract_strided_slice %768 {offsets = [0, 0], sizes = [1, 64], strides = [1, 1]} : vector<1x192xf32> to vector<1x64xf32>
    %797 = arith.addf %795, %796 : vector<1x64xf32>
    %798 = arith.negf %797 : vector<1x64xf32>
    %799 = math.exp %798 : vector<1x64xf32>
    %cst_204 = arith.constant 1.000000e+00 : f32
    %800 = vector.broadcast %cst_204 : f32 to vector<1x64xf32>
    %801 = arith.addf %800, %799 : vector<1x64xf32>
    %802 = arith.divf %800, %801 : vector<1x64xf32>
    %803 = vector.extract_strided_slice %764 {offsets = [0, 64], sizes = [1, 64], strides = [1, 1]} : vector<1x192xf32> to vector<1x64xf32>
    %804 = vector.extract_strided_slice %768 {offsets = [0, 64], sizes = [1, 64], strides = [1, 1]} : vector<1x192xf32> to vector<1x64xf32>
    %805 = arith.addf %803, %804 : vector<1x64xf32>
    %806 = arith.negf %805 : vector<1x64xf32>
    %807 = math.exp %806 : vector<1x64xf32>
    %cst_205 = arith.constant 1.000000e+00 : f32
    %808 = vector.broadcast %cst_205 : f32 to vector<1x64xf32>
    %809 = arith.addf %808, %807 : vector<1x64xf32>
    %810 = arith.divf %808, %809 : vector<1x64xf32>
    %811 = vector.extract_strided_slice %764 {offsets = [0, 128], sizes = [1, 64], strides = [1, 1]} : vector<1x192xf32> to vector<1x64xf32>
    %812 = vector.extract_strided_slice %768 {offsets = [0, 128], sizes = [1, 64], strides = [1, 1]} : vector<1x192xf32> to vector<1x64xf32>
    %813 = arith.mulf %802, %812 : vector<1x64xf32>
    %814 = arith.addf %811, %813 : vector<1x64xf32>
    %815 = math.tanh %814 : vector<1x64xf32>
    %cst_206 = arith.constant 1.000000e+00 : f32
    %816 = vector.broadcast %cst_206 : f32 to vector<1x64xf32>
    %817 = arith.subf %816, %810 : vector<1x64xf32>
    %818 = arith.mulf %817, %815 : vector<1x64xf32>
    %819 = arith.mulf %810, %755 : vector<1x64xf32>
    %820 = arith.addf %818, %819 : vector<1x64xf32>
    %821 = arith.index_cast %c3_i32_195 : i32 to index
    %c0_207 = arith.constant 0 : index
    %822 = vector.load %arg30[%821, %c0_207] : memref<8x128xf32, #tpu.memory_space<vmem>>, vector<1x64xf32>
    tpu.vector_store %arg30[%821, %c0_207], %794 {strides = array<i32>} : memref<8x128xf32, #tpu.memory_space<vmem>>, vector<1x64xf32>,
    %823 = arith.index_cast %760 : i32 to index
    %c64_208 = arith.constant 64 : index
    %824 = vector.load %arg30[%823, %c64_208] : memref<8x128xf32, #tpu.memory_space<vmem>>, vector<1x64xf32>
    tpu.vector_store %arg30[%823, %c64_208], %820 {strides = array<i32>} : memref<8x128xf32, #tpu.memory_space<vmem>>, vector<1x64xf32>,
    %c4_i32_209 = arith.constant 4 : i32
    %c7_i32_210 = arith.constant 7 : i32
    %825 = arith.subi %c7_i32_210, %c4_i32_209 : i32
    %826 = arith.index_cast %c4_i32_209 : i32 to index
    %c0_211 = arith.constant 0 : index
    %827 = vector.load %arg28[%826, %c0_211] : memref<8x192xf32, #tpu.memory_space<vmem>>, vector<1x192xf32>
    %828 = arith.index_cast %825 : i32 to index
    %c0_212 = arith.constant 0 : index
    %829 = vector.load %arg29[%828, %c0_212] : memref<8x192xf32, #tpu.memory_space<vmem>>, vector<1x192xf32>
    %cst_213 = arith.constant dense<0.000000e+00> : vector<1x192xf32>
    %830 = tpu.matmul %794, %560, %cst_213 {dimension_numbers = #tpu.dot_dimension_numbers<[1], [0], [0], [1], [0, 0, 1, 1], [], []>} : vector<1x64xf32>, vector<64x192xf32>, vector<1x192xf32> -> vector<1x192xf32>
    %831 = arith.addf %830, %562 : vector<1x192xf32>
    %cst_214 = arith.constant dense<0.000000e+00> : vector<1x192xf32>
    %832 = tpu.matmul %820, %561, %cst_214 {dimension_numbers = #tpu.dot_dimension_numbers<[1], [0], [0], [1], [0, 0, 1, 1], [], []>} : vector<1x64xf32>, vector<64x192xf32>, vector<1x192xf32> -> vector<1x192xf32>
    %833 = arith.addf %832, %563 : vector<1x192xf32>
    %834 = vector.extract_strided_slice %827 {offsets = [0, 0], sizes = [1, 64], strides = [1, 1]} : vector<1x192xf32> to vector<1x64xf32>
    %835 = vector.extract_strided_slice %831 {offsets = [0, 0], sizes = [1, 64], strides = [1, 1]} : vector<1x192xf32> to vector<1x64xf32>
    %836 = arith.addf %834, %835 : vector<1x64xf32>
    %837 = arith.negf %836 : vector<1x64xf32>
    %838 = math.exp %837 : vector<1x64xf32>
    %cst_215 = arith.constant 1.000000e+00 : f32
    %839 = vector.broadcast %cst_215 : f32 to vector<1x64xf32>
    %840 = arith.addf %839, %838 : vector<1x64xf32>
    %841 = arith.divf %839, %840 : vector<1x64xf32>
    %842 = vector.extract_strided_slice %827 {offsets = [0, 64], sizes = [1, 64], strides = [1, 1]} : vector<1x192xf32> to vector<1x64xf32>
    %843 = vector.extract_strided_slice %831 {offsets = [0, 64], sizes = [1, 64], strides = [1, 1]} : vector<1x192xf32> to vector<1x64xf32>
    %844 = arith.addf %842, %843 : vector<1x64xf32>
    %845 = arith.negf %844 : vector<1x64xf32>
    %846 = math.exp %845 : vector<1x64xf32>
    %cst_216 = arith.constant 1.000000e+00 : f32
    %847 = vector.broadcast %cst_216 : f32 to vector<1x64xf32>
    %848 = arith.addf %847, %846 : vector<1x64xf32>
    %849 = arith.divf %847, %848 : vector<1x64xf32>
    %850 = vector.extract_strided_slice %827 {offsets = [0, 128], sizes = [1, 64], strides = [1, 1]} : vector<1x192xf32> to vector<1x64xf32>
    %851 = vector.extract_strided_slice %831 {offsets = [0, 128], sizes = [1, 64], strides = [1, 1]} : vector<1x192xf32> to vector<1x64xf32>
    %852 = arith.mulf %841, %851 : vector<1x64xf32>
    %853 = arith.addf %850, %852 : vector<1x64xf32>
    %854 = math.tanh %853 : vector<1x64xf32>
    %cst_217 = arith.constant 1.000000e+00 : f32
    %855 = vector.broadcast %cst_217 : f32 to vector<1x64xf32>
    %856 = arith.subf %855, %849 : vector<1x64xf32>
    %857 = arith.mulf %856, %854 : vector<1x64xf32>
    %858 = arith.mulf %849, %794 : vector<1x64xf32>
    %859 = arith.addf %857, %858 : vector<1x64xf32>
    %860 = vector.extract_strided_slice %829 {offsets = [0, 0], sizes = [1, 64], strides = [1, 1]} : vector<1x192xf32> to vector<1x64xf32>
    %861 = vector.extract_strided_slice %833 {offsets = [0, 0], sizes = [1, 64], strides = [1, 1]} : vector<1x192xf32> to vector<1x64xf32>
    %862 = arith.addf %860, %861 : vector<1x64xf32>
    %863 = arith.negf %862 : vector<1x64xf32>
    %864 = math.exp %863 : vector<1x64xf32>
    %cst_218 = arith.constant 1.000000e+00 : f32
    %865 = vector.broadcast %cst_218 : f32 to vector<1x64xf32>
    %866 = arith.addf %865, %864 : vector<1x64xf32>
    %867 = arith.divf %865, %866 : vector<1x64xf32>
    %868 = vector.extract_strided_slice %829 {offsets = [0, 64], sizes = [1, 64], strides = [1, 1]} : vector<1x192xf32> to vector<1x64xf32>
    %869 = vector.extract_strided_slice %833 {offsets = [0, 64], sizes = [1, 64], strides = [1, 1]} : vector<1x192xf32> to vector<1x64xf32>
    %870 = arith.addf %868, %869 : vector<1x64xf32>
    %871 = arith.negf %870 : vector<1x64xf32>
    %872 = math.exp %871 : vector<1x64xf32>
    %cst_219 = arith.constant 1.000000e+00 : f32
    %873 = vector.broadcast %cst_219 : f32 to vector<1x64xf32>
    %874 = arith.addf %873, %872 : vector<1x64xf32>
    %875 = arith.divf %873, %874 : vector<1x64xf32>
    %876 = vector.extract_strided_slice %829 {offsets = [0, 128], sizes = [1, 64], strides = [1, 1]} : vector<1x192xf32> to vector<1x64xf32>
    %877 = vector.extract_strided_slice %833 {offsets = [0, 128], sizes = [1, 64], strides = [1, 1]} : vector<1x192xf32> to vector<1x64xf32>
    %878 = arith.mulf %867, %877 : vector<1x64xf32>
    %879 = arith.addf %876, %878 : vector<1x64xf32>
    %880 = math.tanh %879 : vector<1x64xf32>
    %cst_220 = arith.constant 1.000000e+00 : f32
    %881 = vector.broadcast %cst_220 : f32 to vector<1x64xf32>
    %882 = arith.subf %881, %875 : vector<1x64xf32>
    %883 = arith.mulf %882, %880 : vector<1x64xf32>
    %884 = arith.mulf %875, %820 : vector<1x64xf32>
    %885 = arith.addf %883, %884 : vector<1x64xf32>
    %886 = arith.index_cast %c4_i32_209 : i32 to index
    %c0_221 = arith.constant 0 : index
    %887 = vector.load %arg30[%886, %c0_221] : memref<8x128xf32, #tpu.memory_space<vmem>>, vector<1x64xf32>
    tpu.vector_store %arg30[%886, %c0_221], %859 {strides = array<i32>} : memref<8x128xf32, #tpu.memory_space<vmem>>, vector<1x64xf32>,
    %888 = arith.index_cast %825 : i32 to index
    %c64_222 = arith.constant 64 : index
    %889 = vector.load %arg30[%888, %c64_222] : memref<8x128xf32, #tpu.memory_space<vmem>>, vector<1x64xf32>
    tpu.vector_store %arg30[%888, %c64_222], %885 {strides = array<i32>} : memref<8x128xf32, #tpu.memory_space<vmem>>, vector<1x64xf32>,
    %c5_i32_223 = arith.constant 5 : i32
    %c7_i32_224 = arith.constant 7 : i32
    %890 = arith.subi %c7_i32_224, %c5_i32_223 : i32
    %891 = arith.index_cast %c5_i32_223 : i32 to index
    %c0_225 = arith.constant 0 : index
    %892 = vector.load %arg28[%891, %c0_225] : memref<8x192xf32, #tpu.memory_space<vmem>>, vector<1x192xf32>
    %893 = arith.index_cast %890 : i32 to index
    %c0_226 = arith.constant 0 : index
    %894 = vector.load %arg29[%893, %c0_226] : memref<8x192xf32, #tpu.memory_space<vmem>>, vector<1x192xf32>
    %cst_227 = arith.constant dense<0.000000e+00> : vector<1x192xf32>
    %895 = tpu.matmul %859, %560, %cst_227 {dimension_numbers = #tpu.dot_dimension_numbers<[1], [0], [0], [1], [0, 0, 1, 1], [], []>} : vector<1x64xf32>, vector<64x192xf32>, vector<1x192xf32> -> vector<1x192xf32>
    %896 = arith.addf %895, %562 : vector<1x192xf32>
    %cst_228 = arith.constant dense<0.000000e+00> : vector<1x192xf32>
    %897 = tpu.matmul %885, %561, %cst_228 {dimension_numbers = #tpu.dot_dimension_numbers<[1], [0], [0], [1], [0, 0, 1, 1], [], []>} : vector<1x64xf32>, vector<64x192xf32>, vector<1x192xf32> -> vector<1x192xf32>
    %898 = arith.addf %897, %563 : vector<1x192xf32>
    %899 = vector.extract_strided_slice %892 {offsets = [0, 0], sizes = [1, 64], strides = [1, 1]} : vector<1x192xf32> to vector<1x64xf32>
    %900 = vector.extract_strided_slice %896 {offsets = [0, 0], sizes = [1, 64], strides = [1, 1]} : vector<1x192xf32> to vector<1x64xf32>
    %901 = arith.addf %899, %900 : vector<1x64xf32>
    %902 = arith.negf %901 : vector<1x64xf32>
    %903 = math.exp %902 : vector<1x64xf32>
    %cst_229 = arith.constant 1.000000e+00 : f32
    %904 = vector.broadcast %cst_229 : f32 to vector<1x64xf32>
    %905 = arith.addf %904, %903 : vector<1x64xf32>
    %906 = arith.divf %904, %905 : vector<1x64xf32>
    %907 = vector.extract_strided_slice %892 {offsets = [0, 64], sizes = [1, 64], strides = [1, 1]} : vector<1x192xf32> to vector<1x64xf32>
    %908 = vector.extract_strided_slice %896 {offsets = [0, 64], sizes = [1, 64], strides = [1, 1]} : vector<1x192xf32> to vector<1x64xf32>
    %909 = arith.addf %907, %908 : vector<1x64xf32>
    %910 = arith.negf %909 : vector<1x64xf32>
    %911 = math.exp %910 : vector<1x64xf32>
    %cst_230 = arith.constant 1.000000e+00 : f32
    %912 = vector.broadcast %cst_230 : f32 to vector<1x64xf32>
    %913 = arith.addf %912, %911 : vector<1x64xf32>
    %914 = arith.divf %912, %913 : vector<1x64xf32>
    %915 = vector.extract_strided_slice %892 {offsets = [0, 128], sizes = [1, 64], strides = [1, 1]} : vector<1x192xf32> to vector<1x64xf32>
    %916 = vector.extract_strided_slice %896 {offsets = [0, 128], sizes = [1, 64], strides = [1, 1]} : vector<1x192xf32> to vector<1x64xf32>
    %917 = arith.mulf %906, %916 : vector<1x64xf32>
    %918 = arith.addf %915, %917 : vector<1x64xf32>
    %919 = math.tanh %918 : vector<1x64xf32>
    %cst_231 = arith.constant 1.000000e+00 : f32
    %920 = vector.broadcast %cst_231 : f32 to vector<1x64xf32>
    %921 = arith.subf %920, %914 : vector<1x64xf32>
    %922 = arith.mulf %921, %919 : vector<1x64xf32>
    %923 = arith.mulf %914, %859 : vector<1x64xf32>
    %924 = arith.addf %922, %923 : vector<1x64xf32>
    %925 = vector.extract_strided_slice %894 {offsets = [0, 0], sizes = [1, 64], strides = [1, 1]} : vector<1x192xf32> to vector<1x64xf32>
    %926 = vector.extract_strided_slice %898 {offsets = [0, 0], sizes = [1, 64], strides = [1, 1]} : vector<1x192xf32> to vector<1x64xf32>
    %927 = arith.addf %925, %926 : vector<1x64xf32>
    %928 = arith.negf %927 : vector<1x64xf32>
    %929 = math.exp %928 : vector<1x64xf32>
    %cst_232 = arith.constant 1.000000e+00 : f32
    %930 = vector.broadcast %cst_232 : f32 to vector<1x64xf32>
    %931 = arith.addf %930, %929 : vector<1x64xf32>
    %932 = arith.divf %930, %931 : vector<1x64xf32>
    %933 = vector.extract_strided_slice %894 {offsets = [0, 64], sizes = [1, 64], strides = [1, 1]} : vector<1x192xf32> to vector<1x64xf32>
    %934 = vector.extract_strided_slice %898 {offsets = [0, 64], sizes = [1, 64], strides = [1, 1]} : vector<1x192xf32> to vector<1x64xf32>
    %935 = arith.addf %933, %934 : vector<1x64xf32>
    %936 = arith.negf %935 : vector<1x64xf32>
    %937 = math.exp %936 : vector<1x64xf32>
    %cst_233 = arith.constant 1.000000e+00 : f32
    %938 = vector.broadcast %cst_233 : f32 to vector<1x64xf32>
    %939 = arith.addf %938, %937 : vector<1x64xf32>
    %940 = arith.divf %938, %939 : vector<1x64xf32>
    %941 = vector.extract_strided_slice %894 {offsets = [0, 128], sizes = [1, 64], strides = [1, 1]} : vector<1x192xf32> to vector<1x64xf32>
    %942 = vector.extract_strided_slice %898 {offsets = [0, 128], sizes = [1, 64], strides = [1, 1]} : vector<1x192xf32> to vector<1x64xf32>
    %943 = arith.mulf %932, %942 : vector<1x64xf32>
    %944 = arith.addf %941, %943 : vector<1x64xf32>
    %945 = math.tanh %944 : vector<1x64xf32>
    %cst_234 = arith.constant 1.000000e+00 : f32
    %946 = vector.broadcast %cst_234 : f32 to vector<1x64xf32>
    %947 = arith.subf %946, %940 : vector<1x64xf32>
    %948 = arith.mulf %947, %945 : vector<1x64xf32>
    %949 = arith.mulf %940, %885 : vector<1x64xf32>
    %950 = arith.addf %948, %949 : vector<1x64xf32>
    %951 = arith.index_cast %c5_i32_223 : i32 to index
    %c0_235 = arith.constant 0 : index
    %952 = vector.load %arg30[%951, %c0_235] : memref<8x128xf32, #tpu.memory_space<vmem>>, vector<1x64xf32>
    tpu.vector_store %arg30[%951, %c0_235], %924 {strides = array<i32>} : memref<8x128xf32, #tpu.memory_space<vmem>>, vector<1x64xf32>,
    %953 = arith.index_cast %890 : i32 to index
    %c64_236 = arith.constant 64 : index
    %954 = vector.load %arg30[%953, %c64_236] : memref<8x128xf32, #tpu.memory_space<vmem>>, vector<1x64xf32>
    tpu.vector_store %arg30[%953, %c64_236], %950 {strides = array<i32>} : memref<8x128xf32, #tpu.memory_space<vmem>>, vector<1x64xf32>,
    %c6_i32_237 = arith.constant 6 : i32
    %c7_i32_238 = arith.constant 7 : i32
    %955 = arith.subi %c7_i32_238, %c6_i32_237 : i32
    %956 = arith.index_cast %c6_i32_237 : i32 to index
    %c0_239 = arith.constant 0 : index
    %957 = vector.load %arg28[%956, %c0_239] : memref<8x192xf32, #tpu.memory_space<vmem>>, vector<1x192xf32>
    %958 = arith.index_cast %955 : i32 to index
    %c0_240 = arith.constant 0 : index
    %959 = vector.load %arg29[%958, %c0_240] : memref<8x192xf32, #tpu.memory_space<vmem>>, vector<1x192xf32>
    %cst_241 = arith.constant dense<0.000000e+00> : vector<1x192xf32>
    %960 = tpu.matmul %924, %560, %cst_241 {dimension_numbers = #tpu.dot_dimension_numbers<[1], [0], [0], [1], [0, 0, 1, 1], [], []>} : vector<1x64xf32>, vector<64x192xf32>, vector<1x192xf32> -> vector<1x192xf32>
    %961 = arith.addf %960, %562 : vector<1x192xf32>
    %cst_242 = arith.constant dense<0.000000e+00> : vector<1x192xf32>
    %962 = tpu.matmul %950, %561, %cst_242 {dimension_numbers = #tpu.dot_dimension_numbers<[1], [0], [0], [1], [0, 0, 1, 1], [], []>} : vector<1x64xf32>, vector<64x192xf32>, vector<1x192xf32> -> vector<1x192xf32>
    %963 = arith.addf %962, %563 : vector<1x192xf32>
    %964 = vector.extract_strided_slice %957 {offsets = [0, 0], sizes = [1, 64], strides = [1, 1]} : vector<1x192xf32> to vector<1x64xf32>
    %965 = vector.extract_strided_slice %961 {offsets = [0, 0], sizes = [1, 64], strides = [1, 1]} : vector<1x192xf32> to vector<1x64xf32>
    %966 = arith.addf %964, %965 : vector<1x64xf32>
    %967 = arith.negf %966 : vector<1x64xf32>
    %968 = math.exp %967 : vector<1x64xf32>
    %cst_243 = arith.constant 1.000000e+00 : f32
    %969 = vector.broadcast %cst_243 : f32 to vector<1x64xf32>
    %970 = arith.addf %969, %968 : vector<1x64xf32>
    %971 = arith.divf %969, %970 : vector<1x64xf32>
    %972 = vector.extract_strided_slice %957 {offsets = [0, 64], sizes = [1, 64], strides = [1, 1]} : vector<1x192xf32> to vector<1x64xf32>
    %973 = vector.extract_strided_slice %961 {offsets = [0, 64], sizes = [1, 64], strides = [1, 1]} : vector<1x192xf32> to vector<1x64xf32>
    %974 = arith.addf %972, %973 : vector<1x64xf32>
    %975 = arith.negf %974 : vector<1x64xf32>
    %976 = math.exp %975 : vector<1x64xf32>
    %cst_244 = arith.constant 1.000000e+00 : f32
    %977 = vector.broadcast %cst_244 : f32 to vector<1x64xf32>
    %978 = arith.addf %977, %976 : vector<1x64xf32>
    %979 = arith.divf %977, %978 : vector<1x64xf32>
    %980 = vector.extract_strided_slice %957 {offsets = [0, 128], sizes = [1, 64], strides = [1, 1]} : vector<1x192xf32> to vector<1x64xf32>
    %981 = vector.extract_strided_slice %961 {offsets = [0, 128], sizes = [1, 64], strides = [1, 1]} : vector<1x192xf32> to vector<1x64xf32>
    %982 = arith.mulf %971, %981 : vector<1x64xf32>
    %983 = arith.addf %980, %982 : vector<1x64xf32>
    %984 = math.tanh %983 : vector<1x64xf32>
    %cst_245 = arith.constant 1.000000e+00 : f32
    %985 = vector.broadcast %cst_245 : f32 to vector<1x64xf32>
    %986 = arith.subf %985, %979 : vector<1x64xf32>
    %987 = arith.mulf %986, %984 : vector<1x64xf32>
    %988 = arith.mulf %979, %924 : vector<1x64xf32>
    %989 = arith.addf %987, %988 : vector<1x64xf32>
    %990 = vector.extract_strided_slice %959 {offsets = [0, 0], sizes = [1, 64], strides = [1, 1]} : vector<1x192xf32> to vector<1x64xf32>
    %991 = vector.extract_strided_slice %963 {offsets = [0, 0], sizes = [1, 64], strides = [1, 1]} : vector<1x192xf32> to vector<1x64xf32>
    %992 = arith.addf %990, %991 : vector<1x64xf32>
    %993 = arith.negf %992 : vector<1x64xf32>
    %994 = math.exp %993 : vector<1x64xf32>
    %cst_246 = arith.constant 1.000000e+00 : f32
    %995 = vector.broadcast %cst_246 : f32 to vector<1x64xf32>
    %996 = arith.addf %995, %994 : vector<1x64xf32>
    %997 = arith.divf %995, %996 : vector<1x64xf32>
    %998 = vector.extract_strided_slice %959 {offsets = [0, 64], sizes = [1, 64], strides = [1, 1]} : vector<1x192xf32> to vector<1x64xf32>
    %999 = vector.extract_strided_slice %963 {offsets = [0, 64], sizes = [1, 64], strides = [1, 1]} : vector<1x192xf32> to vector<1x64xf32>
    %1000 = arith.addf %998, %999 : vector<1x64xf32>
    %1001 = arith.negf %1000 : vector<1x64xf32>
    %1002 = math.exp %1001 : vector<1x64xf32>
    %cst_247 = arith.constant 1.000000e+00 : f32
    %1003 = vector.broadcast %cst_247 : f32 to vector<1x64xf32>
    %1004 = arith.addf %1003, %1002 : vector<1x64xf32>
    %1005 = arith.divf %1003, %1004 : vector<1x64xf32>
    %1006 = vector.extract_strided_slice %959 {offsets = [0, 128], sizes = [1, 64], strides = [1, 1]} : vector<1x192xf32> to vector<1x64xf32>
    %1007 = vector.extract_strided_slice %963 {offsets = [0, 128], sizes = [1, 64], strides = [1, 1]} : vector<1x192xf32> to vector<1x64xf32>
    %1008 = arith.mulf %997, %1007 : vector<1x64xf32>
    %1009 = arith.addf %1006, %1008 : vector<1x64xf32>
    %1010 = math.tanh %1009 : vector<1x64xf32>
    %cst_248 = arith.constant 1.000000e+00 : f32
    %1011 = vector.broadcast %cst_248 : f32 to vector<1x64xf32>
    %1012 = arith.subf %1011, %1005 : vector<1x64xf32>
    %1013 = arith.mulf %1012, %1010 : vector<1x64xf32>
    %1014 = arith.mulf %1005, %950 : vector<1x64xf32>
    %1015 = arith.addf %1013, %1014 : vector<1x64xf32>
    %1016 = arith.index_cast %c6_i32_237 : i32 to index
    %c0_249 = arith.constant 0 : index
    %1017 = vector.load %arg30[%1016, %c0_249] : memref<8x128xf32, #tpu.memory_space<vmem>>, vector<1x64xf32>
    tpu.vector_store %arg30[%1016, %c0_249], %989 {strides = array<i32>} : memref<8x128xf32, #tpu.memory_space<vmem>>, vector<1x64xf32>,
    %1018 = arith.index_cast %955 : i32 to index
    %c64_250 = arith.constant 64 : index
    %1019 = vector.load %arg30[%1018, %c64_250] : memref<8x128xf32, #tpu.memory_space<vmem>>, vector<1x64xf32>
    tpu.vector_store %arg30[%1018, %c64_250], %1015 {strides = array<i32>} : memref<8x128xf32, #tpu.memory_space<vmem>>, vector<1x64xf32>,
    %c7_i32_251 = arith.constant 7 : i32
    %c7_i32_252 = arith.constant 7 : i32
    %1020 = arith.subi %c7_i32_252, %c7_i32_251 : i32
    %1021 = arith.index_cast %c7_i32_251 : i32 to index
    %c0_253 = arith.constant 0 : index
    %1022 = vector.load %arg28[%1021, %c0_253] : memref<8x192xf32, #tpu.memory_space<vmem>>, vector<1x192xf32>
    %1023 = arith.index_cast %1020 : i32 to index
    %c0_254 = arith.constant 0 : index
    %1024 = vector.load %arg29[%1023, %c0_254] : memref<8x192xf32, #tpu.memory_space<vmem>>, vector<1x192xf32>
    %cst_255 = arith.constant dense<0.000000e+00> : vector<1x192xf32>
    %1025 = tpu.matmul %989, %560, %cst_255 {dimension_numbers = #tpu.dot_dimension_numbers<[1], [0], [0], [1], [0, 0, 1, 1], [], []>} : vector<1x64xf32>, vector<64x192xf32>, vector<1x192xf32> -> vector<1x192xf32>
    %1026 = arith.addf %1025, %562 : vector<1x192xf32>
    %cst_256 = arith.constant dense<0.000000e+00> : vector<1x192xf32>
    %1027 = tpu.matmul %1015, %561, %cst_256 {dimension_numbers = #tpu.dot_dimension_numbers<[1], [0], [0], [1], [0, 0, 1, 1], [], []>} : vector<1x64xf32>, vector<64x192xf32>, vector<1x192xf32> -> vector<1x192xf32>
    %1028 = arith.addf %1027, %563 : vector<1x192xf32>
    %1029 = vector.extract_strided_slice %1022 {offsets = [0, 0], sizes = [1, 64], strides = [1, 1]} : vector<1x192xf32> to vector<1x64xf32>
    %1030 = vector.extract_strided_slice %1026 {offsets = [0, 0], sizes = [1, 64], strides = [1, 1]} : vector<1x192xf32> to vector<1x64xf32>
    %1031 = arith.addf %1029, %1030 : vector<1x64xf32>
    %1032 = arith.negf %1031 : vector<1x64xf32>
    %1033 = math.exp %1032 : vector<1x64xf32>
    %cst_257 = arith.constant 1.000000e+00 : f32
    %1034 = vector.broadcast %cst_257 : f32 to vector<1x64xf32>
    %1035 = arith.addf %1034, %1033 : vector<1x64xf32>
    %1036 = arith.divf %1034, %1035 : vector<1x64xf32>
    %1037 = vector.extract_strided_slice %1022 {offsets = [0, 64], sizes = [1, 64], strides = [1, 1]} : vector<1x192xf32> to vector<1x64xf32>
    %1038 = vector.extract_strided_slice %1026 {offsets = [0, 64], sizes = [1, 64], strides = [1, 1]} : vector<1x192xf32> to vector<1x64xf32>
    %1039 = arith.addf %1037, %1038 : vector<1x64xf32>
    %1040 = arith.negf %1039 : vector<1x64xf32>
    %1041 = math.exp %1040 : vector<1x64xf32>
    %cst_258 = arith.constant 1.000000e+00 : f32
    %1042 = vector.broadcast %cst_258 : f32 to vector<1x64xf32>
    %1043 = arith.addf %1042, %1041 : vector<1x64xf32>
    %1044 = arith.divf %1042, %1043 : vector<1x64xf32>
    %1045 = vector.extract_strided_slice %1022 {offsets = [0, 128], sizes = [1, 64], strides = [1, 1]} : vector<1x192xf32> to vector<1x64xf32>
    %1046 = vector.extract_strided_slice %1026 {offsets = [0, 128], sizes = [1, 64], strides = [1, 1]} : vector<1x192xf32> to vector<1x64xf32>
    %1047 = arith.mulf %1036, %1046 : vector<1x64xf32>
    %1048 = arith.addf %1045, %1047 : vector<1x64xf32>
    %1049 = math.tanh %1048 : vector<1x64xf32>
    %cst_259 = arith.constant 1.000000e+00 : f32
    %1050 = vector.broadcast %cst_259 : f32 to vector<1x64xf32>
    %1051 = arith.subf %1050, %1044 : vector<1x64xf32>
    %1052 = arith.mulf %1051, %1049 : vector<1x64xf32>
    %1053 = arith.mulf %1044, %989 : vector<1x64xf32>
    %1054 = arith.addf %1052, %1053 : vector<1x64xf32>
    %1055 = vector.extract_strided_slice %1024 {offsets = [0, 0], sizes = [1, 64], strides = [1, 1]} : vector<1x192xf32> to vector<1x64xf32>
    %1056 = vector.extract_strided_slice %1028 {offsets = [0, 0], sizes = [1, 64], strides = [1, 1]} : vector<1x192xf32> to vector<1x64xf32>
    %1057 = arith.addf %1055, %1056 : vector<1x64xf32>
    %1058 = arith.negf %1057 : vector<1x64xf32>
    %1059 = math.exp %1058 : vector<1x64xf32>
    %cst_260 = arith.constant 1.000000e+00 : f32
    %1060 = vector.broadcast %cst_260 : f32 to vector<1x64xf32>
    %1061 = arith.addf %1060, %1059 : vector<1x64xf32>
    %1062 = arith.divf %1060, %1061 : vector<1x64xf32>
    %1063 = vector.extract_strided_slice %1024 {offsets = [0, 64], sizes = [1, 64], strides = [1, 1]} : vector<1x192xf32> to vector<1x64xf32>
    %1064 = vector.extract_strided_slice %1028 {offsets = [0, 64], sizes = [1, 64], strides = [1, 1]} : vector<1x192xf32> to vector<1x64xf32>
    %1065 = arith.addf %1063, %1064 : vector<1x64xf32>
    %1066 = arith.negf %1065 : vector<1x64xf32>
    %1067 = math.exp %1066 : vector<1x64xf32>
    %cst_261 = arith.constant 1.000000e+00 : f32
    %1068 = vector.broadcast %cst_261 : f32 to vector<1x64xf32>
    %1069 = arith.addf %1068, %1067 : vector<1x64xf32>
    %1070 = arith.divf %1068, %1069 : vector<1x64xf32>
    %1071 = vector.extract_strided_slice %1024 {offsets = [0, 128], sizes = [1, 64], strides = [1, 1]} : vector<1x192xf32> to vector<1x64xf32>
    %1072 = vector.extract_strided_slice %1028 {offsets = [0, 128], sizes = [1, 64], strides = [1, 1]} : vector<1x192xf32> to vector<1x64xf32>
    %1073 = arith.mulf %1062, %1072 : vector<1x64xf32>
    %1074 = arith.addf %1071, %1073 : vector<1x64xf32>
    %1075 = math.tanh %1074 : vector<1x64xf32>
    %cst_262 = arith.constant 1.000000e+00 : f32
    %1076 = vector.broadcast %cst_262 : f32 to vector<1x64xf32>
    %1077 = arith.subf %1076, %1070 : vector<1x64xf32>
    %1078 = arith.mulf %1077, %1075 : vector<1x64xf32>
    %1079 = arith.mulf %1070, %1015 : vector<1x64xf32>
    %1080 = arith.addf %1078, %1079 : vector<1x64xf32>
    %1081 = arith.index_cast %c7_i32_251 : i32 to index
    %c0_263 = arith.constant 0 : index
    %1082 = vector.load %arg30[%1081, %c0_263] : memref<8x128xf32, #tpu.memory_space<vmem>>, vector<1x64xf32>
    tpu.vector_store %arg30[%1081, %c0_263], %1054 {strides = array<i32>} : memref<8x128xf32, #tpu.memory_space<vmem>>, vector<1x64xf32>,
    %1083 = arith.index_cast %1020 : i32 to index
    %c64_264 = arith.constant 64 : index
    %1084 = vector.load %arg30[%1083, %c64_264] : memref<8x128xf32, #tpu.memory_space<vmem>>, vector<1x64xf32>
    tpu.vector_store %arg30[%1083, %c64_264], %1080 {strides = array<i32>} : memref<8x128xf32, #tpu.memory_space<vmem>>, vector<1x64xf32>,
    %c8_i32_265 = arith.constant 8 : i32
    %c0_266 = arith.constant 0 : index
    %c0_267 = arith.constant 0 : index
    %1085 = vector.load %arg30[%c0_266, %c0_267] : memref<8x128xf32, #tpu.memory_space<vmem>>, vector<8x128xf32>
    %c0_268 = arith.constant 0 : index
    %c0_269 = arith.constant 0 : index
    %1086 = vector.load %arg17[%c0_268, %c0_269] : memref<128x192xf32, #tpu.memory_space<vmem>>, vector<128x192xf32>
    %cst_270 = arith.constant dense<0.000000e+00> : vector<8x192xf32>
    %1087 = tpu.matmul %1085, %1086, %cst_270 {dimension_numbers = #tpu.dot_dimension_numbers<[1], [0], [0], [1], [0, 0, 1, 1], [], []>} : vector<8x128xf32>, vector<128x192xf32>, vector<8x192xf32> -> vector<8x192xf32>
    %c0_271 = arith.constant 0 : index
    %c0_272 = arith.constant 0 : index
    %1088 = vector.load %arg19[%c0_271, %c0_272] : memref<1x192xf32, #tpu.memory_space<vmem>>, vector<1x192xf32>
    %1089 = vector.broadcast %1088 : vector<1x192xf32> to vector<8x192xf32>
    %1090 = arith.addf %1087, %1089 : vector<8x192xf32>
    %c0_273 = arith.constant 0 : index
    %c0_274 = arith.constant 0 : index
    %1091 = vector.load %arg28[%c0_273, %c0_274] : memref<8x192xf32, #tpu.memory_space<vmem>>, vector<8x192xf32>
    tpu.vector_store %arg28[%c0_273, %c0_274], %1090 {strides = array<i32>} : memref<8x192xf32, #tpu.memory_space<vmem>>, vector<8x192xf32>,
    %c0_275 = arith.constant 0 : index
    %c0_276 = arith.constant 0 : index
    %1092 = vector.load %arg21[%c0_275, %c0_276] : memref<128x192xf32, #tpu.memory_space<vmem>>, vector<128x192xf32>
    %cst_277 = arith.constant dense<0.000000e+00> : vector<8x192xf32>
    %1093 = tpu.matmul %1085, %1092, %cst_277 {dimension_numbers = #tpu.dot_dimension_numbers<[1], [0], [0], [1], [0, 0, 1, 1], [], []>} : vector<8x128xf32>, vector<128x192xf32>, vector<8x192xf32> -> vector<8x192xf32>
    %c0_278 = arith.constant 0 : index
    %c0_279 = arith.constant 0 : index
    %1094 = vector.load %arg23[%c0_278, %c0_279] : memref<1x192xf32, #tpu.memory_space<vmem>>, vector<1x192xf32>
    %1095 = vector.broadcast %1094 : vector<1x192xf32> to vector<8x192xf32>
    %1096 = arith.addf %1093, %1095 : vector<8x192xf32>
    %c0_280 = arith.constant 0 : index
    %c0_281 = arith.constant 0 : index
    %1097 = vector.load %arg29[%c0_280, %c0_281] : memref<8x192xf32, #tpu.memory_space<vmem>>, vector<8x192xf32>
    tpu.vector_store %arg29[%c0_280, %c0_281], %1096 {strides = array<i32>} : memref<8x192xf32, #tpu.memory_space<vmem>>, vector<8x192xf32>,
    %c0_282 = arith.constant 0 : index
    %c0_283 = arith.constant 0 : index
    %1098 = vector.load %arg18[%c0_282, %c0_283] : memref<64x192xf32, #tpu.memory_space<vmem>>, vector<64x192xf32>
    %c0_284 = arith.constant 0 : index
    %c0_285 = arith.constant 0 : index
    %1099 = vector.load %arg22[%c0_284, %c0_285] : memref<64x192xf32, #tpu.memory_space<vmem>>, vector<64x192xf32>
    %c0_286 = arith.constant 0 : index
    %c0_287 = arith.constant 0 : index
    %1100 = vector.load %arg20[%c0_286, %c0_287] : memref<1x192xf32, #tpu.memory_space<vmem>>, vector<1x192xf32>
    %c0_288 = arith.constant 0 : index
    %c0_289 = arith.constant 0 : index
    %1101 = vector.load %arg24[%c0_288, %c0_289] : memref<1x192xf32, #tpu.memory_space<vmem>>, vector<1x192xf32>
    %cst_290 = arith.constant 0.000000e+00 : f32
    %1102 = vector.broadcast %cst_290 : f32 to vector<1x64xf32>
    %c0_i32_291 = arith.constant 0 : i32
    %c7_i32_292 = arith.constant 7 : i32
    %1103 = arith.subi %c7_i32_292, %c0_i32_291 : i32
    %1104 = arith.index_cast %c0_i32_291 : i32 to index
    %c0_293 = arith.constant 0 : index
    %1105 = vector.load %arg28[%1104, %c0_293] : memref<8x192xf32, #tpu.memory_space<vmem>>, vector<1x192xf32>
    %1106 = arith.index_cast %1103 : i32 to index
    %c0_294 = arith.constant 0 : index
    %1107 = vector.load %arg29[%1106, %c0_294] : memref<8x192xf32, #tpu.memory_space<vmem>>, vector<1x192xf32>
    %cst_295 = arith.constant dense<0.000000e+00> : vector<1x192xf32>
    %1108 = tpu.matmul %1102, %1098, %cst_295 {dimension_numbers = #tpu.dot_dimension_numbers<[1], [0], [0], [1], [0, 0, 1, 1], [], []>} : vector<1x64xf32>, vector<64x192xf32>, vector<1x192xf32> -> vector<1x192xf32>
    %1109 = arith.addf %1108, %1100 : vector<1x192xf32>
    %cst_296 = arith.constant dense<0.000000e+00> : vector<1x192xf32>
    %1110 = tpu.matmul %1102, %1099, %cst_296 {dimension_numbers = #tpu.dot_dimension_numbers<[1], [0], [0], [1], [0, 0, 1, 1], [], []>} : vector<1x64xf32>, vector<64x192xf32>, vector<1x192xf32> -> vector<1x192xf32>
    %1111 = arith.addf %1110, %1101 : vector<1x192xf32>
    %1112 = vector.extract_strided_slice %1105 {offsets = [0, 0], sizes = [1, 64], strides = [1, 1]} : vector<1x192xf32> to vector<1x64xf32>
    %1113 = vector.extract_strided_slice %1109 {offsets = [0, 0], sizes = [1, 64], strides = [1, 1]} : vector<1x192xf32> to vector<1x64xf32>
    %1114 = arith.addf %1112, %1113 : vector<1x64xf32>
    %1115 = arith.negf %1114 : vector<1x64xf32>
    %1116 = math.exp %1115 : vector<1x64xf32>
    %cst_297 = arith.constant 1.000000e+00 : f32
    %1117 = vector.broadcast %cst_297 : f32 to vector<1x64xf32>
    %1118 = arith.addf %1117, %1116 : vector<1x64xf32>
    %1119 = arith.divf %1117, %1118 : vector<1x64xf32>
    %1120 = vector.extract_strided_slice %1105 {offsets = [0, 64], sizes = [1, 64], strides = [1, 1]} : vector<1x192xf32> to vector<1x64xf32>
    %1121 = vector.extract_strided_slice %1109 {offsets = [0, 64], sizes = [1, 64], strides = [1, 1]} : vector<1x192xf32> to vector<1x64xf32>
    %1122 = arith.addf %1120, %1121 : vector<1x64xf32>
    %1123 = arith.negf %1122 : vector<1x64xf32>
    %1124 = math.exp %1123 : vector<1x64xf32>
    %cst_298 = arith.constant 1.000000e+00 : f32
    %1125 = vector.broadcast %cst_298 : f32 to vector<1x64xf32>
    %1126 = arith.addf %1125, %1124 : vector<1x64xf32>
    %1127 = arith.divf %1125, %1126 : vector<1x64xf32>
    %1128 = vector.extract_strided_slice %1105 {offsets = [0, 128], sizes = [1, 64], strides = [1, 1]} : vector<1x192xf32> to vector<1x64xf32>
    %1129 = vector.extract_strided_slice %1109 {offsets = [0, 128], sizes = [1, 64], strides = [1, 1]} : vector<1x192xf32> to vector<1x64xf32>
    %1130 = arith.mulf %1119, %1129 : vector<1x64xf32>
    %1131 = arith.addf %1128, %1130 : vector<1x64xf32>
    %1132 = math.tanh %1131 : vector<1x64xf32>
    %cst_299 = arith.constant 1.000000e+00 : f32
    %1133 = vector.broadcast %cst_299 : f32 to vector<1x64xf32>
    %1134 = arith.subf %1133, %1127 : vector<1x64xf32>
    %1135 = arith.mulf %1134, %1132 : vector<1x64xf32>
    %1136 = arith.mulf %1127, %1102 : vector<1x64xf32>
    %1137 = arith.addf %1135, %1136 : vector<1x64xf32>
    %1138 = vector.extract_strided_slice %1107 {offsets = [0, 0], sizes = [1, 64], strides = [1, 1]} : vector<1x192xf32> to vector<1x64xf32>
    %1139 = vector.extract_strided_slice %1111 {offsets = [0, 0], sizes = [1, 64], strides = [1, 1]} : vector<1x192xf32> to vector<1x64xf32>
    %1140 = arith.addf %1138, %1139 : vector<1x64xf32>
    %1141 = arith.negf %1140 : vector<1x64xf32>
    %1142 = math.exp %1141 : vector<1x64xf32>
    %cst_300 = arith.constant 1.000000e+00 : f32
    %1143 = vector.broadcast %cst_300 : f32 to vector<1x64xf32>
    %1144 = arith.addf %1143, %1142 : vector<1x64xf32>
    %1145 = arith.divf %1143, %1144 : vector<1x64xf32>
    %1146 = vector.extract_strided_slice %1107 {offsets = [0, 64], sizes = [1, 64], strides = [1, 1]} : vector<1x192xf32> to vector<1x64xf32>
    %1147 = vector.extract_strided_slice %1111 {offsets = [0, 64], sizes = [1, 64], strides = [1, 1]} : vector<1x192xf32> to vector<1x64xf32>
    %1148 = arith.addf %1146, %1147 : vector<1x64xf32>
    %1149 = arith.negf %1148 : vector<1x64xf32>
    %1150 = math.exp %1149 : vector<1x64xf32>
    %cst_301 = arith.constant 1.000000e+00 : f32
    %1151 = vector.broadcast %cst_301 : f32 to vector<1x64xf32>
    %1152 = arith.addf %1151, %1150 : vector<1x64xf32>
    %1153 = arith.divf %1151, %1152 : vector<1x64xf32>
    %1154 = vector.extract_strided_slice %1107 {offsets = [0, 128], sizes = [1, 64], strides = [1, 1]} : vector<1x192xf32> to vector<1x64xf32>
    %1155 = vector.extract_strided_slice %1111 {offsets = [0, 128], sizes = [1, 64], strides = [1, 1]} : vector<1x192xf32> to vector<1x64xf32>
    %1156 = arith.mulf %1145, %1155 : vector<1x64xf32>
    %1157 = arith.addf %1154, %1156 : vector<1x64xf32>
    %1158 = math.tanh %1157 : vector<1x64xf32>
    %cst_302 = arith.constant 1.000000e+00 : f32
    %1159 = vector.broadcast %cst_302 : f32 to vector<1x64xf32>
    %1160 = arith.subf %1159, %1153 : vector<1x64xf32>
    %1161 = arith.mulf %1160, %1158 : vector<1x64xf32>
    %1162 = arith.mulf %1153, %1102 : vector<1x64xf32>
    %1163 = arith.addf %1161, %1162 : vector<1x64xf32>
    %1164 = arith.index_cast %c0_i32_291 : i32 to index
    %c0_303 = arith.constant 0 : index
    %1165 = vector.load %arg30[%1164, %c0_303] : memref<8x128xf32, #tpu.memory_space<vmem>>, vector<1x64xf32>
    tpu.vector_store %arg30[%1164, %c0_303], %1137 {strides = array<i32>} : memref<8x128xf32, #tpu.memory_space<vmem>>, vector<1x64xf32>,
    %1166 = arith.index_cast %1103 : i32 to index
    %c64_304 = arith.constant 64 : index
    %1167 = vector.load %arg30[%1166, %c64_304] : memref<8x128xf32, #tpu.memory_space<vmem>>, vector<1x64xf32>
    tpu.vector_store %arg30[%1166, %c64_304], %1163 {strides = array<i32>} : memref<8x128xf32, #tpu.memory_space<vmem>>, vector<1x64xf32>,
    %c1_i32_305 = arith.constant 1 : i32
    %c7_i32_306 = arith.constant 7 : i32
    %1168 = arith.subi %c7_i32_306, %c1_i32_305 : i32
    %1169 = arith.index_cast %c1_i32_305 : i32 to index
    %c0_307 = arith.constant 0 : index
    %1170 = vector.load %arg28[%1169, %c0_307] : memref<8x192xf32, #tpu.memory_space<vmem>>, vector<1x192xf32>
    %1171 = arith.index_cast %1168 : i32 to index
    %c0_308 = arith.constant 0 : index
    %1172 = vector.load %arg29[%1171, %c0_308] : memref<8x192xf32, #tpu.memory_space<vmem>>, vector<1x192xf32>
    %cst_309 = arith.constant dense<0.000000e+00> : vector<1x192xf32>
    %1173 = tpu.matmul %1137, %1098, %cst_309 {dimension_numbers = #tpu.dot_dimension_numbers<[1], [0], [0], [1], [0, 0, 1, 1], [], []>} : vector<1x64xf32>, vector<64x192xf32>, vector<1x192xf32> -> vector<1x192xf32>
    %1174 = arith.addf %1173, %1100 : vector<1x192xf32>
    %cst_310 = arith.constant dense<0.000000e+00> : vector<1x192xf32>
    %1175 = tpu.matmul %1163, %1099, %cst_310 {dimension_numbers = #tpu.dot_dimension_numbers<[1], [0], [0], [1], [0, 0, 1, 1], [], []>} : vector<1x64xf32>, vector<64x192xf32>, vector<1x192xf32> -> vector<1x192xf32>
    %1176 = arith.addf %1175, %1101 : vector<1x192xf32>
    %1177 = vector.extract_strided_slice %1170 {offsets = [0, 0], sizes = [1, 64], strides = [1, 1]} : vector<1x192xf32> to vector<1x64xf32>
    %1178 = vector.extract_strided_slice %1174 {offsets = [0, 0], sizes = [1, 64], strides = [1, 1]} : vector<1x192xf32> to vector<1x64xf32>
    %1179 = arith.addf %1177, %1178 : vector<1x64xf32>
    %1180 = arith.negf %1179 : vector<1x64xf32>
    %1181 = math.exp %1180 : vector<1x64xf32>
    %cst_311 = arith.constant 1.000000e+00 : f32
    %1182 = vector.broadcast %cst_311 : f32 to vector<1x64xf32>
    %1183 = arith.addf %1182, %1181 : vector<1x64xf32>
    %1184 = arith.divf %1182, %1183 : vector<1x64xf32>
    %1185 = vector.extract_strided_slice %1170 {offsets = [0, 64], sizes = [1, 64], strides = [1, 1]} : vector<1x192xf32> to vector<1x64xf32>
    %1186 = vector.extract_strided_slice %1174 {offsets = [0, 64], sizes = [1, 64], strides = [1, 1]} : vector<1x192xf32> to vector<1x64xf32>
    %1187 = arith.addf %1185, %1186 : vector<1x64xf32>
    %1188 = arith.negf %1187 : vector<1x64xf32>
    %1189 = math.exp %1188 : vector<1x64xf32>
    %cst_312 = arith.constant 1.000000e+00 : f32
    %1190 = vector.broadcast %cst_312 : f32 to vector<1x64xf32>
    %1191 = arith.addf %1190, %1189 : vector<1x64xf32>
    %1192 = arith.divf %1190, %1191 : vector<1x64xf32>
    %1193 = vector.extract_strided_slice %1170 {offsets = [0, 128], sizes = [1, 64], strides = [1, 1]} : vector<1x192xf32> to vector<1x64xf32>
    %1194 = vector.extract_strided_slice %1174 {offsets = [0, 128], sizes = [1, 64], strides = [1, 1]} : vector<1x192xf32> to vector<1x64xf32>
    %1195 = arith.mulf %1184, %1194 : vector<1x64xf32>
    %1196 = arith.addf %1193, %1195 : vector<1x64xf32>
    %1197 = math.tanh %1196 : vector<1x64xf32>
    %cst_313 = arith.constant 1.000000e+00 : f32
    %1198 = vector.broadcast %cst_313 : f32 to vector<1x64xf32>
    %1199 = arith.subf %1198, %1192 : vector<1x64xf32>
    %1200 = arith.mulf %1199, %1197 : vector<1x64xf32>
    %1201 = arith.mulf %1192, %1137 : vector<1x64xf32>
    %1202 = arith.addf %1200, %1201 : vector<1x64xf32>
    %1203 = vector.extract_strided_slice %1172 {offsets = [0, 0], sizes = [1, 64], strides = [1, 1]} : vector<1x192xf32> to vector<1x64xf32>
    %1204 = vector.extract_strided_slice %1176 {offsets = [0, 0], sizes = [1, 64], strides = [1, 1]} : vector<1x192xf32> to vector<1x64xf32>
    %1205 = arith.addf %1203, %1204 : vector<1x64xf32>
    %1206 = arith.negf %1205 : vector<1x64xf32>
    %1207 = math.exp %1206 : vector<1x64xf32>
    %cst_314 = arith.constant 1.000000e+00 : f32
    %1208 = vector.broadcast %cst_314 : f32 to vector<1x64xf32>
    %1209 = arith.addf %1208, %1207 : vector<1x64xf32>
    %1210 = arith.divf %1208, %1209 : vector<1x64xf32>
    %1211 = vector.extract_strided_slice %1172 {offsets = [0, 64], sizes = [1, 64], strides = [1, 1]} : vector<1x192xf32> to vector<1x64xf32>
    %1212 = vector.extract_strided_slice %1176 {offsets = [0, 64], sizes = [1, 64], strides = [1, 1]} : vector<1x192xf32> to vector<1x64xf32>
    %1213 = arith.addf %1211, %1212 : vector<1x64xf32>
    %1214 = arith.negf %1213 : vector<1x64xf32>
    %1215 = math.exp %1214 : vector<1x64xf32>
    %cst_315 = arith.constant 1.000000e+00 : f32
    %1216 = vector.broadcast %cst_315 : f32 to vector<1x64xf32>
    %1217 = arith.addf %1216, %1215 : vector<1x64xf32>
    %1218 = arith.divf %1216, %1217 : vector<1x64xf32>
    %1219 = vector.extract_strided_slice %1172 {offsets = [0, 128], sizes = [1, 64], strides = [1, 1]} : vector<1x192xf32> to vector<1x64xf32>
    %1220 = vector.extract_strided_slice %1176 {offsets = [0, 128], sizes = [1, 64], strides = [1, 1]} : vector<1x192xf32> to vector<1x64xf32>
    %1221 = arith.mulf %1210, %1220 : vector<1x64xf32>
    %1222 = arith.addf %1219, %1221 : vector<1x64xf32>
    %1223 = math.tanh %1222 : vector<1x64xf32>
    %cst_316 = arith.constant 1.000000e+00 : f32
    %1224 = vector.broadcast %cst_316 : f32 to vector<1x64xf32>
    %1225 = arith.subf %1224, %1218 : vector<1x64xf32>
    %1226 = arith.mulf %1225, %1223 : vector<1x64xf32>
    %1227 = arith.mulf %1218, %1163 : vector<1x64xf32>
    %1228 = arith.addf %1226, %1227 : vector<1x64xf32>
    %1229 = arith.index_cast %c1_i32_305 : i32 to index
    %c0_317 = arith.constant 0 : index
    %1230 = vector.load %arg30[%1229, %c0_317] : memref<8x128xf32, #tpu.memory_space<vmem>>, vector<1x64xf32>
    tpu.vector_store %arg30[%1229, %c0_317], %1202 {strides = array<i32>} : memref<8x128xf32, #tpu.memory_space<vmem>>, vector<1x64xf32>,
    %1231 = arith.index_cast %1168 : i32 to index
    %c64_318 = arith.constant 64 : index
    %1232 = vector.load %arg30[%1231, %c64_318] : memref<8x128xf32, #tpu.memory_space<vmem>>, vector<1x64xf32>
    tpu.vector_store %arg30[%1231, %c64_318], %1228 {strides = array<i32>} : memref<8x128xf32, #tpu.memory_space<vmem>>, vector<1x64xf32>,
    %c2_i32_319 = arith.constant 2 : i32
    %c7_i32_320 = arith.constant 7 : i32
    %1233 = arith.subi %c7_i32_320, %c2_i32_319 : i32
    %1234 = arith.index_cast %c2_i32_319 : i32 to index
    %c0_321 = arith.constant 0 : index
    %1235 = vector.load %arg28[%1234, %c0_321] : memref<8x192xf32, #tpu.memory_space<vmem>>, vector<1x192xf32>
    %1236 = arith.index_cast %1233 : i32 to index
    %c0_322 = arith.constant 0 : index
    %1237 = vector.load %arg29[%1236, %c0_322] : memref<8x192xf32, #tpu.memory_space<vmem>>, vector<1x192xf32>
    %cst_323 = arith.constant dense<0.000000e+00> : vector<1x192xf32>
    %1238 = tpu.matmul %1202, %1098, %cst_323 {dimension_numbers = #tpu.dot_dimension_numbers<[1], [0], [0], [1], [0, 0, 1, 1], [], []>} : vector<1x64xf32>, vector<64x192xf32>, vector<1x192xf32> -> vector<1x192xf32>
    %1239 = arith.addf %1238, %1100 : vector<1x192xf32>
    %cst_324 = arith.constant dense<0.000000e+00> : vector<1x192xf32>
    %1240 = tpu.matmul %1228, %1099, %cst_324 {dimension_numbers = #tpu.dot_dimension_numbers<[1], [0], [0], [1], [0, 0, 1, 1], [], []>} : vector<1x64xf32>, vector<64x192xf32>, vector<1x192xf32> -> vector<1x192xf32>
    %1241 = arith.addf %1240, %1101 : vector<1x192xf32>
    %1242 = vector.extract_strided_slice %1235 {offsets = [0, 0], sizes = [1, 64], strides = [1, 1]} : vector<1x192xf32> to vector<1x64xf32>
    %1243 = vector.extract_strided_slice %1239 {offsets = [0, 0], sizes = [1, 64], strides = [1, 1]} : vector<1x192xf32> to vector<1x64xf32>
    %1244 = arith.addf %1242, %1243 : vector<1x64xf32>
    %1245 = arith.negf %1244 : vector<1x64xf32>
    %1246 = math.exp %1245 : vector<1x64xf32>
    %cst_325 = arith.constant 1.000000e+00 : f32
    %1247 = vector.broadcast %cst_325 : f32 to vector<1x64xf32>
    %1248 = arith.addf %1247, %1246 : vector<1x64xf32>
    %1249 = arith.divf %1247, %1248 : vector<1x64xf32>
    %1250 = vector.extract_strided_slice %1235 {offsets = [0, 64], sizes = [1, 64], strides = [1, 1]} : vector<1x192xf32> to vector<1x64xf32>
    %1251 = vector.extract_strided_slice %1239 {offsets = [0, 64], sizes = [1, 64], strides = [1, 1]} : vector<1x192xf32> to vector<1x64xf32>
    %1252 = arith.addf %1250, %1251 : vector<1x64xf32>
    %1253 = arith.negf %1252 : vector<1x64xf32>
    %1254 = math.exp %1253 : vector<1x64xf32>
    %cst_326 = arith.constant 1.000000e+00 : f32
    %1255 = vector.broadcast %cst_326 : f32 to vector<1x64xf32>
    %1256 = arith.addf %1255, %1254 : vector<1x64xf32>
    %1257 = arith.divf %1255, %1256 : vector<1x64xf32>
    %1258 = vector.extract_strided_slice %1235 {offsets = [0, 128], sizes = [1, 64], strides = [1, 1]} : vector<1x192xf32> to vector<1x64xf32>
    %1259 = vector.extract_strided_slice %1239 {offsets = [0, 128], sizes = [1, 64], strides = [1, 1]} : vector<1x192xf32> to vector<1x64xf32>
    %1260 = arith.mulf %1249, %1259 : vector<1x64xf32>
    %1261 = arith.addf %1258, %1260 : vector<1x64xf32>
    %1262 = math.tanh %1261 : vector<1x64xf32>
    %cst_327 = arith.constant 1.000000e+00 : f32
    %1263 = vector.broadcast %cst_327 : f32 to vector<1x64xf32>
    %1264 = arith.subf %1263, %1257 : vector<1x64xf32>
    %1265 = arith.mulf %1264, %1262 : vector<1x64xf32>
    %1266 = arith.mulf %1257, %1202 : vector<1x64xf32>
    %1267 = arith.addf %1265, %1266 : vector<1x64xf32>
    %1268 = vector.extract_strided_slice %1237 {offsets = [0, 0], sizes = [1, 64], strides = [1, 1]} : vector<1x192xf32> to vector<1x64xf32>
    %1269 = vector.extract_strided_slice %1241 {offsets = [0, 0], sizes = [1, 64], strides = [1, 1]} : vector<1x192xf32> to vector<1x64xf32>
    %1270 = arith.addf %1268, %1269 : vector<1x64xf32>
    %1271 = arith.negf %1270 : vector<1x64xf32>
    %1272 = math.exp %1271 : vector<1x64xf32>
    %cst_328 = arith.constant 1.000000e+00 : f32
    %1273 = vector.broadcast %cst_328 : f32 to vector<1x64xf32>
    %1274 = arith.addf %1273, %1272 : vector<1x64xf32>
    %1275 = arith.divf %1273, %1274 : vector<1x64xf32>
    %1276 = vector.extract_strided_slice %1237 {offsets = [0, 64], sizes = [1, 64], strides = [1, 1]} : vector<1x192xf32> to vector<1x64xf32>
    %1277 = vector.extract_strided_slice %1241 {offsets = [0, 64], sizes = [1, 64], strides = [1, 1]} : vector<1x192xf32> to vector<1x64xf32>
    %1278 = arith.addf %1276, %1277 : vector<1x64xf32>
    %1279 = arith.negf %1278 : vector<1x64xf32>
    %1280 = math.exp %1279 : vector<1x64xf32>
    %cst_329 = arith.constant 1.000000e+00 : f32
    %1281 = vector.broadcast %cst_329 : f32 to vector<1x64xf32>
    %1282 = arith.addf %1281, %1280 : vector<1x64xf32>
    %1283 = arith.divf %1281, %1282 : vector<1x64xf32>
    %1284 = vector.extract_strided_slice %1237 {offsets = [0, 128], sizes = [1, 64], strides = [1, 1]} : vector<1x192xf32> to vector<1x64xf32>
    %1285 = vector.extract_strided_slice %1241 {offsets = [0, 128], sizes = [1, 64], strides = [1, 1]} : vector<1x192xf32> to vector<1x64xf32>
    %1286 = arith.mulf %1275, %1285 : vector<1x64xf32>
    %1287 = arith.addf %1284, %1286 : vector<1x64xf32>
    %1288 = math.tanh %1287 : vector<1x64xf32>
    %cst_330 = arith.constant 1.000000e+00 : f32
    %1289 = vector.broadcast %cst_330 : f32 to vector<1x64xf32>
    %1290 = arith.subf %1289, %1283 : vector<1x64xf32>
    %1291 = arith.mulf %1290, %1288 : vector<1x64xf32>
    %1292 = arith.mulf %1283, %1228 : vector<1x64xf32>
    %1293 = arith.addf %1291, %1292 : vector<1x64xf32>
    %1294 = arith.index_cast %c2_i32_319 : i32 to index
    %c0_331 = arith.constant 0 : index
    %1295 = vector.load %arg30[%1294, %c0_331] : memref<8x128xf32, #tpu.memory_space<vmem>>, vector<1x64xf32>
    tpu.vector_store %arg30[%1294, %c0_331], %1267 {strides = array<i32>} : memref<8x128xf32, #tpu.memory_space<vmem>>, vector<1x64xf32>,
    %1296 = arith.index_cast %1233 : i32 to index
    %c64_332 = arith.constant 64 : index
    %1297 = vector.load %arg30[%1296, %c64_332] : memref<8x128xf32, #tpu.memory_space<vmem>>, vector<1x64xf32>
    tpu.vector_store %arg30[%1296, %c64_332], %1293 {strides = array<i32>} : memref<8x128xf32, #tpu.memory_space<vmem>>, vector<1x64xf32>,
    %c3_i32_333 = arith.constant 3 : i32
    %c7_i32_334 = arith.constant 7 : i32
    %1298 = arith.subi %c7_i32_334, %c3_i32_333 : i32
    %1299 = arith.index_cast %c3_i32_333 : i32 to index
    %c0_335 = arith.constant 0 : index
    %1300 = vector.load %arg28[%1299, %c0_335] : memref<8x192xf32, #tpu.memory_space<vmem>>, vector<1x192xf32>
    %1301 = arith.index_cast %1298 : i32 to index
    %c0_336 = arith.constant 0 : index
    %1302 = vector.load %arg29[%1301, %c0_336] : memref<8x192xf32, #tpu.memory_space<vmem>>, vector<1x192xf32>
    %cst_337 = arith.constant dense<0.000000e+00> : vector<1x192xf32>
    %1303 = tpu.matmul %1267, %1098, %cst_337 {dimension_numbers = #tpu.dot_dimension_numbers<[1], [0], [0], [1], [0, 0, 1, 1], [], []>} : vector<1x64xf32>, vector<64x192xf32>, vector<1x192xf32> -> vector<1x192xf32>
    %1304 = arith.addf %1303, %1100 : vector<1x192xf32>
    %cst_338 = arith.constant dense<0.000000e+00> : vector<1x192xf32>
    %1305 = tpu.matmul %1293, %1099, %cst_338 {dimension_numbers = #tpu.dot_dimension_numbers<[1], [0], [0], [1], [0, 0, 1, 1], [], []>} : vector<1x64xf32>, vector<64x192xf32>, vector<1x192xf32> -> vector<1x192xf32>
    %1306 = arith.addf %1305, %1101 : vector<1x192xf32>
    %1307 = vector.extract_strided_slice %1300 {offsets = [0, 0], sizes = [1, 64], strides = [1, 1]} : vector<1x192xf32> to vector<1x64xf32>
    %1308 = vector.extract_strided_slice %1304 {offsets = [0, 0], sizes = [1, 64], strides = [1, 1]} : vector<1x192xf32> to vector<1x64xf32>
    %1309 = arith.addf %1307, %1308 : vector<1x64xf32>
    %1310 = arith.negf %1309 : vector<1x64xf32>
    %1311 = math.exp %1310 : vector<1x64xf32>
    %cst_339 = arith.constant 1.000000e+00 : f32
    %1312 = vector.broadcast %cst_339 : f32 to vector<1x64xf32>
    %1313 = arith.addf %1312, %1311 : vector<1x64xf32>
    %1314 = arith.divf %1312, %1313 : vector<1x64xf32>
    %1315 = vector.extract_strided_slice %1300 {offsets = [0, 64], sizes = [1, 64], strides = [1, 1]} : vector<1x192xf32> to vector<1x64xf32>
    %1316 = vector.extract_strided_slice %1304 {offsets = [0, 64], sizes = [1, 64], strides = [1, 1]} : vector<1x192xf32> to vector<1x64xf32>
    %1317 = arith.addf %1315, %1316 : vector<1x64xf32>
    %1318 = arith.negf %1317 : vector<1x64xf32>
    %1319 = math.exp %1318 : vector<1x64xf32>
    %cst_340 = arith.constant 1.000000e+00 : f32
    %1320 = vector.broadcast %cst_340 : f32 to vector<1x64xf32>
    %1321 = arith.addf %1320, %1319 : vector<1x64xf32>
    %1322 = arith.divf %1320, %1321 : vector<1x64xf32>
    %1323 = vector.extract_strided_slice %1300 {offsets = [0, 128], sizes = [1, 64], strides = [1, 1]} : vector<1x192xf32> to vector<1x64xf32>
    %1324 = vector.extract_strided_slice %1304 {offsets = [0, 128], sizes = [1, 64], strides = [1, 1]} : vector<1x192xf32> to vector<1x64xf32>
    %1325 = arith.mulf %1314, %1324 : vector<1x64xf32>
    %1326 = arith.addf %1323, %1325 : vector<1x64xf32>
    %1327 = math.tanh %1326 : vector<1x64xf32>
    %cst_341 = arith.constant 1.000000e+00 : f32
    %1328 = vector.broadcast %cst_341 : f32 to vector<1x64xf32>
    %1329 = arith.subf %1328, %1322 : vector<1x64xf32>
    %1330 = arith.mulf %1329, %1327 : vector<1x64xf32>
    %1331 = arith.mulf %1322, %1267 : vector<1x64xf32>
    %1332 = arith.addf %1330, %1331 : vector<1x64xf32>
    %1333 = vector.extract_strided_slice %1302 {offsets = [0, 0], sizes = [1, 64], strides = [1, 1]} : vector<1x192xf32> to vector<1x64xf32>
    %1334 = vector.extract_strided_slice %1306 {offsets = [0, 0], sizes = [1, 64], strides = [1, 1]} : vector<1x192xf32> to vector<1x64xf32>
    %1335 = arith.addf %1333, %1334 : vector<1x64xf32>
    %1336 = arith.negf %1335 : vector<1x64xf32>
    %1337 = math.exp %1336 : vector<1x64xf32>
    %cst_342 = arith.constant 1.000000e+00 : f32
    %1338 = vector.broadcast %cst_342 : f32 to vector<1x64xf32>
    %1339 = arith.addf %1338, %1337 : vector<1x64xf32>
    %1340 = arith.divf %1338, %1339 : vector<1x64xf32>
    %1341 = vector.extract_strided_slice %1302 {offsets = [0, 64], sizes = [1, 64], strides = [1, 1]} : vector<1x192xf32> to vector<1x64xf32>
    %1342 = vector.extract_strided_slice %1306 {offsets = [0, 64], sizes = [1, 64], strides = [1, 1]} : vector<1x192xf32> to vector<1x64xf32>
    %1343 = arith.addf %1341, %1342 : vector<1x64xf32>
    %1344 = arith.negf %1343 : vector<1x64xf32>
    %1345 = math.exp %1344 : vector<1x64xf32>
    %cst_343 = arith.constant 1.000000e+00 : f32
    %1346 = vector.broadcast %cst_343 : f32 to vector<1x64xf32>
    %1347 = arith.addf %1346, %1345 : vector<1x64xf32>
    %1348 = arith.divf %1346, %1347 : vector<1x64xf32>
    %1349 = vector.extract_strided_slice %1302 {offsets = [0, 128], sizes = [1, 64], strides = [1, 1]} : vector<1x192xf32> to vector<1x64xf32>
    %1350 = vector.extract_strided_slice %1306 {offsets = [0, 128], sizes = [1, 64], strides = [1, 1]} : vector<1x192xf32> to vector<1x64xf32>
    %1351 = arith.mulf %1340, %1350 : vector<1x64xf32>
    %1352 = arith.addf %1349, %1351 : vector<1x64xf32>
    %1353 = math.tanh %1352 : vector<1x64xf32>
    %cst_344 = arith.constant 1.000000e+00 : f32
    %1354 = vector.broadcast %cst_344 : f32 to vector<1x64xf32>
    %1355 = arith.subf %1354, %1348 : vector<1x64xf32>
    %1356 = arith.mulf %1355, %1353 : vector<1x64xf32>
    %1357 = arith.mulf %1348, %1293 : vector<1x64xf32>
    %1358 = arith.addf %1356, %1357 : vector<1x64xf32>
    %1359 = arith.index_cast %c3_i32_333 : i32 to index
    %c0_345 = arith.constant 0 : index
    %1360 = vector.load %arg30[%1359, %c0_345] : memref<8x128xf32, #tpu.memory_space<vmem>>, vector<1x64xf32>
    tpu.vector_store %arg30[%1359, %c0_345], %1332 {strides = array<i32>} : memref<8x128xf32, #tpu.memory_space<vmem>>, vector<1x64xf32>,
    %1361 = arith.index_cast %1298 : i32 to index
    %c64_346 = arith.constant 64 : index
    %1362 = vector.load %arg30[%1361, %c64_346] : memref<8x128xf32, #tpu.memory_space<vmem>>, vector<1x64xf32>
    tpu.vector_store %arg30[%1361, %c64_346], %1358 {strides = array<i32>} : memref<8x128xf32, #tpu.memory_space<vmem>>, vector<1x64xf32>,
    %c4_i32_347 = arith.constant 4 : i32
    %c7_i32_348 = arith.constant 7 : i32
    %1363 = arith.subi %c7_i32_348, %c4_i32_347 : i32
    %1364 = arith.index_cast %c4_i32_347 : i32 to index
    %c0_349 = arith.constant 0 : index
    %1365 = vector.load %arg28[%1364, %c0_349] : memref<8x192xf32, #tpu.memory_space<vmem>>, vector<1x192xf32>
    %1366 = arith.index_cast %1363 : i32 to index
    %c0_350 = arith.constant 0 : index
    %1367 = vector.load %arg29[%1366, %c0_350] : memref<8x192xf32, #tpu.memory_space<vmem>>, vector<1x192xf32>
    %cst_351 = arith.constant dense<0.000000e+00> : vector<1x192xf32>
    %1368 = tpu.matmul %1332, %1098, %cst_351 {dimension_numbers = #tpu.dot_dimension_numbers<[1], [0], [0], [1], [0, 0, 1, 1], [], []>} : vector<1x64xf32>, vector<64x192xf32>, vector<1x192xf32> -> vector<1x192xf32>
    %1369 = arith.addf %1368, %1100 : vector<1x192xf32>
    %cst_352 = arith.constant dense<0.000000e+00> : vector<1x192xf32>
    %1370 = tpu.matmul %1358, %1099, %cst_352 {dimension_numbers = #tpu.dot_dimension_numbers<[1], [0], [0], [1], [0, 0, 1, 1], [], []>} : vector<1x64xf32>, vector<64x192xf32>, vector<1x192xf32> -> vector<1x192xf32>
    %1371 = arith.addf %1370, %1101 : vector<1x192xf32>
    %1372 = vector.extract_strided_slice %1365 {offsets = [0, 0], sizes = [1, 64], strides = [1, 1]} : vector<1x192xf32> to vector<1x64xf32>
    %1373 = vector.extract_strided_slice %1369 {offsets = [0, 0], sizes = [1, 64], strides = [1, 1]} : vector<1x192xf32> to vector<1x64xf32>
    %1374 = arith.addf %1372, %1373 : vector<1x64xf32>
    %1375 = arith.negf %1374 : vector<1x64xf32>
    %1376 = math.exp %1375 : vector<1x64xf32>
    %cst_353 = arith.constant 1.000000e+00 : f32
    %1377 = vector.broadcast %cst_353 : f32 to vector<1x64xf32>
    %1378 = arith.addf %1377, %1376 : vector<1x64xf32>
    %1379 = arith.divf %1377, %1378 : vector<1x64xf32>
    %1380 = vector.extract_strided_slice %1365 {offsets = [0, 64], sizes = [1, 64], strides = [1, 1]} : vector<1x192xf32> to vector<1x64xf32>
    %1381 = vector.extract_strided_slice %1369 {offsets = [0, 64], sizes = [1, 64], strides = [1, 1]} : vector<1x192xf32> to vector<1x64xf32>
    %1382 = arith.addf %1380, %1381 : vector<1x64xf32>
    %1383 = arith.negf %1382 : vector<1x64xf32>
    %1384 = math.exp %1383 : vector<1x64xf32>
    %cst_354 = arith.constant 1.000000e+00 : f32
    %1385 = vector.broadcast %cst_354 : f32 to vector<1x64xf32>
    %1386 = arith.addf %1385, %1384 : vector<1x64xf32>
    %1387 = arith.divf %1385, %1386 : vector<1x64xf32>
    %1388 = vector.extract_strided_slice %1365 {offsets = [0, 128], sizes = [1, 64], strides = [1, 1]} : vector<1x192xf32> to vector<1x64xf32>
    %1389 = vector.extract_strided_slice %1369 {offsets = [0, 128], sizes = [1, 64], strides = [1, 1]} : vector<1x192xf32> to vector<1x64xf32>
    %1390 = arith.mulf %1379, %1389 : vector<1x64xf32>
    %1391 = arith.addf %1388, %1390 : vector<1x64xf32>
    %1392 = math.tanh %1391 : vector<1x64xf32>
    %cst_355 = arith.constant 1.000000e+00 : f32
    %1393 = vector.broadcast %cst_355 : f32 to vector<1x64xf32>
    %1394 = arith.subf %1393, %1387 : vector<1x64xf32>
    %1395 = arith.mulf %1394, %1392 : vector<1x64xf32>
    %1396 = arith.mulf %1387, %1332 : vector<1x64xf32>
    %1397 = arith.addf %1395, %1396 : vector<1x64xf32>
    %1398 = vector.extract_strided_slice %1367 {offsets = [0, 0], sizes = [1, 64], strides = [1, 1]} : vector<1x192xf32> to vector<1x64xf32>
    %1399 = vector.extract_strided_slice %1371 {offsets = [0, 0], sizes = [1, 64], strides = [1, 1]} : vector<1x192xf32> to vector<1x64xf32>
    %1400 = arith.addf %1398, %1399 : vector<1x64xf32>
    %1401 = arith.negf %1400 : vector<1x64xf32>
    %1402 = math.exp %1401 : vector<1x64xf32>
    %cst_356 = arith.constant 1.000000e+00 : f32
    %1403 = vector.broadcast %cst_356 : f32 to vector<1x64xf32>
    %1404 = arith.addf %1403, %1402 : vector<1x64xf32>
    %1405 = arith.divf %1403, %1404 : vector<1x64xf32>
    %1406 = vector.extract_strided_slice %1367 {offsets = [0, 64], sizes = [1, 64], strides = [1, 1]} : vector<1x192xf32> to vector<1x64xf32>
    %1407 = vector.extract_strided_slice %1371 {offsets = [0, 64], sizes = [1, 64], strides = [1, 1]} : vector<1x192xf32> to vector<1x64xf32>
    %1408 = arith.addf %1406, %1407 : vector<1x64xf32>
    %1409 = arith.negf %1408 : vector<1x64xf32>
    %1410 = math.exp %1409 : vector<1x64xf32>
    %cst_357 = arith.constant 1.000000e+00 : f32
    %1411 = vector.broadcast %cst_357 : f32 to vector<1x64xf32>
    %1412 = arith.addf %1411, %1410 : vector<1x64xf32>
    %1413 = arith.divf %1411, %1412 : vector<1x64xf32>
    %1414 = vector.extract_strided_slice %1367 {offsets = [0, 128], sizes = [1, 64], strides = [1, 1]} : vector<1x192xf32> to vector<1x64xf32>
    %1415 = vector.extract_strided_slice %1371 {offsets = [0, 128], sizes = [1, 64], strides = [1, 1]} : vector<1x192xf32> to vector<1x64xf32>
    %1416 = arith.mulf %1405, %1415 : vector<1x64xf32>
    %1417 = arith.addf %1414, %1416 : vector<1x64xf32>
    %1418 = math.tanh %1417 : vector<1x64xf32>
    %cst_358 = arith.constant 1.000000e+00 : f32
    %1419 = vector.broadcast %cst_358 : f32 to vector<1x64xf32>
    %1420 = arith.subf %1419, %1413 : vector<1x64xf32>
    %1421 = arith.mulf %1420, %1418 : vector<1x64xf32>
    %1422 = arith.mulf %1413, %1358 : vector<1x64xf32>
    %1423 = arith.addf %1421, %1422 : vector<1x64xf32>
    %1424 = arith.index_cast %c4_i32_347 : i32 to index
    %c0_359 = arith.constant 0 : index
    %1425 = vector.load %arg30[%1424, %c0_359] : memref<8x128xf32, #tpu.memory_space<vmem>>, vector<1x64xf32>
    tpu.vector_store %arg30[%1424, %c0_359], %1397 {strides = array<i32>} : memref<8x128xf32, #tpu.memory_space<vmem>>, vector<1x64xf32>,
    %1426 = arith.index_cast %1363 : i32 to index
    %c64_360 = arith.constant 64 : index
    %1427 = vector.load %arg30[%1426, %c64_360] : memref<8x128xf32, #tpu.memory_space<vmem>>, vector<1x64xf32>
    tpu.vector_store %arg30[%1426, %c64_360], %1423 {strides = array<i32>} : memref<8x128xf32, #tpu.memory_space<vmem>>, vector<1x64xf32>,
    %c5_i32_361 = arith.constant 5 : i32
    %c7_i32_362 = arith.constant 7 : i32
    %1428 = arith.subi %c7_i32_362, %c5_i32_361 : i32
    %1429 = arith.index_cast %c5_i32_361 : i32 to index
    %c0_363 = arith.constant 0 : index
    %1430 = vector.load %arg28[%1429, %c0_363] : memref<8x192xf32, #tpu.memory_space<vmem>>, vector<1x192xf32>
    %1431 = arith.index_cast %1428 : i32 to index
    %c0_364 = arith.constant 0 : index
    %1432 = vector.load %arg29[%1431, %c0_364] : memref<8x192xf32, #tpu.memory_space<vmem>>, vector<1x192xf32>
    %cst_365 = arith.constant dense<0.000000e+00> : vector<1x192xf32>
    %1433 = tpu.matmul %1397, %1098, %cst_365 {dimension_numbers = #tpu.dot_dimension_numbers<[1], [0], [0], [1], [0, 0, 1, 1], [], []>} : vector<1x64xf32>, vector<64x192xf32>, vector<1x192xf32> -> vector<1x192xf32>
    %1434 = arith.addf %1433, %1100 : vector<1x192xf32>
    %cst_366 = arith.constant dense<0.000000e+00> : vector<1x192xf32>
    %1435 = tpu.matmul %1423, %1099, %cst_366 {dimension_numbers = #tpu.dot_dimension_numbers<[1], [0], [0], [1], [0, 0, 1, 1], [], []>} : vector<1x64xf32>, vector<64x192xf32>, vector<1x192xf32> -> vector<1x192xf32>
    %1436 = arith.addf %1435, %1101 : vector<1x192xf32>
    %1437 = vector.extract_strided_slice %1430 {offsets = [0, 0], sizes = [1, 64], strides = [1, 1]} : vector<1x192xf32> to vector<1x64xf32>
    %1438 = vector.extract_strided_slice %1434 {offsets = [0, 0], sizes = [1, 64], strides = [1, 1]} : vector<1x192xf32> to vector<1x64xf32>
    %1439 = arith.addf %1437, %1438 : vector<1x64xf32>
    %1440 = arith.negf %1439 : vector<1x64xf32>
    %1441 = math.exp %1440 : vector<1x64xf32>
    %cst_367 = arith.constant 1.000000e+00 : f32
    %1442 = vector.broadcast %cst_367 : f32 to vector<1x64xf32>
    %1443 = arith.addf %1442, %1441 : vector<1x64xf32>
    %1444 = arith.divf %1442, %1443 : vector<1x64xf32>
    %1445 = vector.extract_strided_slice %1430 {offsets = [0, 64], sizes = [1, 64], strides = [1, 1]} : vector<1x192xf32> to vector<1x64xf32>
    %1446 = vector.extract_strided_slice %1434 {offsets = [0, 64], sizes = [1, 64], strides = [1, 1]} : vector<1x192xf32> to vector<1x64xf32>
    %1447 = arith.addf %1445, %1446 : vector<1x64xf32>
    %1448 = arith.negf %1447 : vector<1x64xf32>
    %1449 = math.exp %1448 : vector<1x64xf32>
    %cst_368 = arith.constant 1.000000e+00 : f32
    %1450 = vector.broadcast %cst_368 : f32 to vector<1x64xf32>
    %1451 = arith.addf %1450, %1449 : vector<1x64xf32>
    %1452 = arith.divf %1450, %1451 : vector<1x64xf32>
    %1453 = vector.extract_strided_slice %1430 {offsets = [0, 128], sizes = [1, 64], strides = [1, 1]} : vector<1x192xf32> to vector<1x64xf32>
    %1454 = vector.extract_strided_slice %1434 {offsets = [0, 128], sizes = [1, 64], strides = [1, 1]} : vector<1x192xf32> to vector<1x64xf32>
    %1455 = arith.mulf %1444, %1454 : vector<1x64xf32>
    %1456 = arith.addf %1453, %1455 : vector<1x64xf32>
    %1457 = math.tanh %1456 : vector<1x64xf32>
    %cst_369 = arith.constant 1.000000e+00 : f32
    %1458 = vector.broadcast %cst_369 : f32 to vector<1x64xf32>
    %1459 = arith.subf %1458, %1452 : vector<1x64xf32>
    %1460 = arith.mulf %1459, %1457 : vector<1x64xf32>
    %1461 = arith.mulf %1452, %1397 : vector<1x64xf32>
    %1462 = arith.addf %1460, %1461 : vector<1x64xf32>
    %1463 = vector.extract_strided_slice %1432 {offsets = [0, 0], sizes = [1, 64], strides = [1, 1]} : vector<1x192xf32> to vector<1x64xf32>
    %1464 = vector.extract_strided_slice %1436 {offsets = [0, 0], sizes = [1, 64], strides = [1, 1]} : vector<1x192xf32> to vector<1x64xf32>
    %1465 = arith.addf %1463, %1464 : vector<1x64xf32>
    %1466 = arith.negf %1465 : vector<1x64xf32>
    %1467 = math.exp %1466 : vector<1x64xf32>
    %cst_370 = arith.constant 1.000000e+00 : f32
    %1468 = vector.broadcast %cst_370 : f32 to vector<1x64xf32>
    %1469 = arith.addf %1468, %1467 : vector<1x64xf32>
    %1470 = arith.divf %1468, %1469 : vector<1x64xf32>
    %1471 = vector.extract_strided_slice %1432 {offsets = [0, 64], sizes = [1, 64], strides = [1, 1]} : vector<1x192xf32> to vector<1x64xf32>
    %1472 = vector.extract_strided_slice %1436 {offsets = [0, 64], sizes = [1, 64], strides = [1, 1]} : vector<1x192xf32> to vector<1x64xf32>
    %1473 = arith.addf %1471, %1472 : vector<1x64xf32>
    %1474 = arith.negf %1473 : vector<1x64xf32>
    %1475 = math.exp %1474 : vector<1x64xf32>
    %cst_371 = arith.constant 1.000000e+00 : f32
    %1476 = vector.broadcast %cst_371 : f32 to vector<1x64xf32>
    %1477 = arith.addf %1476, %1475 : vector<1x64xf32>
    %1478 = arith.divf %1476, %1477 : vector<1x64xf32>
    %1479 = vector.extract_strided_slice %1432 {offsets = [0, 128], sizes = [1, 64], strides = [1, 1]} : vector<1x192xf32> to vector<1x64xf32>
    %1480 = vector.extract_strided_slice %1436 {offsets = [0, 128], sizes = [1, 64], strides = [1, 1]} : vector<1x192xf32> to vector<1x64xf32>
    %1481 = arith.mulf %1470, %1480 : vector<1x64xf32>
    %1482 = arith.addf %1479, %1481 : vector<1x64xf32>
    %1483 = math.tanh %1482 : vector<1x64xf32>
    %cst_372 = arith.constant 1.000000e+00 : f32
    %1484 = vector.broadcast %cst_372 : f32 to vector<1x64xf32>
    %1485 = arith.subf %1484, %1478 : vector<1x64xf32>
    %1486 = arith.mulf %1485, %1483 : vector<1x64xf32>
    %1487 = arith.mulf %1478, %1423 : vector<1x64xf32>
    %1488 = arith.addf %1486, %1487 : vector<1x64xf32>
    %1489 = arith.index_cast %c5_i32_361 : i32 to index
    %c0_373 = arith.constant 0 : index
    %1490 = vector.load %arg30[%1489, %c0_373] : memref<8x128xf32, #tpu.memory_space<vmem>>, vector<1x64xf32>
    tpu.vector_store %arg30[%1489, %c0_373], %1462 {strides = array<i32>} : memref<8x128xf32, #tpu.memory_space<vmem>>, vector<1x64xf32>,
    %1491 = arith.index_cast %1428 : i32 to index
    %c64_374 = arith.constant 64 : index
    %1492 = vector.load %arg30[%1491, %c64_374] : memref<8x128xf32, #tpu.memory_space<vmem>>, vector<1x64xf32>
    tpu.vector_store %arg30[%1491, %c64_374], %1488 {strides = array<i32>} : memref<8x128xf32, #tpu.memory_space<vmem>>, vector<1x64xf32>,
    %c6_i32_375 = arith.constant 6 : i32
    %c7_i32_376 = arith.constant 7 : i32
    %1493 = arith.subi %c7_i32_376, %c6_i32_375 : i32
    %1494 = arith.index_cast %c6_i32_375 : i32 to index
    %c0_377 = arith.constant 0 : index
    %1495 = vector.load %arg28[%1494, %c0_377] : memref<8x192xf32, #tpu.memory_space<vmem>>, vector<1x192xf32>
    %1496 = arith.index_cast %1493 : i32 to index
    %c0_378 = arith.constant 0 : index
    %1497 = vector.load %arg29[%1496, %c0_378] : memref<8x192xf32, #tpu.memory_space<vmem>>, vector<1x192xf32>
    %cst_379 = arith.constant dense<0.000000e+00> : vector<1x192xf32>
    %1498 = tpu.matmul %1462, %1098, %cst_379 {dimension_numbers = #tpu.dot_dimension_numbers<[1], [0], [0], [1], [0, 0, 1, 1], [], []>} : vector<1x64xf32>, vector<64x192xf32>, vector<1x192xf32> -> vector<1x192xf32>
    %1499 = arith.addf %1498, %1100 : vector<1x192xf32>
    %cst_380 = arith.constant dense<0.000000e+00> : vector<1x192xf32>
    %1500 = tpu.matmul %1488, %1099, %cst_380 {dimension_numbers = #tpu.dot_dimension_numbers<[1], [0], [0], [1], [0, 0, 1, 1], [], []>} : vector<1x64xf32>, vector<64x192xf32>, vector<1x192xf32> -> vector<1x192xf32>
    %1501 = arith.addf %1500, %1101 : vector<1x192xf32>
    %1502 = vector.extract_strided_slice %1495 {offsets = [0, 0], sizes = [1, 64], strides = [1, 1]} : vector<1x192xf32> to vector<1x64xf32>
    %1503 = vector.extract_strided_slice %1499 {offsets = [0, 0], sizes = [1, 64], strides = [1, 1]} : vector<1x192xf32> to vector<1x64xf32>
    %1504 = arith.addf %1502, %1503 : vector<1x64xf32>
    %1505 = arith.negf %1504 : vector<1x64xf32>
    %1506 = math.exp %1505 : vector<1x64xf32>
    %cst_381 = arith.constant 1.000000e+00 : f32
    %1507 = vector.broadcast %cst_381 : f32 to vector<1x64xf32>
    %1508 = arith.addf %1507, %1506 : vector<1x64xf32>
    %1509 = arith.divf %1507, %1508 : vector<1x64xf32>
    %1510 = vector.extract_strided_slice %1495 {offsets = [0, 64], sizes = [1, 64], strides = [1, 1]} : vector<1x192xf32> to vector<1x64xf32>
    %1511 = vector.extract_strided_slice %1499 {offsets = [0, 64], sizes = [1, 64], strides = [1, 1]} : vector<1x192xf32> to vector<1x64xf32>
    %1512 = arith.addf %1510, %1511 : vector<1x64xf32>
    %1513 = arith.negf %1512 : vector<1x64xf32>
    %1514 = math.exp %1513 : vector<1x64xf32>
    %cst_382 = arith.constant 1.000000e+00 : f32
    %1515 = vector.broadcast %cst_382 : f32 to vector<1x64xf32>
    %1516 = arith.addf %1515, %1514 : vector<1x64xf32>
    %1517 = arith.divf %1515, %1516 : vector<1x64xf32>
    %1518 = vector.extract_strided_slice %1495 {offsets = [0, 128], sizes = [1, 64], strides = [1, 1]} : vector<1x192xf32> to vector<1x64xf32>
    %1519 = vector.extract_strided_slice %1499 {offsets = [0, 128], sizes = [1, 64], strides = [1, 1]} : vector<1x192xf32> to vector<1x64xf32>
    %1520 = arith.mulf %1509, %1519 : vector<1x64xf32>
    %1521 = arith.addf %1518, %1520 : vector<1x64xf32>
    %1522 = math.tanh %1521 : vector<1x64xf32>
    %cst_383 = arith.constant 1.000000e+00 : f32
    %1523 = vector.broadcast %cst_383 : f32 to vector<1x64xf32>
    %1524 = arith.subf %1523, %1517 : vector<1x64xf32>
    %1525 = arith.mulf %1524, %1522 : vector<1x64xf32>
    %1526 = arith.mulf %1517, %1462 : vector<1x64xf32>
    %1527 = arith.addf %1525, %1526 : vector<1x64xf32>
    %1528 = vector.extract_strided_slice %1497 {offsets = [0, 0], sizes = [1, 64], strides = [1, 1]} : vector<1x192xf32> to vector<1x64xf32>
    %1529 = vector.extract_strided_slice %1501 {offsets = [0, 0], sizes = [1, 64], strides = [1, 1]} : vector<1x192xf32> to vector<1x64xf32>
    %1530 = arith.addf %1528, %1529 : vector<1x64xf32>
    %1531 = arith.negf %1530 : vector<1x64xf32>
    %1532 = math.exp %1531 : vector<1x64xf32>
    %cst_384 = arith.constant 1.000000e+00 : f32
    %1533 = vector.broadcast %cst_384 : f32 to vector<1x64xf32>
    %1534 = arith.addf %1533, %1532 : vector<1x64xf32>
    %1535 = arith.divf %1533, %1534 : vector<1x64xf32>
    %1536 = vector.extract_strided_slice %1497 {offsets = [0, 64], sizes = [1, 64], strides = [1, 1]} : vector<1x192xf32> to vector<1x64xf32>
    %1537 = vector.extract_strided_slice %1501 {offsets = [0, 64], sizes = [1, 64], strides = [1, 1]} : vector<1x192xf32> to vector<1x64xf32>
    %1538 = arith.addf %1536, %1537 : vector<1x64xf32>
    %1539 = arith.negf %1538 : vector<1x64xf32>
    %1540 = math.exp %1539 : vector<1x64xf32>
    %cst_385 = arith.constant 1.000000e+00 : f32
    %1541 = vector.broadcast %cst_385 : f32 to vector<1x64xf32>
    %1542 = arith.addf %1541, %1540 : vector<1x64xf32>
    %1543 = arith.divf %1541, %1542 : vector<1x64xf32>
    %1544 = vector.extract_strided_slice %1497 {offsets = [0, 128], sizes = [1, 64], strides = [1, 1]} : vector<1x192xf32> to vector<1x64xf32>
    %1545 = vector.extract_strided_slice %1501 {offsets = [0, 128], sizes = [1, 64], strides = [1, 1]} : vector<1x192xf32> to vector<1x64xf32>
    %1546 = arith.mulf %1535, %1545 : vector<1x64xf32>
    %1547 = arith.addf %1544, %1546 : vector<1x64xf32>
    %1548 = math.tanh %1547 : vector<1x64xf32>
    %cst_386 = arith.constant 1.000000e+00 : f32
    %1549 = vector.broadcast %cst_386 : f32 to vector<1x64xf32>
    %1550 = arith.subf %1549, %1543 : vector<1x64xf32>
    %1551 = arith.mulf %1550, %1548 : vector<1x64xf32>
    %1552 = arith.mulf %1543, %1488 : vector<1x64xf32>
    %1553 = arith.addf %1551, %1552 : vector<1x64xf32>
    %1554 = arith.index_cast %c6_i32_375 : i32 to index
    %c0_387 = arith.constant 0 : index
    %1555 = vector.load %arg30[%1554, %c0_387] : memref<8x128xf32, #tpu.memory_space<vmem>>, vector<1x64xf32>
    tpu.vector_store %arg30[%1554, %c0_387], %1527 {strides = array<i32>} : memref<8x128xf32, #tpu.memory_space<vmem>>, vector<1x64xf32>,
    %1556 = arith.index_cast %1493 : i32 to index
    %c64_388 = arith.constant 64 : index
    %1557 = vector.load %arg30[%1556, %c64_388] : memref<8x128xf32, #tpu.memory_space<vmem>>, vector<1x64xf32>
    tpu.vector_store %arg30[%1556, %c64_388], %1553 {strides = array<i32>} : memref<8x128xf32, #tpu.memory_space<vmem>>, vector<1x64xf32>,
    %c7_i32_389 = arith.constant 7 : i32
    %c7_i32_390 = arith.constant 7 : i32
    %1558 = arith.subi %c7_i32_390, %c7_i32_389 : i32
    %1559 = arith.index_cast %c7_i32_389 : i32 to index
    %c0_391 = arith.constant 0 : index
    %1560 = vector.load %arg28[%1559, %c0_391] : memref<8x192xf32, #tpu.memory_space<vmem>>, vector<1x192xf32>
    %1561 = arith.index_cast %1558 : i32 to index
    %c0_392 = arith.constant 0 : index
    %1562 = vector.load %arg29[%1561, %c0_392] : memref<8x192xf32, #tpu.memory_space<vmem>>, vector<1x192xf32>
    %cst_393 = arith.constant dense<0.000000e+00> : vector<1x192xf32>
    %1563 = tpu.matmul %1527, %1098, %cst_393 {dimension_numbers = #tpu.dot_dimension_numbers<[1], [0], [0], [1], [0, 0, 1, 1], [], []>} : vector<1x64xf32>, vector<64x192xf32>, vector<1x192xf32> -> vector<1x192xf32>
    %1564 = arith.addf %1563, %1100 : vector<1x192xf32>
    %cst_394 = arith.constant dense<0.000000e+00> : vector<1x192xf32>
    %1565 = tpu.matmul %1553, %1099, %cst_394 {dimension_numbers = #tpu.dot_dimension_numbers<[1], [0], [0], [1], [0, 0, 1, 1], [], []>} : vector<1x64xf32>, vector<64x192xf32>, vector<1x192xf32> -> vector<1x192xf32>
    %1566 = arith.addf %1565, %1101 : vector<1x192xf32>
    %1567 = vector.extract_strided_slice %1560 {offsets = [0, 0], sizes = [1, 64], strides = [1, 1]} : vector<1x192xf32> to vector<1x64xf32>
    %1568 = vector.extract_strided_slice %1564 {offsets = [0, 0], sizes = [1, 64], strides = [1, 1]} : vector<1x192xf32> to vector<1x64xf32>
    %1569 = arith.addf %1567, %1568 : vector<1x64xf32>
    %1570 = arith.negf %1569 : vector<1x64xf32>
    %1571 = math.exp %1570 : vector<1x64xf32>
    %cst_395 = arith.constant 1.000000e+00 : f32
    %1572 = vector.broadcast %cst_395 : f32 to vector<1x64xf32>
    %1573 = arith.addf %1572, %1571 : vector<1x64xf32>
    %1574 = arith.divf %1572, %1573 : vector<1x64xf32>
    %1575 = vector.extract_strided_slice %1560 {offsets = [0, 64], sizes = [1, 64], strides = [1, 1]} : vector<1x192xf32> to vector<1x64xf32>
    %1576 = vector.extract_strided_slice %1564 {offsets = [0, 64], sizes = [1, 64], strides = [1, 1]} : vector<1x192xf32> to vector<1x64xf32>
    %1577 = arith.addf %1575, %1576 : vector<1x64xf32>
    %1578 = arith.negf %1577 : vector<1x64xf32>
    %1579 = math.exp %1578 : vector<1x64xf32>
    %cst_396 = arith.constant 1.000000e+00 : f32
    %1580 = vector.broadcast %cst_396 : f32 to vector<1x64xf32>
    %1581 = arith.addf %1580, %1579 : vector<1x64xf32>
    %1582 = arith.divf %1580, %1581 : vector<1x64xf32>
    %1583 = vector.extract_strided_slice %1560 {offsets = [0, 128], sizes = [1, 64], strides = [1, 1]} : vector<1x192xf32> to vector<1x64xf32>
    %1584 = vector.extract_strided_slice %1564 {offsets = [0, 128], sizes = [1, 64], strides = [1, 1]} : vector<1x192xf32> to vector<1x64xf32>
    %1585 = arith.mulf %1574, %1584 : vector<1x64xf32>
    %1586 = arith.addf %1583, %1585 : vector<1x64xf32>
    %1587 = math.tanh %1586 : vector<1x64xf32>
    %cst_397 = arith.constant 1.000000e+00 : f32
    %1588 = vector.broadcast %cst_397 : f32 to vector<1x64xf32>
    %1589 = arith.subf %1588, %1582 : vector<1x64xf32>
    %1590 = arith.mulf %1589, %1587 : vector<1x64xf32>
    %1591 = arith.mulf %1582, %1527 : vector<1x64xf32>
    %1592 = arith.addf %1590, %1591 : vector<1x64xf32>
    %1593 = vector.extract_strided_slice %1562 {offsets = [0, 0], sizes = [1, 64], strides = [1, 1]} : vector<1x192xf32> to vector<1x64xf32>
    %1594 = vector.extract_strided_slice %1566 {offsets = [0, 0], sizes = [1, 64], strides = [1, 1]} : vector<1x192xf32> to vector<1x64xf32>
    %1595 = arith.addf %1593, %1594 : vector<1x64xf32>
    %1596 = arith.negf %1595 : vector<1x64xf32>
    %1597 = math.exp %1596 : vector<1x64xf32>
    %cst_398 = arith.constant 1.000000e+00 : f32
    %1598 = vector.broadcast %cst_398 : f32 to vector<1x64xf32>
    %1599 = arith.addf %1598, %1597 : vector<1x64xf32>
    %1600 = arith.divf %1598, %1599 : vector<1x64xf32>
    %1601 = vector.extract_strided_slice %1562 {offsets = [0, 64], sizes = [1, 64], strides = [1, 1]} : vector<1x192xf32> to vector<1x64xf32>
    %1602 = vector.extract_strided_slice %1566 {offsets = [0, 64], sizes = [1, 64], strides = [1, 1]} : vector<1x192xf32> to vector<1x64xf32>
    %1603 = arith.addf %1601, %1602 : vector<1x64xf32>
    %1604 = arith.negf %1603 : vector<1x64xf32>
    %1605 = math.exp %1604 : vector<1x64xf32>
    %cst_399 = arith.constant 1.000000e+00 : f32
    %1606 = vector.broadcast %cst_399 : f32 to vector<1x64xf32>
    %1607 = arith.addf %1606, %1605 : vector<1x64xf32>
    %1608 = arith.divf %1606, %1607 : vector<1x64xf32>
    %1609 = vector.extract_strided_slice %1562 {offsets = [0, 128], sizes = [1, 64], strides = [1, 1]} : vector<1x192xf32> to vector<1x64xf32>
    %1610 = vector.extract_strided_slice %1566 {offsets = [0, 128], sizes = [1, 64], strides = [1, 1]} : vector<1x192xf32> to vector<1x64xf32>
    %1611 = arith.mulf %1600, %1610 : vector<1x64xf32>
    %1612 = arith.addf %1609, %1611 : vector<1x64xf32>
    %1613 = math.tanh %1612 : vector<1x64xf32>
    %cst_400 = arith.constant 1.000000e+00 : f32
    %1614 = vector.broadcast %cst_400 : f32 to vector<1x64xf32>
    %1615 = arith.subf %1614, %1608 : vector<1x64xf32>
    %1616 = arith.mulf %1615, %1613 : vector<1x64xf32>
    %1617 = arith.mulf %1608, %1553 : vector<1x64xf32>
    %1618 = arith.addf %1616, %1617 : vector<1x64xf32>
    %1619 = arith.index_cast %c7_i32_389 : i32 to index
    %c0_401 = arith.constant 0 : index
    %1620 = vector.load %arg30[%1619, %c0_401] : memref<8x128xf32, #tpu.memory_space<vmem>>, vector<1x64xf32>
    tpu.vector_store %arg30[%1619, %c0_401], %1592 {strides = array<i32>} : memref<8x128xf32, #tpu.memory_space<vmem>>, vector<1x64xf32>,
    %1621 = arith.index_cast %1558 : i32 to index
    %c64_402 = arith.constant 64 : index
    %1622 = vector.load %arg30[%1621, %c64_402] : memref<8x128xf32, #tpu.memory_space<vmem>>, vector<1x64xf32>
    tpu.vector_store %arg30[%1621, %c64_402], %1618 {strides = array<i32>} : memref<8x128xf32, #tpu.memory_space<vmem>>, vector<1x64xf32>,
    %c8_i32_403 = arith.constant 8 : i32
    %c0_404 = arith.constant 0 : index
    %c0_405 = arith.constant 0 : index
    %1623 = vector.load %arg30[%c0_404, %c0_405] : memref<8x128xf32, #tpu.memory_space<vmem>>, vector<8x128xf32>
    %c0_406 = arith.constant 0 : index
    %c0_407 = arith.constant 0 : index
    %1624 = vector.load %arg25[%c0_406, %c0_407] : memref<6x128xf32, #tpu.memory_space<vmem>>, vector<6x128xf32>
    %1625 = tpu.transpose %1623, [1, 0] : vector<8x128xf32> -> vector<128x8xf32>
    %cst_408 = arith.constant dense<0.000000e+00> : vector<6x8xf32>
    %1626 = tpu.matmul %1624, %1625, %cst_408 {dimension_numbers = #tpu.dot_dimension_numbers<[1], [0], [0], [1], [0, 0, 1, 1], [], []>} : vector<6x128xf32>, vector<128x8xf32>, vector<6x8xf32> -> vector<6x8xf32>
    %c0_409 = arith.constant 0 : index
    %c0_410 = arith.constant 0 : index
    %1627 = vector.load %arg26[%c0_409, %c0_410] : memref<6x1xf32, #tpu.memory_space<vmem>>, vector<6x1xf32>
    %1628 = vector.broadcast %1627 : vector<6x1xf32> to vector<6x8xf32>
    %1629 = arith.addf %1626, %1628 : vector<6x8xf32>
    %c0_411 = arith.constant 0 : index
    %c0_412 = arith.constant 0 : index
    %1630 = vector.load %arg27[%c0_411, %c0_412] : memref<6x8xf32, #tpu.memory_space<vmem>>, vector<6x8xf32>
    tpu.vector_store %arg27[%c0_411, %c0_412], %1629 {strides = array<i32>} : memref<6x8xf32, #tpu.memory_space<vmem>>, vector<6x8xf32>,
    return
  }
}

</mosaic_0001>

<llo_original>
// kernel: ms_tcn2_gru_forward.4
$region0: #{ms_tcn2_gru_forward.4}
  #allocation0 [shape = 'u32[]', space=smem, size = 0x4, offset = 0x4, fixed_abs, tag = 'smem constant byte address 0x4 - core index']
  #allocation1 [shape = 'u32[144,128]{1,0:T(1,128)}', space=vmem, size = 0x12000, scoped, tag = 'internal scratch']
  %s0 = inlined_call_operand.hbm [shape: f32[16,40], index: 0, kind: input, shape index: {}]
  %s1 = inlined_call_operand.vmem [shape: f32[32,16], index: 1, kind: input, shape index: {}]
  %s2 = inlined_call_operand.vmem [shape: f32[32,1], index: 2, kind: input, shape index: {}]
  %s3 = inlined_call_operand.vmem [shape: f32[32,192], index: 3, kind: input, shape index: {}]
  %s4 = inlined_call_operand.vmem [shape: f32[32,1], index: 4, kind: input, shape index: {}]
  %s5 = inlined_call_operand.vmem [shape: f32[32,192], index: 5, kind: input, shape index: {}]
  %s6 = inlined_call_operand.vmem [shape: f32[32,1], index: 6, kind: input, shape index: {}]
  %s7 = inlined_call_operand.vmem [shape: f32[32,192], index: 7, kind: input, shape index: {}]
  %s8 = inlined_call_operand.vmem [shape: f32[32,1], index: 8, kind: input, shape index: {}]
  %s9 = inlined_call_operand.vmem [shape: f32[32,192], index: 9, kind: input, shape index: {}]
  %s10 = inlined_call_operand.vmem [shape: f32[32,1], index: 10, kind: input, shape index: {}]
  %s11 = inlined_call_operand.hbm [shape: f32[6,32], index: 11, kind: input, shape index: {}]
  %s12 = inlined_call_operand.vmem [shape: f32[6,1], index: 12, kind: input, shape index: {}]
  %s13 = inlined_call_operand.vmem [shape: f32[6,40], index: 13, kind: output, shape index: {}]
  %s14 = sld [smem:[#allocation0]]
  $region70: #{ms_tcn2_gru_forward.4} parent=0
    _
  %s16 = ssub.s32 1, %s14
  %s17 = scalar_select 0, %s16, %s14
  $region1: #{ms_tcn2_gru_forward.4} parent=0
    #allocation2 [shape = 'u8[8192]{0}', space=vmem, size = 0x2000, scoped, tag = 'input window, operand 0, single buffered']
    #allocation3 [shape = 's32[1]{0}', space=sflag, size = 0x4, scoped, tag = 'scoped memory for ms_tcn2_gru_forward.4']
    #allocation4 [shape = 'u8[4096]{0}', space=vmem, size = 0x1000, scoped, tag = 'input window, operand 11, single buffered']
    #allocation5 [shape = 's32[1]{0}', space=sflag, size = 0x4, scoped, tag = 'scoped memory for ms_tcn2_gru_forward.4']
    %18 = vsyncpa [#allocation3], 0
    %19 = vsyncpa [#allocation5], 0
    // Predicated region
    $region2: #{ms_tcn2_gru_forward.4} parent=1 // pred_check
      _
    $region3: #{ms_tcn2_gru_forward.4} parent=1 // pred_check_branch
      %21 = sbr.rel (0) target = $region5
    $region4: #{ms_tcn2_gru_forward.4} parent=1 // pred_region
      %s23 = ssub.s32 256, 256
      %24 = vsyncadd [#allocation3], %s23
      %s25 = sshll.u32 [#allocation2], 4
      %s26 = int_to_ptr.vmem [resolvable:$true] %s25
      %31 = dma.hbm_to_vmem [thread:$0]  %s0, 256, %s26, [#allocation3], 128, 128, 8
    $region5: #{ms_tcn2_gru_forward.4} parent=1 // pred_fallthru
      _
    // Predicated region
    $region6: #{ms_tcn2_gru_forward.4} parent=1 // pred_check
      _
    $region7: #{ms_tcn2_gru_forward.4} parent=1 // pred_check_branch
      %33 = sbr.rel (0) target = $region9
    $region8: #{ms_tcn2_gru_forward.4} parent=1 // pred_region
      _
    $region9: #{ms_tcn2_gru_forward.4} parent=1 // pred_fallthru
      _
    // Predicated region
    $region10: #{ms_tcn2_gru_forward.4} parent=1 // pred_check
      _
    $region11: #{ms_tcn2_gru_forward.4} parent=1 // pred_check_branch
      %35 = sbr.rel (0) target = $region13
    $region12: #{ms_tcn2_gru_forward.4} parent=1 // pred_region
      _
    $region13: #{ms_tcn2_gru_forward.4} parent=1 // pred_fallthru
      _
    // Predicated region
    $region14: #{ms_tcn2_gru_forward.4} parent=1 // pred_check
      _
    $region15: #{ms_tcn2_gru_forward.4} parent=1 // pred_check_branch
      %37 = sbr.rel (0) target = $region17
    $region16: #{ms_tcn2_gru_forward.4} parent=1 // pred_region
      _
    $region17: #{ms_tcn2_gru_forward.4} parent=1 // pred_fallthru
      _
    // Predicated region
    $region18: #{ms_tcn2_gru_forward.4} parent=1 // pred_check
      _
    $region19: #{ms_tcn2_gru_forward.4} parent=1 // pred_check_branch
      %39 = sbr.rel (0) target = $region21
    $region20: #{ms_tcn2_gru_forward.4} parent=1 // pred_region
      _
    $region21: #{ms_tcn2_gru_forward.4} parent=1 // pred_fallthru
      _
    // Predicated region
    $region22: #{ms_tcn2_gru_forward.4} parent=1 // pred_check
      _
    $region23: #{ms_tcn2_gru_forward.4} parent=1 // pred_check_branch
      %41 = sbr.rel (0) target = $region25
    $region24: #{ms_tcn2_gru_forward.4} parent=1 // pred_region
      _
    $region25: #{ms_tcn2_gru_forward.4} parent=1 // pred_fallthru
      _
    // Predicated region
    $region26: #{ms_tcn2_gru_forward.4} parent=1 // pred_check
      _
    $region27: #{ms_tcn2_gru_forward.4} parent=1 // pred_check_branch
      %43 = sbr.rel (0) target = $region29
    $region28: #{ms_tcn2_gru_forward.4} parent=1 // pred_region
      _
    $region29: #{ms_tcn2_gru_forward.4} parent=1 // pred_fallthru
      _
    // Predicated region
    $region30: #{ms_tcn2_gru_forward.4} parent=1 // pred_check
      _
    $region31: #{ms_tcn2_gru_forward.4} parent=1 // pred_check_branch
      %45 = sbr.rel (0) target = $region33
    $region32: #{ms_tcn2_gru_forward.4} parent=1 // pred_region
      _
    $region33: #{ms_tcn2_gru_forward.4} parent=1 // pred_fallthru
      _
    // Predicated region
    $region34: #{ms_tcn2_gru_forward.4} parent=1 // pred_check
      _
    $region35: #{ms_tcn2_gru_forward.4} parent=1 // pred_check_branch
      %47 = sbr.rel (0) target = $region37
    $region36: #{ms_tcn2_gru_forward.4} parent=1 // pred_region
      _
    $region37: #{ms_tcn2_gru_forward.4} parent=1 // pred_fallthru
      _
    // Predicated region
    $region38: #{ms_tcn2_gru_forward.4} parent=1 // pred_check
      _
    $region39: #{ms_tcn2_gru_forward.4} parent=1 // pred_check_branch
      %49 = sbr.rel (0) target = $region41
    $region40: #{ms_tcn2_gru_forward.4} parent=1 // pred_region
      _
    $region41: #{ms_tcn2_gru_forward.4} parent=1 // pred_fallthru
      _
    // Predicated region
    $region42: #{ms_tcn2_gru_forward.4} parent=1 // pred_check
      _
    $region43: #{ms_tcn2_gru_forward.4} parent=1 // pred_check_branch
      %51 = sbr.rel (0) target = $region45
    $region44: #{ms_tcn2_gru_forward.4} parent=1 // pred_region
      _
    $region45: #{ms_tcn2_gru_forward.4} parent=1 // pred_fallthru
      _
    // Predicated region
    $region46: #{ms_tcn2_gru_forward.4} parent=1 // pred_check
      _
    $region47: #{ms_tcn2_gru_forward.4} parent=1 // pred_check_branch
      %53 = sbr.rel (0) target = $region49
    $region48: #{ms_tcn2_gru_forward.4} parent=1 // pred_region
      %s55 = ssub.s32 128, 128
      %56 = vsyncadd [#allocation5], %s55
      %s58 = sshll.u32 [#allocation4], 4
      %s59 = int_to_ptr.vmem [resolvable:$true] %s58
      %61 = dma.hbm_to_vmem [thread:$0]  %s11, 128, %s59, [#allocation5]
    $region49: #{ms_tcn2_gru_forward.4} parent=1 // pred_fallthru
      _
    // Predicated region
    $region50: #{ms_tcn2_gru_forward.4} parent=1 // pred_check
      _
    $region51: #{ms_tcn2_gru_forward.4} parent=1 // pred_check_branch
      %63 = sbr.rel (0) target = $region53
    $region52: #{ms_tcn2_gru_forward.4} parent=1 // pred_region
      _
    $region53: #{ms_tcn2_gru_forward.4} parent=1 // pred_fallthru
      _
    // Predicated region
    $region54: #{ms_tcn2_gru_forward.4} parent=1 // pred_check
      _
    $region55: #{ms_tcn2_gru_forward.4} parent=1 // pred_check_branch
      %65 = sbr.rel (0) target = $region57
    $region56: #{ms_tcn2_gru_forward.4} parent=1 // pred_region
      %66 = dma.done [#allocation3], 256
    $region57: #{ms_tcn2_gru_forward.4} parent=1 // pred_fallthru
      _
    // Predicated region
    $region58: #{ms_tcn2_gru_forward.4} parent=1 // pred_check
      _
    $region59: #{ms_tcn2_gru_forward.4} parent=1 // pred_check_branch
      %68 = sbr.rel (0) target = $region61
    $region60: #{ms_tcn2_gru_forward.4} parent=1 // pred_region
      %69 = dma.done [#allocation5], 128
    $region61: #{ms_tcn2_gru_forward.4} parent=1 // pred_fallthru
      _
    %v70 = vld [vmem:[%s1] sm:$0xff]
    %v71 = vld [vmem:[%s1 + $0x8] sm:$0xff]
    %v72 = vld [vmem:[%s1 + $0x10] sm:$0xff]
    %v73 = vld [vmem:[%s1 + $0x18] sm:$0xff]
    %v74 = vld [vmem:[#allocation2] sm:$0xff]
    %v75 = vld [vmem:[#allocation2 + $0x8] sm:$0xff]
    %v76 = vld [vmem:[%s2] sm:$0xff]
    %v77 = vld [vmem:[%s2 + $0x8] sm:$0xff]
    %v78 = vld [vmem:[%s2 + $0x10] sm:$0xff]
    %v79 = vld [vmem:[%s2 + $0x18] sm:$0xff]
    %81 = vset.pattern.permute.xlu0 0
    %82 = vperm.xlu0 %81, %v76
    %v83 = vpop.permute.xlu0 %82
    %86 = vset.pattern.permute.xlu0 0
    %87 = vperm.xlu0 %86, %v77
    %v88 = vpop.permute.xlu0 %87
    %91 = vset.pattern.permute.xlu0 0
    %92 = vperm.xlu0 %91, %v78
    %v93 = vpop.permute.xlu0 %92
    %96 = vset.pattern.permute.xlu0 0
    %97 = vperm.xlu0 %96, %v79
    %v98 = vpop.permute.xlu0 %97
    %vm100 = vcmask 130048
    %v102 = vsel %vm100, %v70, 0
    %v105 = vsel %vm100, %v71, 0
    %v108 = vsel %vm100, %v72, 0
    %v111 = vsel %vm100, %v73, 0
    %113 = vmatprep.subr.mxu0 0.0
    %114 = vmatpush1.msra.mxu0 0.0
    %115 = vmatprep.subr.mxu0 0.0
    %116 = vmatpush1.msra.mxu0 0.0
    %117 = vmatprep.subr.mxu0 0.0
    %118 = vmatpush1.msra.mxu0 0.0
    %119 = vmatprep.subr.mxu0 0.0
    %120 = vmatpush1.msra.mxu0 0.0
    %121 = vmatprep.subr.mxu0 0.0
    %122 = vmatpush1.msra.mxu0 0.0
    %123 = vmatprep.subr.mxu0 0.0
    %124 = vmatpush1.msra.mxu0 0.0
    %125 = vmatprep.subr.mxu0 0.0
    %126 = vmatpush1.msra.mxu0 0.0
    %127 = vmatprep.subr.mxu0 0.0
    %128 = vmatpush1.msra.mxu0 0.0
    %129 = vmatprep.subr.mxu0 0.0
    %130 = vmatpush1.msra.mxu0 0.0
    %131 = vmatprep.subr.mxu0 0.0
    %132 = vmatpush1.msra.mxu0 0.0
    %133 = vmatprep.subr.mxu0 0.0
    %134 = vmatpush1.msra.mxu0 0.0
    %135 = vmatprep.subr.mxu0 0.0
    %136 = vmatpush1.msra.mxu0 0.0
    %137 = vmatprep.subr.mxu0 0.0
    %138 = vmatpush1.msra.mxu0 0.0
    %139 = vmatprep.subr.mxu0 0.0
    %140 = vmatpush1.msra.mxu0 0.0
    %141 = vmatprep.subr.mxu0 0.0
    %142 = vmatpush1.msra.mxu0 %v75
    %143 = vmatprep.subr.mxu0 0.0
    %144 = vmatpush1.msra.mxu0 %v74
    %145 = vmatprep.subr.mxu0 0.0
    %146 = vmatpush2.msra.mxu0 0.0
    %147 = vmatprep.subr.mxu0 0.0
    %148 = vmatpush2.msra.mxu0 0.0
    %149 = vmatprep.subr.mxu0 0.0
    %150 = vmatpush2.msra.mxu0 0.0
    %151 = vmatprep.subr.mxu0 0.0
    %152 = vmatpush2.msra.mxu0 0.0
    %153 = vmatprep.subr.mxu0 0.0
    %154 = vmatpush2.msra.mxu0 0.0
    %155 = vmatprep.subr.mxu0 0.0
    %156 = vmatpush2.msra.mxu0 0.0
    %157 = vmatprep.subr.mxu0 0.0
    %158 = vmatpush2.msra.mxu0 0.0
    %159 = vmatprep.subr.mxu0 0.0
    %160 = vmatpush2.msra.mxu0 0.0
    %161 = vmatprep.subr.mxu0 0.0
    %162 = vmatpush2.msra.mxu0 0.0
    %163 = vmatprep.subr.mxu0 0.0
    %164 = vmatpush2.msra.mxu0 0.0
    %165 = vmatprep.subr.mxu0 0.0
    %166 = vmatpush2.msra.mxu0 0.0
    %167 = vmatprep.subr.mxu0 0.0
    %168 = vmatpush2.msra.mxu0 0.0
    %169 = vmatprep.subr.mxu0 0.0
    %170 = vmatpush2.msra.mxu0 0.0
    %171 = vmatprep.subr.mxu0 0.0
    %172 = vmatpush2.msra.mxu0 0.0
    %173 = vmatprep.subr.mxu0 0.0
    %174 = vmatpush2.msra.mxu0 0.0
    %175 = vmatprep.subr.mxu0 0.0
    %176 = vmatpush2.msra.mxu0 0.0
    %177 = vmatprep.mubr.f32.mxu0 0.0
    %178 = vmatmul.mubr.f32.gmra.mxu0 %v102
    %v179 = vpop.f32.mrf.mxu0
    %v180 = vadd.f32 %v83, %v179
    %v181 = vpop.f32.mrf.mxu0
    %182 = vmatprep.mubr.f32.mxu0 0.0
    %183 = vmatmul.mubr.f32.gmra.mxu0 %v105
    %v184 = vpop.f32.mrf.mxu0
    %v185 = vadd.f32 %v88, %v184
    %v186 = vpop.f32.mrf.mxu0
    %187 = vmatprep.mubr.f32.mxu0 0.0
    %188 = vmatmul.mubr.f32.gmra.mxu0 %v108
    %v189 = vpop.f32.mrf.mxu0
    %v190 = vadd.f32 %v93, %v189
    %v191 = vpop.f32.mrf.mxu0
    %192 = vmatprep.mubr.f32.mxu0 0.0
    %193 = vmatmul.mubr.f32.gmra.mxu0 %v111
    %v194 = vpop.f32.mrf.mxu0
    %v195 = vadd.f32 %v98, %v194
    %v196 = vpop.f32.mrf.mxu0
    %197 = vdwg.mxu0
    %202 = vrot.lane.b32.xlu0 %v180, 8
    %v203 = vpop.permute.xlu0 %202
    %204 = vrot.lane.b32.xlu0 %v185, 8
    %v205 = vpop.permute.xlu0 %204
    %206 = vrot.lane.b32.xlu0 %v190, 8
    %v207 = vpop.permute.xlu0 %206
    %208 = vrot.lane.b32.xlu0 %v195, 8
    %v209 = vpop.permute.xlu0 %208
    %vm214 = vcmask 64512
    %v215 = vsel %vm214, 0.0, %v203
    %v216 = vsel %vm214, 0.0, %v205
    %v217 = vsel %vm214, 0.0, %v207
    %v218 = vsel %vm214, 0.0, %v209
    %219 = vrot.lane.b32.xlu0 %v180, 120
    %v220 = vpop.permute.xlu0 %219
    %221 = vrot.lane.b32.xlu0 %v185, 120
    %v222 = vpop.permute.xlu0 %221
    %223 = vrot.lane.b32.xlu0 %v190, 120
    %v224 = vpop.permute.xlu0 %223
    %225 = vrot.lane.b32.xlu0 %v195, 120
    %v226 = vpop.permute.xlu0 %225
    %vm231 = vcmask 261120
    %v232 = vsel %vm231, %v220, 0.0
    %v233 = vsel %vm231, %v222, 0.0
    %v234 = vsel %vm231, %v224, 0.0
    %v235 = vsel %vm231, %v226, 0.0
    %236 = vrot.lane.b32.xlu0 %v180, 1
    %v237 = vpop.permute.xlu0 %236
    %238 = vrot.lane.b32.xlu0 %v185, 1
    %v239 = vpop.permute.xlu0 %238
    %240 = vrot.lane.b32.xlu0 %v190, 1
    %v241 = vpop.permute.xlu0 %240
    %242 = vrot.lane.b32.xlu0 %v195, 1
    %v243 = vpop.permute.xlu0 %242
    %vm248 = vcmask 7168
    %v249 = vsel %vm248, 0.0, %v237
    %v250 = vsel %vm248, 0.0, %v239
    %v251 = vsel %vm248, 0.0, %v241
    %v252 = vsel %vm248, 0.0, %v243
    %253 = vrot.lane.b32.xlu0 %v180, 127
    %v254 = vpop.permute.xlu0 %253
    %255 = vrot.lane.b32.xlu0 %v185, 127
    %v256 = vpop.permute.xlu0 %255
    %257 = vrot.lane.b32.xlu0 %v190, 127
    %v258 = vpop.permute.xlu0 %257
    %259 = vrot.lane.b32.xlu0 %v195, 127
    %v260 = vpop.permute.xlu0 %259
    %vm265 = vcmask 318464
    %v266 = vsel %vm265, %v254, 0.0
    %v267 = vsel %vm265, %v256, 0.0
    %v268 = vsel %vm265, %v258, 0.0
    %v269 = vsel %vm265, %v260, 0.0
    %v270 = vld [vmem:[%s3] sm:$0xff]
    %v271 = vld [vmem:[%s3 + $0x8] sm:$0xff]
    %v272 = vld [vmem:[%s3 + $0x10] sm:$0xff]
    %v273 = vld [vmem:[%s3 + $0x18] sm:$0xff]
    %v274 = vld [vmem:[%s3 + $0x20] sm:$0xff]
    %v275 = vld [vmem:[%s3 + $0x28] sm:$0xff]
    %v276 = vld [vmem:[%s3 + $0x30] sm:$0xff]
    %v277 = vld [vmem:[%s3 + $0x38] sm:$0xff]
    %v278 = vld [vmem:[%s4] sm:$0xff]
    %v279 = vld [vmem:[%s4 + $0x8] sm:$0xff]
    %v280 = vld [vmem:[%s4 + $0x10] sm:$0xff]
    %v281 = vld [vmem:[%s4 + $0x18] sm:$0xff]
    %283 = vset.pattern.permute.xlu0 0
    %284 = vperm.xlu0 %283, %v278
    %v285 = vpop.permute.xlu0 %284
    %288 = vset.pattern.permute.xlu0 0
    %289 = vperm.xlu0 %288, %v279
    %v290 = vpop.permute.xlu0 %289
    %293 = vset.pattern.permute.xlu0 0
    %294 = vperm.xlu0 %293, %v280
    %v295 = vpop.permute.xlu0 %294
    %298 = vset.pattern.permute.xlu0 0
    %299 = vperm.xlu0 %298, %v281
    %v300 = vpop.permute.xlu0 %299
    %vm302 = vcmask 523264
    %v304 = vsel %vm302, %v271, 0
    %v307 = vsel %vm302, %v273, 0
    %v310 = vsel %vm302, %v275, 0
    %v313 = vsel %vm302, %v277, 0
    %315 = vmatprep.subr.mxu0 0.0
    %316 = vmatpush1.msra.mxu0 %v252
    %317 = vmatprep.subr.mxu0 0.0
    %318 = vmatpush1.msra.mxu0 %v251
    %319 = vmatprep.subr.mxu0 0.0
    %320 = vmatpush1.msra.mxu0 %v250
    %321 = vmatprep.subr.mxu0 0.0
    %322 = vmatpush1.msra.mxu0 %v249
    %323 = vmatprep.subr.mxu0 0.0
    %324 = vmatpush1.msra.mxu0 %v235
    %325 = vmatprep.subr.mxu0 0.0
    %326 = vmatpush1.msra.mxu0 %v234
    %327 = vmatprep.subr.mxu0 0.0
    %328 = vmatpush1.msra.mxu0 %v233
    %329 = vmatprep.subr.mxu0 0.0
    %330 = vmatpush1.msra.mxu0 %v232
    %331 = vmatprep.subr.mxu0 0.0
    %332 = vmatpush1.msra.mxu0 %v195
    %333 = vmatprep.subr.mxu0 0.0
    %334 = vmatpush1.msra.mxu0 %v190
    %335 = vmatprep.subr.mxu0 0.0
    %336 = vmatpush1.msra.mxu0 %v185
    %337 = vmatprep.subr.mxu0 0.0
    %338 = vmatpush1.msra.mxu0 %v180
    %339 = vmatprep.subr.mxu0 0.0
    %340 = vmatpush1.msra.mxu0 %v218
    %341 = vmatprep.subr.mxu0 0.0
    %342 = vmatpush1.msra.mxu0 %v217
    %343 = vmatprep.subr.mxu0 0.0
    %344 = vmatpush1.msra.mxu0 %v216
    %345 = vmatprep.subr.mxu0 0.0
    %346 = vmatpush1.msra.mxu0 %v215
    %347 = vmatprep.subr.mxu0 0.0
    %348 = vmatpush2.msra.mxu0 0.0
    %349 = vmatprep.subr.mxu0 0.0
    %350 = vmatpush2.msra.mxu0 0.0
    %351 = vmatprep.subr.mxu0 0.0
    %352 = vmatpush2.msra.mxu0 0.0
    %353 = vmatprep.subr.mxu0 0.0
    %354 = vmatpush2.msra.mxu0 0.0
    %355 = vmatprep.subr.mxu0 0.0
    %356 = vmatpush2.msra.mxu0 0.0
    %357 = vmatprep.subr.mxu0 0.0
    %358 = vmatpush2.msra.mxu0 0.0
    %359 = vmatprep.subr.mxu0 0.0
    %360 = vmatpush2.msra.mxu0 0.0
    %361 = vmatprep.subr.mxu0 0.0
    %362 = vmatpush2.msra.mxu0 0.0
    %363 = vmatprep.subr.mxu0 0.0
    %364 = vmatpush2.msra.mxu0 %v269
    %365 = vmatprep.subr.mxu0 0.0
    %366 = vmatpush2.msra.mxu0 %v268
    %367 = vmatprep.subr.mxu0 0.0
    %368 = vmatpush2.msra.mxu0 %v267
    %369 = vmatprep.subr.mxu0 0.0
    %370 = vmatpush2.msra.mxu0 %v266
    %371 = vmatprep.subr.mxu0 0.0
    %372 = vmatpush2.msra.mxu0 %v195
    %373 = vmatprep.subr.mxu0 0.0
    %374 = vmatpush2.msra.mxu0 %v190
    %375 = vmatprep.subr.mxu0 0.0
    %376 = vmatpush2.msra.mxu0 %v185
    %377 = vmatprep.subr.mxu0 0.0
    %378 = vmatpush2.msra.mxu0 %v180
    %379 = vmatprep.mubr.f32.mxu0 %v304
    %380 = vmatmul.mubr.f32.gmra.mxu0 %v270
    %v381 = vpop.f32.mrf.mxu0
    %v382 = vadd.f32 %v285, %v381
    %v383 = vpop.f32.mrf.mxu0
    %384 = vmatprep.mubr.f32.mxu0 %v307
    %385 = vmatmul.mubr.f32.gmra.mxu0 %v272
    %v386 = vpop.f32.mrf.mxu0
    %v387 = vadd.f32 %v290, %v386
    %v388 = vpop.f32.mrf.mxu0
    %389 = vmatprep.mubr.f32.mxu0 %v310
    %390 = vmatmul.mubr.f32.gmra.mxu0 %v274
    %v391 = vpop.f32.mrf.mxu0
    %v392 = vadd.f32 %v295, %v391
    %v393 = vpop.f32.mrf.mxu0
    %394 = vmatprep.mubr.f32.mxu0 %v313
    %395 = vmatmul.mubr.f32.gmra.mxu0 %v276
    %v396 = vpop.f32.mrf.mxu0
    %v397 = vadd.f32 %v300, %v396
    %v398 = vpop.f32.mrf.mxu0
    %399 = vdwg.mxu0
    %v400 = vmax.f32 %v382, 0.0
    %v401 = vmax.f32 %v387, 0.0
    %v402 = vmax.f32 %v392, 0.0
    %v403 = vmax.f32 %v397, 0.0
    %v404 = vadd.f32 %v400, %v180
    %v405 = vadd.f32 %v401, %v185
    %v406 = vadd.f32 %v402, %v190
    %v407 = vadd.f32 %v403, %v195
    %412 = vrot.lane.b32.xlu0 %v404, 4
    %v413 = vpop.permute.xlu0 %412
    %414 = vrot.lane.b32.xlu0 %v405, 4
    %v415 = vpop.permute.xlu0 %414
    %416 = vrot.lane.b32.xlu0 %v406, 4
    %v417 = vpop.permute.xlu0 %416
    %418 = vrot.lane.b32.xlu0 %v407, 4
    %v419 = vpop.permute.xlu0 %418
    %vm424 = vcmask 31744
    %v425 = vsel %vm424, 0.0, %v413
    %v426 = vsel %vm424, 0.0, %v415
    %v427 = vsel %vm424, 0.0, %v417
    %v428 = vsel %vm424, 0.0, %v419
    %429 = vrot.lane.b32.xlu0 %v404, 124
    %v430 = vpop.permute.xlu0 %429
    %431 = vrot.lane.b32.xlu0 %v405, 124
    %v432 = vpop.permute.xlu0 %431
    %433 = vrot.lane.b32.xlu0 %v406, 124
    %v434 = vpop.permute.xlu0 %433
    %435 = vrot.lane.b32.xlu0 %v407, 124
    %v436 = vpop.permute.xlu0 %435
    %vm441 = vcmask 293888
    %v442 = vsel %vm441, %v430, 0.0
    %v443 = vsel %vm441, %v432, 0.0
    %v444 = vsel %vm441, %v434, 0.0
    %v445 = vsel %vm441, %v436, 0.0
    %446 = vrot.lane.b32.xlu0 %v404, 2
    %v447 = vpop.permute.xlu0 %446
    %448 = vrot.lane.b32.xlu0 %v405, 2
    %v449 = vpop.permute.xlu0 %448
    %450 = vrot.lane.b32.xlu0 %v406, 2
    %v451 = vpop.permute.xlu0 %450
    %452 = vrot.lane.b32.xlu0 %v407, 2
    %v453 = vpop.permute.xlu0 %452
    %vm458 = vcmask 15360
    %v459 = vsel %vm458, 0.0, %v447
    %v460 = vsel %vm458, 0.0, %v449
    %v461 = vsel %vm458, 0.0, %v451
    %v462 = vsel %vm458, 0.0, %v453
    %463 = vrot.lane.b32.xlu0 %v404, 126
    %v464 = vpop.permute.xlu0 %463
    %465 = vrot.lane.b32.xlu0 %v405, 126
    %v466 = vpop.permute.xlu0 %465
    %467 = vrot.lane.b32.xlu0 %v406, 126
    %v468 = vpop.permute.xlu0 %467
    %469 = vrot.lane.b32.xlu0 %v407, 126
    %v470 = vpop.permute.xlu0 %469
    %vm475 = vcmask 310272
    %v476 = vsel %vm475, %v464, 0.0
    %v477 = vsel %vm475, %v466, 0.0
    %v478 = vsel %vm475, %v468, 0.0
    %v479 = vsel %vm475, %v470, 0.0
    %v480 = vld [vmem:[%s5] sm:$0xff]
    %v481 = vld [vmem:[%s5 + $0x8] sm:$0xff]
    %v482 = vld [vmem:[%s5 + $0x10] sm:$0xff]
    %v483 = vld [vmem:[%s5 + $0x18] sm:$0xff]
    %v484 = vld [vmem:[%s5 + $0x20] sm:$0xff]
    %v485 = vld [vmem:[%s5 + $0x28] sm:$0xff]
    %v486 = vld [vmem:[%s5 + $0x30] sm:$0xff]
    %v487 = vld [vmem:[%s5 + $0x38] sm:$0xff]
    %v488 = vld [vmem:[%s6] sm:$0xff]
    %v489 = vld [vmem:[%s6 + $0x8] sm:$0xff]
    %v490 = vld [vmem:[%s6 + $0x10] sm:$0xff]
    %v491 = vld [vmem:[%s6 + $0x18] sm:$0xff]
    %493 = vset.pattern.permute.xlu0 0
    %494 = vperm.xlu0 %493, %v488
    %v495 = vpop.permute.xlu0 %494
    %498 = vset.pattern.permute.xlu0 0
    %499 = vperm.xlu0 %498, %v489
    %v500 = vpop.permute.xlu0 %499
    %503 = vset.pattern.permute.xlu0 0
    %504 = vperm.xlu0 %503, %v490
    %v505 = vpop.permute.xlu0 %504
    %508 = vset.pattern.permute.xlu0 0
    %509 = vperm.xlu0 %508, %v491
    %v510 = vpop.permute.xlu0 %509
    %v513 = vsel %vm302, %v481, 0
    %v516 = vsel %vm302, %v483, 0
    %v519 = vsel %vm302, %v485, 0
    %v522 = vsel %vm302, %v487, 0
    %524 = vmatprep.subr.mxu0 0.0
    %525 = vmatpush1.msra.mxu0 %v462
    %526 = vmatprep.subr.mxu0 0.0
    %527 = vmatpush1.msra.mxu0 %v461
    %528 = vmatprep.subr.mxu0 0.0
    %529 = vmatpush1.msra.mxu0 %v460
    %530 = vmatprep.subr.mxu0 0.0
    %531 = vmatpush1.msra.mxu0 %v459
    %532 = vmatprep.subr.mxu0 0.0
    %533 = vmatpush1.msra.mxu0 %v445
    %534 = vmatprep.subr.mxu0 0.0
    %535 = vmatpush1.msra.mxu0 %v444
    %536 = vmatprep.subr.mxu0 0.0
    %537 = vmatpush1.msra.mxu0 %v443
    %538 = vmatprep.subr.mxu0 0.0
    %539 = vmatpush1.msra.mxu0 %v442
    %540 = vmatprep.subr.mxu0 0.0
    %541 = vmatpush1.msra.mxu0 %v407
    %542 = vmatprep.subr.mxu0 0.0
    %543 = vmatpush1.msra.mxu0 %v406
    %544 = vmatprep.subr.mxu0 0.0
    %545 = vmatpush1.msra.mxu0 %v405
    %546 = vmatprep.subr.mxu0 0.0
    %547 = vmatpush1.msra.mxu0 %v404
    %548 = vmatprep.subr.mxu0 0.0
    %549 = vmatpush1.msra.mxu0 %v428
    %550 = vmatprep.subr.mxu0 0.0
    %551 = vmatpush1.msra.mxu0 %v427
    %552 = vmatprep.subr.mxu0 0.0
    %553 = vmatpush1.msra.mxu0 %v426
    %554 = vmatprep.subr.mxu0 0.0
    %555 = vmatpush1.msra.mxu0 %v425
    %556 = vmatprep.subr.mxu0 0.0
    %557 = vmatpush2.msra.mxu0 0.0
    %558 = vmatprep.subr.mxu0 0.0
    %559 = vmatpush2.msra.mxu0 0.0
    %560 = vmatprep.subr.mxu0 0.0
    %561 = vmatpush2.msra.mxu0 0.0
    %562 = vmatprep.subr.mxu0 0.0
    %563 = vmatpush2.msra.mxu0 0.0
    %564 = vmatprep.subr.mxu0 0.0
    %565 = vmatpush2.msra.mxu0 0.0
    %566 = vmatprep.subr.mxu0 0.0
    %567 = vmatpush2.msra.mxu0 0.0
    %568 = vmatprep.subr.mxu0 0.0
    %569 = vmatpush2.msra.mxu0 0.0
    %570 = vmatprep.subr.mxu0 0.0
    %571 = vmatpush2.msra.mxu0 0.0
    %572 = vmatprep.subr.mxu0 0.0
    %573 = vmatpush2.msra.mxu0 %v479
    %574 = vmatprep.subr.mxu0 0.0
    %575 = vmatpush2.msra.mxu0 %v478
    %576 = vmatprep.subr.mxu0 0.0
    %577 = vmatpush2.msra.mxu0 %v477
    %578 = vmatprep.subr.mxu0 0.0
    %579 = vmatpush2.msra.mxu0 %v476
    %580 = vmatprep.subr.mxu0 0.0
    %581 = vmatpush2.msra.mxu0 %v407
    %582 = vmatprep.subr.mxu0 0.0
    %583 = vmatpush2.msra.mxu0 %v406
    %584 = vmatprep.subr.mxu0 0.0
    %585 = vmatpush2.msra.mxu0 %v405
    %586 = vmatprep.subr.mxu0 0.0
    %587 = vmatpush2.msra.mxu0 %v404
    %588 = vmatprep.mubr.f32.mxu0 %v513
    %589 = vmatmul.mubr.f32.gmra.mxu0 %v480
    %v590 = vpop.f32.mrf.mxu0
    %v591 = vadd.f32 %v495, %v590
    %v592 = vpop.f32.mrf.mxu0
    %593 = vmatprep.mubr.f32.mxu0 %v516
    %594 = vmatmul.mubr.f32.gmra.mxu0 %v482
    %v595 = vpop.f32.mrf.mxu0
    %v596 = vadd.f32 %v500, %v595
    %v597 = vpop.f32.mrf.mxu0
    %598 = vmatprep.mubr.f32.mxu0 %v519
    %599 = vmatmul.mubr.f32.gmra.mxu0 %v484
    %v600 = vpop.f32.mrf.mxu0
    %v601 = vadd.f32 %v505, %v600
    %v602 = vpop.f32.mrf.mxu0
    %603 = vmatprep.mubr.f32.mxu0 %v522
    %604 = vmatmul.mubr.f32.gmra.mxu0 %v486
    %v605 = vpop.f32.mrf.mxu0
    %v606 = vadd.f32 %v510, %v605
    %v607 = vpop.f32.mrf.mxu0
    %608 = vdwg.mxu0
    %v609 = vmax.f32 %v591, 0.0
    %v610 = vmax.f32 %v596, 0.0
    %v611 = vmax.f32 %v601, 0.0
    %v612 = vmax.f32 %v606, 0.0
    %v613 = vadd.f32 %v609, %v404
    %v614 = vadd.f32 %v610, %v405
    %v615 = vadd.f32 %v611, %v406
    %v616 = vadd.f32 %v612, %v407
    %621 = vrot.lane.b32.xlu0 %v613, 2
    %v622 = vpop.permute.xlu0 %621
    %623 = vrot.lane.b32.xlu0 %v614, 2
    %v624 = vpop.permute.xlu0 %623
    %625 = vrot.lane.b32.xlu0 %v615, 2
    %v626 = vpop.permute.xlu0 %625
    %627 = vrot.lane.b32.xlu0 %v616, 2
    %v628 = vpop.permute.xlu0 %627
    %v633 = vsel %vm458, 0.0, %v622
    %v634 = vsel %vm458, 0.0, %v624
    %v635 = vsel %vm458, 0.0, %v626
    %v636 = vsel %vm458, 0.0, %v628
    %637 = vrot.lane.b32.xlu0 %v613, 126
    %v638 = vpop.permute.xlu0 %637
    %639 = vrot.lane.b32.xlu0 %v614, 126
    %v640 = vpop.permute.xlu0 %639
    %641 = vrot.lane.b32.xlu0 %v615, 126
    %v642 = vpop.permute.xlu0 %641
    %643 = vrot.lane.b32.xlu0 %v616, 126
    %v644 = vpop.permute.xlu0 %643
    %v649 = vsel %vm475, %v638, 0.0
    %v650 = vsel %vm475, %v640, 0.0
    %v651 = vsel %vm475, %v642, 0.0
    %v652 = vsel %vm475, %v644, 0.0
    %653 = vrot.lane.b32.xlu0 %v613, 4
    %v654 = vpop.permute.xlu0 %653
    %655 = vrot.lane.b32.xlu0 %v614, 4
    %v656 = vpop.permute.xlu0 %655
    %657 = vrot.lane.b32.xlu0 %v615, 4
    %v658 = vpop.permute.xlu0 %657
    %659 = vrot.lane.b32.xlu0 %v616, 4
    %v660 = vpop.permute.xlu0 %659
    %v665 = vsel %vm424, 0.0, %v654
    %v666 = vsel %vm424, 0.0, %v656
    %v667 = vsel %vm424, 0.0, %v658
    %v668 = vsel %vm424, 0.0, %v660
    %669 = vrot.lane.b32.xlu0 %v613, 124
    %v670 = vpop.permute.xlu0 %669
    %671 = vrot.lane.b32.xlu0 %v614, 124
    %v672 = vpop.permute.xlu0 %671
    %673 = vrot.lane.b32.xlu0 %v615, 124
    %v674 = vpop.permute.xlu0 %673
    %675 = vrot.lane.b32.xlu0 %v616, 124
    %v676 = vpop.permute.xlu0 %675
    %v681 = vsel %vm441, %v670, 0.0
    %v682 = vsel %vm441, %v672, 0.0
    %v683 = vsel %vm441, %v674, 0.0
    %v684 = vsel %vm441, %v676, 0.0
    %v685 = vld [vmem:[%s7] sm:$0xff]
    %v686 = vld [vmem:[%s7 + $0x8] sm:$0xff]
    %v687 = vld [vmem:[%s7 + $0x10] sm:$0xff]
    %v688 = vld [vmem:[%s7 + $0x18] sm:$0xff]
    %v689 = vld [vmem:[%s7 + $0x20] sm:$0xff]
    %v690 = vld [vmem:[%s7 + $0x28] sm:$0xff]
    %v691 = vld [vmem:[%s7 + $0x30] sm:$0xff]
    %v692 = vld [vmem:[%s7 + $0x38] sm:$0xff]
    %v693 = vld [vmem:[%s8] sm:$0xff]
    %v694 = vld [vmem:[%s8 + $0x8] sm:$0xff]
    %v695 = vld [vmem:[%s8 + $0x10] sm:$0xff]
    %v696 = vld [vmem:[%s8 + $0x18] sm:$0xff]
    %698 = vset.pattern.permute.xlu0 0
    %699 = vperm.xlu0 %698, %v693
    %v700 = vpop.permute.xlu0 %699
    %703 = vset.pattern.permute.xlu0 0
    %704 = vperm.xlu0 %703, %v694
    %v705 = vpop.permute.xlu0 %704
    %708 = vset.pattern.permute.xlu0 0
    %709 = vperm.xlu0 %708, %v695
    %v710 = vpop.permute.xlu0 %709
    %713 = vset.pattern.permute.xlu0 0
    %714 = vperm.xlu0 %713, %v696
    %v715 = vpop.permute.xlu0 %714
    %v718 = vsel %vm302, %v686, 0
    %v721 = vsel %vm302, %v688, 0
    %v724 = vsel %vm302, %v690, 0
    %v727 = vsel %vm302, %v692, 0
    %729 = vmatprep.subr.mxu0 0.0
    %730 = vmatpush1.msra.mxu0 %v668
    %731 = vmatprep.subr.mxu0 0.0
    %732 = vmatpush1.msra.mxu0 %v667
    %733 = vmatprep.subr.mxu0 0.0
    %734 = vmatpush1.msra.mxu0 %v666
    %735 = vmatprep.subr.mxu0 0.0
    %736 = vmatpush1.msra.mxu0 %v665
    %737 = vmatprep.subr.mxu0 0.0
    %738 = vmatpush1.msra.mxu0 %v652
    %739 = vmatprep.subr.mxu0 0.0
    %740 = vmatpush1.msra.mxu0 %v651
    %741 = vmatprep.subr.mxu0 0.0
    %742 = vmatpush1.msra.mxu0 %v650
    %743 = vmatprep.subr.mxu0 0.0
    %744 = vmatpush1.msra.mxu0 %v649
    %745 = vmatprep.subr.mxu0 0.0
    %746 = vmatpush1.msra.mxu0 %v616
    %747 = vmatprep.subr.mxu0 0.0
    %748 = vmatpush1.msra.mxu0 %v615
    %749 = vmatprep.subr.mxu0 0.0
    %750 = vmatpush1.msra.mxu0 %v614
    %751 = vmatprep.subr.mxu0 0.0
    %752 = vmatpush1.msra.mxu0 %v613
    %753 = vmatprep.subr.mxu0 0.0
    %754 = vmatpush1.msra.mxu0 %v636
    %755 = vmatprep.subr.mxu0 0.0
    %756 = vmatpush1.msra.mxu0 %v635
    %757 = vmatprep.subr.mxu0 0.0
    %758 = vmatpush1.msra.mxu0 %v634
    %759 = vmatprep.subr.mxu0 0.0
    %760 = vmatpush1.msra.mxu0 %v633
    %761 = vmatprep.subr.mxu0 0.0
    %762 = vmatpush2.msra.mxu0 0.0
    %763 = vmatprep.subr.mxu0 0.0
    %764 = vmatpush2.msra.mxu0 0.0
    %765 = vmatprep.subr.mxu0 0.0
    %766 = vmatpush2.msra.mxu0 0.0
    %767 = vmatprep.subr.mxu0 0.0
    %768 = vmatpush2.msra.mxu0 0.0
    %769 = vmatprep.subr.mxu0 0.0
    %770 = vmatpush2.msra.mxu0 0.0
    %771 = vmatprep.subr.mxu0 0.0
    %772 = vmatpush2.msra.mxu0 0.0
    %773 = vmatprep.subr.mxu0 0.0
    %774 = vmatpush2.msra.mxu0 0.0
    %775 = vmatprep.subr.mxu0 0.0
    %776 = vmatpush2.msra.mxu0 0.0
    %777 = vmatprep.subr.mxu0 0.0
    %778 = vmatpush2.msra.mxu0 %v684
    %779 = vmatprep.subr.mxu0 0.0
    %780 = vmatpush2.msra.mxu0 %v683
    %781 = vmatprep.subr.mxu0 0.0
    %782 = vmatpush2.msra.mxu0 %v682
    %783 = vmatprep.subr.mxu0 0.0
    %784 = vmatpush2.msra.mxu0 %v681
    %785 = vmatprep.subr.mxu0 0.0
    %786 = vmatpush2.msra.mxu0 %v616
    %787 = vmatprep.subr.mxu0 0.0
    %788 = vmatpush2.msra.mxu0 %v615
    %789 = vmatprep.subr.mxu0 0.0
    %790 = vmatpush2.msra.mxu0 %v614
    %791 = vmatprep.subr.mxu0 0.0
    %792 = vmatpush2.msra.mxu0 %v613
    %793 = vmatprep.mubr.f32.mxu0 %v718
    %794 = vmatmul.mubr.f32.gmra.mxu0 %v685
    %v795 = vpop.f32.mrf.mxu0
    %v796 = vadd.f32 %v700, %v795
    %v797 = vpop.f32.mrf.mxu0
    %798 = vmatprep.mubr.f32.mxu0 %v721
    %799 = vmatmul.mubr.f32.gmra.mxu0 %v687
    %v800 = vpop.f32.mrf.mxu0
    %v801 = vadd.f32 %v705, %v800
    %v802 = vpop.f32.mrf.mxu0
    %803 = vmatprep.mubr.f32.mxu0 %v724
    %804 = vmatmul.mubr.f32.gmra.mxu0 %v689
    %v805 = vpop.f32.mrf.mxu0
    %v806 = vadd.f32 %v710, %v805
    %v807 = vpop.f32.mrf.mxu0
    %808 = vmatprep.mubr.f32.mxu0 %v727
    %809 = vmatmul.mubr.f32.gmra.mxu0 %v691
    %v810 = vpop.f32.mrf.mxu0
    %v811 = vadd.f32 %v715, %v810
    %v812 = vpop.f32.mrf.mxu0
    %813 = vdwg.mxu0
    %v814 = vmax.f32 %v796, 0.0
    %v815 = vmax.f32 %v801, 0.0
    %v816 = vmax.f32 %v806, 0.0
    %v817 = vmax.f32 %v811, 0.0
    %v818 = vadd.f32 %v814, %v613
    %v819 = vadd.f32 %v815, %v614
    %v820 = vadd.f32 %v816, %v615
    %v821 = vadd.f32 %v817, %v616
    %826 = vrot.lane.b32.xlu0 %v818, 1
    %v827 = vpop.permute.xlu0 %826
    %828 = vrot.lane.b32.xlu0 %v819, 1
    %v829 = vpop.permute.xlu0 %828
    %830 = vrot.lane.b32.xlu0 %v820, 1
    %v831 = vpop.permute.xlu0 %830
    %832 = vrot.lane.b32.xlu0 %v821, 1
    %v833 = vpop.permute.xlu0 %832
    %v838 = vsel %vm248, 0.0, %v827
    %v839 = vsel %vm248, 0.0, %v829
    %v840 = vsel %vm248, 0.0, %v831
    %v841 = vsel %vm248, 0.0, %v833
    %842 = vrot.lane.b32.xlu0 %v818, 127
    %v843 = vpop.permute.xlu0 %842
    %844 = vrot.lane.b32.xlu0 %v819, 127
    %v845 = vpop.permute.xlu0 %844
    %846 = vrot.lane.b32.xlu0 %v820, 127
    %v847 = vpop.permute.xlu0 %846
    %848 = vrot.lane.b32.xlu0 %v821, 127
    %v849 = vpop.permute.xlu0 %848
    %v854 = vsel %vm265, %v843, 0.0
    %v855 = vsel %vm265, %v845, 0.0
    %v856 = vsel %vm265, %v847, 0.0
    %v857 = vsel %vm265, %v849, 0.0
    %858 = vrot.lane.b32.xlu0 %v818, 8
    %v859 = vpop.permute.xlu0 %858
    %860 = vrot.lane.b32.xlu0 %v819, 8
    %v861 = vpop.permute.xlu0 %860
    %862 = vrot.lane.b32.xlu0 %v820, 8
    %v863 = vpop.permute.xlu0 %862
    %864 = vrot.lane.b32.xlu0 %v821, 8
    %v865 = vpop.permute.xlu0 %864
    %v870 = vsel %vm214, 0.0, %v859
    %v871 = vsel %vm214, 0.0, %v861
    %v872 = vsel %vm214, 0.0, %v863
    %v873 = vsel %vm214, 0.0, %v865
    %874 = vrot.lane.b32.xlu0 %v818, 120
    %v875 = vpop.permute.xlu0 %874
    %876 = vrot.lane.b32.xlu0 %v819, 120
    %v877 = vpop.permute.xlu0 %876
    %878 = vrot.lane.b32.xlu0 %v820, 120
    %v879 = vpop.permute.xlu0 %878
    %880 = vrot.lane.b32.xlu0 %v821, 120
    %v881 = vpop.permute.xlu0 %880
    %v886 = vsel %vm231, %v875, 0.0
    %v887 = vsel %vm231, %v877, 0.0
    %v888 = vsel %vm231, %v879, 0.0
    %v889 = vsel %vm231, %v881, 0.0
    %v890 = vld [vmem:[%s9] sm:$0xff]
    %v891 = vld [vmem:[%s9 + $0x8] sm:$0xff]
    %v892 = vld [vmem:[%s9 + $0x10] sm:$0xff]
    %v893 = vld [vmem:[%s9 + $0x18] sm:$0xff]
    %v894 = vld [vmem:[%s9 + $0x20] sm:$0xff]
    %v895 = vld [vmem:[%s9 + $0x28] sm:$0xff]
    %v896 = vld [vmem:[%s9 + $0x30] sm:$0xff]
    %v897 = vld [vmem:[%s9 + $0x38] sm:$0xff]
    %v898 = vld [vmem:[%s10] sm:$0xff]
    %v899 = vld [vmem:[%s10 + $0x8] sm:$0xff]
    %v900 = vld [vmem:[%s10 + $0x10] sm:$0xff]
    %v901 = vld [vmem:[%s10 + $0x18] sm:$0xff]
    %903 = vset.pattern.permute.xlu0 0
    %904 = vperm.xlu0 %903, %v898
    %v905 = vpop.permute.xlu0 %904
    %908 = vset.pattern.permute.xlu0 0
    %909 = vperm.xlu0 %908, %v899
    %v910 = vpop.permute.xlu0 %909
    %913 = vset.pattern.permute.xlu0 0
    %914 = vperm.xlu0 %913, %v900
    %v915 = vpop.permute.xlu0 %914
    %918 = vset.pattern.permute.xlu0 0
    %919 = vperm.xlu0 %918, %v901
    %v920 = vpop.permute.xlu0 %919
    %v923 = vsel %vm302, %v891, 0
    %v926 = vsel %vm302, %v893, 0
    %v929 = vsel %vm302, %v895, 0
    %v932 = vsel %vm302, %v897, 0
    %934 = vmatprep.subr.mxu0 0.0
    %935 = vmatpush1.msra.mxu0 %v873
    %936 = vmatprep.subr.mxu0 0.0
    %937 = vmatpush1.msra.mxu0 %v872
    %938 = vmatprep.subr.mxu0 0.0
    %939 = vmatpush1.msra.mxu0 %v871
    %940 = vmatprep.subr.mxu0 0.0
    %941 = vmatpush1.msra.mxu0 %v870
    %942 = vmatprep.subr.mxu0 0.0
    %943 = vmatpush1.msra.mxu0 %v857
    %944 = vmatprep.subr.mxu0 0.0
    %945 = vmatpush1.msra.mxu0 %v856
    %946 = vmatprep.subr.mxu0 0.0
    %947 = vmatpush1.msra.mxu0 %v855
    %948 = vmatprep.subr.mxu0 0.0
    %949 = vmatpush1.msra.mxu0 %v854
    %950 = vmatprep.subr.mxu0 0.0
    %951 = vmatpush1.msra.mxu0 %v821
    %952 = vmatprep.subr.mxu0 0.0
    %953 = vmatpush1.msra.mxu0 %v820
    %954 = vmatprep.subr.mxu0 0.0
    %955 = vmatpush1.msra.mxu0 %v819
    %956 = vmatprep.subr.mxu0 0.0
    %957 = vmatpush1.msra.mxu0 %v818
    %958 = vmatprep.subr.mxu0 0.0
    %959 = vmatpush1.msra.mxu0 %v841
    %960 = vmatprep.subr.mxu0 0.0
    %961 = vmatpush1.msra.mxu0 %v840
    %962 = vmatprep.subr.mxu0 0.0
    %963 = vmatpush1.msra.mxu0 %v839
    %964 = vmatprep.subr.mxu0 0.0
    %965 = vmatpush1.msra.mxu0 %v838
    %966 = vmatprep.subr.mxu0 0.0
    %967 = vmatpush2.msra.mxu0 0.0
    %968 = vmatprep.subr.mxu0 0.0
    %969 = vmatpush2.msra.mxu0 0.0
    %970 = vmatprep.subr.mxu0 0.0
    %971 = vmatpush2.msra.mxu0 0.0
    %972 = vmatprep.subr.mxu0 0.0
    %973 = vmatpush2.msra.mxu0 0.0
    %974 = vmatprep.subr.mxu0 0.0
    %975 = vmatpush2.msra.mxu0 0.0
    %976 = vmatprep.subr.mxu0 0.0
    %977 = vmatpush2.msra.mxu0 0.0
    %978 = vmatprep.subr.mxu0 0.0
    %979 = vmatpush2.msra.mxu0 0.0
    %980 = vmatprep.subr.mxu0 0.0
    %981 = vmatpush2.msra.mxu0 0.0
    %982 = vmatprep.subr.mxu0 0.0
    %983 = vmatpush2.msra.mxu0 %v889
    %984 = vmatprep.subr.mxu0 0.0
    %985 = vmatpush2.msra.mxu0 %v888
    %986 = vmatprep.subr.mxu0 0.0
    %987 = vmatpush2.msra.mxu0 %v887
    %988 = vmatprep.subr.mxu0 0.0
    %989 = vmatpush2.msra.mxu0 %v886
    %990 = vmatprep.subr.mxu0 0.0
    %991 = vmatpush2.msra.mxu0 %v821
    %992 = vmatprep.subr.mxu0 0.0
    %993 = vmatpush2.msra.mxu0 %v820
    %994 = vmatprep.subr.mxu0 0.0
    %995 = vmatpush2.msra.mxu0 %v819
    %996 = vmatprep.subr.mxu0 0.0
    %997 = vmatpush2.msra.mxu0 %v818
    %998 = vmatprep.mubr.f32.mxu0 %v923
    %999 = vmatmul.mubr.f32.gmra.mxu0 %v890
    %v1000 = vpop.f32.mrf.mxu0
    %v1001 = vadd.f32 %v905, %v1000
    %v1002 = vpop.f32.mrf.mxu0
    %1003 = vmatprep.mubr.f32.mxu0 %v926
    %1004 = vmatmul.mubr.f32.gmra.mxu0 %v892
    %v1005 = vpop.f32.mrf.mxu0
    %v1006 = vadd.f32 %v910, %v1005
    %v1007 = vpop.f32.mrf.mxu0
    %1008 = vmatprep.mubr.f32.mxu0 %v929
    %1009 = vmatmul.mubr.f32.gmra.mxu0 %v894
    %v1010 = vpop.f32.mrf.mxu0
    %v1011 = vadd.f32 %v915, %v1010
    %v1012 = vpop.f32.mrf.mxu0
    %1013 = vmatprep.mubr.f32.mxu0 %v932
    %1014 = vmatmul.mubr.f32.gmra.mxu0 %v896
    %v1015 = vpop.f32.mrf.mxu0
    %v1016 = vadd.f32 %v920, %v1015
    %v1017 = vpop.f32.mrf.mxu0
    %1018 = vdwg.mxu0
    %v1019 = vmax.f32 %v1001, 0.0
    %v1020 = vmax.f32 %v1006, 0.0
    %v1021 = vmax.f32 %v1011, 0.0
    %v1022 = vmax.f32 %v1016, 0.0
    %v1023 = vadd.f32 %v1019, %v818
    %v1024 = vadd.f32 %v1020, %v819
    %v1025 = vadd.f32 %v1021, %v820
    %v1026 = vadd.f32 %v1022, %v821
    %v1027 = vld [vmem:[#allocation4] sm:$0x3f]
    %v1028 = vld [vmem:[%s12] sm:$0x3f]
    %1030 = vset.pattern.permute.xlu0 0
    %1031 = vperm.xlu0 %1030, %v1028
    %v1032 = vpop.permute.xlu0 %1031
    %v1035 = vsel %vm231, %v1027, 0
    %1037 = vmatprep.subr.mxu0 0.0
    %1038 = vmatpush1.msra.mxu0 0.0
    %1039 = vmatprep.subr.mxu0 0.0
    %1040 = vmatpush1.msra.mxu0 0.0
    %1041 = vmatprep.subr.mxu0 0.0
    %1042 = vmatpush1.msra.mxu0 0.0
    %1043 = vmatprep.subr.mxu0 0.0
    %1044 = vmatpush1.msra.mxu0 0.0
    %1045 = vmatprep.subr.mxu0 0.0
    %1046 = vmatpush1.msra.mxu0 0.0
    %1047 = vmatprep.subr.mxu0 0.0
    %1048 = vmatpush1.msra.mxu0 0.0
    %1049 = vmatprep.subr.mxu0 0.0
    %1050 = vmatpush1.msra.mxu0 0.0
    %1051 = vmatprep.subr.mxu0 0.0
    %1052 = vmatpush1.msra.mxu0 0.0
    %1053 = vmatprep.subr.mxu0 0.0
    %1054 = vmatpush1.msra.mxu0 0.0
    %1055 = vmatprep.subr.mxu0 0.0
    %1056 = vmatpush1.msra.mxu0 0.0
    %1057 = vmatprep.subr.mxu0 0.0
    %1058 = vmatpush1.msra.mxu0 0.0
    %1059 = vmatprep.subr.mxu0 0.0
    %1060 = vmatpush1.msra.mxu0 0.0
    %1061 = vmatprep.subr.mxu0 0.0
    %1062 = vmatpush1.msra.mxu0 %v1026
    %1063 = vmatprep.subr.mxu0 0.0
    %1064 = vmatpush1.msra.mxu0 %v1025
    %1065 = vmatprep.subr.mxu0 0.0
    %1066 = vmatpush1.msra.mxu0 %v1024
    %1067 = vmatprep.subr.mxu0 0.0
    %1068 = vmatpush1.msra.mxu0 %v1023
    %1069 = vmatprep.subr.mxu0 0.0
    %1070 = vmatpush2.msra.mxu0 0.0
    %1071 = vmatprep.subr.mxu0 0.0
    %1072 = vmatpush2.msra.mxu0 0.0
    %1073 = vmatprep.subr.mxu0 0.0
    %1074 = vmatpush2.msra.mxu0 0.0
    %1075 = vmatprep.subr.mxu0 0.0
    %1076 = vmatpush2.msra.mxu0 0.0
    %1077 = vmatprep.subr.mxu0 0.0
    %1078 = vmatpush2.msra.mxu0 0.0
    %1079 = vmatprep.subr.mxu0 0.0
    %1080 = vmatpush2.msra.mxu0 0.0
    %1081 = vmatprep.subr.mxu0 0.0
    %1082 = vmatpush2.msra.mxu0 0.0
    %1083 = vmatprep.subr.mxu0 0.0
    %1084 = vmatpush2.msra.mxu0 0.0
    %1085 = vmatprep.subr.mxu0 0.0
    %1086 = vmatpush2.msra.mxu0 0.0
    %1087 = vmatprep.subr.mxu0 0.0
    %1088 = vmatpush2.msra.mxu0 0.0
    %1089 = vmatprep.subr.mxu0 0.0
    %1090 = vmatpush2.msra.mxu0 0.0
    %1091 = vmatprep.subr.mxu0 0.0
    %1092 = vmatpush2.msra.mxu0 0.0
    %1093 = vmatprep.subr.mxu0 0.0
    %1094 = vmatpush2.msra.mxu0 0.0
    %1095 = vmatprep.subr.mxu0 0.0
    %1096 = vmatpush2.msra.mxu0 0.0
    %1097 = vmatprep.subr.mxu0 0.0
    %1098 = vmatpush2.msra.mxu0 0.0
    %1099 = vmatprep.subr.mxu0 0.0
    %1100 = vmatpush2.msra.mxu0 0.0
    %1101 = vmatprep.mubr.f32.mxu0 0.0
    %1102 = vmatmul.mubr.f32.gmra.mxu0 %v1035
    %v1103 = vpop.f32.mrf.mxu0
    %v1104 = vadd.f32 %v1032, %v1103
    %v1105 = vpop.f32.mrf.mxu0
    %1106 = vdwg.mxu0
    %vm1107 = vcmask 324608
    %1108 = vst.msk [vmem:[%s13] sm:$0x3f] %vm1107, %v1104
    // Predicated region
    $region62: #{ms_tcn2_gru_forward.4} parent=1 // pred_check
      _
    $region63: #{ms_tcn2_gru_forward.4} parent=1 // pred_check_branch
      %1110 = sbr.rel (0) target = $region65
    $region64: #{ms_tcn2_gru_forward.4} parent=1 // pred_region
      _
    $region65: #{ms_tcn2_gru_forward.4} parent=1 // pred_fallthru
      _
    // Predicated region
    $region66: #{ms_tcn2_gru_forward.4} parent=1 // pred_check
      _
    $region67: #{ms_tcn2_gru_forward.4} parent=1 // pred_check_branch
      %1112 = sbr.rel (0) target = $region69
    $region68: #{ms_tcn2_gru_forward.4} parent=1 // pred_region
      _
    $region69: #{ms_tcn2_gru_forward.4} parent=1 // pred_fallthru
      _
    %1113 = vsyncpa [#allocation3], 1
    %1114 = vsyncpa [#allocation5], 1

// kernel: ms_tcn2_gru_forward.5
$region0: #{ms_tcn2_gru_forward.5}
  #allocation0 [shape = 'u32[]', space=smem, size = 0x4, offset = 0x4, fixed_abs, tag = 'smem constant byte address 0x4 - core index']
  #allocation1 [shape = 'u32[144,128]{1,0:T(1,128)}', space=vmem, size = 0x12000, scoped, tag = 'internal scratch']
  %s0 = inlined_call_operand.vmem [shape: f32[6,40], index: 0, kind: input, shape index: {}]
  %s1 = inlined_call_operand.vmem [shape: f32[32,6], index: 1, kind: input, shape index: {}]
  %s2 = inlined_call_operand.vmem [shape: f32[32,1], index: 2, kind: input, shape index: {}]
  %s3 = inlined_call_operand.vmem [shape: f32[32,96], index: 3, kind: input, shape index: {}]
  %s4 = inlined_call_operand.vmem [shape: f32[32,1], index: 4, kind: input, shape index: {}]
  %s5 = inlined_call_operand.vmem [shape: f32[32,32], index: 5, kind: input, shape index: {}]
  %s6 = inlined_call_operand.vmem [shape: f32[32,1], index: 6, kind: input, shape index: {}]
  %s7 = inlined_call_operand.vmem [shape: f32[32,96], index: 7, kind: input, shape index: {}]
  %s8 = inlined_call_operand.vmem [shape: f32[32,1], index: 8, kind: input, shape index: {}]
  %s9 = inlined_call_operand.vmem [shape: f32[32,32], index: 9, kind: input, shape index: {}]
  %s10 = inlined_call_operand.vmem [shape: f32[32,1], index: 10, kind: input, shape index: {}]
  %s11 = inlined_call_operand.vmem [shape: f32[32,96], index: 11, kind: input, shape index: {}]
  %s12 = inlined_call_operand.vmem [shape: f32[32,1], index: 12, kind: input, shape index: {}]
  %s13 = inlined_call_operand.vmem [shape: f32[32,32], index: 13, kind: input, shape index: {}]
  %s14 = inlined_call_operand.vmem [shape: f32[32,1], index: 14, kind: input, shape index: {}]
  %s15 = inlined_call_operand.vmem [shape: f32[6,32], index: 15, kind: input, shape index: {}]
  %s16 = inlined_call_operand.vmem [shape: f32[6,1], index: 16, kind: input, shape index: {}]
  %s17 = inlined_call_operand.vmem [shape: f32[6,40], index: 17, kind: output, shape index: {}]
  %s18 = sld [smem:[#allocation0]]
  $region78: #{ms_tcn2_gru_forward.5} parent=0
    _
  %s20 = ssub.s32 1, %s18
  %s21 = scalar_select 0, %s20, %s18
  // Predicated region
  $region2: #{ms_tcn2_gru_forward.5} parent=0 // pred_check
    _
  $region3: #{ms_tcn2_gru_forward.5} parent=0 // pred_check_branch
    %23 = sbr.rel (0) target = $region5
  $region4: #{ms_tcn2_gru_forward.5} parent=0 // pred_region
    _
  $region5: #{ms_tcn2_gru_forward.5} parent=0 // pred_fallthru
    _
  // Predicated region
  $region6: #{ms_tcn2_gru_forward.5} parent=0 // pred_check
    _
  $region7: #{ms_tcn2_gru_forward.5} parent=0 // pred_check_branch
    %25 = sbr.rel (0) target = $region9
  $region8: #{ms_tcn2_gru_forward.5} parent=0 // pred_region
    _
  $region9: #{ms_tcn2_gru_forward.5} parent=0 // pred_fallthru
    _
  // Predicated region
  $region10: #{ms_tcn2_gru_forward.5} parent=0 // pred_check
    _
  $region11: #{ms_tcn2_gru_forward.5} parent=0 // pred_check_branch
    %27 = sbr.rel (0) target = $region13
  $region12: #{ms_tcn2_gru_forward.5} parent=0 // pred_region
    _
  $region13: #{ms_tcn2_gru_forward.5} parent=0 // pred_fallthru
    _
  // Predicated region
  $region14: #{ms_tcn2_gru_forward.5} parent=0 // pred_check
    _
  $region15: #{ms_tcn2_gru_forward.5} parent=0 // pred_check_branch
    %29 = sbr.rel (0) target = $region17
  $region16: #{ms_tcn2_gru_forward.5} parent=0 // pred_region
    _
  $region17: #{ms_tcn2_gru_forward.5} parent=0 // pred_fallthru
    _
  // Predicated region
  $region18: #{ms_tcn2_gru_forward.5} parent=0 // pred_check
    _
  $region19: #{ms_tcn2_gru_forward.5} parent=0 // pred_check_branch
    %31 = sbr.rel (0) target = $region21
  $region20: #{ms_tcn2_gru_forward.5} parent=0 // pred_region
    _
  $region21: #{ms_tcn2_gru_forward.5} parent=0 // pred_fallthru
    _
  // Predicated region
  $region22: #{ms_tcn2_gru_forward.5} parent=0 // pred_check
    _
  $region23: #{ms_tcn2_gru_forward.5} parent=0 // pred_check_branch
    %33 = sbr.rel (0) target = $region25
  $region24: #{ms_tcn2_gru_forward.5} parent=0 // pred_region
    _
  $region25: #{ms_tcn2_gru_forward.5} parent=0 // pred_fallthru
    _
  // Predicated region
  $region26: #{ms_tcn2_gru_forward.5} parent=0 // pred_check
    _
  $region27: #{ms_tcn2_gru_forward.5} parent=0 // pred_check_branch
    %35 = sbr.rel (0) target = $region29
  $region28: #{ms_tcn2_gru_forward.5} parent=0 // pred_region
    _
  $region29: #{ms_tcn2_gru_forward.5} parent=0 // pred_fallthru
    _
  // Predicated region
  $region30: #{ms_tcn2_gru_forward.5} parent=0 // pred_check
    _
  $region31: #{ms_tcn2_gru_forward.5} parent=0 // pred_check_branch
    %37 = sbr.rel (0) target = $region33
  $region32: #{ms_tcn2_gru_forward.5} parent=0 // pred_region
    _
  $region33: #{ms_tcn2_gru_forward.5} parent=0 // pred_fallthru
    _
  // Predicated region
  $region34: #{ms_tcn2_gru_forward.5} parent=0 // pred_check
    _
  $region35: #{ms_tcn2_gru_forward.5} parent=0 // pred_check_branch
    %39 = sbr.rel (0) target = $region37
  $region36: #{ms_tcn2_gru_forward.5} parent=0 // pred_region
    _
  $region37: #{ms_tcn2_gru_forward.5} parent=0 // pred_fallthru
    _
  // Predicated region
  $region38: #{ms_tcn2_gru_forward.5} parent=0 // pred_check
    _
  $region39: #{ms_tcn2_gru_forward.5} parent=0 // pred_check_branch
    %41 = sbr.rel (0) target = $region41
  $region40: #{ms_tcn2_gru_forward.5} parent=0 // pred_region
    _
  $region41: #{ms_tcn2_gru_forward.5} parent=0 // pred_fallthru
    _
  // Predicated region
  $region42: #{ms_tcn2_gru_forward.5} parent=0 // pred_check
    _
  $region43: #{ms_tcn2_gru_forward.5} parent=0 // pred_check_branch
    %43 = sbr.rel (0) target = $region45
  $region44: #{ms_tcn2_gru_forward.5} parent=0 // pred_region
    _
  $region45: #{ms_tcn2_gru_forward.5} parent=0 // pred_fallthru
    _
  // Predicated region
  $region46: #{ms_tcn2_gru_forward.5} parent=0 // pred_check
    _
  $region47: #{ms_tcn2_gru_forward.5} parent=0 // pred_check_branch
    %45 = sbr.rel (0) target = $region49
  $region48: #{ms_tcn2_gru_forward.5} parent=0 // pred_region
    _
  $region49: #{ms_tcn2_gru_forward.5} parent=0 // pred_fallthru
    _
  // Predicated region
  $region50: #{ms_tcn2_gru_forward.5} parent=0 // pred_check
    _
  $region51: #{ms_tcn2_gru_forward.5} parent=0 // pred_check_branch
    %47 = sbr.rel (0) target = $region53
  $region52: #{ms_tcn2_gru_forward.5} parent=0 // pred_region
    _
  $region53: #{ms_tcn2_gru_forward.5} parent=0 // pred_fallthru
    _
  // Predicated region
  $region54: #{ms_tcn2_gru_forward.5} parent=0 // pred_check
    _
  $region55: #{ms_tcn2_gru_forward.5} parent=0 // pred_check_branch
    %49 = sbr.rel (0) target = $region57
  $region56: #{ms_tcn2_gru_forward.5} parent=0 // pred_region
    _
  $region57: #{ms_tcn2_gru_forward.5} parent=0 // pred_fallthru
    _
  // Predicated region
  $region58: #{ms_tcn2_gru_forward.5} parent=0 // pred_check
    _
  $region59: #{ms_tcn2_gru_forward.5} parent=0 // pred_check_branch
    %51 = sbr.rel (0) target = $region61
  $region60: #{ms_tcn2_gru_forward.5} parent=0 // pred_region
    _
  $region61: #{ms_tcn2_gru_forward.5} parent=0 // pred_fallthru
    _
  // Predicated region
  $region62: #{ms_tcn2_gru_forward.5} parent=0 // pred_check
    _
  $region63: #{ms_tcn2_gru_forward.5} parent=0 // pred_check_branch
    %53 = sbr.rel (0) target = $region65
  $region64: #{ms_tcn2_gru_forward.5} parent=0 // pred_region
    _
  $region65: #{ms_tcn2_gru_forward.5} parent=0 // pred_fallthru
    _
  // Predicated region
  $region66: #{ms_tcn2_gru_forward.5} parent=0 // pred_check
    _
  $region67: #{ms_tcn2_gru_forward.5} parent=0 // pred_check_branch
    %55 = sbr.rel (0) target = $region69
  $region68: #{ms_tcn2_gru_forward.5} parent=0 // pred_region
    _
  $region69: #{ms_tcn2_gru_forward.5} parent=0 // pred_fallthru
    _
  %v56 = vld [vmem:[%s0] sm:$0x3f]
  %vm57 = vcmask 324608
  %v58 = vsel %vm57, %v56, -inf
  %v59 = vrot.slane %v58, 4
  %v60 = vmax.f32 %v58, %v59
  %v61 = vrot.slane %v60, 2
  %v62 = vmax.f32 %v60, %v61
  %v63 = vrot.slane %v62, 1
  %v64 = vmax.f32 %v62, %v63
  %v65 = vsub.f32 %v56, %v64
  %v66 = vmul.f32 %v65, 1.442695
  %v67 = vpow.pop %v66
  %v68 = vsel %vm57, %v67, 0.0
  %v69 = vrot.slane %v68, 4
  %v70 = vadd.f32 %v68, %v69
  %v71 = vrot.slane %v70, 2
  %v72 = vadd.f32 %v70, %v71
  %v73 = vrot.slane %v72, 1
  %v74 = vadd.f32 %v72, %v73
  %v75 = vrcp.pop %v74
  %v76 = vmul.f32 %v67, %v75
  %v77 = vld [vmem:[%s1] sm:$0xff]
  %v78 = vld [vmem:[%s1 + $0x8] sm:$0xff]
  %v79 = vld [vmem:[%s1 + $0x10] sm:$0xff]
  %v80 = vld [vmem:[%s1 + $0x18] sm:$0xff]
  %v81 = vld [vmem:[%s2] sm:$0xff]
  %v82 = vld [vmem:[%s2 + $0x8] sm:$0xff]
  %v83 = vld [vmem:[%s2 + $0x10] sm:$0xff]
  %v84 = vld [vmem:[%s2 + $0x18] sm:$0xff]
  %86 = vset.pattern.permute.xlu0 0
  %87 = vperm.xlu0 %86, %v81
  %v88 = vpop.permute.xlu0 %87
  %91 = vset.pattern.permute.xlu0 0
  %92 = vperm.xlu0 %91, %v82
  %v93 = vpop.permute.xlu0 %92
  %96 = vset.pattern.permute.xlu0 0
  %97 = vperm.xlu0 %96, %v83
  %v98 = vpop.permute.xlu0 %97
  %101 = vset.pattern.permute.xlu0 0
  %102 = vperm.xlu0 %101, %v84
  %v103 = vpop.permute.xlu0 %102
  %vm105 = vcmask 48128
  %v107 = vsel %vm105, %v77, 0
  %v110 = vsel %vm105, %v78, 0
  %v113 = vsel %vm105, %v79, 0
  %v116 = vsel %vm105, %v80, 0
  %vm118 = vcmask 1045504
  %v120 = vsel %vm118, %v76, 0
  %122 = vmatprep.subr.mxu0 0.0
  %123 = vmatpush1.msra.mxu0 0.0
  %124 = vmatprep.subr.mxu0 0.0
  %125 = vmatpush1.msra.mxu0 0.0
  %126 = vmatprep.subr.mxu0 0.0
  %127 = vmatpush1.msra.mxu0 0.0
  %128 = vmatprep.subr.mxu0 0.0
  %129 = vmatpush1.msra.mxu0 0.0
  %130 = vmatprep.subr.mxu0 0.0
  %131 = vmatpush1.msra.mxu0 0.0
  %132 = vmatprep.subr.mxu0 0.0
  %133 = vmatpush1.msra.mxu0 0.0
  %134 = vmatprep.subr.mxu0 0.0
  %135 = vmatpush1.msra.mxu0 0.0
  %136 = vmatprep.subr.mxu0 0.0
  %137 = vmatpush1.msra.mxu0 0.0
  %138 = vmatprep.subr.mxu0 0.0
  %139 = vmatpush1.msra.mxu0 0.0
  %140 = vmatprep.subr.mxu0 0.0
  %141 = vmatpush1.msra.mxu0 0.0
  %142 = vmatprep.subr.mxu0 0.0
  %143 = vmatpush1.msra.mxu0 0.0
  %144 = vmatprep.subr.mxu0 0.0
  %145 = vmatpush1.msra.mxu0 0.0
  %146 = vmatprep.subr.mxu0 0.0
  %147 = vmatpush1.msra.mxu0 0.0
  %148 = vmatprep.subr.mxu0 0.0
  %149 = vmatpush1.msra.mxu0 0.0
  %150 = vmatprep.subr.mxu0 0.0
  %151 = vmatpush1.msra.mxu0 0.0
  %152 = vmatprep.subr.mxu0 0.0
  %153 = vmatpush1.msra.mxu0 %v120
  %154 = vmatprep.subr.mxu0 0.0
  %155 = vmatpush2.msra.mxu0 0.0
  %156 = vmatprep.subr.mxu0 0.0
  %157 = vmatpush2.msra.mxu0 0.0
  %158 = vmatprep.subr.mxu0 0.0
  %159 = vmatpush2.msra.mxu0 0.0
  %160 = vmatprep.subr.mxu0 0.0
  %161 = vmatpush2.msra.mxu0 0.0
  %162 = vmatprep.subr.mxu0 0.0
  %163 = vmatpush2.msra.mxu0 0.0
  %164 = vmatprep.subr.mxu0 0.0
  %165 = vmatpush2.msra.mxu0 0.0
  %166 = vmatprep.subr.mxu0 0.0
  %167 = vmatpush2.msra.mxu0 0.0
  %168 = vmatprep.subr.mxu0 0.0
  %169 = vmatpush2.msra.mxu0 0.0
  %170 = vmatprep.subr.mxu0 0.0
  %171 = vmatpush2.msra.mxu0 0.0
  %172 = vmatprep.subr.mxu0 0.0
  %173 = vmatpush2.msra.mxu0 0.0
  %174 = vmatprep.subr.mxu0 0.0
  %175 = vmatpush2.msra.mxu0 0.0
  %176 = vmatprep.subr.mxu0 0.0
  %177 = vmatpush2.msra.mxu0 0.0
  %178 = vmatprep.subr.mxu0 0.0
  %179 = vmatpush2.msra.mxu0 0.0
  %180 = vmatprep.subr.mxu0 0.0
  %181 = vmatpush2.msra.mxu0 0.0
  %182 = vmatprep.subr.mxu0 0.0
  %183 = vmatpush2.msra.mxu0 0.0
  %184 = vmatprep.subr.mxu0 0.0
  %185 = vmatpush2.msra.mxu0 0.0
  %186 = vmatprep.mubr.f32.mxu0 0.0
  %187 = vmatmul.mubr.f32.gmra.mxu0 %v107
  %v188 = vpop.f32.mrf.mxu0
  %v189 = vadd.f32 %v88, %v188
  %v190 = vpop.f32.mrf.mxu0
  %191 = vmatprep.mubr.f32.mxu0 0.0
  %192 = vmatmul.mubr.f32.gmra.mxu0 %v110
  %v193 = vpop.f32.mrf.mxu0
  %v194 = vadd.f32 %v93, %v193
  %v195 = vpop.f32.mrf.mxu0
  %196 = vmatprep.mubr.f32.mxu0 0.0
  %197 = vmatmul.mubr.f32.gmra.mxu0 %v113
  %v198 = vpop.f32.mrf.mxu0
  %v199 = vadd.f32 %v98, %v198
  %v200 = vpop.f32.mrf.mxu0
  %201 = vmatprep.mubr.f32.mxu0 0.0
  %202 = vmatmul.mubr.f32.gmra.mxu0 %v116
  %v203 = vpop.f32.mrf.mxu0
  %v204 = vadd.f32 %v103, %v203
  %v205 = vpop.f32.mrf.mxu0
  %206 = vdwg.mxu0
  %211 = vrot.lane.b32.xlu0 %v189, 1
  %v212 = vpop.permute.xlu0 %211
  %213 = vrot.lane.b32.xlu0 %v194, 1
  %v214 = vpop.permute.xlu0 %213
  %215 = vrot.lane.b32.xlu0 %v199, 1
  %v216 = vpop.permute.xlu0 %215
  %217 = vrot.lane.b32.xlu0 %v204, 1
  %v218 = vpop.permute.xlu0 %217
  %vm223 = vcmask 7168
  %v224 = vsel %vm223, 0.0, %v212
  %v225 = vsel %vm223, 0.0, %v214
  %v226 = vsel %vm223, 0.0, %v216
  %v227 = vsel %vm223, 0.0, %v218
  %228 = vrot.lane.b32.xlu0 %v189, 127
  %v229 = vpop.permute.xlu0 %228
  %230 = vrot.lane.b32.xlu0 %v194, 127
  %v231 = vpop.permute.xlu0 %230
  %232 = vrot.lane.b32.xlu0 %v199, 127
  %v233 = vpop.permute.xlu0 %232
  %234 = vrot.lane.b32.xlu0 %v204, 127
  %v235 = vpop.permute.xlu0 %234
  %vm240 = vcmask 318464
  %v241 = vsel %vm240, %v229, 0.0
  %v242 = vsel %vm240, %v231, 0.0
  %v243 = vsel %vm240, %v233, 0.0
  %v244 = vsel %vm240, %v235, 0.0
  %v245 = vld [vmem:[%s3] sm:$0xff]
  %v246 = vld [vmem:[%s3 + $0x8] sm:$0xff]
  %v247 = vld [vmem:[%s3 + $0x10] sm:$0xff]
  %v248 = vld [vmem:[%s3 + $0x18] sm:$0xff]
  %v249 = vld [vmem:[%s4] sm:$0xff]
  %v250 = vld [vmem:[%s4 + $0x8] sm:$0xff]
  %v251 = vld [vmem:[%s4 + $0x10] sm:$0xff]
  %v252 = vld [vmem:[%s4 + $0x18] sm:$0xff]
  %254 = vset.pattern.permute.xlu0 0
  %255 = vperm.xlu0 %254, %v249
  %v256 = vpop.permute.xlu0 %255
  %259 = vset.pattern.permute.xlu0 0
  %260 = vperm.xlu0 %259, %v250
  %v261 = vpop.permute.xlu0 %260
  %264 = vset.pattern.permute.xlu0 0
  %265 = vperm.xlu0 %264, %v251
  %v266 = vpop.permute.xlu0 %265
  %269 = vset.pattern.permute.xlu0 0
  %270 = vperm.xlu0 %269, %v252
  %v271 = vpop.permute.xlu0 %270
  %vm273 = vcmask 785408
  %v275 = vsel %vm273, %v245, 0
  %v278 = vsel %vm273, %v246, 0
  %v281 = vsel %vm273, %v247, 0
  %v284 = vsel %vm273, %v248, 0
  %286 = vmatprep.subr.mxu0 0.0
  %287 = vmatpush1.msra.mxu0 0.0
  %288 = vmatprep.subr.mxu0 0.0
  %289 = vmatpush1.msra.mxu0 0.0
  %290 = vmatprep.subr.mxu0 0.0
  %291 = vmatpush1.msra.mxu0 0.0
  %292 = vmatprep.subr.mxu0 0.0
  %293 = vmatpush1.msra.mxu0 0.0
  %294 = vmatprep.subr.mxu0 0.0
  %295 = vmatpush1.msra.mxu0 %v244
  %296 = vmatprep.subr.mxu0 0.0
  %297 = vmatpush1.msra.mxu0 %v243
  %298 = vmatprep.subr.mxu0 0.0
  %299 = vmatpush1.msra.mxu0 %v242
  %300 = vmatprep.subr.mxu0 0.0
  %301 = vmatpush1.msra.mxu0 %v241
  %302 = vmatprep.subr.mxu0 0.0
  %303 = vmatpush1.msra.mxu0 %v204
  %304 = vmatprep.subr.mxu0 0.0
  %305 = vmatpush1.msra.mxu0 %v199
  %306 = vmatprep.subr.mxu0 0.0
  %307 = vmatpush1.msra.mxu0 %v194
  %308 = vmatprep.subr.mxu0 0.0
  %309 = vmatpush1.msra.mxu0 %v189
  %310 = vmatprep.subr.mxu0 0.0
  %311 = vmatpush1.msra.mxu0 %v227
  %312 = vmatprep.subr.mxu0 0.0
  %313 = vmatpush1.msra.mxu0 %v226
  %314 = vmatprep.subr.mxu0 0.0
  %315 = vmatpush1.msra.mxu0 %v225
  %316 = vmatprep.subr.mxu0 0.0
  %317 = vmatpush1.msra.mxu0 %v224
  %318 = vmatprep.subr.mxu0 0.0
  %319 = vmatpush2.msra.mxu0 0.0
  %320 = vmatprep.subr.mxu0 0.0
  %321 = vmatpush2.msra.mxu0 0.0
  %322 = vmatprep.subr.mxu0 0.0
  %323 = vmatpush2.msra.mxu0 0.0
  %324 = vmatprep.subr.mxu0 0.0
  %325 = vmatpush2.msra.mxu0 0.0
  %326 = vmatprep.subr.mxu0 0.0
  %327 = vmatpush2.msra.mxu0 0.0
  %328 = vmatprep.subr.mxu0 0.0
  %329 = vmatpush2.msra.mxu0 0.0
  %330 = vmatprep.subr.mxu0 0.0
  %331 = vmatpush2.msra.mxu0 0.0
  %332 = vmatprep.subr.mxu0 0.0
  %333 = vmatpush2.msra.mxu0 0.0
  %334 = vmatprep.subr.mxu0 0.0
  %335 = vmatpush2.msra.mxu0 0.0
  %336 = vmatprep.subr.mxu0 0.0
  %337 = vmatpush2.msra.mxu0 0.0
  %338 = vmatprep.subr.mxu0 0.0
  %339 = vmatpush2.msra.mxu0 0.0
  %340 = vmatprep.subr.mxu0 0.0
  %341 = vmatpush2.msra.mxu0 0.0
  %342 = vmatprep.subr.mxu0 0.0
  %343 = vmatpush2.msra.mxu0 0.0
  %344 = vmatprep.subr.mxu0 0.0
  %345 = vmatpush2.msra.mxu0 0.0
  %346 = vmatprep.subr.mxu0 0.0
  %347 = vmatpush2.msra.mxu0 0.0
  %348 = vmatprep.subr.mxu0 0.0
  %349 = vmatpush2.msra.mxu0 0.0
  %350 = vmatprep.mubr.f32.mxu0 0.0
  %351 = vmatmul.mubr.f32.gmra.mxu0 %v275
  %v352 = vpop.f32.mrf.mxu0
  %v353 = vadd.f32 %v256, %v352
  %v354 = vpop.f32.mrf.mxu0
  %355 = vmatprep.mubr.f32.mxu0 0.0
  %356 = vmatmul.mubr.f32.gmra.mxu0 %v278
  %v357 = vpop.f32.mrf.mxu0
  %v358 = vadd.f32 %v261, %v357
  %v359 = vpop.f32.mrf.mxu0
  %360 = vmatprep.mubr.f32.mxu0 0.0
  %361 = vmatmul.mubr.f32.gmra.mxu0 %v281
  %v362 = vpop.f32.mrf.mxu0
  %v363 = vadd.f32 %v266, %v362
  %v364 = vpop.f32.mrf.mxu0
  %365 = vmatprep.mubr.f32.mxu0 0.0
  %366 = vmatmul.mubr.f32.gmra.mxu0 %v284
  %v367 = vpop.f32.mrf.mxu0
  %v368 = vadd.f32 %v271, %v367
  %v369 = vpop.f32.mrf.mxu0
  %370 = vdwg.mxu0
  %v371 = vmax.f32 %v353, 0.0
  %v372 = vmax.f32 %v358, 0.0
  %v373 = vmax.f32 %v363, 0.0
  %v374 = vmax.f32 %v368, 0.0
  %v375 = vld [vmem:[%s5] sm:$0xff]
  %v376 = vld [vmem:[%s5 + $0x8] sm:$0xff]
  %v377 = vld [vmem:[%s5 + $0x10] sm:$0xff]
  %v378 = vld [vmem:[%s5 + $0x18] sm:$0xff]
  %vm379 = vcmask 261120
  %v381 = vsel %vm379, %v375, 0
  %v384 = vsel %vm379, %v376, 0
  %v387 = vsel %vm379, %v377, 0
  %v390 = vsel %vm379, %v378, 0
  %392 = vmatprep.subr.mxu0 0.0
  %393 = vmatpush1.msra.mxu0 0.0
  %394 = vmatprep.subr.mxu0 0.0
  %395 = vmatpush1.msra.mxu0 0.0
  %396 = vmatprep.subr.mxu0 0.0
  %397 = vmatpush1.msra.mxu0 0.0
  %398 = vmatprep.subr.mxu0 0.0
  %399 = vmatpush1.msra.mxu0 0.0
  %400 = vmatprep.subr.mxu0 0.0
  %401 = vmatpush1.msra.mxu0 0.0
  %402 = vmatprep.subr.mxu0 0.0
  %403 = vmatpush1.msra.mxu0 0.0
  %404 = vmatprep.subr.mxu0 0.0
  %405 = vmatpush1.msra.mxu0 0.0
  %406 = vmatprep.subr.mxu0 0.0
  %407 = vmatpush1.msra.mxu0 0.0
  %408 = vmatprep.subr.mxu0 0.0
  %409 = vmatpush1.msra.mxu0 0.0
  %410 = vmatprep.subr.mxu0 0.0
  %411 = vmatpush1.msra.mxu0 0.0
  %412 = vmatprep.subr.mxu0 0.0
  %413 = vmatpush1.msra.mxu0 0.0
  %414 = vmatprep.subr.mxu0 0.0
  %415 = vmatpush1.msra.mxu0 0.0
  %416 = vmatprep.subr.mxu0 0.0
  %417 = vmatpush1.msra.mxu0 %v374
  %418 = vmatprep.subr.mxu0 0.0
  %419 = vmatpush1.msra.mxu0 %v373
  %420 = vmatprep.subr.mxu0 0.0
  %421 = vmatpush1.msra.mxu0 %v372
  %422 = vmatprep.subr.mxu0 0.0
  %423 = vmatpush1.msra.mxu0 %v371
  %424 = vmatprep.subr.mxu0 0.0
  %425 = vmatpush2.msra.mxu0 0.0
  %426 = vmatprep.subr.mxu0 0.0
  %427 = vmatpush2.msra.mxu0 0.0
  %428 = vmatprep.subr.mxu0 0.0
  %429 = vmatpush2.msra.mxu0 0.0
  %430 = vmatprep.subr.mxu0 0.0
  %431 = vmatpush2.msra.mxu0 0.0
  %432 = vmatprep.subr.mxu0 0.0
  %433 = vmatpush2.msra.mxu0 0.0
  %434 = vmatprep.subr.mxu0 0.0
  %435 = vmatpush2.msra.mxu0 0.0
  %436 = vmatprep.subr.mxu0 0.0
  %437 = vmatpush2.msra.mxu0 0.0
  %438 = vmatprep.subr.mxu0 0.0
  %439 = vmatpush2.msra.mxu0 0.0
  %440 = vmatprep.subr.mxu0 0.0
  %441 = vmatpush2.msra.mxu0 0.0
  %442 = vmatprep.subr.mxu0 0.0
  %443 = vmatpush2.msra.mxu0 0.0
  %444 = vmatprep.subr.mxu0 0.0
  %445 = vmatpush2.msra.mxu0 0.0
  %446 = vmatprep.subr.mxu0 0.0
  %447 = vmatpush2.msra.mxu0 0.0
  %448 = vmatprep.subr.mxu0 0.0
  %449 = vmatpush2.msra.mxu0 0.0
  %450 = vmatprep.subr.mxu0 0.0
  %451 = vmatpush2.msra.mxu0 0.0
  %452 = vmatprep.subr.mxu0 0.0
  %453 = vmatpush2.msra.mxu0 0.0
  %454 = vmatprep.subr.mxu0 0.0
  %455 = vmatpush2.msra.mxu0 0.0
  %456 = vmatprep.mubr.f32.mxu0 0.0
  %457 = vmatmul.mubr.f32.gmra.mxu0 %v381
  %v458 = vpop.f32.mrf.mxu0
  %v459 = vadd.f32 0.0, %v458
  %v460 = vpop.f32.mrf.mxu0
  %461 = vmatprep.mubr.f32.mxu0 0.0
  %462 = vmatmul.mubr.f32.gmra.mxu0 %v384
  %v463 = vpop.f32.mrf.mxu0
  %v464 = vadd.f32 0.0, %v463
  %v465 = vpop.f32.mrf.mxu0
  %466 = vmatprep.mubr.f32.mxu0 0.0
  %467 = vmatmul.mubr.f32.gmra.mxu0 %v387
  %v468 = vpop.f32.mrf.mxu0
  %v469 = vadd.f32 0.0, %v468
  %v470 = vpop.f32.mrf.mxu0
  %471 = vmatprep.mubr.f32.mxu0 0.0
  %472 = vmatmul.mubr.f32.gmra.mxu0 %v390
  %v473 = vpop.f32.mrf.mxu0
  %v474 = vadd.f32 0.0, %v473
  %v475 = vpop.f32.mrf.mxu0
  %476 = vdwg.mxu0
  %v477 = vadd.f32 %v189, %v459
  %v478 = vadd.f32 %v194, %v464
  %v479 = vadd.f32 %v199, %v469
  %v480 = vadd.f32 %v204, %v474
  %v481 = vld [vmem:[%s6] sm:$0xff]
  %v482 = vld [vmem:[%s6 + $0x8] sm:$0xff]
  %v483 = vld [vmem:[%s6 + $0x10] sm:$0xff]
  %v484 = vld [vmem:[%s6 + $0x18] sm:$0xff]
  %486 = vset.pattern.permute.xlu0 0
  %487 = vperm.xlu0 %486, %v481
  %v488 = vpop.permute.xlu0 %487
  %491 = vset.pattern.permute.xlu0 0
  %492 = vperm.xlu0 %491, %v482
  %v493 = vpop.permute.xlu0 %492
  %496 = vset.pattern.permute.xlu0 0
  %497 = vperm.xlu0 %496, %v483
  %v498 = vpop.permute.xlu0 %497
  %501 = vset.pattern.permute.xlu0 0
  %502 = vperm.xlu0 %501, %v484
  %v503 = vpop.permute.xlu0 %502
  %v505 = vadd.f32 %v477, %v488
  %v506 = vadd.f32 %v478, %v493
  %v507 = vadd.f32 %v479, %v498
  %v508 = vadd.f32 %v480, %v503
  %513 = vrot.lane.b32.xlu0 %v505, 2
  %v514 = vpop.permute.xlu0 %513
  %515 = vrot.lane.b32.xlu0 %v506, 2
  %v516 = vpop.permute.xlu0 %515
  %517 = vrot.lane.b32.xlu0 %v507, 2
  %v518 = vpop.permute.xlu0 %517
  %519 = vrot.lane.b32.xlu0 %v508, 2
  %v520 = vpop.permute.xlu0 %519
  %vm525 = vcmask 15360
  %v526 = vsel %vm525, 0.0, %v514
  %v527 = vsel %vm525, 0.0, %v516
  %v528 = vsel %vm525, 0.0, %v518
  %v529 = vsel %vm525, 0.0, %v520
  %530 = vrot.lane.b32.xlu0 %v505, 126
  %v531 = vpop.permute.xlu0 %530
  %532 = vrot.lane.b32.xlu0 %v506, 126
  %v533 = vpop.permute.xlu0 %532
  %534 = vrot.lane.b32.xlu0 %v507, 126
  %v535 = vpop.permute.xlu0 %534
  %536 = vrot.lane.b32.xlu0 %v508, 126
  %v537 = vpop.permute.xlu0 %536
  %vm542 = vcmask 310272
  %v543 = vsel %vm542, %v531, 0.0
  %v544 = vsel %vm542, %v533, 0.0
  %v545 = vsel %vm542, %v535, 0.0
  %v546 = vsel %vm542, %v537, 0.0
  %v547 = vld [vmem:[%s7] sm:$0xff]
  %v548 = vld [vmem:[%s7 + $0x8] sm:$0xff]
  %v549 = vld [vmem:[%s7 + $0x10] sm:$0xff]
  %v550 = vld [vmem:[%s7 + $0x18] sm:$0xff]
  %v551 = vld [vmem:[%s8] sm:$0xff]
  %v552 = vld [vmem:[%s8 + $0x8] sm:$0xff]
  %v553 = vld [vmem:[%s8 + $0x10] sm:$0xff]
  %v554 = vld [vmem:[%s8 + $0x18] sm:$0xff]
  %556 = vset.pattern.permute.xlu0 0
  %557 = vperm.xlu0 %556, %v551
  %v558 = vpop.permute.xlu0 %557
  %561 = vset.pattern.permute.xlu0 0
  %562 = vperm.xlu0 %561, %v552
  %v563 = vpop.permute.xlu0 %562
  %566 = vset.pattern.permute.xlu0 0
  %567 = vperm.xlu0 %566, %v553
  %v568 = vpop.permute.xlu0 %567
  %571 = vset.pattern.permute.xlu0 0
  %572 = vperm.xlu0 %571, %v554
  %v573 = vpop.permute.xlu0 %572
  %v576 = vsel %vm273, %v547, 0
  %v579 = vsel %vm273, %v548, 0
  %v582 = vsel %vm273, %v549, 0
  %v585 = vsel %vm273, %v550, 0
  %587 = vmatprep.subr.mxu0 0.0
  %588 = vmatpush1.msra.mxu0 0.0
  %589 = vmatprep.subr.mxu0 0.0
  %590 = vmatpush1.msra.mxu0 0.0
  %591 = vmatprep.subr.mxu0 0.0
  %592 = vmatpush1.msra.mxu0 0.0
  %593 = vmatprep.subr.mxu0 0.0
  %594 = vmatpush1.msra.mxu0 0.0
  %595 = vmatprep.subr.mxu0 0.0
  %596 = vmatpush1.msra.mxu0 %v546
  %597 = vmatprep.subr.mxu0 0.0
  %598 = vmatpush1.msra.mxu0 %v545
  %599 = vmatprep.subr.mxu0 0.0
  %600 = vmatpush1.msra.mxu0 %v544
  %601 = vmatprep.subr.mxu0 0.0
  %602 = vmatpush1.msra.mxu0 %v543
  %603 = vmatprep.subr.mxu0 0.0
  %604 = vmatpush1.msra.mxu0 %v508
  %605 = vmatprep.subr.mxu0 0.0
  %606 = vmatpush1.msra.mxu0 %v507
  %607 = vmatprep.subr.mxu0 0.0
  %608 = vmatpush1.msra.mxu0 %v506
  %609 = vmatprep.subr.mxu0 0.0
  %610 = vmatpush1.msra.mxu0 %v505
  %611 = vmatprep.subr.mxu0 0.0
  %612 = vmatpush1.msra.mxu0 %v529
  %613 = vmatprep.subr.mxu0 0.0
  %614 = vmatpush1.msra.mxu0 %v528
  %615 = vmatprep.subr.mxu0 0.0
  %616 = vmatpush1.msra.mxu0 %v527
  %617 = vmatprep.subr.mxu0 0.0
  %618 = vmatpush1.msra.mxu0 %v526
  %619 = vmatprep.subr.mxu0 0.0
  %620 = vmatpush2.msra.mxu0 0.0
  %621 = vmatprep.subr.mxu0 0.0
  %622 = vmatpush2.msra.mxu0 0.0
  %623 = vmatprep.subr.mxu0 0.0
  %624 = vmatpush2.msra.mxu0 0.0
  %625 = vmatprep.subr.mxu0 0.0
  %626 = vmatpush2.msra.mxu0 0.0
  %627 = vmatprep.subr.mxu0 0.0
  %628 = vmatpush2.msra.mxu0 0.0
  %629 = vmatprep.subr.mxu0 0.0
  %630 = vmatpush2.msra.mxu0 0.0
  %631 = vmatprep.subr.mxu0 0.0
  %632 = vmatpush2.msra.mxu0 0.0
  %633 = vmatprep.subr.mxu0 0.0
  %634 = vmatpush2.msra.mxu0 0.0
  %635 = vmatprep.subr.mxu0 0.0
  %636 = vmatpush2.msra.mxu0 0.0
  %637 = vmatprep.subr.mxu0 0.0
  %638 = vmatpush2.msra.mxu0 0.0
  %639 = vmatprep.subr.mxu0 0.0
  %640 = vmatpush2.msra.mxu0 0.0
  %641 = vmatprep.subr.mxu0 0.0
  %642 = vmatpush2.msra.mxu0 0.0
  %643 = vmatprep.subr.mxu0 0.0
  %644 = vmatpush2.msra.mxu0 0.0
  %645 = vmatprep.subr.mxu0 0.0
  %646 = vmatpush2.msra.mxu0 0.0
  %647 = vmatprep.subr.mxu0 0.0
  %648 = vmatpush2.msra.mxu0 0.0
  %649 = vmatprep.subr.mxu0 0.0
  %650 = vmatpush2.msra.mxu0 0.0
  %651 = vmatprep.mubr.f32.mxu0 0.0
  %652 = vmatmul.mubr.f32.gmra.mxu0 %v576
  %v653 = vpop.f32.mrf.mxu0
  %v654 = vadd.f32 %v558, %v653
  %v655 = vpop.f32.mrf.mxu0
  %656 = vmatprep.mubr.f32.mxu0 0.0
  %657 = vmatmul.mubr.f32.gmra.mxu0 %v579
  %v658 = vpop.f32.mrf.mxu0
  %v659 = vadd.f32 %v563, %v658
  %v660 = vpop.f32.mrf.mxu0
  %661 = vmatprep.mubr.f32.mxu0 0.0
  %662 = vmatmul.mubr.f32.gmra.mxu0 %v582
  %v663 = vpop.f32.mrf.mxu0
  %v664 = vadd.f32 %v568, %v663
  %v665 = vpop.f32.mrf.mxu0
  %666 = vmatprep.mubr.f32.mxu0 0.0
  %667 = vmatmul.mubr.f32.gmra.mxu0 %v585
  %v668 = vpop.f32.mrf.mxu0
  %v669 = vadd.f32 %v573, %v668
  %v670 = vpop.f32.mrf.mxu0
  %671 = vdwg.mxu0
  %v672 = vmax.f32 %v654, 0.0
  %v673 = vmax.f32 %v659, 0.0
  %v674 = vmax.f32 %v664, 0.0
  %v675 = vmax.f32 %v669, 0.0
  %v676 = vld [vmem:[%s9] sm:$0xff]
  %v677 = vld [vmem:[%s9 + $0x8] sm:$0xff]
  %v678 = vld [vmem:[%s9 + $0x10] sm:$0xff]
  %v679 = vld [vmem:[%s9 + $0x18] sm:$0xff]
  %v681 = vsel %vm379, %v676, 0
  %v684 = vsel %vm379, %v677, 0
  %v687 = vsel %vm379, %v678, 0
  %v690 = vsel %vm379, %v679, 0
  %692 = vmatprep.subr.mxu0 0.0
  %693 = vmatpush1.msra.mxu0 0.0
  %694 = vmatprep.subr.mxu0 0.0
  %695 = vmatpush1.msra.mxu0 0.0
  %696 = vmatprep.subr.mxu0 0.0
  %697 = vmatpush1.msra.mxu0 0.0
  %698 = vmatprep.subr.mxu0 0.0
  %699 = vmatpush1.msra.mxu0 0.0
  %700 = vmatprep.subr.mxu0 0.0
  %701 = vmatpush1.msra.mxu0 0.0
  %702 = vmatprep.subr.mxu0 0.0
  %703 = vmatpush1.msra.mxu0 0.0
  %704 = vmatprep.subr.mxu0 0.0
  %705 = vmatpush1.msra.mxu0 0.0
  %706 = vmatprep.subr.mxu0 0.0
  %707 = vmatpush1.msra.mxu0 0.0
  %708 = vmatprep.subr.mxu0 0.0
  %709 = vmatpush1.msra.mxu0 0.0
  %710 = vmatprep.subr.mxu0 0.0
  %711 = vmatpush1.msra.mxu0 0.0
  %712 = vmatprep.subr.mxu0 0.0
  %713 = vmatpush1.msra.mxu0 0.0
  %714 = vmatprep.subr.mxu0 0.0
  %715 = vmatpush1.msra.mxu0 0.0
  %716 = vmatprep.subr.mxu0 0.0
  %717 = vmatpush1.msra.mxu0 %v675
  %718 = vmatprep.subr.mxu0 0.0
  %719 = vmatpush1.msra.mxu0 %v674
  %720 = vmatprep.subr.mxu0 0.0
  %721 = vmatpush1.msra.mxu0 %v673
  %722 = vmatprep.subr.mxu0 0.0
  %723 = vmatpush1.msra.mxu0 %v672
  %724 = vmatprep.subr.mxu0 0.0
  %725 = vmatpush2.msra.mxu0 0.0
  %726 = vmatprep.subr.mxu0 0.0
  %727 = vmatpush2.msra.mxu0 0.0
  %728 = vmatprep.subr.mxu0 0.0
  %729 = vmatpush2.msra.mxu0 0.0
  %730 = vmatprep.subr.mxu0 0.0
  %731 = vmatpush2.msra.mxu0 0.0
  %732 = vmatprep.subr.mxu0 0.0
  %733 = vmatpush2.msra.mxu0 0.0
  %734 = vmatprep.subr.mxu0 0.0
  %735 = vmatpush2.msra.mxu0 0.0
  %736 = vmatprep.subr.mxu0 0.0
  %737 = vmatpush2.msra.mxu0 0.0
  %738 = vmatprep.subr.mxu0 0.0
  %739 = vmatpush2.msra.mxu0 0.0
  %740 = vmatprep.subr.mxu0 0.0
  %741 = vmatpush2.msra.mxu0 0.0
  %742 = vmatprep.subr.mxu0 0.0
  %743 = vmatpush2.msra.mxu0 0.0
  %744 = vmatprep.subr.mxu0 0.0
  %745 = vmatpush2.msra.mxu0 0.0
  %746 = vmatprep.subr.mxu0 0.0
  %747 = vmatpush2.msra.mxu0 0.0
  %748 = vmatprep.subr.mxu0 0.0
  %749 = vmatpush2.msra.mxu0 0.0
  %750 = vmatprep.subr.mxu0 0.0
  %751 = vmatpush2.msra.mxu0 0.0
  %752 = vmatprep.subr.mxu0 0.0
  %753 = vmatpush2.msra.mxu0 0.0
  %754 = vmatprep.subr.mxu0 0.0
  %755 = vmatpush2.msra.mxu0 0.0
  %756 = vmatprep.mubr.f32.mxu0 0.0
  %757 = vmatmul.mubr.f32.gmra.mxu0 %v681
  %v758 = vpop.f32.mrf.mxu0
  %v759 = vadd.f32 0.0, %v758
  %v760 = vpop.f32.mrf.mxu0
  %761 = vmatprep.mubr.f32.mxu0 0.0
  %762 = vmatmul.mubr.f32.gmra.mxu0 %v684
  %v763 = vpop.f32.mrf.mxu0
  %v764 = vadd.f32 0.0, %v763
  %v765 = vpop.f32.mrf.mxu0
  %766 = vmatprep.mubr.f32.mxu0 0.0
  %767 = vmatmul.mubr.f32.gmra.mxu0 %v687
  %v768 = vpop.f32.mrf.mxu0
  %v769 = vadd.f32 0.0, %v768
  %v770 = vpop.f32.mrf.mxu0
  %771 = vmatprep.mubr.f32.mxu0 0.0
  %772 = vmatmul.mubr.f32.gmra.mxu0 %v690
  %v773 = vpop.f32.mrf.mxu0
  %v774 = vadd.f32 0.0, %v773
  %v775 = vpop.f32.mrf.mxu0
  %776 = vdwg.mxu0
  %v777 = vadd.f32 %v505, %v759
  %v778 = vadd.f32 %v506, %v764
  %v779 = vadd.f32 %v507, %v769
  %v780 = vadd.f32 %v508, %v774
  %v781 = vld [vmem:[%s10] sm:$0xff]
  %v782 = vld [vmem:[%s10 + $0x8] sm:$0xff]
  %v783 = vld [vmem:[%s10 + $0x10] sm:$0xff]
  %v784 = vld [vmem:[%s10 + $0x18] sm:$0xff]
  %786 = vset.pattern.permute.xlu0 0
  %787 = vperm.xlu0 %786, %v781
  %v788 = vpop.permute.xlu0 %787
  %791 = vset.pattern.permute.xlu0 0
  %792 = vperm.xlu0 %791, %v782
  %v793 = vpop.permute.xlu0 %792
  %796 = vset.pattern.permute.xlu0 0
  %797 = vperm.xlu0 %796, %v783
  %v798 = vpop.permute.xlu0 %797
  %801 = vset.pattern.permute.xlu0 0
  %802 = vperm.xlu0 %801, %v784
  %v803 = vpop.permute.xlu0 %802
  %v805 = vadd.f32 %v777, %v788
  %v806 = vadd.f32 %v778, %v793
  %v807 = vadd.f32 %v779, %v798
  %v808 = vadd.f32 %v780, %v803
  %813 = vrot.lane.b32.xlu0 %v805, 4
  %v814 = vpop.permute.xlu0 %813
  %815 = vrot.lane.b32.xlu0 %v806, 4
  %v816 = vpop.permute.xlu0 %815
  %817 = vrot.lane.b32.xlu0 %v807, 4
  %v818 = vpop.permute.xlu0 %817
  %819 = vrot.lane.b32.xlu0 %v808, 4
  %v820 = vpop.permute.xlu0 %819
  %vm825 = vcmask 31744
  %v826 = vsel %vm825, 0.0, %v814
  %v827 = vsel %vm825, 0.0, %v816
  %v828 = vsel %vm825, 0.0, %v818
  %v829 = vsel %vm825, 0.0, %v820
  %830 = vrot.lane.b32.xlu0 %v805, 124
  %v831 = vpop.permute.xlu0 %830
  %832 = vrot.lane.b32.xlu0 %v806, 124
  %v833 = vpop.permute.xlu0 %832
  %834 = vrot.lane.b32.xlu0 %v807, 124
  %v835 = vpop.permute.xlu0 %834
  %836 = vrot.lane.b32.xlu0 %v808, 124
  %v837 = vpop.permute.xlu0 %836
  %vm842 = vcmask 293888
  %v843 = vsel %vm842, %v831, 0.0
  %v844 = vsel %vm842, %v833, 0.0
  %v845 = vsel %vm842, %v835, 0.0
  %v846 = vsel %vm842, %v837, 0.0
  %v847 = vld [vmem:[%s11] sm:$0xff]
  %v848 = vld [vmem:[%s11 + $0x8] sm:$0xff]
  %v849 = vld [vmem:[%s11 + $0x10] sm:$0xff]
  %v850 = vld [vmem:[%s11 + $0x18] sm:$0xff]
  %v851 = vld [vmem:[%s12] sm:$0xff]
  %v852 = vld [vmem:[%s12 + $0x8] sm:$0xff]
  %v853 = vld [vmem:[%s12 + $0x10] sm:$0xff]
  %v854 = vld [vmem:[%s12 + $0x18] sm:$0xff]
  %856 = vset.pattern.permute.xlu0 0
  %857 = vperm.xlu0 %856, %v851
  %v858 = vpop.permute.xlu0 %857
  %861 = vset.pattern.permute.xlu0 0
  %862 = vperm.xlu0 %861, %v852
  %v863 = vpop.permute.xlu0 %862
  %866 = vset.pattern.permute.xlu0 0
  %867 = vperm.xlu0 %866, %v853
  %v868 = vpop.permute.xlu0 %867
  %871 = vset.pattern.permute.xlu0 0
  %872 = vperm.xlu0 %871, %v854
  %v873 = vpop.permute.xlu0 %872
  %v876 = vsel %vm273, %v847, 0
  %v879 = vsel %vm273, %v848, 0
  %v882 = vsel %vm273, %v849, 0
  %v885 = vsel %vm273, %v850, 0
  %887 = vmatprep.subr.mxu0 0.0
  %888 = vmatpush1.msra.mxu0 0.0
  %889 = vmatprep.subr.mxu0 0.0
  %890 = vmatpush1.msra.mxu0 0.0
  %891 = vmatprep.subr.mxu0 0.0
  %892 = vmatpush1.msra.mxu0 0.0
  %893 = vmatprep.subr.mxu0 0.0
  %894 = vmatpush1.msra.mxu0 0.0
  %895 = vmatprep.subr.mxu0 0.0
  %896 = vmatpush1.msra.mxu0 %v846
  %897 = vmatprep.subr.mxu0 0.0
  %898 = vmatpush1.msra.mxu0 %v845
  %899 = vmatprep.subr.mxu0 0.0
  %900 = vmatpush1.msra.mxu0 %v844
  %901 = vmatprep.subr.mxu0 0.0
  %902 = vmatpush1.msra.mxu0 %v843
  %903 = vmatprep.subr.mxu0 0.0
  %904 = vmatpush1.msra.mxu0 %v808
  %905 = vmatprep.subr.mxu0 0.0
  %906 = vmatpush1.msra.mxu0 %v807
  %907 = vmatprep.subr.mxu0 0.0
  %908 = vmatpush1.msra.mxu0 %v806
  %909 = vmatprep.subr.mxu0 0.0
  %910 = vmatpush1.msra.mxu0 %v805
  %911 = vmatprep.subr.mxu0 0.0
  %912 = vmatpush1.msra.mxu0 %v829
  %913 = vmatprep.subr.mxu0 0.0
  %914 = vmatpush1.msra.mxu0 %v828
  %915 = vmatprep.subr.mxu0 0.0
  %916 = vmatpush1.msra.mxu0 %v827
  %917 = vmatprep.subr.mxu0 0.0
  %918 = vmatpush1.msra.mxu0 %v826
  %919 = vmatprep.subr.mxu0 0.0
  %920 = vmatpush2.msra.mxu0 0.0
  %921 = vmatprep.subr.mxu0 0.0
  %922 = vmatpush2.msra.mxu0 0.0
  %923 = vmatprep.subr.mxu0 0.0
  %924 = vmatpush2.msra.mxu0 0.0
  %925 = vmatprep.subr.mxu0 0.0
  %926 = vmatpush2.msra.mxu0 0.0
  %927 = vmatprep.subr.mxu0 0.0
  %928 = vmatpush2.msra.mxu0 0.0
  %929 = vmatprep.subr.mxu0 0.0
  %930 = vmatpush2.msra.mxu0 0.0
  %931 = vmatprep.subr.mxu0 0.0
  %932 = vmatpush2.msra.mxu0 0.0
  %933 = vmatprep.subr.mxu0 0.0
  %934 = vmatpush2.msra.mxu0 0.0
  %935 = vmatprep.subr.mxu0 0.0
  %936 = vmatpush2.msra.mxu0 0.0
  %937 = vmatprep.subr.mxu0 0.0
  %938 = vmatpush2.msra.mxu0 0.0
  %939 = vmatprep.subr.mxu0 0.0
  %940 = vmatpush2.msra.mxu0 0.0
  %941 = vmatprep.subr.mxu0 0.0
  %942 = vmatpush2.msra.mxu0 0.0
  %943 = vmatprep.subr.mxu0 0.0
  %944 = vmatpush2.msra.mxu0 0.0
  %945 = vmatprep.subr.mxu0 0.0
  %946 = vmatpush2.msra.mxu0 0.0
  %947 = vmatprep.subr.mxu0 0.0
  %948 = vmatpush2.msra.mxu0 0.0
  %949 = vmatprep.subr.mxu0 0.0
  %950 = vmatpush2.msra.mxu0 0.0
  %951 = vmatprep.mubr.f32.mxu0 0.0
  %952 = vmatmul.mubr.f32.gmra.mxu0 %v876
  %v953 = vpop.f32.mrf.mxu0
  %v954 = vadd.f32 %v858, %v953
  %v955 = vpop.f32.mrf.mxu0
  %956 = vmatprep.mubr.f32.mxu0 0.0
  %957 = vmatmul.mubr.f32.gmra.mxu0 %v879
  %v958 = vpop.f32.mrf.mxu0
  %v959 = vadd.f32 %v863, %v958
  %v960 = vpop.f32.mrf.mxu0
  %961 = vmatprep.mubr.f32.mxu0 0.0
  %962 = vmatmul.mubr.f32.gmra.mxu0 %v882
  %v963 = vpop.f32.mrf.mxu0
  %v964 = vadd.f32 %v868, %v963
  %v965 = vpop.f32.mrf.mxu0
  %966 = vmatprep.mubr.f32.mxu0 0.0
  %967 = vmatmul.mubr.f32.gmra.mxu0 %v885
  %v968 = vpop.f32.mrf.mxu0
  %v969 = vadd.f32 %v873, %v968
  %v970 = vpop.f32.mrf.mxu0
  %971 = vdwg.mxu0
  %v972 = vmax.f32 %v954, 0.0
  %v973 = vmax.f32 %v959, 0.0
  %v974 = vmax.f32 %v964, 0.0
  %v975 = vmax.f32 %v969, 0.0
  %v976 = vld [vmem:[%s13] sm:$0xff]
  %v977 = vld [vmem:[%s13 + $0x8] sm:$0xff]
  %v978 = vld [vmem:[%s13 + $0x10] sm:$0xff]
  %v979 = vld [vmem:[%s13 + $0x18] sm:$0xff]
  %v981 = vsel %vm379, %v976, 0
  %v984 = vsel %vm379, %v977, 0
  %v987 = vsel %vm379, %v978, 0
  %v990 = vsel %vm379, %v979, 0
  %992 = vmatprep.subr.mxu0 0.0
  %993 = vmatpush1.msra.mxu0 0.0
  %994 = vmatprep.subr.mxu0 0.0
  %995 = vmatpush1.msra.mxu0 0.0
  %996 = vmatprep.subr.mxu0 0.0
  %997 = vmatpush1.msra.mxu0 0.0
  %998 = vmatprep.subr.mxu0 0.0
  %999 = vmatpush1.msra.mxu0 0.0
  %1000 = vmatprep.subr.mxu0 0.0
  %1001 = vmatpush1.msra.mxu0 0.0
  %1002 = vmatprep.subr.mxu0 0.0
  %1003 = vmatpush1.msra.mxu0 0.0
  %1004 = vmatprep.subr.mxu0 0.0
  %1005 = vmatpush1.msra.mxu0 0.0
  %1006 = vmatprep.subr.mxu0 0.0
  %1007 = vmatpush1.msra.mxu0 0.0
  %1008 = vmatprep.subr.mxu0 0.0
  %1009 = vmatpush1.msra.mxu0 0.0
  %1010 = vmatprep.subr.mxu0 0.0
  %1011 = vmatpush1.msra.mxu0 0.0
  %1012 = vmatprep.subr.mxu0 0.0
  %1013 = vmatpush1.msra.mxu0 0.0
  %1014 = vmatprep.subr.mxu0 0.0
  %1015 = vmatpush1.msra.mxu0 0.0
  %1016 = vmatprep.subr.mxu0 0.0
  %1017 = vmatpush1.msra.mxu0 %v975
  %1018 = vmatprep.subr.mxu0 0.0
  %1019 = vmatpush1.msra.mxu0 %v974
  %1020 = vmatprep.subr.mxu0 0.0
  %1021 = vmatpush1.msra.mxu0 %v973
  %1022 = vmatprep.subr.mxu0 0.0
  %1023 = vmatpush1.msra.mxu0 %v972
  %1024 = vmatprep.subr.mxu0 0.0
  %1025 = vmatpush2.msra.mxu0 0.0
  %1026 = vmatprep.subr.mxu0 0.0
  %1027 = vmatpush2.msra.mxu0 0.0
  %1028 = vmatprep.subr.mxu0 0.0
  %1029 = vmatpush2.msra.mxu0 0.0
  %1030 = vmatprep.subr.mxu0 0.0
  %1031 = vmatpush2.msra.mxu0 0.0
  %1032 = vmatprep.subr.mxu0 0.0
  %1033 = vmatpush2.msra.mxu0 0.0
  %1034 = vmatprep.subr.mxu0 0.0
  %1035 = vmatpush2.msra.mxu0 0.0
  %1036 = vmatprep.subr.mxu0 0.0
  %1037 = vmatpush2.msra.mxu0 0.0
  %1038 = vmatprep.subr.mxu0 0.0
  %1039 = vmatpush2.msra.mxu0 0.0
  %1040 = vmatprep.subr.mxu0 0.0
  %1041 = vmatpush2.msra.mxu0 0.0
  %1042 = vmatprep.subr.mxu0 0.0
  %1043 = vmatpush2.msra.mxu0 0.0
  %1044 = vmatprep.subr.mxu0 0.0
  %1045 = vmatpush2.msra.mxu0 0.0
  %1046 = vmatprep.subr.mxu0 0.0
  %1047 = vmatpush2.msra.mxu0 0.0
  %1048 = vmatprep.subr.mxu0 0.0
  %1049 = vmatpush2.msra.mxu0 0.0
  %1050 = vmatprep.subr.mxu0 0.0
  %1051 = vmatpush2.msra.mxu0 0.0
  %1052 = vmatprep.subr.mxu0 0.0
  %1053 = vmatpush2.msra.mxu0 0.0
  %1054 = vmatprep.subr.mxu0 0.0
  %1055 = vmatpush2.msra.mxu0 0.0
  %1056 = vmatprep.mubr.f32.mxu0 0.0
  %1057 = vmatmul.mubr.f32.gmra.mxu0 %v981
  %v1058 = vpop.f32.mrf.mxu0
  %v1059 = vadd.f32 0.0, %v1058
  %v1060 = vpop.f32.mrf.mxu0
  %1061 = vmatprep.mubr.f32.mxu0 0.0
  %1062 = vmatmul.mubr.f32.gmra.mxu0 %v984
  %v1063 = vpop.f32.mrf.mxu0
  %v1064 = vadd.f32 0.0, %v1063
  %v1065 = vpop.f32.mrf.mxu0
  %1066 = vmatprep.mubr.f32.mxu0 0.0
  %1067 = vmatmul.mubr.f32.gmra.mxu0 %v987
  %v1068 = vpop.f32.mrf.mxu0
  %v1069 = vadd.f32 0.0, %v1068
  %v1070 = vpop.f32.mrf.mxu0
  %1071 = vmatprep.mubr.f32.mxu0 0.0
  %1072 = vmatmul.mubr.f32.gmra.mxu0 %v990
  %v1073 = vpop.f32.mrf.mxu0
  %v1074 = vadd.f32 0.0, %v1073
  %v1075 = vpop.f32.mrf.mxu0
  %1076 = vdwg.mxu0
  %v1077 = vadd.f32 %v805, %v1059
  %v1078 = vadd.f32 %v806, %v1064
  %v1079 = vadd.f32 %v807, %v1069
  %v1080 = vadd.f32 %v808, %v1074
  %v1081 = vld [vmem:[%s14] sm:$0xff]
  %v1082 = vld [vmem:[%s14 + $0x8] sm:$0xff]
  %v1083 = vld [vmem:[%s14 + $0x10] sm:$0xff]
  %v1084 = vld [vmem:[%s14 + $0x18] sm:$0xff]
  %1086 = vset.pattern.permute.xlu0 0
  %1087 = vperm.xlu0 %1086, %v1081
  %v1088 = vpop.permute.xlu0 %1087
  %1091 = vset.pattern.permute.xlu0 0
  %1092 = vperm.xlu0 %1091, %v1082
  %v1093 = vpop.permute.xlu0 %1092
  %1096 = vset.pattern.permute.xlu0 0
  %1097 = vperm.xlu0 %1096, %v1083
  %v1098 = vpop.permute.xlu0 %1097
  %1101 = vset.pattern.permute.xlu0 0
  %1102 = vperm.xlu0 %1101, %v1084
  %v1103 = vpop.permute.xlu0 %1102
  %v1105 = vadd.f32 %v1077, %v1088
  %v1106 = vadd.f32 %v1078, %v1093
  %v1107 = vadd.f32 %v1079, %v1098
  %v1108 = vadd.f32 %v1080, %v1103
  %v1109 = vld [vmem:[%s15] sm:$0x3f]
  %v1110 = vld [vmem:[%s16] sm:$0x3f]
  %1112 = vset.pattern.permute.xlu0 0
  %1113 = vperm.xlu0 %1112, %v1110
  %v1114 = vpop.permute.xlu0 %1113
  %v1117 = vsel %vm379, %v1109, 0
  %1119 = vmatprep.subr.mxu0 0.0
  %1120 = vmatpush1.msra.mxu0 0.0
  %1121 = vmatprep.subr.mxu0 0.0
  %1122 = vmatpush1.msra.mxu0 0.0
  %1123 = vmatprep.subr.mxu0 0.0
  %1124 = vmatpush1.msra.mxu0 0.0
  %1125 = vmatprep.subr.mxu0 0.0
  %1126 = vmatpush1.msra.mxu0 0.0
  %1127 = vmatprep.subr.mxu0 0.0
  %1128 = vmatpush1.msra.mxu0 0.0
  %1129 = vmatprep.subr.mxu0 0.0
  %1130 = vmatpush1.msra.mxu0 0.0
  %1131 = vmatprep.subr.mxu0 0.0
  %1132 = vmatpush1.msra.mxu0 0.0
  %1133 = vmatprep.subr.mxu0 0.0
  %1134 = vmatpush1.msra.mxu0 0.0
  %1135 = vmatprep.subr.mxu0 0.0
  %1136 = vmatpush1.msra.mxu0 0.0
  %1137 = vmatprep.subr.mxu0 0.0
  %1138 = vmatpush1.msra.mxu0 0.0
  %1139 = vmatprep.subr.mxu0 0.0
  %1140 = vmatpush1.msra.mxu0 0.0
  %1141 = vmatprep.subr.mxu0 0.0
  %1142 = vmatpush1.msra.mxu0 0.0
  %1143 = vmatprep.subr.mxu0 0.0
  %1144 = vmatpush1.msra.mxu0 %v1108
  %1145 = vmatprep.subr.mxu0 0.0
  %1146 = vmatpush1.msra.mxu0 %v1107
  %1147 = vmatprep.subr.mxu0 0.0
  %1148 = vmatpush1.msra.mxu0 %v1106
  %1149 = vmatprep.subr.mxu0 0.0
  %1150 = vmatpush1.msra.mxu0 %v1105
  %1151 = vmatprep.subr.mxu0 0.0
  %1152 = vmatpush2.msra.mxu0 0.0
  %1153 = vmatprep.subr.mxu0 0.0
  %1154 = vmatpush2.msra.mxu0 0.0
  %1155 = vmatprep.subr.mxu0 0.0
  %1156 = vmatpush2.msra.mxu0 0.0
  %1157 = vmatprep.subr.mxu0 0.0
  %1158 = vmatpush2.msra.mxu0 0.0
  %1159 = vmatprep.subr.mxu0 0.0
  %1160 = vmatpush2.msra.mxu0 0.0
  %1161 = vmatprep.subr.mxu0 0.0
  %1162 = vmatpush2.msra.mxu0 0.0
  %1163 = vmatprep.subr.mxu0 0.0
  %1164 = vmatpush2.msra.mxu0 0.0
  %1165 = vmatprep.subr.mxu0 0.0
  %1166 = vmatpush2.msra.mxu0 0.0
  %1167 = vmatprep.subr.mxu0 0.0
  %1168 = vmatpush2.msra.mxu0 0.0
  %1169 = vmatprep.subr.mxu0 0.0
  %1170 = vmatpush2.msra.mxu0 0.0
  %1171 = vmatprep.subr.mxu0 0.0
  %1172 = vmatpush2.msra.mxu0 0.0
  %1173 = vmatprep.subr.mxu0 0.0
  %1174 = vmatpush2.msra.mxu0 0.0
  %1175 = vmatprep.subr.mxu0 0.0
  %1176 = vmatpush2.msra.mxu0 0.0
  %1177 = vmatprep.subr.mxu0 0.0
  %1178 = vmatpush2.msra.mxu0 0.0
  %1179 = vmatprep.subr.mxu0 0.0
  %1180 = vmatpush2.msra.mxu0 0.0
  %1181 = vmatprep.subr.mxu0 0.0
  %1182 = vmatpush2.msra.mxu0 0.0
  %1183 = vmatprep.mubr.f32.mxu0 0.0
  %1184 = vmatmul.mubr.f32.gmra.mxu0 %v1117
  %v1185 = vpop.f32.mrf.mxu0
  %v1186 = vadd.f32 %v1114, %v1185
  %v1187 = vpop.f32.mrf.mxu0
  %1188 = vdwg.mxu0
  %1189 = vst.msk [vmem:[%s17] sm:$0x3f] %vm57, %v1186
  // Predicated region
  $region70: #{ms_tcn2_gru_forward.5} parent=0 // pred_check
    _
  $region71: #{ms_tcn2_gru_forward.5} parent=0 // pred_check_branch
    %1191 = sbr.rel (0) target = $region73
  $region72: #{ms_tcn2_gru_forward.5} parent=0 // pred_region
    _
  $region73: #{ms_tcn2_gru_forward.5} parent=0 // pred_fallthru
    _
  // Predicated region
  $region74: #{ms_tcn2_gru_forward.5} parent=0 // pred_check
    _
  $region75: #{ms_tcn2_gru_forward.5} parent=0 // pred_check_branch
    %1193 = sbr.rel (0) target = $region77
  $region76: #{ms_tcn2_gru_forward.5} parent=0 // pred_region
    _
  $region77: #{ms_tcn2_gru_forward.5} parent=0 // pred_fallthru
    _

// kernel: ms_tcn2_gru_forward.7
$region0: #{ms_tcn2_gru_forward.7}
  #allocation0 [shape = 'u32[]', space=smem, size = 0x4, offset = 0x4, fixed_abs, tag = 'smem constant byte address 0x4 - core index']
  #allocation1 [shape = 'u32[144,128]{1,0:T(1,128)}', space=vmem, size = 0x12000, scoped, tag = 'internal scratch']
  #allocation2 [shape = 'f32[8,192]{1,0:T(8,128)}', space=vmem, size = 0x2000, scoped, tag = 'scratch operand']
  #allocation3 [shape = 'f32[8,192]{1,0:T(8,128)}', space=vmem, size = 0x2000, scoped, tag = 'scratch operand']
  #allocation4 [shape = 'f32[8,128]{1,0:T(8,128)}', space=vmem, size = 0x1000, scoped, tag = 'scratch operand']
  %s0 = inlined_call_operand.vmem [shape: f32[8,6], index: 0, kind: input, shape index: {}]
  %s1 = inlined_call_operand.vmem [shape: f32[6,192], index: 1, kind: input, shape index: {}]
  %s2 = inlined_call_operand.vmem [shape: f32[64,192], index: 2, kind: input, shape index: {}]
  %s3 = inlined_call_operand.vmem [shape: f32[1,192], index: 3, kind: input, shape index: {}]
  %s4 = inlined_call_operand.vmem [shape: f32[1,192], index: 4, kind: input, shape index: {}]
  %s5 = inlined_call_operand.vmem [shape: f32[6,192], index: 5, kind: input, shape index: {}]
  %s6 = inlined_call_operand.vmem [shape: f32[64,192], index: 6, kind: input, shape index: {}]
  %s7 = inlined_call_operand.vmem [shape: f32[1,192], index: 7, kind: input, shape index: {}]
  %s8 = inlined_call_operand.vmem [shape: f32[1,192], index: 8, kind: input, shape index: {}]
  %s9 = inlined_call_operand.vmem [shape: f32[128,192], index: 9, kind: input, shape index: {}]
  %s10 = inlined_call_operand.vmem [shape: f32[64,192], index: 10, kind: input, shape index: {}]
  %s11 = inlined_call_operand.vmem [shape: f32[1,192], index: 11, kind: input, shape index: {}]
  %s12 = inlined_call_operand.vmem [shape: f32[1,192], index: 12, kind: input, shape index: {}]
  %s13 = inlined_call_operand.vmem [shape: f32[128,192], index: 13, kind: input, shape index: {}]
  %s14 = inlined_call_operand.vmem [shape: f32[64,192], index: 14, kind: input, shape index: {}]
  %s15 = inlined_call_operand.vmem [shape: f32[1,192], index: 15, kind: input, shape index: {}]
  %s16 = inlined_call_operand.vmem [shape: f32[1,192], index: 16, kind: input, shape index: {}]
  %s17 = inlined_call_operand.vmem [shape: f32[128,192], index: 17, kind: input, shape index: {}]
  %s18 = inlined_call_operand.vmem [shape: f32[64,192], index: 18, kind: input, shape index: {}]
  %s19 = inlined_call_operand.vmem [shape: f32[1,192], index: 19, kind: input, shape index: {}]
  %s20 = inlined_call_operand.vmem [shape: f32[1,192], index: 20, kind: input, shape index: {}]
  %s21 = inlined_call_operand.vmem [shape: f32[128,192], index: 21, kind: input, shape index: {}]
  %s22 = inlined_call_operand.vmem [shape: f32[64,192], index: 22, kind: input, shape index: {}]
  %s23 = inlined_call_operand.vmem [shape: f32[1,192], index: 23, kind: input, shape index: {}]
  %s24 = inlined_call_operand.vmem [shape: f32[1,192], index: 24, kind: input, shape index: {}]
  %s25 = inlined_call_operand.vmem [shape: f32[6,128], index: 25, kind: input, shape index: {}]
  %s26 = inlined_call_operand.vmem [shape: f32[6,1], index: 26, kind: input, shape index: {}]
  %s27 = inlined_call_operand.vmem [shape: f32[6,8], index: 27, kind: output, shape index: {}]
  %s28 = sld [smem:[#allocation0]]
  $region118: #{ms_tcn2_gru_forward.7} parent=0
    _
  %s30 = ssub.s32 1, %s28
  %s31 = scalar_select 0, %s30, %s28
  // Predicated region
  $region2: #{ms_tcn2_gru_forward.7} parent=0 // pred_check
    _
  $region3: #{ms_tcn2_gru_forward.7} parent=0 // pred_check_branch
    %33 = sbr.rel (0) target = $region5
  $region4: #{ms_tcn2_gru_forward.7} parent=0 // pred_region
    _
  $region5: #{ms_tcn2_gru_forward.7} parent=0 // pred_fallthru
    _
  // Predicated region
  $region6: #{ms_tcn2_gru_forward.7} parent=0 // pred_check
    _
  $region7: #{ms_tcn2_gru_forward.7} parent=0 // pred_check_branch
    %35 = sbr.rel (0) target = $region9
  $region8: #{ms_tcn2_gru_forward.7} parent=0 // pred_region
    _
  $region9: #{ms_tcn2_gru_forward.7} parent=0 // pred_fallthru
    _
  // Predicated region
  $region10: #{ms_tcn2_gru_forward.7} parent=0 // pred_check
    _
  $region11: #{ms_tcn2_gru_forward.7} parent=0 // pred_check_branch
    %37 = sbr.rel (0) target = $region13
  $region12: #{ms_tcn2_gru_forward.7} parent=0 // pred_region
    _
  $region13: #{ms_tcn2_gru_forward.7} parent=0 // pred_fallthru
    _
  // Predicated region
  $region14: #{ms_tcn2_gru_forward.7} parent=0 // pred_check
    _
  $region15: #{ms_tcn2_gru_forward.7} parent=0 // pred_check_branch
    %39 = sbr.rel (0) target = $region17
  $region16: #{ms_tcn2_gru_forward.7} parent=0 // pred_region
    _
  $region17: #{ms_tcn2_gru_forward.7} parent=0 // pred_fallthru
    _
  // Predicated region
  $region18: #{ms_tcn2_gru_forward.7} parent=0 // pred_check
    _
  $region19: #{ms_tcn2_gru_forward.7} parent=0 // pred_check_branch
    %41 = sbr.rel (0) target = $region21
  $region20: #{ms_tcn2_gru_forward.7} parent=0 // pred_region
    _
  $region21: #{ms_tcn2_gru_forward.7} parent=0 // pred_fallthru
    _
  // Predicated region
  $region22: #{ms_tcn2_gru_forward.7} parent=0 // pred_check
    _
  $region23: #{ms_tcn2_gru_forward.7} parent=0 // pred_check_branch
    %43 = sbr.rel (0) target = $region25
  $region24: #{ms_tcn2_gru_forward.7} parent=0 // pred_region
    _
  $region25: #{ms_tcn2_gru_forward.7} parent=0 // pred_fallthru
    _
  // Predicated region
  $region26: #{ms_tcn2_gru_forward.7} parent=0 // pred_check
    _
  $region27: #{ms_tcn2_gru_forward.7} parent=0 // pred_check_branch
    %45 = sbr.rel (0) target = $region29
  $region28: #{ms_tcn2_gru_forward.7} parent=0 // pred_region
    _
  $region29: #{ms_tcn2_gru_forward.7} parent=0 // pred_fallthru
    _
  // Predicated region
  $region30: #{ms_tcn2_gru_forward.7} parent=0 // pred_check
    _
  $region31: #{ms_tcn2_gru_forward.7} parent=0 // pred_check_branch
    %47 = sbr.rel (0) target = $region33
  $region32: #{ms_tcn2_gru_forward.7} parent=0 // pred_region
    _
  $region33: #{ms_tcn2_gru_forward.7} parent=0 // pred_fallthru
    _
  // Predicated region
  $region34: #{ms_tcn2_gru_forward.7} parent=0 // pred_check
    _
  $region35: #{ms_tcn2_gru_forward.7} parent=0 // pred_check_branch
    %49 = sbr.rel (0) target = $region37
  $region36: #{ms_tcn2_gru_forward.7} parent=0 // pred_region
    _
  $region37: #{ms_tcn2_gru_forward.7} parent=0 // pred_fallthru
    _
  // Predicated region
  $region38: #{ms_tcn2_gru_forward.7} parent=0 // pred_check
    _
  $region39: #{ms_tcn2_gru_forward.7} parent=0 // pred_check_branch
    %51 = sbr.rel (0) target = $region41
  $region40: #{ms_tcn2_gru_forward.7} parent=0 // pred_region
    _
  $region41: #{ms_tcn2_gru_forward.7} parent=0 // pred_fallthru
    _
  // Predicated region
  $region42: #{ms_tcn2_gru_forward.7} parent=0 // pred_check
    _
  $region43: #{ms_tcn2_gru_forward.7} parent=0 // pred_check_branch
    %53 = sbr.rel (0) target = $region45
  $region44: #{ms_tcn2_gru_forward.7} parent=0 // pred_region
    _
  $region45: #{ms_tcn2_gru_forward.7} parent=0 // pred_fallthru
    _
  // Predicated region
  $region46: #{ms_tcn2_gru_forward.7} parent=0 // pred_check
    _
  $region47: #{ms_tcn2_gru_forward.7} parent=0 // pred_check_branch
    %55 = sbr.rel (0) target = $region49
  $region48: #{ms_tcn2_gru_forward.7} parent=0 // pred_region
    _
  $region49: #{ms_tcn2_gru_forward.7} parent=0 // pred_fallthru
    _
  // Predicated region
  $region50: #{ms_tcn2_gru_forward.7} parent=0 // pred_check
    _
  $region51: #{ms_tcn2_gru_forward.7} parent=0 // pred_check_branch
    %57 = sbr.rel (0) target = $region53
  $region52: #{ms_tcn2_gru_forward.7} parent=0 // pred_region
    _
  $region53: #{ms_tcn2_gru_forward.7} parent=0 // pred_fallthru
    _
  // Predicated region
  $region54: #{ms_tcn2_gru_forward.7} parent=0 // pred_check
    _
  $region55: #{ms_tcn2_gru_forward.7} parent=0 // pred_check_branch
    %59 = sbr.rel (0) target = $region57
  $region56: #{ms_tcn2_gru_forward.7} parent=0 // pred_region
    _
  $region57: #{ms_tcn2_gru_forward.7} parent=0 // pred_fallthru
    _
  // Predicated region
  $region58: #{ms_tcn2_gru_forward.7} parent=0 // pred_check
    _
  $region59: #{ms_tcn2_gru_forward.7} parent=0 // pred_check_branch
    %61 = sbr.rel (0) target = $region61
  $region60: #{ms_tcn2_gru_forward.7} parent=0 // pred_region
    _
  $region61: #{ms_tcn2_gru_forward.7} parent=0 // pred_fallthru
    _
  // Predicated region
  $region62: #{ms_tcn2_gru_forward.7} parent=0 // pred_check
    _
  $region63: #{ms_tcn2_gru_forward.7} parent=0 // pred_check_branch
    %63 = sbr.rel (0) target = $region65
  $region64: #{ms_tcn2_gru_forward.7} parent=0 // pred_region
    _
  $region65: #{ms_tcn2_gru_forward.7} parent=0 // pred_fallthru
    _
  // Predicated region
  $region66: #{ms_tcn2_gru_forward.7} parent=0 // pred_check
    _
  $region67: #{ms_tcn2_gru_forward.7} parent=0 // pred_check_branch
    %65 = sbr.rel (0) target = $region69
  $region68: #{ms_tcn2_gru_forward.7} parent=0 // pred_region
    _
  $region69: #{ms_tcn2_gru_forward.7} parent=0 // pred_fallthru
    _
  // Predicated region
  $region70: #{ms_tcn2_gru_forward.7} parent=0 // pred_check
    _
  $region71: #{ms_tcn2_gru_forward.7} parent=0 // pred_check_branch
    %67 = sbr.rel (0) target = $region73
  $region72: #{ms_tcn2_gru_forward.7} parent=0 // pred_region
    _
  $region73: #{ms_tcn2_gru_forward.7} parent=0 // pred_fallthru
    _
  // Predicated region
  $region74: #{ms_tcn2_gru_forward.7} parent=0 // pred_check
    _
  $region75: #{ms_tcn2_gru_forward.7} parent=0 // pred_check_branch
    %69 = sbr.rel (0) target = $region77
  $region76: #{ms_tcn2_gru_forward.7} parent=0 // pred_region
    _
  $region77: #{ms_tcn2_gru_forward.7} parent=0 // pred_fallthru
    _
  // Predicated region
  $region78: #{ms_tcn2_gru_forward.7} parent=0 // pred_check
    _
  $region79: #{ms_tcn2_gru_forward.7} parent=0 // pred_check_branch
    %71 = sbr.rel (0) target = $region81
  $region80: #{ms_tcn2_gru_forward.7} parent=0 // pred_region
    _
  $region81: #{ms_tcn2_gru_forward.7} parent=0 // pred_fallthru
    _
  // Predicated region
  $region82: #{ms_tcn2_gru_forward.7} parent=0 // pred_check
    _
  $region83: #{ms_tcn2_gru_forward.7} parent=0 // pred_check_branch
    %73 = sbr.rel (0) target = $region85
  $region84: #{ms_tcn2_gru_forward.7} parent=0 // pred_region
    _
  $region85: #{ms_tcn2_gru_forward.7} parent=0 // pred_fallthru
    _
  // Predicated region
  $region86: #{ms_tcn2_gru_forward.7} parent=0 // pred_check
    _
  $region87: #{ms_tcn2_gru_forward.7} parent=0 // pred_check_branch
    %75 = sbr.rel (0) target = $region89
  $region88: #{ms_tcn2_gru_forward.7} parent=0 // pred_region
    _
  $region89: #{ms_tcn2_gru_forward.7} parent=0 // pred_fallthru
    _
  // Predicated region
  $region90: #{ms_tcn2_gru_forward.7} parent=0 // pred_check
    _
  $region91: #{ms_tcn2_gru_forward.7} parent=0 // pred_check_branch
    %77 = sbr.rel (0) target = $region93
  $region92: #{ms_tcn2_gru_forward.7} parent=0 // pred_region
    _
  $region93: #{ms_tcn2_gru_forward.7} parent=0 // pred_fallthru
    _
  // Predicated region
  $region94: #{ms_tcn2_gru_forward.7} parent=0 // pred_check
    _
  $region95: #{ms_tcn2_gru_forward.7} parent=0 // pred_check_branch
    %79 = sbr.rel (0) target = $region97
  $region96: #{ms_tcn2_gru_forward.7} parent=0 // pred_region
    _
  $region97: #{ms_tcn2_gru_forward.7} parent=0 // pred_fallthru
    _
  // Predicated region
  $region98: #{ms_tcn2_gru_forward.7} parent=0 // pred_check
    _
  $region99: #{ms_tcn2_gru_forward.7} parent=0 // pred_check_branch
    %81 = sbr.rel (0) target = $region101
  $region100: #{ms_tcn2_gru_forward.7} parent=0 // pred_region
    _
  $region101: #{ms_tcn2_gru_forward.7} parent=0 // pred_fallthru
    _
  // Predicated region
  $region102: #{ms_tcn2_gru_forward.7} parent=0 // pred_check
    _
  $region103: #{ms_tcn2_gru_forward.7} parent=0 // pred_check_branch
    %83 = sbr.rel (0) target = $region105
  $region104: #{ms_tcn2_gru_forward.7} parent=0 // pred_region
    _
  $region105: #{ms_tcn2_gru_forward.7} parent=0 // pred_fallthru
    _
  // Predicated region
  $region106: #{ms_tcn2_gru_forward.7} parent=0 // pred_check
    _
  $region107: #{ms_tcn2_gru_forward.7} parent=0 // pred_check_branch
    %85 = sbr.rel (0) target = $region109
  $region108: #{ms_tcn2_gru_forward.7} parent=0 // pred_region
    _
  $region109: #{ms_tcn2_gru_forward.7} parent=0 // pred_fallthru
    _
  %v86 = vld [vmem:[%s0] sm:$0xff]
  %vm87 = vcmask 48128
  %v88 = vsel %vm87, %v86, -inf
  %89 = vmax.xlane.f32.xlu0 %v88
  %v90 = vpop.xlane.xlu0 %89
  %v91 = vsub.f32 %v86, %v90
  %v92 = vmul.f32 %v91, 1.442695
  %v93 = vpow.pop %v92
  %v94 = vsel %vm87, %v93, 0.0
  %95 = vadd.xlane.f32.xlu0 %v94
  %v96 = vpop.xlane.xlu0 %95
  %v97 = vrcp.pop %v96
  %v98 = vmul.f32 %v93, %v97
  %v99 = vld [vmem:[%s1] sm:$0x3f]
  %v100 = vld [vmem:[%s1 + $0x8] sm:$0x3f]
  %v101 = vld [vmem:[%s3] sm:$0x3]
  %v103 = vlaneseq
  %v104 = vshrl.u32 %v103, 7
  %v105 = vsub.s32 0, %v104
  %v106 = vrot.slane %v101, %v105
  %v107 = vlaneseq
  %v108 = vshrl.u32 %v107, 7
  %v109 = vsub.s32 1, %v108
  %v110 = vrot.slane %v101, %v109
  %v114 = vsel %vm87, %v98, 0
  %vm116 = vcmask 1045504
  %v118 = vsel %vm116, %v99, 0
  %v121 = vsel %vm116, %v100, 0
  %123 = vmatprep.subr.mxu0 0.0
  %124 = vmatpush1.msra.mxu0 0.0
  %125 = vmatprep.subr.mxu0 0.0
  %126 = vmatpush1.msra.mxu0 0.0
  %127 = vmatprep.subr.mxu0 0.0
  %128 = vmatpush1.msra.mxu0 0.0
  %129 = vmatprep.subr.mxu0 0.0
  %130 = vmatpush1.msra.mxu0 0.0
  %131 = vmatprep.subr.mxu0 0.0
  %132 = vmatpush1.msra.mxu0 0.0
  %133 = vmatprep.subr.mxu0 0.0
  %134 = vmatpush1.msra.mxu0 0.0
  %135 = vmatprep.subr.mxu0 0.0
  %136 = vmatpush1.msra.mxu0 0.0
  %137 = vmatprep.subr.mxu0 0.0
  %138 = vmatpush1.msra.mxu0 0.0
  %139 = vmatprep.subr.mxu0 0.0
  %140 = vmatpush1.msra.mxu0 0.0
  %141 = vmatprep.subr.mxu0 0.0
  %142 = vmatpush1.msra.mxu0 0.0
  %143 = vmatprep.subr.mxu0 0.0
  %144 = vmatpush1.msra.mxu0 0.0
  %145 = vmatprep.subr.mxu0 0.0
  %146 = vmatpush1.msra.mxu0 0.0
  %147 = vmatprep.subr.mxu0 0.0
  %148 = vmatpush1.msra.mxu0 0.0
  %149 = vmatprep.subr.mxu0 0.0
  %150 = vmatpush1.msra.mxu0 0.0
  %151 = vmatprep.subr.mxu0 0.0
  %152 = vmatpush1.msra.mxu0 0.0
  %153 = vmatprep.subr.mxu0 %v121
  %154 = vmatpush1.msra.mxu0 %v118
  %155 = vmatprep.subr.mxu0 0.0
  %156 = vmatpush2.msra.mxu0 0.0
  %157 = vmatprep.subr.mxu0 0.0
  %158 = vmatpush2.msra.mxu0 0.0
  %159 = vmatprep.subr.mxu0 0.0
  %160 = vmatpush2.msra.mxu0 0.0
  %161 = vmatprep.subr.mxu0 0.0
  %162 = vmatpush2.msra.mxu0 0.0
  %163 = vmatprep.subr.mxu0 0.0
  %164 = vmatpush2.msra.mxu0 0.0
  %165 = vmatprep.subr.mxu0 0.0
  %166 = vmatpush2.msra.mxu0 0.0
  %167 = vmatprep.subr.mxu0 0.0
  %168 = vmatpush2.msra.mxu0 0.0
  %169 = vmatprep.subr.mxu0 0.0
  %170 = vmatpush2.msra.mxu0 0.0
  %171 = vmatprep.subr.mxu0 0.0
  %172 = vmatpush2.msra.mxu0 0.0
  %173 = vmatprep.subr.mxu0 0.0
  %174 = vmatpush2.msra.mxu0 0.0
  %175 = vmatprep.subr.mxu0 0.0
  %176 = vmatpush2.msra.mxu0 0.0
  %177 = vmatprep.subr.mxu0 0.0
  %178 = vmatpush2.msra.mxu0 0.0
  %179 = vmatprep.subr.mxu0 0.0
  %180 = vmatpush2.msra.mxu0 0.0
  %181 = vmatprep.subr.mxu0 0.0
  %182 = vmatpush2.msra.mxu0 0.0
  %183 = vmatprep.subr.mxu0 0.0
  %184 = vmatpush2.msra.mxu0 0.0
  %185 = vmatprep.subr.mxu0 0.0
  %186 = vmatpush2.msra.mxu0 0.0
  %187 = vmatprep.mubr.f32.mxu0 0.0
  %188 = vmatmul.mubr.f32.gmra.mxu0 %v114
  %v189 = vpop.f32.mrf.mxu0
  %v190 = vadd.f32 %v106, %v189
  %v191 = vpop.f32.mrf.mxu0
  %v192 = vadd.f32 %v110, %v191
  %193 = vdwg.mxu0
  %194 = vst [vmem:[#allocation2] sm:$0xff] %v190
  %vm195 = vcmask 523264
  %196 = vst.msk [vmem:[#allocation2 + $0x8] sm:$0xff] %vm195, %v192
  %v197 = vld [vmem:[%s5] sm:$0x3f]
  %v198 = vld [vmem:[%s5 + $0x8] sm:$0x3f]
  %v199 = vld [vmem:[%s7] sm:$0x3]
  %v201 = vlaneseq
  %v202 = vshrl.u32 %v201, 7
  %v203 = vsub.s32 0, %v202
  %v204 = vrot.slane %v199, %v203
  %v205 = vlaneseq
  %v206 = vshrl.u32 %v205, 7
  %v207 = vsub.s32 1, %v206
  %v208 = vrot.slane %v199, %v207
  %v212 = vsel %vm116, %v197, 0
  %v215 = vsel %vm116, %v198, 0
  %217 = vmatprep.subr.mxu0 0.0
  %218 = vmatpush1.msra.mxu0 0.0
  %219 = vmatprep.subr.mxu0 0.0
  %220 = vmatpush1.msra.mxu0 0.0
  %221 = vmatprep.subr.mxu0 0.0
  %222 = vmatpush1.msra.mxu0 0.0
  %223 = vmatprep.subr.mxu0 0.0
  %224 = vmatpush1.msra.mxu0 0.0
  %225 = vmatprep.subr.mxu0 0.0
  %226 = vmatpush1.msra.mxu0 0.0
  %227 = vmatprep.subr.mxu0 0.0
  %228 = vmatpush1.msra.mxu0 0.0
  %229 = vmatprep.subr.mxu0 0.0
  %230 = vmatpush1.msra.mxu0 0.0
  %231 = vmatprep.subr.mxu0 0.0
  %232 = vmatpush1.msra.mxu0 0.0
  %233 = vmatprep.subr.mxu0 0.0
  %234 = vmatpush1.msra.mxu0 0.0
  %235 = vmatprep.subr.mxu0 0.0
  %236 = vmatpush1.msra.mxu0 0.0
  %237 = vmatprep.subr.mxu0 0.0
  %238 = vmatpush1.msra.mxu0 0.0
  %239 = vmatprep.subr.mxu0 0.0
  %240 = vmatpush1.msra.mxu0 0.0
  %241 = vmatprep.subr.mxu0 0.0
  %242 = vmatpush1.msra.mxu0 0.0
  %243 = vmatprep.subr.mxu0 0.0
  %244 = vmatpush1.msra.mxu0 0.0
  %245 = vmatprep.subr.mxu0 0.0
  %246 = vmatpush1.msra.mxu0 0.0
  %247 = vmatprep.subr.mxu0 %v215
  %248 = vmatpush1.msra.mxu0 %v212
  %249 = vmatprep.subr.mxu0 0.0
  %250 = vmatpush2.msra.mxu0 0.0
  %251 = vmatprep.subr.mxu0 0.0
  %252 = vmatpush2.msra.mxu0 0.0
  %253 = vmatprep.subr.mxu0 0.0
  %254 = vmatpush2.msra.mxu0 0.0
  %255 = vmatprep.subr.mxu0 0.0
  %256 = vmatpush2.msra.mxu0 0.0
  %257 = vmatprep.subr.mxu0 0.0
  %258 = vmatpush2.msra.mxu0 0.0
  %259 = vmatprep.subr.mxu0 0.0
  %260 = vmatpush2.msra.mxu0 0.0
  %261 = vmatprep.subr.mxu0 0.0
  %262 = vmatpush2.msra.mxu0 0.0
  %263 = vmatprep.subr.mxu0 0.0
  %264 = vmatpush2.msra.mxu0 0.0
  %265 = vmatprep.subr.mxu0 0.0
  %266 = vmatpush2.msra.mxu0 0.0
  %267 = vmatprep.subr.mxu0 0.0
  %268 = vmatpush2.msra.mxu0 0.0
  %269 = vmatprep.subr.mxu0 0.0
  %270 = vmatpush2.msra.mxu0 0.0
  %271 = vmatprep.subr.mxu0 0.0
  %272 = vmatpush2.msra.mxu0 0.0
  %273 = vmatprep.subr.mxu0 0.0
  %274 = vmatpush2.msra.mxu0 0.0
  %275 = vmatprep.subr.mxu0 0.0
  %276 = vmatpush2.msra.mxu0 0.0
  %277 = vmatprep.subr.mxu0 0.0
  %278 = vmatpush2.msra.mxu0 0.0
  %279 = vmatprep.subr.mxu0 0.0
  %280 = vmatpush2.msra.mxu0 0.0
  %281 = vmatprep.mubr.f32.mxu0 0.0
  %282 = vmatmul.mubr.f32.gmra.mxu0 %v114
  %v283 = vpop.f32.mrf.mxu0
  %v284 = vadd.f32 %v204, %v283
  %v285 = vpop.f32.mrf.mxu0
  %v286 = vadd.f32 %v208, %v285
  %287 = vdwg.mxu0
  %288 = vst [vmem:[#allocation3] sm:$0xff] %v284
  %289 = vst.msk [vmem:[#allocation3 + $0x8] sm:$0xff] %vm195, %v286
  %v290 = vld [vmem:[%s2] sm:$0xff]
  %v291 = vld [vmem:[%s2 + $0x8] sm:$0xff]
  %v292 = vld [vmem:[%s2 + $0x10] sm:$0xff]
  %v293 = vld [vmem:[%s2 + $0x18] sm:$0xff]
  %v294 = vld [vmem:[%s2 + $0x20] sm:$0xff]
  %v295 = vld [vmem:[%s2 + $0x28] sm:$0xff]
  %v296 = vld [vmem:[%s2 + $0x30] sm:$0xff]
  %v297 = vld [vmem:[%s2 + $0x38] sm:$0xff]
  %v298 = vld [vmem:[%s2 + $0x40] sm:$0xff]
  %v299 = vld [vmem:[%s2 + $0x48] sm:$0xff]
  %v300 = vld [vmem:[%s2 + $0x50] sm:$0xff]
  %v301 = vld [vmem:[%s2 + $0x58] sm:$0xff]
  %v302 = vld [vmem:[%s2 + $0x60] sm:$0xff]
  %v303 = vld [vmem:[%s2 + $0x68] sm:$0xff]
  %v304 = vld [vmem:[%s2 + $0x70] sm:$0xff]
  %v305 = vld [vmem:[%s2 + $0x78] sm:$0xff]
  %v306 = vld [vmem:[%s6] sm:$0xff]
  %v307 = vld [vmem:[%s6 + $0x8] sm:$0xff]
  %v308 = vld [vmem:[%s6 + $0x10] sm:$0xff]
  %v309 = vld [vmem:[%s6 + $0x18] sm:$0xff]
  %v310 = vld [vmem:[%s6 + $0x20] sm:$0xff]
  %v311 = vld [vmem:[%s6 + $0x28] sm:$0xff]
  %v312 = vld [vmem:[%s6 + $0x30] sm:$0xff]
  %v313 = vld [vmem:[%s6 + $0x38] sm:$0xff]
  %v314 = vld [vmem:[%s6 + $0x40] sm:$0xff]
  %v315 = vld [vmem:[%s6 + $0x48] sm:$0xff]
  %v316 = vld [vmem:[%s6 + $0x50] sm:$0xff]
  %v317 = vld [vmem:[%s6 + $0x58] sm:$0xff]
  %v318 = vld [vmem:[%s6 + $0x60] sm:$0xff]
  %v319 = vld [vmem:[%s6 + $0x68] sm:$0xff]
  %v320 = vld [vmem:[%s6 + $0x70] sm:$0xff]
  %v321 = vld [vmem:[%s6 + $0x78] sm:$0xff]
  %v322 = vld [vmem:[%s4] sm:$0x3]
  %v323 = vld [vmem:[%s8] sm:$0x3]
  %v324 = vld [vmem:[#allocation2] ss:$8 sm:$0x3]
  %s325 = scalar_lea.vmem [#allocation3], 7
  %v326 = vld [vmem:[%s325] ss:$8 sm:$0x3]
  %v328 = vlaneseq
  %v329 = vshrl.u32 %v328, 7
  %v330 = vsub.s32 0, %v329
  %v331 = vrot.slane %v322, %v330
  %v332 = vlaneseq
  %v333 = vshrl.u32 %v332, 7
  %v334 = vsub.s32 1, %v333
  %v335 = vrot.slane %v322, %v334
  %v339 = vsel %vm195, 0.0, 0
  %341 = vmatprep.subr.mxu0 0.0
  %342 = vmatpush1.msra.mxu0 0.0
  %343 = vmatprep.subr.mxu0 0.0
  %344 = vmatpush1.msra.mxu0 0.0
  %345 = vmatprep.subr.mxu0 0.0
  %346 = vmatpush1.msra.mxu0 0.0
  %347 = vmatprep.subr.mxu0 0.0
  %348 = vmatpush1.msra.mxu0 0.0
  %349 = vmatprep.subr.mxu0 0.0
  %350 = vmatpush1.msra.mxu0 0.0
  %351 = vmatprep.subr.mxu0 0.0
  %352 = vmatpush1.msra.mxu0 0.0
  %353 = vmatprep.subr.mxu0 0.0
  %354 = vmatpush1.msra.mxu0 0.0
  %355 = vmatprep.subr.mxu0 0.0
  %356 = vmatpush1.msra.mxu0 0.0
  %357 = vmatprep.subr.mxu0 %v305
  %358 = vmatpush1.msra.mxu0 %v304
  %359 = vmatprep.subr.mxu0 %v303
  %360 = vmatpush1.msra.mxu0 %v302
  %361 = vmatprep.subr.mxu0 %v301
  %362 = vmatpush1.msra.mxu0 %v300
  %363 = vmatprep.subr.mxu0 %v299
  %364 = vmatpush1.msra.mxu0 %v298
  %365 = vmatprep.subr.mxu0 %v297
  %366 = vmatpush1.msra.mxu0 %v296
  %367 = vmatprep.subr.mxu0 %v295
  %368 = vmatpush1.msra.mxu0 %v294
  %369 = vmatprep.subr.mxu0 %v293
  %370 = vmatpush1.msra.mxu0 %v292
  %371 = vmatprep.subr.mxu0 %v291
  %372 = vmatpush1.msra.mxu0 %v290
  %373 = vmatprep.subr.mxu0 0.0
  %374 = vmatpush2.msra.mxu0 0.0
  %375 = vmatprep.subr.mxu0 0.0
  %376 = vmatpush2.msra.mxu0 0.0
  %377 = vmatprep.subr.mxu0 0.0
  %378 = vmatpush2.msra.mxu0 0.0
  %379 = vmatprep.subr.mxu0 0.0
  %380 = vmatpush2.msra.mxu0 0.0
  %381 = vmatprep.subr.mxu0 0.0
  %382 = vmatpush2.msra.mxu0 0.0
  %383 = vmatprep.subr.mxu0 0.0
  %384 = vmatpush2.msra.mxu0 0.0
  %385 = vmatprep.subr.mxu0 0.0
  %386 = vmatpush2.msra.mxu0 0.0
  %387 = vmatprep.subr.mxu0 0.0
  %388 = vmatpush2.msra.mxu0 0.0
  %389 = vmatprep.subr.mxu0 0.0
  %390 = vmatpush2.msra.mxu0 0.0
  %391 = vmatprep.subr.mxu0 0.0
  %392 = vmatpush2.msra.mxu0 0.0
  %393 = vmatprep.subr.mxu0 0.0
  %394 = vmatpush2.msra.mxu0 0.0
  %395 = vmatprep.subr.mxu0 0.0
  %396 = vmatpush2.msra.mxu0 0.0
  %397 = vmatprep.subr.mxu0 0.0
  %398 = vmatpush2.msra.mxu0 0.0
  %399 = vmatprep.subr.mxu0 0.0
  %400 = vmatpush2.msra.mxu0 0.0
  %401 = vmatprep.subr.mxu0 0.0
  %402 = vmatpush2.msra.mxu0 0.0
  %403 = vmatprep.subr.mxu0 0.0
  %404 = vmatpush2.msra.mxu0 0.0
  %405 = vmatprep.mubr.f32.mxu0 0.0
  %406 = vmatmul.mubr.f32.gmra.mxu0 %v339
  %v407 = vpop.f32.mrf.mxu0
  %v408 = vadd.f32 %v331, %v407
  %v409 = vpop.f32.mrf.mxu0
  %v410 = vadd.f32 %v335, %v409
  %411 = vdwg.mxu0
  %v413 = vlaneseq
  %v414 = vshrl.u32 %v413, 7
  %v415 = vsub.s32 0, %v414
  %v416 = vrot.slane %v323, %v415
  %v417 = vlaneseq
  %v418 = vshrl.u32 %v417, 7
  %v419 = vsub.s32 1, %v418
  %v420 = vrot.slane %v323, %v419
  %423 = vmatprep.subr.mxu0 0.0
  %424 = vmatpush1.msra.mxu0 0.0
  %425 = vmatprep.subr.mxu0 0.0
  %426 = vmatpush1.msra.mxu0 0.0
  %427 = vmatprep.subr.mxu0 0.0
  %428 = vmatpush1.msra.mxu0 0.0
  %429 = vmatprep.subr.mxu0 0.0
  %430 = vmatpush1.msra.mxu0 0.0
  %431 = vmatprep.subr.mxu0 0.0
  %432 = vmatpush1.msra.mxu0 0.0
  %433 = vmatprep.subr.mxu0 0.0
  %434 = vmatpush1.msra.mxu0 0.0
  %435 = vmatprep.subr.mxu0 0.0
  %436 = vmatpush1.msra.mxu0 0.0
  %437 = vmatprep.subr.mxu0 0.0
  %438 = vmatpush1.msra.mxu0 0.0
  %439 = vmatprep.subr.mxu0 %v321
  %440 = vmatpush1.msra.mxu0 %v320
  %441 = vmatprep.subr.mxu0 %v319
  %442 = vmatpush1.msra.mxu0 %v318
  %443 = vmatprep.subr.mxu0 %v317
  %444 = vmatpush1.msra.mxu0 %v316
  %445 = vmatprep.subr.mxu0 %v315
  %446 = vmatpush1.msra.mxu0 %v314
  %447 = vmatprep.subr.mxu0 %v313
  %448 = vmatpush1.msra.mxu0 %v312
  %449 = vmatprep.subr.mxu0 %v311
  %450 = vmatpush1.msra.mxu0 %v310
  %451 = vmatprep.subr.mxu0 %v309
  %452 = vmatpush1.msra.mxu0 %v308
  %453 = vmatprep.subr.mxu0 %v307
  %454 = vmatpush1.msra.mxu0 %v306
  %455 = vmatprep.subr.mxu0 0.0
  %456 = vmatpush2.msra.mxu0 0.0
  %457 = vmatprep.subr.mxu0 0.0
  %458 = vmatpush2.msra.mxu0 0.0
  %459 = vmatprep.subr.mxu0 0.0
  %460 = vmatpush2.msra.mxu0 0.0
  %461 = vmatprep.subr.mxu0 0.0
  %462 = vmatpush2.msra.mxu0 0.0
  %463 = vmatprep.subr.mxu0 0.0
  %464 = vmatpush2.msra.mxu0 0.0
  %465 = vmatprep.subr.mxu0 0.0
  %466 = vmatpush2.msra.mxu0 0.0
  %467 = vmatprep.subr.mxu0 0.0
  %468 = vmatpush2.msra.mxu0 0.0
  %469 = vmatprep.subr.mxu0 0.0
  %470 = vmatpush2.msra.mxu0 0.0
  %471 = vmatprep.subr.mxu0 0.0
  %472 = vmatpush2.msra.mxu0 0.0
  %473 = vmatprep.subr.mxu0 0.0
  %474 = vmatpush2.msra.mxu0 0.0
  %475 = vmatprep.subr.mxu0 0.0
  %476 = vmatpush2.msra.mxu0 0.0
  %477 = vmatprep.subr.mxu0 0.0
  %478 = vmatpush2.msra.mxu0 0.0
  %479 = vmatprep.subr.mxu0 0.0
  %480 = vmatpush2.msra.mxu0 0.0
  %481 = vmatprep.subr.mxu0 0.0
  %482 = vmatpush2.msra.mxu0 0.0
  %483 = vmatprep.subr.mxu0 0.0
  %484 = vmatpush2.msra.mxu0 0.0
  %485 = vmatprep.subr.mxu0 0.0
  %486 = vmatpush2.msra.mxu0 0.0
  %487 = vmatprep.mubr.f32.mxu0 0.0
  %488 = vmatmul.mubr.f32.gmra.mxu0 %v339
  %v489 = vpop.f32.mrf.mxu0
  %v490 = vadd.f32 %v416, %v489
  %v491 = vpop.f32.mrf.mxu0
  %v492 = vadd.f32 %v420, %v491
  %493 = vdwg.mxu0
  %v494 = vadd.f32 %v324, %v408
  %v495 = vxor.u32 %v494, 2147483648
  %v496 = vmul.f32 %v495, 1.442695
  %v497 = vpow.pop %v496
  %v498 = vadd.f32 %v497, 1.0
  %v499 = vrcp.pop %v498
  %v500 = vmul.f32 1.0, %v499
  %v501 = vmul.f32 %v500, %v410
  %v503 = vrot.slane %v324, 1
  %v505 = vadd.f32 %v503, %v501
  %v506 = vtanh.pop %v505
  %v507 = vsub.f32 1.0, %v500
  %509 = vrot.lane.b32.xlu0 %v506, 64
  %v510 = vpop.permute.xlu0 %509
  %v512 = vmul.f32 %v507, %v510
  %v513 = vmul.f32 %v500, 0.0
  %v514 = vadd.f32 %v512, %v513
  %v515 = vadd.f32 %v326, %v490
  %v516 = vxor.u32 %v515, 2147483648
  %v517 = vmul.f32 %v516, 1.442695
  %v518 = vpow.pop %v517
  %v519 = vadd.f32 %v518, 1.0
  %v520 = vrcp.pop %v519
  %v521 = vmul.f32 1.0, %v520
  %v522 = vmul.f32 %v521, %v492
  %v524 = vrot.slane %v326, 1
  %v526 = vadd.f32 %v524, %v522
  %v527 = vtanh.pop %v526
  %v528 = vsub.f32 1.0, %v521
  %530 = vrot.lane.b32.xlu0 %v527, 64
  %v531 = vpop.permute.xlu0 %530
  %v533 = vmul.f32 %v528, %v531
  %v534 = vmul.f32 %v521, 0.0
  %v535 = vadd.f32 %v533, %v534
  %v537 = vlaneseq
  %v538 = vshrl.u32 %v537, 7
  %v539 = vsub.s32 0, %v538
  %v540 = vrot.slane %v514, %v539
  %541 = vrot.lane.b32.xlu0 %v540, 64
  %v542 = vpop.permute.xlu0 %541
  %vm544 = vcmask 516096
  %545 = vst.msk [vmem:[#allocation4] sm:$0x1] %vm544, %v542
  %vm546 = vcmask 1040896
  %547 = vst.msk [vmem:[#allocation4 + $0x7] sm:$0x1] %vm546, %v535
  %s548 = scalar_lea.vmem [#allocation2], 1
  %v549 = vld [vmem:[%s548] ss:$8 sm:$0x3]
  %s550 = scalar_lea.vmem [#allocation3], 6
  %v551 = vld [vmem:[%s550] ss:$8 sm:$0x3]
  %v552 = vsel %vm195, %v542, 0
  %554 = vmatprep.subr.mxu0 0.0
  %555 = vmatpush1.msra.mxu0 0.0
  %556 = vmatprep.subr.mxu0 0.0
  %557 = vmatpush1.msra.mxu0 0.0
  %558 = vmatprep.subr.mxu0 0.0
  %559 = vmatpush1.msra.mxu0 0.0
  %560 = vmatprep.subr.mxu0 0.0
  %561 = vmatpush1.msra.mxu0 0.0
  %562 = vmatprep.subr.mxu0 0.0
  %563 = vmatpush1.msra.mxu0 0.0
  %564 = vmatprep.subr.mxu0 0.0
  %565 = vmatpush1.msra.mxu0 0.0
  %566 = vmatprep.subr.mxu0 0.0
  %567 = vmatpush1.msra.mxu0 0.0
  %568 = vmatprep.subr.mxu0 0.0
  %569 = vmatpush1.msra.mxu0 0.0
  %570 = vmatprep.subr.mxu0 %v305
  %571 = vmatpush1.msra.mxu0 %v304
  %572 = vmatprep.subr.mxu0 %v303
  %573 = vmatpush1.msra.mxu0 %v302
  %574 = vmatprep.subr.mxu0 %v301
  %575 = vmatpush1.msra.mxu0 %v300
  %576 = vmatprep.subr.mxu0 %v299
  %577 = vmatpush1.msra.mxu0 %v298
  %578 = vmatprep.subr.mxu0 %v297
  %579 = vmatpush1.msra.mxu0 %v296
  %580 = vmatprep.subr.mxu0 %v295
  %581 = vmatpush1.msra.mxu0 %v294
  %582 = vmatprep.subr.mxu0 %v293
  %583 = vmatpush1.msra.mxu0 %v292
  %584 = vmatprep.subr.mxu0 %v291
  %585 = vmatpush1.msra.mxu0 %v290
  %586 = vmatprep.subr.mxu0 0.0
  %587 = vmatpush2.msra.mxu0 0.0
  %588 = vmatprep.subr.mxu0 0.0
  %589 = vmatpush2.msra.mxu0 0.0
  %590 = vmatprep.subr.mxu0 0.0
  %591 = vmatpush2.msra.mxu0 0.0
  %592 = vmatprep.subr.mxu0 0.0
  %593 = vmatpush2.msra.mxu0 0.0
  %594 = vmatprep.subr.mxu0 0.0
  %595 = vmatpush2.msra.mxu0 0.0
  %596 = vmatprep.subr.mxu0 0.0
  %597 = vmatpush2.msra.mxu0 0.0
  %598 = vmatprep.subr.mxu0 0.0
  %599 = vmatpush2.msra.mxu0 0.0
  %600 = vmatprep.subr.mxu0 0.0
  %601 = vmatpush2.msra.mxu0 0.0
  %602 = vmatprep.subr.mxu0 0.0
  %603 = vmatpush2.msra.mxu0 0.0
  %604 = vmatprep.subr.mxu0 0.0
  %605 = vmatpush2.msra.mxu0 0.0
  %606 = vmatprep.subr.mxu0 0.0
  %607 = vmatpush2.msra.mxu0 0.0
  %608 = vmatprep.subr.mxu0 0.0
  %609 = vmatpush2.msra.mxu0 0.0
  %610 = vmatprep.subr.mxu0 0.0
  %611 = vmatpush2.msra.mxu0 0.0
  %612 = vmatprep.subr.mxu0 0.0
  %613 = vmatpush2.msra.mxu0 0.0
  %614 = vmatprep.subr.mxu0 0.0
  %615 = vmatpush2.msra.mxu0 0.0
  %616 = vmatprep.subr.mxu0 0.0
  %617 = vmatpush2.msra.mxu0 0.0
  %618 = vmatprep.mubr.f32.mxu0 0.0
  %619 = vmatmul.mubr.f32.gmra.mxu0 %v552
  %v620 = vpop.f32.mrf.mxu0
  %v621 = vadd.f32 %v331, %v620
  %v622 = vpop.f32.mrf.mxu0
  %v623 = vadd.f32 %v335, %v622
  %624 = vdwg.mxu0
  %v626 = vlaneseq
  %v627 = vshrl.u32 %v626, 7
  %v628 = vsub.s32 0, %v627
  %v629 = vrot.slane %v535, %v628
  %630 = vrot.lane.b32.xlu0 %v629, 64
  %v631 = vpop.permute.xlu0 %630
  %v632 = vsel %vm195, %v631, 0
  %634 = vmatprep.subr.mxu0 0.0
  %635 = vmatpush1.msra.mxu0 0.0
  %636 = vmatprep.subr.mxu0 0.0
  %637 = vmatpush1.msra.mxu0 0.0
  %638 = vmatprep.subr.mxu0 0.0
  %639 = vmatpush1.msra.mxu0 0.0
  %640 = vmatprep.subr.mxu0 0.0
  %641 = vmatpush1.msra.mxu0 0.0
  %642 = vmatprep.subr.mxu0 0.0
  %643 = vmatpush1.msra.mxu0 0.0
  %644 = vmatprep.subr.mxu0 0.0
  %645 = vmatpush1.msra.mxu0 0.0
  %646 = vmatprep.subr.mxu0 0.0
  %647 = vmatpush1.msra.mxu0 0.0
  %648 = vmatprep.subr.mxu0 0.0
  %649 = vmatpush1.msra.mxu0 0.0
  %650 = vmatprep.subr.mxu0 %v321
  %651 = vmatpush1.msra.mxu0 %v320
  %652 = vmatprep.subr.mxu0 %v319
  %653 = vmatpush1.msra.mxu0 %v318
  %654 = vmatprep.subr.mxu0 %v317
  %655 = vmatpush1.msra.mxu0 %v316
  %656 = vmatprep.subr.mxu0 %v315
  %657 = vmatpush1.msra.mxu0 %v314
  %658 = vmatprep.subr.mxu0 %v313
  %659 = vmatpush1.msra.mxu0 %v312
  %660 = vmatprep.subr.mxu0 %v311
  %661 = vmatpush1.msra.mxu0 %v310
  %662 = vmatprep.subr.mxu0 %v309
  %663 = vmatpush1.msra.mxu0 %v308
  %664 = vmatprep.subr.mxu0 %v307
  %665 = vmatpush1.msra.mxu0 %v306
  %666 = vmatprep.subr.mxu0 0.0
  %667 = vmatpush2.msra.mxu0 0.0
  %668 = vmatprep.subr.mxu0 0.0
  %669 = vmatpush2.msra.mxu0 0.0
  %670 = vmatprep.subr.mxu0 0.0
  %671 = vmatpush2.msra.mxu0 0.0
  %672 = vmatprep.subr.mxu0 0.0
  %673 = vmatpush2.msra.mxu0 0.0
  %674 = vmatprep.subr.mxu0 0.0
  %675 = vmatpush2.msra.mxu0 0.0
  %676 = vmatprep.subr.mxu0 0.0
  %677 = vmatpush2.msra.mxu0 0.0
  %678 = vmatprep.subr.mxu0 0.0
  %679 = vmatpush2.msra.mxu0 0.0
  %680 = vmatprep.subr.mxu0 0.0
  %681 = vmatpush2.msra.mxu0 0.0
  %682 = vmatprep.subr.mxu0 0.0
  %683 = vmatpush2.msra.mxu0 0.0
  %684 = vmatprep.subr.mxu0 0.0
  %685 = vmatpush2.msra.mxu0 0.0
  %686 = vmatprep.subr.mxu0 0.0
  %687 = vmatpush2.msra.mxu0 0.0
  %688 = vmatprep.subr.mxu0 0.0
  %689 = vmatpush2.msra.mxu0 0.0
  %690 = vmatprep.subr.mxu0 0.0
  %691 = vmatpush2.msra.mxu0 0.0
  %692 = vmatprep.subr.mxu0 0.0
  %693 = vmatpush2.msra.mxu0 0.0
  %694 = vmatprep.subr.mxu0 0.0
  %695 = vmatpush2.msra.mxu0 0.0
  %696 = vmatprep.subr.mxu0 0.0
  %697 = vmatpush2.msra.mxu0 0.0
  %698 = vmatprep.mubr.f32.mxu0 0.0
  %699 = vmatmul.mubr.f32.gmra.mxu0 %v632
  %v700 = vpop.f32.mrf.mxu0
  %v701 = vadd.f32 %v416, %v700
  %v702 = vpop.f32.mrf.mxu0
  %v703 = vadd.f32 %v420, %v702
  %704 = vdwg.mxu0
  %v705 = vadd.f32 %v549, %v621
  %v706 = vxor.u32 %v705, 2147483648
  %v707 = vmul.f32 %v706, 1.442695
  %v708 = vpow.pop %v707
  %v709 = vadd.f32 %v708, 1.0
  %v710 = vrcp.pop %v709
  %v711 = vmul.f32 1.0, %v710
  %v712 = vmul.f32 %v711, %v623
  %v714 = vrot.slane %v549, 1
  %v716 = vadd.f32 %v714, %v712
  %v717 = vtanh.pop %v716
  %v718 = vsub.f32 1.0, %v711
  %720 = vrot.lane.b32.xlu0 %v717, 64
  %v721 = vpop.permute.xlu0 %720
  %v723 = vmul.f32 %v718, %v721
  %v724 = vmul.f32 %v711, %v514
  %v725 = vadd.f32 %v723, %v724
  %v726 = vadd.f32 %v551, %v701
  %v727 = vxor.u32 %v726, 2147483648
  %v728 = vmul.f32 %v727, 1.442695
  %v729 = vpow.pop %v728
  %v730 = vadd.f32 %v729, 1.0
  %v731 = vrcp.pop %v730
  %v732 = vmul.f32 1.0, %v731
  %v733 = vmul.f32 %v732, %v703
  %v735 = vrot.slane %v551, 1
  %v737 = vadd.f32 %v735, %v733
  %v738 = vtanh.pop %v737
  %v739 = vsub.f32 1.0, %v732
  %741 = vrot.lane.b32.xlu0 %v738, 64
  %v742 = vpop.permute.xlu0 %741
  %v744 = vmul.f32 %v739, %v742
  %v745 = vmul.f32 %v732, %v535
  %v746 = vadd.f32 %v744, %v745
  %v748 = vlaneseq
  %v749 = vshrl.u32 %v748, 7
  %v750 = vsub.s32 0, %v749
  %v751 = vrot.slane %v725, %v750
  %752 = vrot.lane.b32.xlu0 %v751, 64
  %v753 = vpop.permute.xlu0 %752
  %755 = vst.msk [vmem:[#allocation4 + $0x1] sm:$0x1] %vm544, %v753
  %756 = vst.msk [vmem:[#allocation4 + $0x6] sm:$0x1] %vm546, %v746
  %s757 = scalar_lea.vmem [#allocation2], 2
  %v758 = vld [vmem:[%s757] ss:$8 sm:$0x3]
  %s759 = scalar_lea.vmem [#allocation3], 5
  %v760 = vld [vmem:[%s759] ss:$8 sm:$0x3]
  %v761 = vsel %vm195, %v753, 0
  %763 = vmatprep.subr.mxu0 0.0
  %764 = vmatpush1.msra.mxu0 0.0
  %765 = vmatprep.subr.mxu0 0.0
  %766 = vmatpush1.msra.mxu0 0.0
  %767 = vmatprep.subr.mxu0 0.0
  %768 = vmatpush1.msra.mxu0 0.0
  %769 = vmatprep.subr.mxu0 0.0
  %770 = vmatpush1.msra.mxu0 0.0
  %771 = vmatprep.subr.mxu0 0.0
  %772 = vmatpush1.msra.mxu0 0.0
  %773 = vmatprep.subr.mxu0 0.0
  %774 = vmatpush1.msra.mxu0 0.0
  %775 = vmatprep.subr.mxu0 0.0
  %776 = vmatpush1.msra.mxu0 0.0
  %777 = vmatprep.subr.mxu0 0.0
  %778 = vmatpush1.msra.mxu0 0.0
  %779 = vmatprep.subr.mxu0 %v305
  %780 = vmatpush1.msra.mxu0 %v304
  %781 = vmatprep.subr.mxu0 %v303
  %782 = vmatpush1.msra.mxu0 %v302
  %783 = vmatprep.subr.mxu0 %v301
  %784 = vmatpush1.msra.mxu0 %v300
  %785 = vmatprep.subr.mxu0 %v299
  %786 = vmatpush1.msra.mxu0 %v298
  %787 = vmatprep.subr.mxu0 %v297
  %788 = vmatpush1.msra.mxu0 %v296
  %789 = vmatprep.subr.mxu0 %v295
  %790 = vmatpush1.msra.mxu0 %v294
  %791 = vmatprep.subr.mxu0 %v293
  %792 = vmatpush1.msra.mxu0 %v292
  %793 = vmatprep.subr.mxu0 %v291
  %794 = vmatpush1.msra.mxu0 %v290
  %795 = vmatprep.subr.mxu0 0.0
  %796 = vmatpush2.msra.mxu0 0.0
  %797 = vmatprep.subr.mxu0 0.0
  %798 = vmatpush2.msra.mxu0 0.0
  %799 = vmatprep.subr.mxu0 0.0
  %800 = vmatpush2.msra.mxu0 0.0
  %801 = vmatprep.subr.mxu0 0.0
  %802 = vmatpush2.msra.mxu0 0.0
  %803 = vmatprep.subr.mxu0 0.0
  %804 = vmatpush2.msra.mxu0 0.0
  %805 = vmatprep.subr.mxu0 0.0
  %806 = vmatpush2.msra.mxu0 0.0
  %807 = vmatprep.subr.mxu0 0.0
  %808 = vmatpush2.msra.mxu0 0.0
  %809 = vmatprep.subr.mxu0 0.0
  %810 = vmatpush2.msra.mxu0 0.0
  %811 = vmatprep.subr.mxu0 0.0
  %812 = vmatpush2.msra.mxu0 0.0
  %813 = vmatprep.subr.mxu0 0.0
  %814 = vmatpush2.msra.mxu0 0.0
  %815 = vmatprep.subr.mxu0 0.0
  %816 = vmatpush2.msra.mxu0 0.0
  %817 = vmatprep.subr.mxu0 0.0
  %818 = vmatpush2.msra.mxu0 0.0
  %819 = vmatprep.subr.mxu0 0.0
  %820 = vmatpush2.msra.mxu0 0.0
  %821 = vmatprep.subr.mxu0 0.0
  %822 = vmatpush2.msra.mxu0 0.0
  %823 = vmatprep.subr.mxu0 0.0
  %824 = vmatpush2.msra.mxu0 0.0
  %825 = vmatprep.subr.mxu0 0.0
  %826 = vmatpush2.msra.mxu0 0.0
  %827 = vmatprep.mubr.f32.mxu0 0.0
  %828 = vmatmul.mubr.f32.gmra.mxu0 %v761
  %v829 = vpop.f32.mrf.mxu0
  %v830 = vadd.f32 %v331, %v829
  %v831 = vpop.f32.mrf.mxu0
  %v832 = vadd.f32 %v335, %v831
  %833 = vdwg.mxu0
  %v835 = vlaneseq
  %v836 = vshrl.u32 %v835, 7
  %v837 = vsub.s32 0, %v836
  %v838 = vrot.slane %v746, %v837
  %839 = vrot.lane.b32.xlu0 %v838, 64
  %v840 = vpop.permute.xlu0 %839
  %v841 = vsel %vm195, %v840, 0
  %843 = vmatprep.subr.mxu0 0.0
  %844 = vmatpush1.msra.mxu0 0.0
  %845 = vmatprep.subr.mxu0 0.0
  %846 = vmatpush1.msra.mxu0 0.0
  %847 = vmatprep.subr.mxu0 0.0
  %848 = vmatpush1.msra.mxu0 0.0
  %849 = vmatprep.subr.mxu0 0.0
  %850 = vmatpush1.msra.mxu0 0.0
  %851 = vmatprep.subr.mxu0 0.0
  %852 = vmatpush1.msra.mxu0 0.0
  %853 = vmatprep.subr.mxu0 0.0
  %854 = vmatpush1.msra.mxu0 0.0
  %855 = vmatprep.subr.mxu0 0.0
  %856 = vmatpush1.msra.mxu0 0.0
  %857 = vmatprep.subr.mxu0 0.0
  %858 = vmatpush1.msra.mxu0 0.0
  %859 = vmatprep.subr.mxu0 %v321
  %860 = vmatpush1.msra.mxu0 %v320
  %861 = vmatprep.subr.mxu0 %v319
  %862 = vmatpush1.msra.mxu0 %v318
  %863 = vmatprep.subr.mxu0 %v317
  %864 = vmatpush1.msra.mxu0 %v316
  %865 = vmatprep.subr.mxu0 %v315
  %866 = vmatpush1.msra.mxu0 %v314
  %867 = vmatprep.subr.mxu0 %v313
  %868 = vmatpush1.msra.mxu0 %v312
  %869 = vmatprep.subr.mxu0 %v311
  %870 = vmatpush1.msra.mxu0 %v310
  %871 = vmatprep.subr.mxu0 %v309
  %872 = vmatpush1.msra.mxu0 %v308
  %873 = vmatprep.subr.mxu0 %v307
  %874 = vmatpush1.msra.mxu0 %v306
  %875 = vmatprep.subr.mxu0 0.0
  %876 = vmatpush2.msra.mxu0 0.0
  %877 = vmatprep.subr.mxu0 0.0
  %878 = vmatpush2.msra.mxu0 0.0
  %879 = vmatprep.subr.mxu0 0.0
  %880 = vmatpush2.msra.mxu0 0.0
  %881 = vmatprep.subr.mxu0 0.0
  %882 = vmatpush2.msra.mxu0 0.0
  %883 = vmatprep.subr.mxu0 0.0
  %884 = vmatpush2.msra.mxu0 0.0
  %885 = vmatprep.subr.mxu0 0.0
  %886 = vmatpush2.msra.mxu0 0.0
  %887 = vmatprep.subr.mxu0 0.0
  %888 = vmatpush2.msra.mxu0 0.0
  %889 = vmatprep.subr.mxu0 0.0
  %890 = vmatpush2.msra.mxu0 0.0
  %891 = vmatprep.subr.mxu0 0.0
  %892 = vmatpush2.msra.mxu0 0.0
  %893 = vmatprep.subr.mxu0 0.0
  %894 = vmatpush2.msra.mxu0 0.0
  %895 = vmatprep.subr.mxu0 0.0
  %896 = vmatpush2.msra.mxu0 0.0
  %897 = vmatprep.subr.mxu0 0.0
  %898 = vmatpush2.msra.mxu0 0.0
  %899 = vmatprep.subr.mxu0 0.0
  %900 = vmatpush2.msra.mxu0 0.0
  %901 = vmatprep.subr.mxu0 0.0
  %902 = vmatpush2.msra.mxu0 0.0
  %903 = vmatprep.subr.mxu0 0.0
  %904 = vmatpush2.msra.mxu0 0.0
  %905 = vmatprep.subr.mxu0 0.0
  %906 = vmatpush2.msra.mxu0 0.0
  %907 = vmatprep.mubr.f32.mxu0 0.0
  %908 = vmatmul.mubr.f32.gmra.mxu0 %v841
  %v909 = vpop.f32.mrf.mxu0
  %v910 = vadd.f32 %v416, %v909
  %v911 = vpop.f32.mrf.mxu0
  %v912 = vadd.f32 %v420, %v911
  %913 = vdwg.mxu0
  %v914 = vadd.f32 %v758, %v830
  %v915 = vxor.u32 %v914, 2147483648
  %v916 = vmul.f32 %v915, 1.442695
  %v917 = vpow.pop %v916
  %v918 = vadd.f32 %v917, 1.0
  %v919 = vrcp.pop %v918
  %v920 = vmul.f32 1.0, %v919
  %v921 = vmul.f32 %v920, %v832
  %v923 = vrot.slane %v758, 1
  %v925 = vadd.f32 %v923, %v921
  %v926 = vtanh.pop %v925
  %v927 = vsub.f32 1.0, %v920
  %929 = vrot.lane.b32.xlu0 %v926, 64
  %v930 = vpop.permute.xlu0 %929
  %v932 = vmul.f32 %v927, %v930
  %v933 = vmul.f32 %v920, %v725
  %v934 = vadd.f32 %v932, %v933
  %v935 = vadd.f32 %v760, %v910
  %v936 = vxor.u32 %v935, 2147483648
  %v937 = vmul.f32 %v936, 1.442695
  %v938 = vpow.pop %v937
  %v939 = vadd.f32 %v938, 1.0
  %v940 = vrcp.pop %v939
  %v941 = vmul.f32 1.0, %v940
  %v942 = vmul.f32 %v941, %v912
  %v944 = vrot.slane %v760, 1
  %v946 = vadd.f32 %v944, %v942
  %v947 = vtanh.pop %v946
  %v948 = vsub.f32 1.0, %v941
  %950 = vrot.lane.b32.xlu0 %v947, 64
  %v951 = vpop.permute.xlu0 %950
  %v953 = vmul.f32 %v948, %v951
  %v954 = vmul.f32 %v941, %v746
  %v955 = vadd.f32 %v953, %v954
  %v957 = vlaneseq
  %v958 = vshrl.u32 %v957, 7
  %v959 = vsub.s32 0, %v958
  %v960 = vrot.slane %v934, %v959
  %961 = vrot.lane.b32.xlu0 %v960, 64
  %v962 = vpop.permute.xlu0 %961
  %964 = vst.msk [vmem:[#allocation4 + $0x2] sm:$0x1] %vm544, %v962
  %965 = vst.msk [vmem:[#allocation4 + $0x5] sm:$0x1] %vm546, %v955
  %s966 = scalar_lea.vmem [#allocation2], 3
  %v967 = vld [vmem:[%s966] ss:$8 sm:$0x3]
  %s968 = scalar_lea.vmem [#allocation3], 4
  %v969 = vld [vmem:[%s968] ss:$8 sm:$0x3]
  %v970 = vsel %vm195, %v962, 0
  %972 = vmatprep.subr.mxu0 0.0
  %973 = vmatpush1.msra.mxu0 0.0
  %974 = vmatprep.subr.mxu0 0.0
  %975 = vmatpush1.msra.mxu0 0.0
  %976 = vmatprep.subr.mxu0 0.0
  %977 = vmatpush1.msra.mxu0 0.0
  %978 = vmatprep.subr.mxu0 0.0
  %979 = vmatpush1.msra.mxu0 0.0
  %980 = vmatprep.subr.mxu0 0.0
  %981 = vmatpush1.msra.mxu0 0.0
  %982 = vmatprep.subr.mxu0 0.0
  %983 = vmatpush1.msra.mxu0 0.0
  %984 = vmatprep.subr.mxu0 0.0
  %985 = vmatpush1.msra.mxu0 0.0
  %986 = vmatprep.subr.mxu0 0.0
  %987 = vmatpush1.msra.mxu0 0.0
  %988 = vmatprep.subr.mxu0 %v305
  %989 = vmatpush1.msra.mxu0 %v304
  %990 = vmatprep.subr.mxu0 %v303
  %991 = vmatpush1.msra.mxu0 %v302
  %992 = vmatprep.subr.mxu0 %v301
  %993 = vmatpush1.msra.mxu0 %v300
  %994 = vmatprep.subr.mxu0 %v299
  %995 = vmatpush1.msra.mxu0 %v298
  %996 = vmatprep.subr.mxu0 %v297
  %997 = vmatpush1.msra.mxu0 %v296
  %998 = vmatprep.subr.mxu0 %v295
  %999 = vmatpush1.msra.mxu0 %v294
  %1000 = vmatprep.subr.mxu0 %v293
  %1001 = vmatpush1.msra.mxu0 %v292
  %1002 = vmatprep.subr.mxu0 %v291
  %1003 = vmatpush1.msra.mxu0 %v290
  %1004 = vmatprep.subr.mxu0 0.0
  %1005 = vmatpush2.msra.mxu0 0.0
  %1006 = vmatprep.subr.mxu0 0.0
  %1007 = vmatpush2.msra.mxu0 0.0
  %1008 = vmatprep.subr.mxu0 0.0
  %1009 = vmatpush2.msra.mxu0 0.0
  %1010 = vmatprep.subr.mxu0 0.0
  %1011 = vmatpush2.msra.mxu0 0.0
  %1012 = vmatprep.subr.mxu0 0.0
  %1013 = vmatpush2.msra.mxu0 0.0
  %1014 = vmatprep.subr.mxu0 0.0
  %1015 = vmatpush2.msra.mxu0 0.0
  %1016 = vmatprep.subr.mxu0 0.0
  %1017 = vmatpush2.msra.mxu0 0.0
  %1018 = vmatprep.subr.mxu0 0.0
  %1019 = vmatpush2.msra.mxu0 0.0
  %1020 = vmatprep.subr.mxu0 0.0
  %1021 = vmatpush2.msra.mxu0 0.0
  %1022 = vmatprep.subr.mxu0 0.0
  %1023 = vmatpush2.msra.mxu0 0.0
  %1024 = vmatprep.subr.mxu0 0.0
  %1025 = vmatpush2.msra.mxu0 0.0
  %1026 = vmatprep.subr.mxu0 0.0
  %1027 = vmatpush2.msra.mxu0 0.0
  %1028 = vmatprep.subr.mxu0 0.0
  %1029 = vmatpush2.msra.mxu0 0.0
  %1030 = vmatprep.subr.mxu0 0.0
  %1031 = vmatpush2.msra.mxu0 0.0
  %1032 = vmatprep.subr.mxu0 0.0
  %1033 = vmatpush2.msra.mxu0 0.0
  %1034 = vmatprep.subr.mxu0 0.0
  %1035 = vmatpush2.msra.mxu0 0.0
  %1036 = vmatprep.mubr.f32.mxu0 0.0
  %1037 = vmatmul.mubr.f32.gmra.mxu0 %v970
  %v1038 = vpop.f32.mrf.mxu0
  %v1039 = vadd.f32 %v331, %v1038
  %v1040 = vpop.f32.mrf.mxu0
  %v1041 = vadd.f32 %v335, %v1040
  %1042 = vdwg.mxu0
  %v1044 = vlaneseq
  %v1045 = vshrl.u32 %v1044, 7
  %v1046 = vsub.s32 0, %v1045
  %v1047 = vrot.slane %v955, %v1046
  %1048 = vrot.lane.b32.xlu0 %v1047, 64
  %v1049 = vpop.permute.xlu0 %1048
  %v1050 = vsel %vm195, %v1049, 0
  %1052 = vmatprep.subr.mxu0 0.0
  %1053 = vmatpush1.msra.mxu0 0.0
  %1054 = vmatprep.subr.mxu0 0.0
  %1055 = vmatpush1.msra.mxu0 0.0
  %1056 = vmatprep.subr.mxu0 0.0
  %1057 = vmatpush1.msra.mxu0 0.0
  %1058 = vmatprep.subr.mxu0 0.0
  %1059 = vmatpush1.msra.mxu0 0.0
  %1060 = vmatprep.subr.mxu0 0.0
  %1061 = vmatpush1.msra.mxu0 0.0
  %1062 = vmatprep.subr.mxu0 0.0
  %1063 = vmatpush1.msra.mxu0 0.0
  %1064 = vmatprep.subr.mxu0 0.0
  %1065 = vmatpush1.msra.mxu0 0.0
  %1066 = vmatprep.subr.mxu0 0.0
  %1067 = vmatpush1.msra.mxu0 0.0
  %1068 = vmatprep.subr.mxu0 %v321
  %1069 = vmatpush1.msra.mxu0 %v320
  %1070 = vmatprep.subr.mxu0 %v319
  %1071 = vmatpush1.msra.mxu0 %v318
  %1072 = vmatprep.subr.mxu0 %v317
  %1073 = vmatpush1.msra.mxu0 %v316
  %1074 = vmatprep.subr.mxu0 %v315
  %1075 = vmatpush1.msra.mxu0 %v314
  %1076 = vmatprep.subr.mxu0 %v313
  %1077 = vmatpush1.msra.mxu0 %v312
  %1078 = vmatprep.subr.mxu0 %v311
  %1079 = vmatpush1.msra.mxu0 %v310
  %1080 = vmatprep.subr.mxu0 %v309
  %1081 = vmatpush1.msra.mxu0 %v308
  %1082 = vmatprep.subr.mxu0 %v307
  %1083 = vmatpush1.msra.mxu0 %v306
  %1084 = vmatprep.subr.mxu0 0.0
  %1085 = vmatpush2.msra.mxu0 0.0
  %1086 = vmatprep.subr.mxu0 0.0
  %1087 = vmatpush2.msra.mxu0 0.0
  %1088 = vmatprep.subr.mxu0 0.0
  %1089 = vmatpush2.msra.mxu0 0.0
  %1090 = vmatprep.subr.mxu0 0.0
  %1091 = vmatpush2.msra.mxu0 0.0
  %1092 = vmatprep.subr.mxu0 0.0
  %1093 = vmatpush2.msra.mxu0 0.0
  %1094 = vmatprep.subr.mxu0 0.0
  %1095 = vmatpush2.msra.mxu0 0.0
  %1096 = vmatprep.subr.mxu0 0.0
  %1097 = vmatpush2.msra.mxu0 0.0
  %1098 = vmatprep.subr.mxu0 0.0
  %1099 = vmatpush2.msra.mxu0 0.0
  %1100 = vmatprep.subr.mxu0 0.0
  %1101 = vmatpush2.msra.mxu0 0.0
  %1102 = vmatprep.subr.mxu0 0.0
  %1103 = vmatpush2.msra.mxu0 0.0
  %1104 = vmatprep.subr.mxu0 0.0
  %1105 = vmatpush2.msra.mxu0 0.0
  %1106 = vmatprep.subr.mxu0 0.0
  %1107 = vmatpush2.msra.mxu0 0.0
  %1108 = vmatprep.subr.mxu0 0.0
  %1109 = vmatpush2.msra.mxu0 0.0
  %1110 = vmatprep.subr.mxu0 0.0
  %1111 = vmatpush2.msra.mxu0 0.0
  %1112 = vmatprep.subr.mxu0 0.0
  %1113 = vmatpush2.msra.mxu0 0.0
  %1114 = vmatprep.subr.mxu0 0.0
  %1115 = vmatpush2.msra.mxu0 0.0
  %1116 = vmatprep.mubr.f32.mxu0 0.0
  %1117 = vmatmul.mubr.f32.gmra.mxu0 %v1050
  %v1118 = vpop.f32.mrf.mxu0
  %v1119 = vadd.f32 %v416, %v1118
  %v1120 = vpop.f32.mrf.mxu0
  %v1121 = vadd.f32 %v420, %v1120
  %1122 = vdwg.mxu0
  %v1123 = vadd.f32 %v967, %v1039
  %v1124 = vxor.u32 %v1123, 2147483648
  %v1125 = vmul.f32 %v1124, 1.442695
  %v1126 = vpow.pop %v1125
  %v1127 = vadd.f32 %v1126, 1.0
  %v1128 = vrcp.pop %v1127
  %v1129 = vmul.f32 1.0, %v1128
  %v1130 = vmul.f32 %v1129, %v1041
  %v1132 = vrot.slane %v967, 1
  %v1134 = vadd.f32 %v1132, %v1130
  %v1135 = vtanh.pop %v1134
  %v1136 = vsub.f32 1.0, %v1129
  %1138 = vrot.lane.b32.xlu0 %v1135, 64
  %v1139 = vpop.permute.xlu0 %1138
  %v1141 = vmul.f32 %v1136, %v1139
  %v1142 = vmul.f32 %v1129, %v934
  %v1143 = vadd.f32 %v1141, %v1142
  %v1144 = vadd.f32 %v969, %v1119
  %v1145 = vxor.u32 %v1144, 2147483648
  %v1146 = vmul.f32 %v1145, 1.442695
  %v1147 = vpow.pop %v1146
  %v1148 = vadd.f32 %v1147, 1.0
  %v1149 = vrcp.pop %v1148
  %v1150 = vmul.f32 1.0, %v1149
  %v1151 = vmul.f32 %v1150, %v1121
  %v1153 = vrot.slane %v969, 1
  %v1155 = vadd.f32 %v1153, %v1151
  %v1156 = vtanh.pop %v1155
  %v1157 = vsub.f32 1.0, %v1150
  %1159 = vrot.lane.b32.xlu0 %v1156, 64
  %v1160 = vpop.permute.xlu0 %1159
  %v1162 = vmul.f32 %v1157, %v1160
  %v1163 = vmul.f32 %v1150, %v955
  %v1164 = vadd.f32 %v1162, %v1163
  %v1166 = vlaneseq
  %v1167 = vshrl.u32 %v1166, 7
  %v1168 = vsub.s32 0, %v1167
  %v1169 = vrot.slane %v1143, %v1168
  %1170 = vrot.lane.b32.xlu0 %v1169, 64
  %v1171 = vpop.permute.xlu0 %1170
  %1173 = vst.msk [vmem:[#allocation4 + $0x3] sm:$0x1] %vm544, %v1171
  %1174 = vst.msk [vmem:[#allocation4 + $0x4] sm:$0x1] %vm546, %v1164
  %s1175 = scalar_lea.vmem [#allocation2], 4
  %v1176 = vld [vmem:[%s1175] ss:$8 sm:$0x3]
  %s1177 = scalar_lea.vmem [#allocation3], 3
  %v1178 = vld [vmem:[%s1177] ss:$8 sm:$0x3]
  %v1179 = vsel %vm195, %v1171, 0
  %1181 = vmatprep.subr.mxu0 0.0
  %1182 = vmatpush1.msra.mxu0 0.0
  %1183 = vmatprep.subr.mxu0 0.0
  %1184 = vmatpush1.msra.mxu0 0.0
  %1185 = vmatprep.subr.mxu0 0.0
  %1186 = vmatpush1.msra.mxu0 0.0
  %1187 = vmatprep.subr.mxu0 0.0
  %1188 = vmatpush1.msra.mxu0 0.0
  %1189 = vmatprep.subr.mxu0 0.0
  %1190 = vmatpush1.msra.mxu0 0.0
  %1191 = vmatprep.subr.mxu0 0.0
  %1192 = vmatpush1.msra.mxu0 0.0
  %1193 = vmatprep.subr.mxu0 0.0
  %1194 = vmatpush1.msra.mxu0 0.0
  %1195 = vmatprep.subr.mxu0 0.0
  %1196 = vmatpush1.msra.mxu0 0.0
  %1197 = vmatprep.subr.mxu0 %v305
  %1198 = vmatpush1.msra.mxu0 %v304
  %1199 = vmatprep.subr.mxu0 %v303
  %1200 = vmatpush1.msra.mxu0 %v302
  %1201 = vmatprep.subr.mxu0 %v301
  %1202 = vmatpush1.msra.mxu0 %v300
  %1203 = vmatprep.subr.mxu0 %v299
  %1204 = vmatpush1.msra.mxu0 %v298
  %1205 = vmatprep.subr.mxu0 %v297
  %1206 = vmatpush1.msra.mxu0 %v296
  %1207 = vmatprep.subr.mxu0 %v295
  %1208 = vmatpush1.msra.mxu0 %v294
  %1209 = vmatprep.subr.mxu0 %v293
  %1210 = vmatpush1.msra.mxu0 %v292
  %1211 = vmatprep.subr.mxu0 %v291
  %1212 = vmatpush1.msra.mxu0 %v290
  %1213 = vmatprep.subr.mxu0 0.0
  %1214 = vmatpush2.msra.mxu0 0.0
  %1215 = vmatprep.subr.mxu0 0.0
  %1216 = vmatpush2.msra.mxu0 0.0
  %1217 = vmatprep.subr.mxu0 0.0
  %1218 = vmatpush2.msra.mxu0 0.0
  %1219 = vmatprep.subr.mxu0 0.0
  %1220 = vmatpush2.msra.mxu0 0.0
  %1221 = vmatprep.subr.mxu0 0.0
  %1222 = vmatpush2.msra.mxu0 0.0
  %1223 = vmatprep.subr.mxu0 0.0
  %1224 = vmatpush2.msra.mxu0 0.0
  %1225 = vmatprep.subr.mxu0 0.0
  %1226 = vmatpush2.msra.mxu0 0.0
  %1227 = vmatprep.subr.mxu0 0.0
  %1228 = vmatpush2.msra.mxu0 0.0
  %1229 = vmatprep.subr.mxu0 0.0
  %1230 = vmatpush2.msra.mxu0 0.0
  %1231 = vmatprep.subr.mxu0 0.0
  %1232 = vmatpush2.msra.mxu0 0.0
  %1233 = vmatprep.subr.mxu0 0.0
  %1234 = vmatpush2.msra.mxu0 0.0
  %1235 = vmatprep.subr.mxu0 0.0
  %1236 = vmatpush2.msra.mxu0 0.0
  %1237 = vmatprep.subr.mxu0 0.0
  %1238 = vmatpush2.msra.mxu0 0.0
  %1239 = vmatprep.subr.mxu0 0.0
  %1240 = vmatpush2.msra.mxu0 0.0
  %1241 = vmatprep.subr.mxu0 0.0
  %1242 = vmatpush2.msra.mxu0 0.0
  %1243 = vmatprep.subr.mxu0 0.0
  %1244 = vmatpush2.msra.mxu0 0.0
  %1245 = vmatprep.mubr.f32.mxu0 0.0
  %1246 = vmatmul.mubr.f32.gmra.mxu0 %v1179
  %v1247 = vpop.f32.mrf.mxu0
  %v1248 = vadd.f32 %v331, %v1247
  %v1249 = vpop.f32.mrf.mxu0
  %v1250 = vadd.f32 %v335, %v1249
  %1251 = vdwg.mxu0
  %v1253 = vlaneseq
  %v1254 = vshrl.u32 %v1253, 7
  %v1255 = vsub.s32 0, %v1254
  %v1256 = vrot.slane %v1164, %v1255
  %1257 = vrot.lane.b32.xlu0 %v1256, 64
  %v1258 = vpop.permute.xlu0 %1257
  %v1259 = vsel %vm195, %v1258, 0
  %1261 = vmatprep.subr.mxu0 0.0
  %1262 = vmatpush1.msra.mxu0 0.0
  %1263 = vmatprep.subr.mxu0 0.0
  %1264 = vmatpush1.msra.mxu0 0.0
  %1265 = vmatprep.subr.mxu0 0.0
  %1266 = vmatpush1.msra.mxu0 0.0
  %1267 = vmatprep.subr.mxu0 0.0
  %1268 = vmatpush1.msra.mxu0 0.0
  %1269 = vmatprep.subr.mxu0 0.0
  %1270 = vmatpush1.msra.mxu0 0.0
  %1271 = vmatprep.subr.mxu0 0.0
  %1272 = vmatpush1.msra.mxu0 0.0
  %1273 = vmatprep.subr.mxu0 0.0
  %1274 = vmatpush1.msra.mxu0 0.0
  %1275 = vmatprep.subr.mxu0 0.0
  %1276 = vmatpush1.msra.mxu0 0.0
  %1277 = vmatprep.subr.mxu0 %v321
  %1278 = vmatpush1.msra.mxu0 %v320
  %1279 = vmatprep.subr.mxu0 %v319
  %1280 = vmatpush1.msra.mxu0 %v318
  %1281 = vmatprep.subr.mxu0 %v317
  %1282 = vmatpush1.msra.mxu0 %v316
  %1283 = vmatprep.subr.mxu0 %v315
  %1284 = vmatpush1.msra.mxu0 %v314
  %1285 = vmatprep.subr.mxu0 %v313
  %1286 = vmatpush1.msra.mxu0 %v312
  %1287 = vmatprep.subr.mxu0 %v311
  %1288 = vmatpush1.msra.mxu0 %v310
  %1289 = vmatprep.subr.mxu0 %v309
  %1290 = vmatpush1.msra.mxu0 %v308
  %1291 = vmatprep.subr.mxu0 %v307
  %1292 = vmatpush1.msra.mxu0 %v306
  %1293 = vmatprep.subr.mxu0 0.0
  %1294 = vmatpush2.msra.mxu0 0.0
  %1295 = vmatprep.subr.mxu0 0.0
  %1296 = vmatpush2.msra.mxu0 0.0
  %1297 = vmatprep.subr.mxu0 0.0
  %1298 = vmatpush2.msra.mxu0 0.0
  %1299 = vmatprep.subr.mxu0 0.0
  %1300 = vmatpush2.msra.mxu0 0.0
  %1301 = vmatprep.subr.mxu0 0.0
  %1302 = vmatpush2.msra.mxu0 0.0
  %1303 = vmatprep.subr.mxu0 0.0
  %1304 = vmatpush2.msra.mxu0 0.0
  %1305 = vmatprep.subr.mxu0 0.0
  %1306 = vmatpush2.msra.mxu0 0.0
  %1307 = vmatprep.subr.mxu0 0.0
  %1308 = vmatpush2.msra.mxu0 0.0
  %1309 = vmatprep.subr.mxu0 0.0
  %1310 = vmatpush2.msra.mxu0 0.0
  %1311 = vmatprep.subr.mxu0 0.0
  %1312 = vmatpush2.msra.mxu0 0.0
  %1313 = vmatprep.subr.mxu0 0.0
  %1314 = vmatpush2.msra.mxu0 0.0
  %1315 = vmatprep.subr.mxu0 0.0
  %1316 = vmatpush2.msra.mxu0 0.0
  %1317 = vmatprep.subr.mxu0 0.0
  %1318 = vmatpush2.msra.mxu0 0.0
  %1319 = vmatprep.subr.mxu0 0.0
  %1320 = vmatpush2.msra.mxu0 0.0
  %1321 = vmatprep.subr.mxu0 0.0
  %1322 = vmatpush2.msra.mxu0 0.0
  %1323 = vmatprep.subr.mxu0 0.0
  %1324 = vmatpush2.msra.mxu0 0.0
  %1325 = vmatprep.mubr.f32.mxu0 0.0
  %1326 = vmatmul.mubr.f32.gmra.mxu0 %v1259
  %v1327 = vpop.f32.mrf.mxu0
  %v1328 = vadd.f32 %v416, %v1327
  %v1329 = vpop.f32.mrf.mxu0
  %v1330 = vadd.f32 %v420, %v1329
  %1331 = vdwg.mxu0
  %v1332 = vadd.f32 %v1176, %v1248
  %v1333 = vxor.u32 %v1332, 2147483648
  %v1334 = vmul.f32 %v1333, 1.442695
  %v1335 = vpow.pop %v1334
  %v1336 = vadd.f32 %v1335, 1.0
  %v1337 = vrcp.pop %v1336
  %v1338 = vmul.f32 1.0, %v1337
  %v1339 = vmul.f32 %v1338, %v1250
  %v1341 = vrot.slane %v1176, 1
  %v1343 = vadd.f32 %v1341, %v1339
  %v1344 = vtanh.pop %v1343
  %v1345 = vsub.f32 1.0, %v1338
  %1347 = vrot.lane.b32.xlu0 %v1344, 64
  %v1348 = vpop.permute.xlu0 %1347
  %v1350 = vmul.f32 %v1345, %v1348
  %v1351 = vmul.f32 %v1338, %v1143
  %v1352 = vadd.f32 %v1350, %v1351
  %v1353 = vadd.f32 %v1178, %v1328
  %v1354 = vxor.u32 %v1353, 2147483648
  %v1355 = vmul.f32 %v1354, 1.442695
  %v1356 = vpow.pop %v1355
  %v1357 = vadd.f32 %v1356, 1.0
  %v1358 = vrcp.pop %v1357
  %v1359 = vmul.f32 1.0, %v1358
  %v1360 = vmul.f32 %v1359, %v1330
  %v1362 = vrot.slane %v1178, 1
  %v1364 = vadd.f32 %v1362, %v1360
  %v1365 = vtanh.pop %v1364
  %v1366 = vsub.f32 1.0, %v1359
  %1368 = vrot.lane.b32.xlu0 %v1365, 64
  %v1369 = vpop.permute.xlu0 %1368
  %v1371 = vmul.f32 %v1366, %v1369
  %v1372 = vmul.f32 %v1359, %v1164
  %v1373 = vadd.f32 %v1371, %v1372
  %v1375 = vlaneseq
  %v1376 = vshrl.u32 %v1375, 7
  %v1377 = vsub.s32 0, %v1376
  %v1378 = vrot.slane %v1352, %v1377
  %1379 = vrot.lane.b32.xlu0 %v1378, 64
  %v1380 = vpop.permute.xlu0 %1379
  %1382 = vst.msk [vmem:[#allocation4 + $0x4] sm:$0x1] %vm544, %v1380
  %1383 = vst.msk [vmem:[#allocation4 + $0x3] sm:$0x1] %vm546, %v1373
  %s1384 = scalar_lea.vmem [#allocation2], 5
  %v1385 = vld [vmem:[%s1384] ss:$8 sm:$0x3]
  %s1386 = scalar_lea.vmem [#allocation3], 2
  %v1387 = vld [vmem:[%s1386] ss:$8 sm:$0x3]
  %v1388 = vsel %vm195, %v1380, 0
  %1390 = vmatprep.subr.mxu0 0.0
  %1391 = vmatpush1.msra.mxu0 0.0
  %1392 = vmatprep.subr.mxu0 0.0
  %1393 = vmatpush1.msra.mxu0 0.0
  %1394 = vmatprep.subr.mxu0 0.0
  %1395 = vmatpush1.msra.mxu0 0.0
  %1396 = vmatprep.subr.mxu0 0.0
  %1397 = vmatpush1.msra.mxu0 0.0
  %1398 = vmatprep.subr.mxu0 0.0
  %1399 = vmatpush1.msra.mxu0 0.0
  %1400 = vmatprep.subr.mxu0 0.0
  %1401 = vmatpush1.msra.mxu0 0.0
  %1402 = vmatprep.subr.mxu0 0.0
  %1403 = vmatpush1.msra.mxu0 0.0
  %1404 = vmatprep.subr.mxu0 0.0
  %1405 = vmatpush1.msra.mxu0 0.0
  %1406 = vmatprep.subr.mxu0 %v305
  %1407 = vmatpush1.msra.mxu0 %v304
  %1408 = vmatprep.subr.mxu0 %v303
  %1409 = vmatpush1.msra.mxu0 %v302
  %1410 = vmatprep.subr.mxu0 %v301
  %1411 = vmatpush1.msra.mxu0 %v300
  %1412 = vmatprep.subr.mxu0 %v299
  %1413 = vmatpush1.msra.mxu0 %v298
  %1414 = vmatprep.subr.mxu0 %v297
  %1415 = vmatpush1.msra.mxu0 %v296
  %1416 = vmatprep.subr.mxu0 %v295
  %1417 = vmatpush1.msra.mxu0 %v294
  %1418 = vmatprep.subr.mxu0 %v293
  %1419 = vmatpush1.msra.mxu0 %v292
  %1420 = vmatprep.subr.mxu0 %v291
  %1421 = vmatpush1.msra.mxu0 %v290
  %1422 = vmatprep.subr.mxu0 0.0
  %1423 = vmatpush2.msra.mxu0 0.0
  %1424 = vmatprep.subr.mxu0 0.0
  %1425 = vmatpush2.msra.mxu0 0.0
  %1426 = vmatprep.subr.mxu0 0.0
  %1427 = vmatpush2.msra.mxu0 0.0
  %1428 = vmatprep.subr.mxu0 0.0
  %1429 = vmatpush2.msra.mxu0 0.0
  %1430 = vmatprep.subr.mxu0 0.0
  %1431 = vmatpush2.msra.mxu0 0.0
  %1432 = vmatprep.subr.mxu0 0.0
  %1433 = vmatpush2.msra.mxu0 0.0
  %1434 = vmatprep.subr.mxu0 0.0
  %1435 = vmatpush2.msra.mxu0 0.0
  %1436 = vmatprep.subr.mxu0 0.0
  %1437 = vmatpush2.msra.mxu0 0.0
  %1438 = vmatprep.subr.mxu0 0.0
  %1439 = vmatpush2.msra.mxu0 0.0
  %1440 = vmatprep.subr.mxu0 0.0
  %1441 = vmatpush2.msra.mxu0 0.0
  %1442 = vmatprep.subr.mxu0 0.0
  %1443 = vmatpush2.msra.mxu0 0.0
  %1444 = vmatprep.subr.mxu0 0.0
  %1445 = vmatpush2.msra.mxu0 0.0
  %1446 = vmatprep.subr.mxu0 0.0
  %1447 = vmatpush2.msra.mxu0 0.0
  %1448 = vmatprep.subr.mxu0 0.0
  %1449 = vmatpush2.msra.mxu0 0.0
  %1450 = vmatprep.subr.mxu0 0.0
  %1451 = vmatpush2.msra.mxu0 0.0
  %1452 = vmatprep.subr.mxu0 0.0
  %1453 = vmatpush2.msra.mxu0 0.0
  %1454 = vmatprep.mubr.f32.mxu0 0.0
  %1455 = vmatmul.mubr.f32.gmra.mxu0 %v1388
  %v1456 = vpop.f32.mrf.mxu0
  %v1457 = vadd.f32 %v331, %v1456
  %v1458 = vpop.f32.mrf.mxu0
  %v1459 = vadd.f32 %v335, %v1458
  %1460 = vdwg.mxu0
  %v1462 = vlaneseq
  %v1463 = vshrl.u32 %v1462, 7
  %v1464 = vsub.s32 0, %v1463
  %v1465 = vrot.slane %v1373, %v1464
  %1466 = vrot.lane.b32.xlu0 %v1465, 64
  %v1467 = vpop.permute.xlu0 %1466
  %v1468 = vsel %vm195, %v1467, 0
  %1470 = vmatprep.subr.mxu0 0.0
  %1471 = vmatpush1.msra.mxu0 0.0
  %1472 = vmatprep.subr.mxu0 0.0
  %1473 = vmatpush1.msra.mxu0 0.0
  %1474 = vmatprep.subr.mxu0 0.0
  %1475 = vmatpush1.msra.mxu0 0.0
  %1476 = vmatprep.subr.mxu0 0.0
  %1477 = vmatpush1.msra.mxu0 0.0
  %1478 = vmatprep.subr.mxu0 0.0
  %1479 = vmatpush1.msra.mxu0 0.0
  %1480 = vmatprep.subr.mxu0 0.0
  %1481 = vmatpush1.msra.mxu0 0.0
  %1482 = vmatprep.subr.mxu0 0.0
  %1483 = vmatpush1.msra.mxu0 0.0
  %1484 = vmatprep.subr.mxu0 0.0
  %1485 = vmatpush1.msra.mxu0 0.0
  %1486 = vmatprep.subr.mxu0 %v321
  %1487 = vmatpush1.msra.mxu0 %v320
  %1488 = vmatprep.subr.mxu0 %v319
  %1489 = vmatpush1.msra.mxu0 %v318
  %1490 = vmatprep.subr.mxu0 %v317
  %1491 = vmatpush1.msra.mxu0 %v316
  %1492 = vmatprep.subr.mxu0 %v315
  %1493 = vmatpush1.msra.mxu0 %v314
  %1494 = vmatprep.subr.mxu0 %v313
  %1495 = vmatpush1.msra.mxu0 %v312
  %1496 = vmatprep.subr.mxu0 %v311
  %1497 = vmatpush1.msra.mxu0 %v310
  %1498 = vmatprep.subr.mxu0 %v309
  %1499 = vmatpush1.msra.mxu0 %v308
  %1500 = vmatprep.subr.mxu0 %v307
  %1501 = vmatpush1.msra.mxu0 %v306
  %1502 = vmatprep.subr.mxu0 0.0
  %1503 = vmatpush2.msra.mxu0 0.0
  %1504 = vmatprep.subr.mxu0 0.0
  %1505 = vmatpush2.msra.mxu0 0.0
  %1506 = vmatprep.subr.mxu0 0.0
  %1507 = vmatpush2.msra.mxu0 0.0
  %1508 = vmatprep.subr.mxu0 0.0
  %1509 = vmatpush2.msra.mxu0 0.0
  %1510 = vmatprep.subr.mxu0 0.0
  %1511 = vmatpush2.msra.mxu0 0.0
  %1512 = vmatprep.subr.mxu0 0.0
  %1513 = vmatpush2.msra.mxu0 0.0
  %1514 = vmatprep.subr.mxu0 0.0
  %1515 = vmatpush2.msra.mxu0 0.0
  %1516 = vmatprep.subr.mxu0 0.0
  %1517 = vmatpush2.msra.mxu0 0.0
  %1518 = vmatprep.subr.mxu0 0.0
  %1519 = vmatpush2.msra.mxu0 0.0
  %1520 = vmatprep.subr.mxu0 0.0
  %1521 = vmatpush2.msra.mxu0 0.0
  %1522 = vmatprep.subr.mxu0 0.0
  %1523 = vmatpush2.msra.mxu0 0.0
  %1524 = vmatprep.subr.mxu0 0.0
  %1525 = vmatpush2.msra.mxu0 0.0
  %1526 = vmatprep.subr.mxu0 0.0
  %1527 = vmatpush2.msra.mxu0 0.0
  %1528 = vmatprep.subr.mxu0 0.0
  %1529 = vmatpush2.msra.mxu0 0.0
  %1530 = vmatprep.subr.mxu0 0.0
  %1531 = vmatpush2.msra.mxu0 0.0
  %1532 = vmatprep.subr.mxu0 0.0
  %1533 = vmatpush2.msra.mxu0 0.0
  %1534 = vmatprep.mubr.f32.mxu0 0.0
  %1535 = vmatmul.mubr.f32.gmra.mxu0 %v1468
  %v1536 = vpop.f32.mrf.mxu0
  %v1537 = vadd.f32 %v416, %v1536
  %v1538 = vpop.f32.mrf.mxu0
  %v1539 = vadd.f32 %v420, %v1538
  %1540 = vdwg.mxu0
  %v1541 = vadd.f32 %v1385, %v1457
  %v1542 = vxor.u32 %v1541, 2147483648
  %v1543 = vmul.f32 %v1542, 1.442695
  %v1544 = vpow.pop %v1543
  %v1545 = vadd.f32 %v1544, 1.0
  %v1546 = vrcp.pop %v1545
  %v1547 = vmul.f32 1.0, %v1546
  %v1548 = vmul.f32 %v1547, %v1459
  %v1550 = vrot.slane %v1385, 1
  %v1552 = vadd.f32 %v1550, %v1548
  %v1553 = vtanh.pop %v1552
  %v1554 = vsub.f32 1.0, %v1547
  %1556 = vrot.lane.b32.xlu0 %v1553, 64
  %v1557 = vpop.permute.xlu0 %1556
  %v1559 = vmul.f32 %v1554, %v1557
  %v1560 = vmul.f32 %v1547, %v1352
  %v1561 = vadd.f32 %v1559, %v1560
  %v1562 = vadd.f32 %v1387, %v1537
  %v1563 = vxor.u32 %v1562, 2147483648
  %v1564 = vmul.f32 %v1563, 1.442695
  %v1565 = vpow.pop %v1564
  %v1566 = vadd.f32 %v1565, 1.0
  %v1567 = vrcp.pop %v1566
  %v1568 = vmul.f32 1.0, %v1567
  %v1569 = vmul.f32 %v1568, %v1539
  %v1571 = vrot.slane %v1387, 1
  %v1573 = vadd.f32 %v1571, %v1569
  %v1574 = vtanh.pop %v1573
  %v1575 = vsub.f32 1.0, %v1568
  %1577 = vrot.lane.b32.xlu0 %v1574, 64
  %v1578 = vpop.permute.xlu0 %1577
  %v1580 = vmul.f32 %v1575, %v1578
  %v1581 = vmul.f32 %v1568, %v1373
  %v1582 = vadd.f32 %v1580, %v1581
  %v1584 = vlaneseq
  %v1585 = vshrl.u32 %v1584, 7
  %v1586 = vsub.s32 0, %v1585
  %v1587 = vrot.slane %v1561, %v1586
  %1588 = vrot.lane.b32.xlu0 %v1587, 64
  %v1589 = vpop.permute.xlu0 %1588
  %1591 = vst.msk [vmem:[#allocation4 + $0x5] sm:$0x1] %vm544, %v1589
  %1592 = vst.msk [vmem:[#allocation4 + $0x2] sm:$0x1] %vm546, %v1582
  %s1593 = scalar_lea.vmem [#allocation2], 6
  %v1594 = vld [vmem:[%s1593] ss:$8 sm:$0x3]
  %s1595 = scalar_lea.vmem [#allocation3], 1
  %v1596 = vld [vmem:[%s1595] ss:$8 sm:$0x3]
  %v1597 = vsel %vm195, %v1589, 0
  %1599 = vmatprep.subr.mxu0 0.0
  %1600 = vmatpush1.msra.mxu0 0.0
  %1601 = vmatprep.subr.mxu0 0.0
  %1602 = vmatpush1.msra.mxu0 0.0
  %1603 = vmatprep.subr.mxu0 0.0
  %1604 = vmatpush1.msra.mxu0 0.0
  %1605 = vmatprep.subr.mxu0 0.0
  %1606 = vmatpush1.msra.mxu0 0.0
  %1607 = vmatprep.subr.mxu0 0.0
  %1608 = vmatpush1.msra.mxu0 0.0
  %1609 = vmatprep.subr.mxu0 0.0
  %1610 = vmatpush1.msra.mxu0 0.0
  %1611 = vmatprep.subr.mxu0 0.0
  %1612 = vmatpush1.msra.mxu0 0.0
  %1613 = vmatprep.subr.mxu0 0.0
  %1614 = vmatpush1.msra.mxu0 0.0
  %1615 = vmatprep.subr.mxu0 %v305
  %1616 = vmatpush1.msra.mxu0 %v304
  %1617 = vmatprep.subr.mxu0 %v303
  %1618 = vmatpush1.msra.mxu0 %v302
  %1619 = vmatprep.subr.mxu0 %v301
  %1620 = vmatpush1.msra.mxu0 %v300
  %1621 = vmatprep.subr.mxu0 %v299
  %1622 = vmatpush1.msra.mxu0 %v298
  %1623 = vmatprep.subr.mxu0 %v297
  %1624 = vmatpush1.msra.mxu0 %v296
  %1625 = vmatprep.subr.mxu0 %v295
  %1626 = vmatpush1.msra.mxu0 %v294
  %1627 = vmatprep.subr.mxu0 %v293
  %1628 = vmatpush1.msra.mxu0 %v292
  %1629 = vmatprep.subr.mxu0 %v291
  %1630 = vmatpush1.msra.mxu0 %v290
  %1631 = vmatprep.subr.mxu0 0.0
  %1632 = vmatpush2.msra.mxu0 0.0
  %1633 = vmatprep.subr.mxu0 0.0
  %1634 = vmatpush2.msra.mxu0 0.0
  %1635 = vmatprep.subr.mxu0 0.0
  %1636 = vmatpush2.msra.mxu0 0.0
  %1637 = vmatprep.subr.mxu0 0.0
  %1638 = vmatpush2.msra.mxu0 0.0
  %1639 = vmatprep.subr.mxu0 0.0
  %1640 = vmatpush2.msra.mxu0 0.0
  %1641 = vmatprep.subr.mxu0 0.0
  %1642 = vmatpush2.msra.mxu0 0.0
  %1643 = vmatprep.subr.mxu0 0.0
  %1644 = vmatpush2.msra.mxu0 0.0
  %1645 = vmatprep.subr.mxu0 0.0
  %1646 = vmatpush2.msra.mxu0 0.0
  %1647 = vmatprep.subr.mxu0 0.0
  %1648 = vmatpush2.msra.mxu0 0.0
  %1649 = vmatprep.subr.mxu0 0.0
  %1650 = vmatpush2.msra.mxu0 0.0
  %1651 = vmatprep.subr.mxu0 0.0
  %1652 = vmatpush2.msra.mxu0 0.0
  %1653 = vmatprep.subr.mxu0 0.0
  %1654 = vmatpush2.msra.mxu0 0.0
  %1655 = vmatprep.subr.mxu0 0.0
  %1656 = vmatpush2.msra.mxu0 0.0
  %1657 = vmatprep.subr.mxu0 0.0
  %1658 = vmatpush2.msra.mxu0 0.0
  %1659 = vmatprep.subr.mxu0 0.0
  %1660 = vmatpush2.msra.mxu0 0.0
  %1661 = vmatprep.subr.mxu0 0.0
  %1662 = vmatpush2.msra.mxu0 0.0
  %1663 = vmatprep.mubr.f32.mxu0 0.0
  %1664 = vmatmul.mubr.f32.gmra.mxu0 %v1597
  %v1665 = vpop.f32.mrf.mxu0
  %v1666 = vadd.f32 %v331, %v1665
  %v1667 = vpop.f32.mrf.mxu0
  %v1668 = vadd.f32 %v335, %v1667
  %1669 = vdwg.mxu0
  %v1671 = vlaneseq
  %v1672 = vshrl.u32 %v1671, 7
  %v1673 = vsub.s32 0, %v1672
  %v1674 = vrot.slane %v1582, %v1673
  %1675 = vrot.lane.b32.xlu0 %v1674, 64
  %v1676 = vpop.permute.xlu0 %1675
  %v1677 = vsel %vm195, %v1676, 0
  %1679 = vmatprep.subr.mxu0 0.0
  %1680 = vmatpush1.msra.mxu0 0.0
  %1681 = vmatprep.subr.mxu0 0.0
  %1682 = vmatpush1.msra.mxu0 0.0
  %1683 = vmatprep.subr.mxu0 0.0
  %1684 = vmatpush1.msra.mxu0 0.0
  %1685 = vmatprep.subr.mxu0 0.0
  %1686 = vmatpush1.msra.mxu0 0.0
  %1687 = vmatprep.subr.mxu0 0.0
  %1688 = vmatpush1.msra.mxu0 0.0
  %1689 = vmatprep.subr.mxu0 0.0
  %1690 = vmatpush1.msra.mxu0 0.0
  %1691 = vmatprep.subr.mxu0 0.0
  %1692 = vmatpush1.msra.mxu0 0.0
  %1693 = vmatprep.subr.mxu0 0.0
  %1694 = vmatpush1.msra.mxu0 0.0
  %1695 = vmatprep.subr.mxu0 %v321
  %1696 = vmatpush1.msra.mxu0 %v320
  %1697 = vmatprep.subr.mxu0 %v319
  %1698 = vmatpush1.msra.mxu0 %v318
  %1699 = vmatprep.subr.mxu0 %v317
  %1700 = vmatpush1.msra.mxu0 %v316
  %1701 = vmatprep.subr.mxu0 %v315
  %1702 = vmatpush1.msra.mxu0 %v314
  %1703 = vmatprep.subr.mxu0 %v313
  %1704 = vmatpush1.msra.mxu0 %v312
  %1705 = vmatprep.subr.mxu0 %v311
  %1706 = vmatpush1.msra.mxu0 %v310
  %1707 = vmatprep.subr.mxu0 %v309
  %1708 = vmatpush1.msra.mxu0 %v308
  %1709 = vmatprep.subr.mxu0 %v307
  %1710 = vmatpush1.msra.mxu0 %v306
  %1711 = vmatprep.subr.mxu0 0.0
  %1712 = vmatpush2.msra.mxu0 0.0
  %1713 = vmatprep.subr.mxu0 0.0
  %1714 = vmatpush2.msra.mxu0 0.0
  %1715 = vmatprep.subr.mxu0 0.0
  %1716 = vmatpush2.msra.mxu0 0.0
  %1717 = vmatprep.subr.mxu0 0.0
  %1718 = vmatpush2.msra.mxu0 0.0
  %1719 = vmatprep.subr.mxu0 0.0
  %1720 = vmatpush2.msra.mxu0 0.0
  %1721 = vmatprep.subr.mxu0 0.0
  %1722 = vmatpush2.msra.mxu0 0.0
  %1723 = vmatprep.subr.mxu0 0.0
  %1724 = vmatpush2.msra.mxu0 0.0
  %1725 = vmatprep.subr.mxu0 0.0
  %1726 = vmatpush2.msra.mxu0 0.0
  %1727 = vmatprep.subr.mxu0 0.0
  %1728 = vmatpush2.msra.mxu0 0.0
  %1729 = vmatprep.subr.mxu0 0.0
  %1730 = vmatpush2.msra.mxu0 0.0
  %1731 = vmatprep.subr.mxu0 0.0
  %1732 = vmatpush2.msra.mxu0 0.0
  %1733 = vmatprep.subr.mxu0 0.0
  %1734 = vmatpush2.msra.mxu0 0.0
  %1735 = vmatprep.subr.mxu0 0.0
  %1736 = vmatpush2.msra.mxu0 0.0
  %1737 = vmatprep.subr.mxu0 0.0
  %1738 = vmatpush2.msra.mxu0 0.0
  %1739 = vmatprep.subr.mxu0 0.0
  %1740 = vmatpush2.msra.mxu0 0.0
  %1741 = vmatprep.subr.mxu0 0.0
  %1742 = vmatpush2.msra.mxu0 0.0
  %1743 = vmatprep.mubr.f32.mxu0 0.0
  %1744 = vmatmul.mubr.f32.gmra.mxu0 %v1677
  %v1745 = vpop.f32.mrf.mxu0
  %v1746 = vadd.f32 %v416, %v1745
  %v1747 = vpop.f32.mrf.mxu0
  %v1748 = vadd.f32 %v420, %v1747
  %1749 = vdwg.mxu0
  %v1750 = vadd.f32 %v1594, %v1666
  %v1751 = vxor.u32 %v1750, 2147483648
  %v1752 = vmul.f32 %v1751, 1.442695
  %v1753 = vpow.pop %v1752
  %v1754 = vadd.f32 %v1753, 1.0
  %v1755 = vrcp.pop %v1754
  %v1756 = vmul.f32 1.0, %v1755
  %v1757 = vmul.f32 %v1756, %v1668
  %v1759 = vrot.slane %v1594, 1
  %v1761 = vadd.f32 %v1759, %v1757
  %v1762 = vtanh.pop %v1761
  %v1763 = vsub.f32 1.0, %v1756
  %1765 = vrot.lane.b32.xlu0 %v1762, 64
  %v1766 = vpop.permute.xlu0 %1765
  %v1768 = vmul.f32 %v1763, %v1766
  %v1769 = vmul.f32 %v1756, %v1561
  %v1770 = vadd.f32 %v1768, %v1769
  %v1771 = vadd.f32 %v1596, %v1746
  %v1772 = vxor.u32 %v1771, 2147483648
  %v1773 = vmul.f32 %v1772, 1.442695
  %v1774 = vpow.pop %v1773
  %v1775 = vadd.f32 %v1774, 1.0
  %v1776 = vrcp.pop %v1775
  %v1777 = vmul.f32 1.0, %v1776
  %v1778 = vmul.f32 %v1777, %v1748
  %v1780 = vrot.slane %v1596, 1
  %v1782 = vadd.f32 %v1780, %v1778
  %v1783 = vtanh.pop %v1782
  %v1784 = vsub.f32 1.0, %v1777
  %1786 = vrot.lane.b32.xlu0 %v1783, 64
  %v1787 = vpop.permute.xlu0 %1786
  %v1789 = vmul.f32 %v1784, %v1787
  %v1790 = vmul.f32 %v1777, %v1582
  %v1791 = vadd.f32 %v1789, %v1790
  %v1793 = vlaneseq
  %v1794 = vshrl.u32 %v1793, 7
  %v1795 = vsub.s32 0, %v1794
  %v1796 = vrot.slane %v1770, %v1795
  %1797 = vrot.lane.b32.xlu0 %v1796, 64
  %v1798 = vpop.permute.xlu0 %1797
  %1800 = vst.msk [vmem:[#allocation4 + $0x6] sm:$0x1] %vm544, %v1798
  %1801 = vst.msk [vmem:[#allocation4 + $0x1] sm:$0x1] %vm546, %v1791
  %s1802 = scalar_lea.vmem [#allocation2], 7
  %v1803 = vld [vmem:[%s1802] ss:$8 sm:$0x3]
  %v1804 = vld [vmem:[#allocation3] ss:$8 sm:$0x3]
  %v1805 = vsel %vm195, %v1798, 0
  %1807 = vmatprep.subr.mxu0 0.0
  %1808 = vmatpush1.msra.mxu0 0.0
  %1809 = vmatprep.subr.mxu0 0.0
  %1810 = vmatpush1.msra.mxu0 0.0
  %1811 = vmatprep.subr.mxu0 0.0
  %1812 = vmatpush1.msra.mxu0 0.0
  %1813 = vmatprep.subr.mxu0 0.0
  %1814 = vmatpush1.msra.mxu0 0.0
  %1815 = vmatprep.subr.mxu0 0.0
  %1816 = vmatpush1.msra.mxu0 0.0
  %1817 = vmatprep.subr.mxu0 0.0
  %1818 = vmatpush1.msra.mxu0 0.0
  %1819 = vmatprep.subr.mxu0 0.0
  %1820 = vmatpush1.msra.mxu0 0.0
  %1821 = vmatprep.subr.mxu0 0.0
  %1822 = vmatpush1.msra.mxu0 0.0
  %1823 = vmatprep.subr.mxu0 %v305
  %1824 = vmatpush1.msra.mxu0 %v304
  %1825 = vmatprep.subr.mxu0 %v303
  %1826 = vmatpush1.msra.mxu0 %v302
  %1827 = vmatprep.subr.mxu0 %v301
  %1828 = vmatpush1.msra.mxu0 %v300
  %1829 = vmatprep.subr.mxu0 %v299
  %1830 = vmatpush1.msra.mxu0 %v298
  %1831 = vmatprep.subr.mxu0 %v297
  %1832 = vmatpush1.msra.mxu0 %v296
  %1833 = vmatprep.subr.mxu0 %v295
  %1834 = vmatpush1.msra.mxu0 %v294
  %1835 = vmatprep.subr.mxu0 %v293
  %1836 = vmatpush1.msra.mxu0 %v292
  %1837 = vmatprep.subr.mxu0 %v291
  %1838 = vmatpush1.msra.mxu0 %v290
  %1839 = vmatprep.subr.mxu0 0.0
  %1840 = vmatpush2.msra.mxu0 0.0
  %1841 = vmatprep.subr.mxu0 0.0
  %1842 = vmatpush2.msra.mxu0 0.0
  %1843 = vmatprep.subr.mxu0 0.0
  %1844 = vmatpush2.msra.mxu0 0.0
  %1845 = vmatprep.subr.mxu0 0.0
  %1846 = vmatpush2.msra.mxu0 0.0
  %1847 = vmatprep.subr.mxu0 0.0
  %1848 = vmatpush2.msra.mxu0 0.0
  %1849 = vmatprep.subr.mxu0 0.0
  %1850 = vmatpush2.msra.mxu0 0.0
  %1851 = vmatprep.subr.mxu0 0.0
  %1852 = vmatpush2.msra.mxu0 0.0
  %1853 = vmatprep.subr.mxu0 0.0
  %1854 = vmatpush2.msra.mxu0 0.0
  %1855 = vmatprep.subr.mxu0 0.0
  %1856 = vmatpush2.msra.mxu0 0.0
  %1857 = vmatprep.subr.mxu0 0.0
  %1858 = vmatpush2.msra.mxu0 0.0
  %1859 = vmatprep.subr.mxu0 0.0
  %1860 = vmatpush2.msra.mxu0 0.0
  %1861 = vmatprep.subr.mxu0 0.0
  %1862 = vmatpush2.msra.mxu0 0.0
  %1863 = vmatprep.subr.mxu0 0.0
  %1864 = vmatpush2.msra.mxu0 0.0
  %1865 = vmatprep.subr.mxu0 0.0
  %1866 = vmatpush2.msra.mxu0 0.0
  %1867 = vmatprep.subr.mxu0 0.0
  %1868 = vmatpush2.msra.mxu0 0.0
  %1869 = vmatprep.subr.mxu0 0.0
  %1870 = vmatpush2.msra.mxu0 0.0
  %1871 = vmatprep.mubr.f32.mxu0 0.0
  %1872 = vmatmul.mubr.f32.gmra.mxu0 %v1805
  %v1873 = vpop.f32.mrf.mxu0
  %v1874 = vadd.f32 %v331, %v1873
  %v1875 = vpop.f32.mrf.mxu0
  %v1876 = vadd.f32 %v335, %v1875
  %1877 = vdwg.mxu0
  %v1879 = vlaneseq
  %v1880 = vshrl.u32 %v1879, 7
  %v1881 = vsub.s32 0, %v1880
  %v1882 = vrot.slane %v1791, %v1881
  %1883 = vrot.lane.b32.xlu0 %v1882, 64
  %v1884 = vpop.permute.xlu0 %1883
  %v1885 = vsel %vm195, %v1884, 0
  %1887 = vmatprep.subr.mxu0 0.0
  %1888 = vmatpush1.msra.mxu0 0.0
  %1889 = vmatprep.subr.mxu0 0.0
  %1890 = vmatpush1.msra.mxu0 0.0
  %1891 = vmatprep.subr.mxu0 0.0
  %1892 = vmatpush1.msra.mxu0 0.0
  %1893 = vmatprep.subr.mxu0 0.0
  %1894 = vmatpush1.msra.mxu0 0.0
  %1895 = vmatprep.subr.mxu0 0.0
  %1896 = vmatpush1.msra.mxu0 0.0
  %1897 = vmatprep.subr.mxu0 0.0
  %1898 = vmatpush1.msra.mxu0 0.0
  %1899 = vmatprep.subr.mxu0 0.0
  %1900 = vmatpush1.msra.mxu0 0.0
  %1901 = vmatprep.subr.mxu0 0.0
  %1902 = vmatpush1.msra.mxu0 0.0
  %1903 = vmatprep.subr.mxu0 %v321
  %1904 = vmatpush1.msra.mxu0 %v320
  %1905 = vmatprep.subr.mxu0 %v319
  %1906 = vmatpush1.msra.mxu0 %v318
  %1907 = vmatprep.subr.mxu0 %v317
  %1908 = vmatpush1.msra.mxu0 %v316
  %1909 = vmatprep.subr.mxu0 %v315
  %1910 = vmatpush1.msra.mxu0 %v314
  %1911 = vmatprep.subr.mxu0 %v313
  %1912 = vmatpush1.msra.mxu0 %v312
  %1913 = vmatprep.subr.mxu0 %v311
  %1914 = vmatpush1.msra.mxu0 %v310
  %1915 = vmatprep.subr.mxu0 %v309
  %1916 = vmatpush1.msra.mxu0 %v308
  %1917 = vmatprep.subr.mxu0 %v307
  %1918 = vmatpush1.msra.mxu0 %v306
  %1919 = vmatprep.subr.mxu0 0.0
  %1920 = vmatpush2.msra.mxu0 0.0
  %1921 = vmatprep.subr.mxu0 0.0
  %1922 = vmatpush2.msra.mxu0 0.0
  %1923 = vmatprep.subr.mxu0 0.0
  %1924 = vmatpush2.msra.mxu0 0.0
  %1925 = vmatprep.subr.mxu0 0.0
  %1926 = vmatpush2.msra.mxu0 0.0
  %1927 = vmatprep.subr.mxu0 0.0
  %1928 = vmatpush2.msra.mxu0 0.0
  %1929 = vmatprep.subr.mxu0 0.0
  %1930 = vmatpush2.msra.mxu0 0.0
  %1931 = vmatprep.subr.mxu0 0.0
  %1932 = vmatpush2.msra.mxu0 0.0
  %1933 = vmatprep.subr.mxu0 0.0
  %1934 = vmatpush2.msra.mxu0 0.0
  %1935 = vmatprep.subr.mxu0 0.0
  %1936 = vmatpush2.msra.mxu0 0.0
  %1937 = vmatprep.subr.mxu0 0.0
  %1938 = vmatpush2.msra.mxu0 0.0
  %1939 = vmatprep.subr.mxu0 0.0
  %1940 = vmatpush2.msra.mxu0 0.0
  %1941 = vmatprep.subr.mxu0 0.0
  %1942 = vmatpush2.msra.mxu0 0.0
  %1943 = vmatprep.subr.mxu0 0.0
  %1944 = vmatpush2.msra.mxu0 0.0
  %1945 = vmatprep.subr.mxu0 0.0
  %1946 = vmatpush2.msra.mxu0 0.0
  %1947 = vmatprep.subr.mxu0 0.0
  %1948 = vmatpush2.msra.mxu0 0.0
  %1949 = vmatprep.subr.mxu0 0.0
  %1950 = vmatpush2.msra.mxu0 0.0
  %1951 = vmatprep.mubr.f32.mxu0 0.0
  %1952 = vmatmul.mubr.f32.gmra.mxu0 %v1885
  %v1953 = vpop.f32.mrf.mxu0
  %v1954 = vadd.f32 %v416, %v1953
  %v1955 = vpop.f32.mrf.mxu0
  %v1956 = vadd.f32 %v420, %v1955
  %1957 = vdwg.mxu0
  %v1958 = vadd.f32 %v1803, %v1874
  %v1959 = vxor.u32 %v1958, 2147483648
  %v1960 = vmul.f32 %v1959, 1.442695
  %v1961 = vpow.pop %v1960
  %v1962 = vadd.f32 %v1961, 1.0
  %v1963 = vrcp.pop %v1962
  %v1964 = vmul.f32 1.0, %v1963
  %v1965 = vmul.f32 %v1964, %v1876
  %v1967 = vrot.slane %v1803, 1
  %v1969 = vadd.f32 %v1967, %v1965
  %v1970 = vtanh.pop %v1969
  %v1971 = vsub.f32 1.0, %v1964
  %1973 = vrot.lane.b32.xlu0 %v1970, 64
  %v1974 = vpop.permute.xlu0 %1973
  %v1976 = vmul.f32 %v1971, %v1974
  %v1977 = vmul.f32 %v1964, %v1770
  %v1978 = vadd.f32 %v1976, %v1977
  %v1979 = vadd.f32 %v1804, %v1954
  %v1980 = vxor.u32 %v1979, 2147483648
  %v1981 = vmul.f32 %v1980, 1.442695
  %v1982 = vpow.pop %v1981
  %v1983 = vadd.f32 %v1982, 1.0
  %v1984 = vrcp.pop %v1983
  %v1985 = vmul.f32 1.0, %v1984
  %v1986 = vmul.f32 %v1985, %v1956
  %v1988 = vrot.slane %v1804, 1
  %v1990 = vadd.f32 %v1988, %v1986
  %v1991 = vtanh.pop %v1990
  %v1992 = vsub.f32 1.0, %v1985
  %1994 = vrot.lane.b32.xlu0 %v1991, 64
  %v1995 = vpop.permute.xlu0 %1994
  %v1997 = vmul.f32 %v1992, %v1995
  %v1998 = vmul.f32 %v1985, %v1791
  %v1999 = vadd.f32 %v1997, %v1998
  %v2001 = vlaneseq
  %v2002 = vshrl.u32 %v2001, 7
  %v2003 = vsub.s32 0, %v2002
  %v2004 = vrot.slane %v1978, %v2003
  %2005 = vrot.lane.b32.xlu0 %v2004, 64
  %v2006 = vpop.permute.xlu0 %2005
  %2008 = vst.msk [vmem:[#allocation4 + $0x7] sm:$0x1] %vm544, %v2006
  %2009 = vst.msk [vmem:[#allocation4] sm:$0x1] %vm546, %v1999
  %v2010 = vld [vmem:[#allocation4] sm:$0xff]
  %v2011 = vld [vmem:[%s9] sm:$0xff]
  %v2012 = vld [vmem:[%s9 + $0x8] sm:$0xff]
  %v2013 = vld [vmem:[%s9 + $0x10] sm:$0xff]
  %v2014 = vld [vmem:[%s9 + $0x18] sm:$0xff]
  %v2015 = vld [vmem:[%s9 + $0x20] sm:$0xff]
  %v2016 = vld [vmem:[%s9 + $0x28] sm:$0xff]
  %v2017 = vld [vmem:[%s9 + $0x30] sm:$0xff]
  %v2018 = vld [vmem:[%s9 + $0x38] sm:$0xff]
  %v2019 = vld [vmem:[%s9 + $0x40] sm:$0xff]
  %v2020 = vld [vmem:[%s9 + $0x48] sm:$0xff]
  %v2021 = vld [vmem:[%s9 + $0x50] sm:$0xff]
  %v2022 = vld [vmem:[%s9 + $0x58] sm:$0xff]
  %v2023 = vld [vmem:[%s9 + $0x60] sm:$0xff]
  %v2024 = vld [vmem:[%s9 + $0x68] sm:$0xff]
  %v2025 = vld [vmem:[%s9 + $0x70] sm:$0xff]
  %v2026 = vld [vmem:[%s9 + $0x78] sm:$0xff]
  %v2027 = vld [vmem:[%s9 + $0x80] sm:$0xff]
  %v2028 = vld [vmem:[%s9 + $0x88] sm:$0xff]
  %v2029 = vld [vmem:[%s9 + $0x90] sm:$0xff]
  %v2030 = vld [vmem:[%s9 + $0x98] sm:$0xff]
  %v2031 = vld [vmem:[%s9 + $0xa0] sm:$0xff]
  %v2032 = vld [vmem:[%s9 + $0xa8] sm:$0xff]
  %v2033 = vld [vmem:[%s9 + $0xb0] sm:$0xff]
  %v2034 = vld [vmem:[%s9 + $0xb8] sm:$0xff]
  %v2035 = vld [vmem:[%s9 + $0xc0] sm:$0xff]
  %v2036 = vld [vmem:[%s9 + $0xc8] sm:$0xff]
  %v2037 = vld [vmem:[%s9 + $0xd0] sm:$0xff]
  %v2038 = vld [vmem:[%s9 + $0xd8] sm:$0xff]
  %v2039 = vld [vmem:[%s9 + $0xe0] sm:$0xff]
  %v2040 = vld [vmem:[%s9 + $0xe8] sm:$0xff]
  %v2041 = vld [vmem:[%s9 + $0xf0] sm:$0xff]
  %v2042 = vld [vmem:[%s9 + $0xf8] sm:$0xff]
  %v2043 = vld [vmem:[%s11] sm:$0x3]
  %v2045 = vlaneseq
  %v2046 = vshrl.u32 %v2045, 7
  %v2047 = vsub.s32 0, %v2046
  %v2048 = vrot.slane %v2043, %v2047
  %v2049 = vlaneseq
  %v2050 = vshrl.u32 %v2049, 7
  %v2051 = vsub.s32 1, %v2050
  %v2052 = vrot.slane %v2043, %v2051
  %2055 = vmatprep.subr.mxu0 %v2042
  %2056 = vmatpush1.msra.mxu0 %v2041
  %2057 = vmatprep.subr.mxu0 %v2040
  %2058 = vmatpush1.msra.mxu0 %v2039
  %2059 = vmatprep.subr.mxu0 %v2038
  %2060 = vmatpush1.msra.mxu0 %v2037
  %2061 = vmatprep.subr.mxu0 %v2036
  %2062 = vmatpush1.msra.mxu0 %v2035
  %2063 = vmatprep.subr.mxu0 %v2034
  %2064 = vmatpush1.msra.mxu0 %v2033
  %2065 = vmatprep.subr.mxu0 %v2032
  %2066 = vmatpush1.msra.mxu0 %v2031
  %2067 = vmatprep.subr.mxu0 %v2030
  %2068 = vmatpush1.msra.mxu0 %v2029
  %2069 = vmatprep.subr.mxu0 %v2028
  %2070 = vmatpush1.msra.mxu0 %v2027
  %2071 = vmatprep.subr.mxu0 %v2026
  %2072 = vmatpush1.msra.mxu0 %v2025
  %2073 = vmatprep.subr.mxu0 %v2024
  %2074 = vmatpush1.msra.mxu0 %v2023
  %2075 = vmatprep.subr.mxu0 %v2022
  %2076 = vmatpush1.msra.mxu0 %v2021
  %2077 = vmatprep.subr.mxu0 %v2020
  %2078 = vmatpush1.msra.mxu0 %v2019
  %2079 = vmatprep.subr.mxu0 %v2018
  %2080 = vmatpush1.msra.mxu0 %v2017
  %2081 = vmatprep.subr.mxu0 %v2016
  %2082 = vmatpush1.msra.mxu0 %v2015
  %2083 = vmatprep.subr.mxu0 %v2014
  %2084 = vmatpush1.msra.mxu0 %v2013
  %2085 = vmatprep.subr.mxu0 %v2012
  %2086 = vmatpush1.msra.mxu0 %v2011
  %2087 = vmatprep.subr.mxu0 0.0
  %2088 = vmatpush2.msra.mxu0 0.0
  %2089 = vmatprep.subr.mxu0 0.0
  %2090 = vmatpush2.msra.mxu0 0.0
  %2091 = vmatprep.subr.mxu0 0.0
  %2092 = vmatpush2.msra.mxu0 0.0
  %2093 = vmatprep.subr.mxu0 0.0
  %2094 = vmatpush2.msra.mxu0 0.0
  %2095 = vmatprep.subr.mxu0 0.0
  %2096 = vmatpush2.msra.mxu0 0.0
  %2097 = vmatprep.subr.mxu0 0.0
  %2098 = vmatpush2.msra.mxu0 0.0
  %2099 = vmatprep.subr.mxu0 0.0
  %2100 = vmatpush2.msra.mxu0 0.0
  %2101 = vmatprep.subr.mxu0 0.0
  %2102 = vmatpush2.msra.mxu0 0.0
  %2103 = vmatprep.subr.mxu0 0.0
  %2104 = vmatpush2.msra.mxu0 0.0
  %2105 = vmatprep.subr.mxu0 0.0
  %2106 = vmatpush2.msra.mxu0 0.0
  %2107 = vmatprep.subr.mxu0 0.0
  %2108 = vmatpush2.msra.mxu0 0.0
  %2109 = vmatprep.subr.mxu0 0.0
  %2110 = vmatpush2.msra.mxu0 0.0
  %2111 = vmatprep.subr.mxu0 0.0
  %2112 = vmatpush2.msra.mxu0 0.0
  %2113 = vmatprep.subr.mxu0 0.0
  %2114 = vmatpush2.msra.mxu0 0.0
  %2115 = vmatprep.subr.mxu0 0.0
  %2116 = vmatpush2.msra.mxu0 0.0
  %2117 = vmatprep.subr.mxu0 0.0
  %2118 = vmatpush2.msra.mxu0 0.0
  %2119 = vmatprep.mubr.f32.mxu0 0.0
  %2120 = vmatmul.mubr.f32.gmra.mxu0 %v2010
  %v2121 = vpop.f32.mrf.mxu0
  %v2122 = vadd.f32 %v2048, %v2121
  %v2123 = vpop.f32.mrf.mxu0
  %v2124 = vadd.f32 %v2052, %v2123
  %2125 = vdwg.mxu0
  %2126 = vst [vmem:[#allocation2] sm:$0xff] %v2122
  %2127 = vst.msk [vmem:[#allocation2 + $0x8] sm:$0xff] %vm195, %v2124
  %v2128 = vld [vmem:[%s13] sm:$0xff]
  %v2129 = vld [vmem:[%s13 + $0x8] sm:$0xff]
  %v2130 = vld [vmem:[%s13 + $0x10] sm:$0xff]
  %v2131 = vld [vmem:[%s13 + $0x18] sm:$0xff]
  %v2132 = vld [vmem:[%s13 + $0x20] sm:$0xff]
  %v2133 = vld [vmem:[%s13 + $0x28] sm:$0xff]
  %v2134 = vld [vmem:[%s13 + $0x30] sm:$0xff]
  %v2135 = vld [vmem:[%s13 + $0x38] sm:$0xff]
  %v2136 = vld [vmem:[%s13 + $0x40] sm:$0xff]
  %v2137 = vld [vmem:[%s13 + $0x48] sm:$0xff]
  %v2138 = vld [vmem:[%s13 + $0x50] sm:$0xff]
  %v2139 = vld [vmem:[%s13 + $0x58] sm:$0xff]
  %v2140 = vld [vmem:[%s13 + $0x60] sm:$0xff]
  %v2141 = vld [vmem:[%s13 + $0x68] sm:$0xff]
  %v2142 = vld [vmem:[%s13 + $0x70] sm:$0xff]
  %v2143 = vld [vmem:[%s13 + $0x78] sm:$0xff]
  %v2144 = vld [vmem:[%s13 + $0x80] sm:$0xff]
  %v2145 = vld [vmem:[%s13 + $0x88] sm:$0xff]
  %v2146 = vld [vmem:[%s13 + $0x90] sm:$0xff]
  %v2147 = vld [vmem:[%s13 + $0x98] sm:$0xff]
  %v2148 = vld [vmem:[%s13 + $0xa0] sm:$0xff]
  %v2149 = vld [vmem:[%s13 + $0xa8] sm:$0xff]
  %v2150 = vld [vmem:[%s13 + $0xb0] sm:$0xff]
  %v2151 = vld [vmem:[%s13 + $0xb8] sm:$0xff]
  %v2152 = vld [vmem:[%s13 + $0xc0] sm:$0xff]
  %v2153 = vld [vmem:[%s13 + $0xc8] sm:$0xff]
  %v2154 = vld [vmem:[%s13 + $0xd0] sm:$0xff]
  %v2155 = vld [vmem:[%s13 + $0xd8] sm:$0xff]
  %v2156 = vld [vmem:[%s13 + $0xe0] sm:$0xff]
  %v2157 = vld [vmem:[%s13 + $0xe8] sm:$0xff]
  %v2158 = vld [vmem:[%s13 + $0xf0] sm:$0xff]
  %v2159 = vld [vmem:[%s13 + $0xf8] sm:$0xff]
  %v2160 = vld [vmem:[%s15] sm:$0x3]
  %v2162 = vlaneseq
  %v2163 = vshrl.u32 %v2162, 7
  %v2164 = vsub.s32 0, %v2163
  %v2165 = vrot.slane %v2160, %v2164
  %v2166 = vlaneseq
  %v2167 = vshrl.u32 %v2166, 7
  %v2168 = vsub.s32 1, %v2167
  %v2169 = vrot.slane %v2160, %v2168
  %2172 = vmatprep.subr.mxu0 %v2159
  %2173 = vmatpush1.msra.mxu0 %v2158
  %2174 = vmatprep.subr.mxu0 %v2157
  %2175 = vmatpush1.msra.mxu0 %v2156
  %2176 = vmatprep.subr.mxu0 %v2155
  %2177 = vmatpush1.msra.mxu0 %v2154
  %2178 = vmatprep.subr.mxu0 %v2153
  %2179 = vmatpush1.msra.mxu0 %v2152
  %2180 = vmatprep.subr.mxu0 %v2151
  %2181 = vmatpush1.msra.mxu0 %v2150
  %2182 = vmatprep.subr.mxu0 %v2149
  %2183 = vmatpush1.msra.mxu0 %v2148
  %2184 = vmatprep.subr.mxu0 %v2147
  %2185 = vmatpush1.msra.mxu0 %v2146
  %2186 = vmatprep.subr.mxu0 %v2145
  %2187 = vmatpush1.msra.mxu0 %v2144
  %2188 = vmatprep.subr.mxu0 %v2143
  %2189 = vmatpush1.msra.mxu0 %v2142
  %2190 = vmatprep.subr.mxu0 %v2141
  %2191 = vmatpush1.msra.mxu0 %v2140
  %2192 = vmatprep.subr.mxu0 %v2139
  %2193 = vmatpush1.msra.mxu0 %v2138
  %2194 = vmatprep.subr.mxu0 %v2137
  %2195 = vmatpush1.msra.mxu0 %v2136
  %2196 = vmatprep.subr.mxu0 %v2135
  %2197 = vmatpush1.msra.mxu0 %v2134
  %2198 = vmatprep.subr.mxu0 %v2133
  %2199 = vmatpush1.msra.mxu0 %v2132
  %2200 = vmatprep.subr.mxu0 %v2131
  %2201 = vmatpush1.msra.mxu0 %v2130
  %2202 = vmatprep.subr.mxu0 %v2129
  %2203 = vmatpush1.msra.mxu0 %v2128
  %2204 = vmatprep.subr.mxu0 0.0
  %2205 = vmatpush2.msra.mxu0 0.0
  %2206 = vmatprep.subr.mxu0 0.0
  %2207 = vmatpush2.msra.mxu0 0.0
  %2208 = vmatprep.subr.mxu0 0.0
  %2209 = vmatpush2.msra.mxu0 0.0
  %2210 = vmatprep.subr.mxu0 0.0
  %2211 = vmatpush2.msra.mxu0 0.0
  %2212 = vmatprep.subr.mxu0 0.0
  %2213 = vmatpush2.msra.mxu0 0.0
  %2214 = vmatprep.subr.mxu0 0.0
  %2215 = vmatpush2.msra.mxu0 0.0
  %2216 = vmatprep.subr.mxu0 0.0
  %2217 = vmatpush2.msra.mxu0 0.0
  %2218 = vmatprep.subr.mxu0 0.0
  %2219 = vmatpush2.msra.mxu0 0.0
  %2220 = vmatprep.subr.mxu0 0.0
  %2221 = vmatpush2.msra.mxu0 0.0
  %2222 = vmatprep.subr.mxu0 0.0
  %2223 = vmatpush2.msra.mxu0 0.0
  %2224 = vmatprep.subr.mxu0 0.0
  %2225 = vmatpush2.msra.mxu0 0.0
  %2226 = vmatprep.subr.mxu0 0.0
  %2227 = vmatpush2.msra.mxu0 0.0
  %2228 = vmatprep.subr.mxu0 0.0
  %2229 = vmatpush2.msra.mxu0 0.0
  %2230 = vmatprep.subr.mxu0 0.0
  %2231 = vmatpush2.msra.mxu0 0.0
  %2232 = vmatprep.subr.mxu0 0.0
  %2233 = vmatpush2.msra.mxu0 0.0
  %2234 = vmatprep.subr.mxu0 0.0
  %2235 = vmatpush2.msra.mxu0 0.0
  %2236 = vmatprep.mubr.f32.mxu0 0.0
  %2237 = vmatmul.mubr.f32.gmra.mxu0 %v2010
  %v2238 = vpop.f32.mrf.mxu0
  %v2239 = vadd.f32 %v2165, %v2238
  %v2240 = vpop.f32.mrf.mxu0
  %v2241 = vadd.f32 %v2169, %v2240
  %2242 = vdwg.mxu0
  %2243 = vst [vmem:[#allocation3] sm:$0xff] %v2239
  %2244 = vst.msk [vmem:[#allocation3 + $0x8] sm:$0xff] %vm195, %v2241
  %v2245 = vld [vmem:[%s10] sm:$0xff]
  %v2246 = vld [vmem:[%s10 + $0x8] sm:$0xff]
  %v2247 = vld [vmem:[%s10 + $0x10] sm:$0xff]
  %v2248 = vld [vmem:[%s10 + $0x18] sm:$0xff]
  %v2249 = vld [vmem:[%s10 + $0x20] sm:$0xff]
  %v2250 = vld [vmem:[%s10 + $0x28] sm:$0xff]
  %v2251 = vld [vmem:[%s10 + $0x30] sm:$0xff]
  %v2252 = vld [vmem:[%s10 + $0x38] sm:$0xff]
  %v2253 = vld [vmem:[%s10 + $0x40] sm:$0xff]
  %v2254 = vld [vmem:[%s10 + $0x48] sm:$0xff]
  %v2255 = vld [vmem:[%s10 + $0x50] sm:$0xff]
  %v2256 = vld [vmem:[%s10 + $0x58] sm:$0xff]
  %v2257 = vld [vmem:[%s10 + $0x60] sm:$0xff]
  %v2258 = vld [vmem:[%s10 + $0x68] sm:$0xff]
  %v2259 = vld [vmem:[%s10 + $0x70] sm:$0xff]
  %v2260 = vld [vmem:[%s10 + $0x78] sm:$0xff]
  %v2261 = vld [vmem:[%s14] sm:$0xff]
  %v2262 = vld [vmem:[%s14 + $0x8] sm:$0xff]
  %v2263 = vld [vmem:[%s14 + $0x10] sm:$0xff]
  %v2264 = vld [vmem:[%s14 + $0x18] sm:$0xff]
  %v2265 = vld [vmem:[%s14 + $0x20] sm:$0xff]
  %v2266 = vld [vmem:[%s14 + $0x28] sm:$0xff]
  %v2267 = vld [vmem:[%s14 + $0x30] sm:$0xff]
  %v2268 = vld [vmem:[%s14 + $0x38] sm:$0xff]
  %v2269 = vld [vmem:[%s14 + $0x40] sm:$0xff]
  %v2270 = vld [vmem:[%s14 + $0x48] sm:$0xff]
  %v2271 = vld [vmem:[%s14 + $0x50] sm:$0xff]
  %v2272 = vld [vmem:[%s14 + $0x58] sm:$0xff]
  %v2273 = vld [vmem:[%s14 + $0x60] sm:$0xff]
  %v2274 = vld [vmem:[%s14 + $0x68] sm:$0xff]
  %v2275 = vld [vmem:[%s14 + $0x70] sm:$0xff]
  %v2276 = vld [vmem:[%s14 + $0x78] sm:$0xff]
  %v2277 = vld [vmem:[%s12] sm:$0x3]
  %v2278 = vld [vmem:[%s16] sm:$0x3]
  %v2279 = vld [vmem:[#allocation2] ss:$8 sm:$0x3]
  %v2280 = vld [vmem:[%s325] ss:$8 sm:$0x3]
  %v2282 = vlaneseq
  %v2283 = vshrl.u32 %v2282, 7
  %v2284 = vsub.s32 0, %v2283
  %v2285 = vrot.slane %v2277, %v2284
  %v2286 = vlaneseq
  %v2287 = vshrl.u32 %v2286, 7
  %v2288 = vsub.s32 1, %v2287
  %v2289 = vrot.slane %v2277, %v2288
  %2292 = vmatprep.subr.mxu0 0.0
  %2293 = vmatpush1.msra.mxu0 0.0
  %2294 = vmatprep.subr.mxu0 0.0
  %2295 = vmatpush1.msra.mxu0 0.0
  %2296 = vmatprep.subr.mxu0 0.0
  %2297 = vmatpush1.msra.mxu0 0.0
  %2298 = vmatprep.subr.mxu0 0.0
  %2299 = vmatpush1.msra.mxu0 0.0
  %2300 = vmatprep.subr.mxu0 0.0
  %2301 = vmatpush1.msra.mxu0 0.0
  %2302 = vmatprep.subr.mxu0 0.0
  %2303 = vmatpush1.msra.mxu0 0.0
  %2304 = vmatprep.subr.mxu0 0.0
  %2305 = vmatpush1.msra.mxu0 0.0
  %2306 = vmatprep.subr.mxu0 0.0
  %2307 = vmatpush1.msra.mxu0 0.0
  %2308 = vmatprep.subr.mxu0 %v2260
  %2309 = vmatpush1.msra.mxu0 %v2259
  %2310 = vmatprep.subr.mxu0 %v2258
  %2311 = vmatpush1.msra.mxu0 %v2257
  %2312 = vmatprep.subr.mxu0 %v2256
  %2313 = vmatpush1.msra.mxu0 %v2255
  %2314 = vmatprep.subr.mxu0 %v2254
  %2315 = vmatpush1.msra.mxu0 %v2253
  %2316 = vmatprep.subr.mxu0 %v2252
  %2317 = vmatpush1.msra.mxu0 %v2251
  %2318 = vmatprep.subr.mxu0 %v2250
  %2319 = vmatpush1.msra.mxu0 %v2249
  %2320 = vmatprep.subr.mxu0 %v2248
  %2321 = vmatpush1.msra.mxu0 %v2247
  %2322 = vmatprep.subr.mxu0 %v2246
  %2323 = vmatpush1.msra.mxu0 %v2245
  %2324 = vmatprep.subr.mxu0 0.0
  %2325 = vmatpush2.msra.mxu0 0.0
  %2326 = vmatprep.subr.mxu0 0.0
  %2327 = vmatpush2.msra.mxu0 0.0
  %2328 = vmatprep.subr.mxu0 0.0
  %2329 = vmatpush2.msra.mxu0 0.0
  %2330 = vmatprep.subr.mxu0 0.0
  %2331 = vmatpush2.msra.mxu0 0.0
  %2332 = vmatprep.subr.mxu0 0.0
  %2333 = vmatpush2.msra.mxu0 0.0
  %2334 = vmatprep.subr.mxu0 0.0
  %2335 = vmatpush2.msra.mxu0 0.0
  %2336 = vmatprep.subr.mxu0 0.0
  %2337 = vmatpush2.msra.mxu0 0.0
  %2338 = vmatprep.subr.mxu0 0.0
  %2339 = vmatpush2.msra.mxu0 0.0
  %2340 = vmatprep.subr.mxu0 0.0
  %2341 = vmatpush2.msra.mxu0 0.0
  %2342 = vmatprep.subr.mxu0 0.0
  %2343 = vmatpush2.msra.mxu0 0.0
  %2344 = vmatprep.subr.mxu0 0.0
  %2345 = vmatpush2.msra.mxu0 0.0
  %2346 = vmatprep.subr.mxu0 0.0
  %2347 = vmatpush2.msra.mxu0 0.0
  %2348 = vmatprep.subr.mxu0 0.0
  %2349 = vmatpush2.msra.mxu0 0.0
  %2350 = vmatprep.subr.mxu0 0.0
  %2351 = vmatpush2.msra.mxu0 0.0
  %2352 = vmatprep.subr.mxu0 0.0
  %2353 = vmatpush2.msra.mxu0 0.0
  %2354 = vmatprep.subr.mxu0 0.0
  %2355 = vmatpush2.msra.mxu0 0.0
  %2356 = vmatprep.mubr.f32.mxu0 0.0
  %2357 = vmatmul.mubr.f32.gmra.mxu0 %v339
  %v2358 = vpop.f32.mrf.mxu0
  %v2359 = vadd.f32 %v2285, %v2358
  %v2360 = vpop.f32.mrf.mxu0
  %v2361 = vadd.f32 %v2289, %v2360
  %2362 = vdwg.mxu0
  %v2364 = vlaneseq
  %v2365 = vshrl.u32 %v2364, 7
  %v2366 = vsub.s32 0, %v2365
  %v2367 = vrot.slane %v2278, %v2366
  %v2368 = vlaneseq
  %v2369 = vshrl.u32 %v2368, 7
  %v2370 = vsub.s32 1, %v2369
  %v2371 = vrot.slane %v2278, %v2370
  %2374 = vmatprep.subr.mxu0 0.0
  %2375 = vmatpush1.msra.mxu0 0.0
  %2376 = vmatprep.subr.mxu0 0.0
  %2377 = vmatpush1.msra.mxu0 0.0
  %2378 = vmatprep.subr.mxu0 0.0
  %2379 = vmatpush1.msra.mxu0 0.0
  %2380 = vmatprep.subr.mxu0 0.0
  %2381 = vmatpush1.msra.mxu0 0.0
  %2382 = vmatprep.subr.mxu0 0.0
  %2383 = vmatpush1.msra.mxu0 0.0
  %2384 = vmatprep.subr.mxu0 0.0
  %2385 = vmatpush1.msra.mxu0 0.0
  %2386 = vmatprep.subr.mxu0 0.0
  %2387 = vmatpush1.msra.mxu0 0.0
  %2388 = vmatprep.subr.mxu0 0.0
  %2389 = vmatpush1.msra.mxu0 0.0
  %2390 = vmatprep.subr.mxu0 %v2276
  %2391 = vmatpush1.msra.mxu0 %v2275
  %2392 = vmatprep.subr.mxu0 %v2274
  %2393 = vmatpush1.msra.mxu0 %v2273
  %2394 = vmatprep.subr.mxu0 %v2272
  %2395 = vmatpush1.msra.mxu0 %v2271
  %2396 = vmatprep.subr.mxu0 %v2270
  %2397 = vmatpush1.msra.mxu0 %v2269
  %2398 = vmatprep.subr.mxu0 %v2268
  %2399 = vmatpush1.msra.mxu0 %v2267
  %2400 = vmatprep.subr.mxu0 %v2266
  %2401 = vmatpush1.msra.mxu0 %v2265
  %2402 = vmatprep.subr.mxu0 %v2264
  %2403 = vmatpush1.msra.mxu0 %v2263
  %2404 = vmatprep.subr.mxu0 %v2262
  %2405 = vmatpush1.msra.mxu0 %v2261
  %2406 = vmatprep.subr.mxu0 0.0
  %2407 = vmatpush2.msra.mxu0 0.0
  %2408 = vmatprep.subr.mxu0 0.0
  %2409 = vmatpush2.msra.mxu0 0.0
  %2410 = vmatprep.subr.mxu0 0.0
  %2411 = vmatpush2.msra.mxu0 0.0
  %2412 = vmatprep.subr.mxu0 0.0
  %2413 = vmatpush2.msra.mxu0 0.0
  %2414 = vmatprep.subr.mxu0 0.0
  %2415 = vmatpush2.msra.mxu0 0.0
  %2416 = vmatprep.subr.mxu0 0.0
  %2417 = vmatpush2.msra.mxu0 0.0
  %2418 = vmatprep.subr.mxu0 0.0
  %2419 = vmatpush2.msra.mxu0 0.0
  %2420 = vmatprep.subr.mxu0 0.0
  %2421 = vmatpush2.msra.mxu0 0.0
  %2422 = vmatprep.subr.mxu0 0.0
  %2423 = vmatpush2.msra.mxu0 0.0
  %2424 = vmatprep.subr.mxu0 0.0
  %2425 = vmatpush2.msra.mxu0 0.0
  %2426 = vmatprep.subr.mxu0 0.0
  %2427 = vmatpush2.msra.mxu0 0.0
  %2428 = vmatprep.subr.mxu0 0.0
  %2429 = vmatpush2.msra.mxu0 0.0
  %2430 = vmatprep.subr.mxu0 0.0
  %2431 = vmatpush2.msra.mxu0 0.0
  %2432 = vmatprep.subr.mxu0 0.0
  %2433 = vmatpush2.msra.mxu0 0.0
  %2434 = vmatprep.subr.mxu0 0.0
  %2435 = vmatpush2.msra.mxu0 0.0
  %2436 = vmatprep.subr.mxu0 0.0
  %2437 = vmatpush2.msra.mxu0 0.0
  %2438 = vmatprep.mubr.f32.mxu0 0.0
  %2439 = vmatmul.mubr.f32.gmra.mxu0 %v339
  %v2440 = vpop.f32.mrf.mxu0
  %v2441 = vadd.f32 %v2367, %v2440
  %v2442 = vpop.f32.mrf.mxu0
  %v2443 = vadd.f32 %v2371, %v2442
  %2444 = vdwg.mxu0
  %v2445 = vadd.f32 %v2279, %v2359
  %v2446 = vxor.u32 %v2445, 2147483648
  %v2447 = vmul.f32 %v2446, 1.442695
  %v2448 = vpow.pop %v2447
  %v2449 = vadd.f32 %v2448, 1.0
  %v2450 = vrcp.pop %v2449
  %v2451 = vmul.f32 1.0, %v2450
  %v2452 = vmul.f32 %v2451, %v2361
  %v2454 = vrot.slane %v2279, 1
  %v2456 = vadd.f32 %v2454, %v2452
  %v2457 = vtanh.pop %v2456
  %v2458 = vsub.f32 1.0, %v2451
  %2460 = vrot.lane.b32.xlu0 %v2457, 64
  %v2461 = vpop.permute.xlu0 %2460
  %v2463 = vmul.f32 %v2458, %v2461
  %v2464 = vmul.f32 %v2451, 0.0
  %v2465 = vadd.f32 %v2463, %v2464
  %v2466 = vadd.f32 %v2280, %v2441
  %v2467 = vxor.u32 %v2466, 2147483648
  %v2468 = vmul.f32 %v2467, 1.442695
  %v2469 = vpow.pop %v2468
  %v2470 = vadd.f32 %v2469, 1.0
  %v2471 = vrcp.pop %v2470
  %v2472 = vmul.f32 1.0, %v2471
  %v2473 = vmul.f32 %v2472, %v2443
  %v2475 = vrot.slane %v2280, 1
  %v2477 = vadd.f32 %v2475, %v2473
  %v2478 = vtanh.pop %v2477
  %v2479 = vsub.f32 1.0, %v2472
  %2481 = vrot.lane.b32.xlu0 %v2478, 64
  %v2482 = vpop.permute.xlu0 %2481
  %v2484 = vmul.f32 %v2479, %v2482
  %v2485 = vmul.f32 %v2472, 0.0
  %v2486 = vadd.f32 %v2484, %v2485
  %v2488 = vlaneseq
  %v2489 = vshrl.u32 %v2488, 7
  %v2490 = vsub.s32 0, %v2489
  %v2491 = vrot.slane %v2465, %v2490
  %2492 = vrot.lane.b32.xlu0 %v2491, 64
  %v2493 = vpop.permute.xlu0 %2492
  %2495 = vst.msk [vmem:[#allocation4] sm:$0x1] %vm544, %v2493
  %2496 = vst.msk [vmem:[#allocation4 + $0x7] sm:$0x1] %vm546, %v2486
  %v2497 = vld [vmem:[%s548] ss:$8 sm:$0x3]
  %v2498 = vld [vmem:[%s550] ss:$8 sm:$0x3]
  %v2499 = vsel %vm195, %v2493, 0
  %2501 = vmatprep.subr.mxu0 0.0
  %2502 = vmatpush1.msra.mxu0 0.0
  %2503 = vmatprep.subr.mxu0 0.0
  %2504 = vmatpush1.msra.mxu0 0.0
  %2505 = vmatprep.subr.mxu0 0.0
  %2506 = vmatpush1.msra.mxu0 0.0
  %2507 = vmatprep.subr.mxu0 0.0
  %2508 = vmatpush1.msra.mxu0 0.0
  %2509 = vmatprep.subr.mxu0 0.0
  %2510 = vmatpush1.msra.mxu0 0.0
  %2511 = vmatprep.subr.mxu0 0.0
  %2512 = vmatpush1.msra.mxu0 0.0
  %2513 = vmatprep.subr.mxu0 0.0
  %2514 = vmatpush1.msra.mxu0 0.0
  %2515 = vmatprep.subr.mxu0 0.0
  %2516 = vmatpush1.msra.mxu0 0.0
  %2517 = vmatprep.subr.mxu0 %v2260
  %2518 = vmatpush1.msra.mxu0 %v2259
  %2519 = vmatprep.subr.mxu0 %v2258
  %2520 = vmatpush1.msra.mxu0 %v2257
  %2521 = vmatprep.subr.mxu0 %v2256
  %2522 = vmatpush1.msra.mxu0 %v2255
  %2523 = vmatprep.subr.mxu0 %v2254
  %2524 = vmatpush1.msra.mxu0 %v2253
  %2525 = vmatprep.subr.mxu0 %v2252
  %2526 = vmatpush1.msra.mxu0 %v2251
  %2527 = vmatprep.subr.mxu0 %v2250
  %2528 = vmatpush1.msra.mxu0 %v2249
  %2529 = vmatprep.subr.mxu0 %v2248
  %2530 = vmatpush1.msra.mxu0 %v2247
  %2531 = vmatprep.subr.mxu0 %v2246
  %2532 = vmatpush1.msra.mxu0 %v2245
  %2533 = vmatprep.subr.mxu0 0.0
  %2534 = vmatpush2.msra.mxu0 0.0
  %2535 = vmatprep.subr.mxu0 0.0
  %2536 = vmatpush2.msra.mxu0 0.0
  %2537 = vmatprep.subr.mxu0 0.0
  %2538 = vmatpush2.msra.mxu0 0.0
  %2539 = vmatprep.subr.mxu0 0.0
  %2540 = vmatpush2.msra.mxu0 0.0
  %2541 = vmatprep.subr.mxu0 0.0
  %2542 = vmatpush2.msra.mxu0 0.0
  %2543 = vmatprep.subr.mxu0 0.0
  %2544 = vmatpush2.msra.mxu0 0.0
  %2545 = vmatprep.subr.mxu0 0.0
  %2546 = vmatpush2.msra.mxu0 0.0
  %2547 = vmatprep.subr.mxu0 0.0
  %2548 = vmatpush2.msra.mxu0 0.0
  %2549 = vmatprep.subr.mxu0 0.0
  %2550 = vmatpush2.msra.mxu0 0.0
  %2551 = vmatprep.subr.mxu0 0.0
  %2552 = vmatpush2.msra.mxu0 0.0
  %2553 = vmatprep.subr.mxu0 0.0
  %2554 = vmatpush2.msra.mxu0 0.0
  %2555 = vmatprep.subr.mxu0 0.0
  %2556 = vmatpush2.msra.mxu0 0.0
  %2557 = vmatprep.subr.mxu0 0.0
  %2558 = vmatpush2.msra.mxu0 0.0
  %2559 = vmatprep.subr.mxu0 0.0
  %2560 = vmatpush2.msra.mxu0 0.0
  %2561 = vmatprep.subr.mxu0 0.0
  %2562 = vmatpush2.msra.mxu0 0.0
  %2563 = vmatprep.subr.mxu0 0.0
  %2564 = vmatpush2.msra.mxu0 0.0
  %2565 = vmatprep.mubr.f32.mxu0 0.0
  %2566 = vmatmul.mubr.f32.gmra.mxu0 %v2499
  %v2567 = vpop.f32.mrf.mxu0
  %v2568 = vadd.f32 %v2285, %v2567
  %v2569 = vpop.f32.mrf.mxu0
  %v2570 = vadd.f32 %v2289, %v2569
  %2571 = vdwg.mxu0
  %v2573 = vlaneseq
  %v2574 = vshrl.u32 %v2573, 7
  %v2575 = vsub.s32 0, %v2574
  %v2576 = vrot.slane %v2486, %v2575
  %2577 = vrot.lane.b32.xlu0 %v2576, 64
  %v2578 = vpop.permute.xlu0 %2577
  %v2579 = vsel %vm195, %v2578, 0
  %2581 = vmatprep.subr.mxu0 0.0
  %2582 = vmatpush1.msra.mxu0 0.0
  %2583 = vmatprep.subr.mxu0 0.0
  %2584 = vmatpush1.msra.mxu0 0.0
  %2585 = vmatprep.subr.mxu0 0.0
  %2586 = vmatpush1.msra.mxu0 0.0
  %2587 = vmatprep.subr.mxu0 0.0
  %2588 = vmatpush1.msra.mxu0 0.0
  %2589 = vmatprep.subr.mxu0 0.0
  %2590 = vmatpush1.msra.mxu0 0.0
  %2591 = vmatprep.subr.mxu0 0.0
  %2592 = vmatpush1.msra.mxu0 0.0
  %2593 = vmatprep.subr.mxu0 0.0
  %2594 = vmatpush1.msra.mxu0 0.0
  %2595 = vmatprep.subr.mxu0 0.0
  %2596 = vmatpush1.msra.mxu0 0.0
  %2597 = vmatprep.subr.mxu0 %v2276
  %2598 = vmatpush1.msra.mxu0 %v2275
  %2599 = vmatprep.subr.mxu0 %v2274
  %2600 = vmatpush1.msra.mxu0 %v2273
  %2601 = vmatprep.subr.mxu0 %v2272
  %2602 = vmatpush1.msra.mxu0 %v2271
  %2603 = vmatprep.subr.mxu0 %v2270
  %2604 = vmatpush1.msra.mxu0 %v2269
  %2605 = vmatprep.subr.mxu0 %v2268
  %2606 = vmatpush1.msra.mxu0 %v2267
  %2607 = vmatprep.subr.mxu0 %v2266
  %2608 = vmatpush1.msra.mxu0 %v2265
  %2609 = vmatprep.subr.mxu0 %v2264
  %2610 = vmatpush1.msra.mxu0 %v2263
  %2611 = vmatprep.subr.mxu0 %v2262
  %2612 = vmatpush1.msra.mxu0 %v2261
  %2613 = vmatprep.subr.mxu0 0.0
  %2614 = vmatpush2.msra.mxu0 0.0
  %2615 = vmatprep.subr.mxu0 0.0
  %2616 = vmatpush2.msra.mxu0 0.0
  %2617 = vmatprep.subr.mxu0 0.0
  %2618 = vmatpush2.msra.mxu0 0.0
  %2619 = vmatprep.subr.mxu0 0.0
  %2620 = vmatpush2.msra.mxu0 0.0
  %2621 = vmatprep.subr.mxu0 0.0
  %2622 = vmatpush2.msra.mxu0 0.0
  %2623 = vmatprep.subr.mxu0 0.0
  %2624 = vmatpush2.msra.mxu0 0.0
  %2625 = vmatprep.subr.mxu0 0.0
  %2626 = vmatpush2.msra.mxu0 0.0
  %2627 = vmatprep.subr.mxu0 0.0
  %2628 = vmatpush2.msra.mxu0 0.0
  %2629 = vmatprep.subr.mxu0 0.0
  %2630 = vmatpush2.msra.mxu0 0.0
  %2631 = vmatprep.subr.mxu0 0.0
  %2632 = vmatpush2.msra.mxu0 0.0
  %2633 = vmatprep.subr.mxu0 0.0
  %2634 = vmatpush2.msra.mxu0 0.0
  %2635 = vmatprep.subr.mxu0 0.0
  %2636 = vmatpush2.msra.mxu0 0.0
  %2637 = vmatprep.subr.mxu0 0.0
  %2638 = vmatpush2.msra.mxu0 0.0
  %2639 = vmatprep.subr.mxu0 0.0
  %2640 = vmatpush2.msra.mxu0 0.0
  %2641 = vmatprep.subr.mxu0 0.0
  %2642 = vmatpush2.msra.mxu0 0.0
  %2643 = vmatprep.subr.mxu0 0.0
  %2644 = vmatpush2.msra.mxu0 0.0
  %2645 = vmatprep.mubr.f32.mxu0 0.0
  %2646 = vmatmul.mubr.f32.gmra.mxu0 %v2579
  %v2647 = vpop.f32.mrf.mxu0
  %v2648 = vadd.f32 %v2367, %v2647
  %v2649 = vpop.f32.mrf.mxu0
  %v2650 = vadd.f32 %v2371, %v2649
  %2651 = vdwg.mxu0
  %v2652 = vadd.f32 %v2497, %v2568
  %v2653 = vxor.u32 %v2652, 2147483648
  %v2654 = vmul.f32 %v2653, 1.442695
  %v2655 = vpow.pop %v2654
  %v2656 = vadd.f32 %v2655, 1.0
  %v2657 = vrcp.pop %v2656
  %v2658 = vmul.f32 1.0, %v2657
  %v2659 = vmul.f32 %v2658, %v2570
  %v2661 = vrot.slane %v2497, 1
  %v2663 = vadd.f32 %v2661, %v2659
  %v2664 = vtanh.pop %v2663
  %v2665 = vsub.f32 1.0, %v2658
  %2667 = vrot.lane.b32.xlu0 %v2664, 64
  %v2668 = vpop.permute.xlu0 %2667
  %v2670 = vmul.f32 %v2665, %v2668
  %v2671 = vmul.f32 %v2658, %v2465
  %v2672 = vadd.f32 %v2670, %v2671
  %v2673 = vadd.f32 %v2498, %v2648
  %v2674 = vxor.u32 %v2673, 2147483648
  %v2675 = vmul.f32 %v2674, 1.442695
  %v2676 = vpow.pop %v2675
  %v2677 = vadd.f32 %v2676, 1.0
  %v2678 = vrcp.pop %v2677
  %v2679 = vmul.f32 1.0, %v2678
  %v2680 = vmul.f32 %v2679, %v2650
  %v2682 = vrot.slane %v2498, 1
  %v2684 = vadd.f32 %v2682, %v2680
  %v2685 = vtanh.pop %v2684
  %v2686 = vsub.f32 1.0, %v2679
  %2688 = vrot.lane.b32.xlu0 %v2685, 64
  %v2689 = vpop.permute.xlu0 %2688
  %v2691 = vmul.f32 %v2686, %v2689
  %v2692 = vmul.f32 %v2679, %v2486
  %v2693 = vadd.f32 %v2691, %v2692
  %v2695 = vlaneseq
  %v2696 = vshrl.u32 %v2695, 7
  %v2697 = vsub.s32 0, %v2696
  %v2698 = vrot.slane %v2672, %v2697
  %2699 = vrot.lane.b32.xlu0 %v2698, 64
  %v2700 = vpop.permute.xlu0 %2699
  %2702 = vst.msk [vmem:[#allocation4 + $0x1] sm:$0x1] %vm544, %v2700
  %2703 = vst.msk [vmem:[#allocation4 + $0x6] sm:$0x1] %vm546, %v2693
  %v2704 = vld [vmem:[%s757] ss:$8 sm:$0x3]
  %v2705 = vld [vmem:[%s759] ss:$8 sm:$0x3]
  %v2706 = vsel %vm195, %v2700, 0
  %2708 = vmatprep.subr.mxu0 0.0
  %2709 = vmatpush1.msra.mxu0 0.0
  %2710 = vmatprep.subr.mxu0 0.0
  %2711 = vmatpush1.msra.mxu0 0.0
  %2712 = vmatprep.subr.mxu0 0.0
  %2713 = vmatpush1.msra.mxu0 0.0
  %2714 = vmatprep.subr.mxu0 0.0
  %2715 = vmatpush1.msra.mxu0 0.0
  %2716 = vmatprep.subr.mxu0 0.0
  %2717 = vmatpush1.msra.mxu0 0.0
  %2718 = vmatprep.subr.mxu0 0.0
  %2719 = vmatpush1.msra.mxu0 0.0
  %2720 = vmatprep.subr.mxu0 0.0
  %2721 = vmatpush1.msra.mxu0 0.0
  %2722 = vmatprep.subr.mxu0 0.0
  %2723 = vmatpush1.msra.mxu0 0.0
  %2724 = vmatprep.subr.mxu0 %v2260
  %2725 = vmatpush1.msra.mxu0 %v2259
  %2726 = vmatprep.subr.mxu0 %v2258
  %2727 = vmatpush1.msra.mxu0 %v2257
  %2728 = vmatprep.subr.mxu0 %v2256
  %2729 = vmatpush1.msra.mxu0 %v2255
  %2730 = vmatprep.subr.mxu0 %v2254
  %2731 = vmatpush1.msra.mxu0 %v2253
  %2732 = vmatprep.subr.mxu0 %v2252
  %2733 = vmatpush1.msra.mxu0 %v2251
  %2734 = vmatprep.subr.mxu0 %v2250
  %2735 = vmatpush1.msra.mxu0 %v2249
  %2736 = vmatprep.subr.mxu0 %v2248
  %2737 = vmatpush1.msra.mxu0 %v2247
  %2738 = vmatprep.subr.mxu0 %v2246
  %2739 = vmatpush1.msra.mxu0 %v2245
  %2740 = vmatprep.subr.mxu0 0.0
  %2741 = vmatpush2.msra.mxu0 0.0
  %2742 = vmatprep.subr.mxu0 0.0
  %2743 = vmatpush2.msra.mxu0 0.0
  %2744 = vmatprep.subr.mxu0 0.0
  %2745 = vmatpush2.msra.mxu0 0.0
  %2746 = vmatprep.subr.mxu0 0.0
  %2747 = vmatpush2.msra.mxu0 0.0
  %2748 = vmatprep.subr.mxu0 0.0
  %2749 = vmatpush2.msra.mxu0 0.0
  %2750 = vmatprep.subr.mxu0 0.0
  %2751 = vmatpush2.msra.mxu0 0.0
  %2752 = vmatprep.subr.mxu0 0.0
  %2753 = vmatpush2.msra.mxu0 0.0
  %2754 = vmatprep.subr.mxu0 0.0
  %2755 = vmatpush2.msra.mxu0 0.0
  %2756 = vmatprep.subr.mxu0 0.0
  %2757 = vmatpush2.msra.mxu0 0.0
  %2758 = vmatprep.subr.mxu0 0.0
  %2759 = vmatpush2.msra.mxu0 0.0
  %2760 = vmatprep.subr.mxu0 0.0
  %2761 = vmatpush2.msra.mxu0 0.0
  %2762 = vmatprep.subr.mxu0 0.0
  %2763 = vmatpush2.msra.mxu0 0.0
  %2764 = vmatprep.subr.mxu0 0.0
  %2765 = vmatpush2.msra.mxu0 0.0
  %2766 = vmatprep.subr.mxu0 0.0
  %2767 = vmatpush2.msra.mxu0 0.0
  %2768 = vmatprep.subr.mxu0 0.0
  %2769 = vmatpush2.msra.mxu0 0.0
  %2770 = vmatprep.subr.mxu0 0.0
  %2771 = vmatpush2.msra.mxu0 0.0
  %2772 = vmatprep.mubr.f32.mxu0 0.0
  %2773 = vmatmul.mubr.f32.gmra.mxu0 %v2706
  %v2774 = vpop.f32.mrf.mxu0
  %v2775 = vadd.f32 %v2285, %v2774
  %v2776 = vpop.f32.mrf.mxu0
  %v2777 = vadd.f32 %v2289, %v2776
  %2778 = vdwg.mxu0
  %v2780 = vlaneseq
  %v2781 = vshrl.u32 %v2780, 7
  %v2782 = vsub.s32 0, %v2781
  %v2783 = vrot.slane %v2693, %v2782
  %2784 = vrot.lane.b32.xlu0 %v2783, 64
  %v2785 = vpop.permute.xlu0 %2784
  %v2786 = vsel %vm195, %v2785, 0
  %2788 = vmatprep.subr.mxu0 0.0
  %2789 = vmatpush1.msra.mxu0 0.0
  %2790 = vmatprep.subr.mxu0 0.0
  %2791 = vmatpush1.msra.mxu0 0.0
  %2792 = vmatprep.subr.mxu0 0.0
  %2793 = vmatpush1.msra.mxu0 0.0
  %2794 = vmatprep.subr.mxu0 0.0
  %2795 = vmatpush1.msra.mxu0 0.0
  %2796 = vmatprep.subr.mxu0 0.0
  %2797 = vmatpush1.msra.mxu0 0.0
  %2798 = vmatprep.subr.mxu0 0.0
  %2799 = vmatpush1.msra.mxu0 0.0
  %2800 = vmatprep.subr.mxu0 0.0
  %2801 = vmatpush1.msra.mxu0 0.0
  %2802 = vmatprep.subr.mxu0 0.0
  %2803 = vmatpush1.msra.mxu0 0.0
  %2804 = vmatprep.subr.mxu0 %v2276
  %2805 = vmatpush1.msra.mxu0 %v2275
  %2806 = vmatprep.subr.mxu0 %v2274
  %2807 = vmatpush1.msra.mxu0 %v2273
  %2808 = vmatprep.subr.mxu0 %v2272
  %2809 = vmatpush1.msra.mxu0 %v2271
  %2810 = vmatprep.subr.mxu0 %v2270
  %2811 = vmatpush1.msra.mxu0 %v2269
  %2812 = vmatprep.subr.mxu0 %v2268
  %2813 = vmatpush1.msra.mxu0 %v2267
  %2814 = vmatprep.subr.mxu0 %v2266
  %2815 = vmatpush1.msra.mxu0 %v2265
  %2816 = vmatprep.subr.mxu0 %v2264
  %2817 = vmatpush1.msra.mxu0 %v2263
  %2818 = vmatprep.subr.mxu0 %v2262
  %2819 = vmatpush1.msra.mxu0 %v2261
  %2820 = vmatprep.subr.mxu0 0.0
  %2821 = vmatpush2.msra.mxu0 0.0
  %2822 = vmatprep.subr.mxu0 0.0
  %2823 = vmatpush2.msra.mxu0 0.0
  %2824 = vmatprep.subr.mxu0 0.0
  %2825 = vmatpush2.msra.mxu0 0.0
  %2826 = vmatprep.subr.mxu0 0.0
  %2827 = vmatpush2.msra.mxu0 0.0
  %2828 = vmatprep.subr.mxu0 0.0
  %2829 = vmatpush2.msra.mxu0 0.0
  %2830 = vmatprep.subr.mxu0 0.0
  %2831 = vmatpush2.msra.mxu0 0.0
  %2832 = vmatprep.subr.mxu0 0.0
  %2833 = vmatpush2.msra.mxu0 0.0
  %2834 = vmatprep.subr.mxu0 0.0
  %2835 = vmatpush2.msra.mxu0 0.0
  %2836 = vmatprep.subr.mxu0 0.0
  %2837 = vmatpush2.msra.mxu0 0.0
  %2838 = vmatprep.subr.mxu0 0.0
  %2839 = vmatpush2.msra.mxu0 0.0
  %2840 = vmatprep.subr.mxu0 0.0
  %2841 = vmatpush2.msra.mxu0 0.0
  %2842 = vmatprep.subr.mxu0 0.0
  %2843 = vmatpush2.msra.mxu0 0.0
  %2844 = vmatprep.subr.mxu0 0.0
  %2845 = vmatpush2.msra.mxu0 0.0
  %2846 = vmatprep.subr.mxu0 0.0
  %2847 = vmatpush2.msra.mxu0 0.0
  %2848 = vmatprep.subr.mxu0 0.0
  %2849 = vmatpush2.msra.mxu0 0.0
  %2850 = vmatprep.subr.mxu0 0.0
  %2851 = vmatpush2.msra.mxu0 0.0
  %2852 = vmatprep.mubr.f32.mxu0 0.0
  %2853 = vmatmul.mubr.f32.gmra.mxu0 %v2786
  %v2854 = vpop.f32.mrf.mxu0
  %v2855 = vadd.f32 %v2367, %v2854
  %v2856 = vpop.f32.mrf.mxu0
  %v2857 = vadd.f32 %v2371, %v2856
  %2858 = vdwg.mxu0
  %v2859 = vadd.f32 %v2704, %v2775
  %v2860 = vxor.u32 %v2859, 2147483648
  %v2861 = vmul.f32 %v2860, 1.442695
  %v2862 = vpow.pop %v2861
  %v2863 = vadd.f32 %v2862, 1.0
  %v2864 = vrcp.pop %v2863
  %v2865 = vmul.f32 1.0, %v2864
  %v2866 = vmul.f32 %v2865, %v2777
  %v2868 = vrot.slane %v2704, 1
  %v2870 = vadd.f32 %v2868, %v2866
  %v2871 = vtanh.pop %v2870
  %v2872 = vsub.f32 1.0, %v2865
  %2874 = vrot.lane.b32.xlu0 %v2871, 64
  %v2875 = vpop.permute.xlu0 %2874
  %v2877 = vmul.f32 %v2872, %v2875
  %v2878 = vmul.f32 %v2865, %v2672
  %v2879 = vadd.f32 %v2877, %v2878
  %v2880 = vadd.f32 %v2705, %v2855
  %v2881 = vxor.u32 %v2880, 2147483648
  %v2882 = vmul.f32 %v2881, 1.442695
  %v2883 = vpow.pop %v2882
  %v2884 = vadd.f32 %v2883, 1.0
  %v2885 = vrcp.pop %v2884
  %v2886 = vmul.f32 1.0, %v2885
  %v2887 = vmul.f32 %v2886, %v2857
  %v2889 = vrot.slane %v2705, 1
  %v2891 = vadd.f32 %v2889, %v2887
  %v2892 = vtanh.pop %v2891
  %v2893 = vsub.f32 1.0, %v2886
  %2895 = vrot.lane.b32.xlu0 %v2892, 64
  %v2896 = vpop.permute.xlu0 %2895
  %v2898 = vmul.f32 %v2893, %v2896
  %v2899 = vmul.f32 %v2886, %v2693
  %v2900 = vadd.f32 %v2898, %v2899
  %v2902 = vlaneseq
  %v2903 = vshrl.u32 %v2902, 7
  %v2904 = vsub.s32 0, %v2903
  %v2905 = vrot.slane %v2879, %v2904
  %2906 = vrot.lane.b32.xlu0 %v2905, 64
  %v2907 = vpop.permute.xlu0 %2906
  %2909 = vst.msk [vmem:[#allocation4 + $0x2] sm:$0x1] %vm544, %v2907
  %2910 = vst.msk [vmem:[#allocation4 + $0x5] sm:$0x1] %vm546, %v2900
  %v2911 = vld [vmem:[%s966] ss:$8 sm:$0x3]
  %v2912 = vld [vmem:[%s968] ss:$8 sm:$0x3]
  %v2913 = vsel %vm195, %v2907, 0
  %2915 = vmatprep.subr.mxu0 0.0
  %2916 = vmatpush1.msra.mxu0 0.0
  %2917 = vmatprep.subr.mxu0 0.0
  %2918 = vmatpush1.msra.mxu0 0.0
  %2919 = vmatprep.subr.mxu0 0.0
  %2920 = vmatpush1.msra.mxu0 0.0
  %2921 = vmatprep.subr.mxu0 0.0
  %2922 = vmatpush1.msra.mxu0 0.0
  %2923 = vmatprep.subr.mxu0 0.0
  %2924 = vmatpush1.msra.mxu0 0.0
  %2925 = vmatprep.subr.mxu0 0.0
  %2926 = vmatpush1.msra.mxu0 0.0
  %2927 = vmatprep.subr.mxu0 0.0
  %2928 = vmatpush1.msra.mxu0 0.0
  %2929 = vmatprep.subr.mxu0 0.0
  %2930 = vmatpush1.msra.mxu0 0.0
  %2931 = vmatprep.subr.mxu0 %v2260
  %2932 = vmatpush1.msra.mxu0 %v2259
  %2933 = vmatprep.subr.mxu0 %v2258
  %2934 = vmatpush1.msra.mxu0 %v2257
  %2935 = vmatprep.subr.mxu0 %v2256
  %2936 = vmatpush1.msra.mxu0 %v2255
  %2937 = vmatprep.subr.mxu0 %v2254
  %2938 = vmatpush1.msra.mxu0 %v2253
  %2939 = vmatprep.subr.mxu0 %v2252
  %2940 = vmatpush1.msra.mxu0 %v2251
  %2941 = vmatprep.subr.mxu0 %v2250
  %2942 = vmatpush1.msra.mxu0 %v2249
  %2943 = vmatprep.subr.mxu0 %v2248
  %2944 = vmatpush1.msra.mxu0 %v2247
  %2945 = vmatprep.subr.mxu0 %v2246
  %2946 = vmatpush1.msra.mxu0 %v2245
  %2947 = vmatprep.subr.mxu0 0.0
  %2948 = vmatpush2.msra.mxu0 0.0
  %2949 = vmatprep.subr.mxu0 0.0
  %2950 = vmatpush2.msra.mxu0 0.0
  %2951 = vmatprep.subr.mxu0 0.0
  %2952 = vmatpush2.msra.mxu0 0.0
  %2953 = vmatprep.subr.mxu0 0.0
  %2954 = vmatpush2.msra.mxu0 0.0
  %2955 = vmatprep.subr.mxu0 0.0
  %2956 = vmatpush2.msra.mxu0 0.0
  %2957 = vmatprep.subr.mxu0 0.0
  %2958 = vmatpush2.msra.mxu0 0.0
  %2959 = vmatprep.subr.mxu0 0.0
  %2960 = vmatpush2.msra.mxu0 0.0
  %2961 = vmatprep.subr.mxu0 0.0
  %2962 = vmatpush2.msra.mxu0 0.0
  %2963 = vmatprep.subr.mxu0 0.0
  %2964 = vmatpush2.msra.mxu0 0.0
  %2965 = vmatprep.subr.mxu0 0.0
  %2966 = vmatpush2.msra.mxu0 0.0
  %2967 = vmatprep.subr.mxu0 0.0
  %2968 = vmatpush2.msra.mxu0 0.0
  %2969 = vmatprep.subr.mxu0 0.0
  %2970 = vmatpush2.msra.mxu0 0.0
  %2971 = vmatprep.subr.mxu0 0.0
  %2972 = vmatpush2.msra.mxu0 0.0
  %2973 = vmatprep.subr.mxu0 0.0
  %2974 = vmatpush2.msra.mxu0 0.0
  %2975 = vmatprep.subr.mxu0 0.0
  %2976 = vmatpush2.msra.mxu0 0.0
  %2977 = vmatprep.subr.mxu0 0.0
  %2978 = vmatpush2.msra.mxu0 0.0
  %2979 = vmatprep.mubr.f32.mxu0 0.0
  %2980 = vmatmul.mubr.f32.gmra.mxu0 %v2913
  %v2981 = vpop.f32.mrf.mxu0
  %v2982 = vadd.f32 %v2285, %v2981
  %v2983 = vpop.f32.mrf.mxu0
  %v2984 = vadd.f32 %v2289, %v2983
  %2985 = vdwg.mxu0
  %v2987 = vlaneseq
  %v2988 = vshrl.u32 %v2987, 7
  %v2989 = vsub.s32 0, %v2988
  %v2990 = vrot.slane %v2900, %v2989
  %2991 = vrot.lane.b32.xlu0 %v2990, 64
  %v2992 = vpop.permute.xlu0 %2991
  %v2993 = vsel %vm195, %v2992, 0
  %2995 = vmatprep.subr.mxu0 0.0
  %2996 = vmatpush1.msra.mxu0 0.0
  %2997 = vmatprep.subr.mxu0 0.0
  %2998 = vmatpush1.msra.mxu0 0.0
  %2999 = vmatprep.subr.mxu0 0.0
  %3000 = vmatpush1.msra.mxu0 0.0
  %3001 = vmatprep.subr.mxu0 0.0
  %3002 = vmatpush1.msra.mxu0 0.0
  %3003 = vmatprep.subr.mxu0 0.0
  %3004 = vmatpush1.msra.mxu0 0.0
  %3005 = vmatprep.subr.mxu0 0.0
  %3006 = vmatpush1.msra.mxu0 0.0
  %3007 = vmatprep.subr.mxu0 0.0
  %3008 = vmatpush1.msra.mxu0 0.0
  %3009 = vmatprep.subr.mxu0 0.0
  %3010 = vmatpush1.msra.mxu0 0.0
  %3011 = vmatprep.subr.mxu0 %v2276
  %3012 = vmatpush1.msra.mxu0 %v2275
  %3013 = vmatprep.subr.mxu0 %v2274
  %3014 = vmatpush1.msra.mxu0 %v2273
  %3015 = vmatprep.subr.mxu0 %v2272
  %3016 = vmatpush1.msra.mxu0 %v2271
  %3017 = vmatprep.subr.mxu0 %v2270
  %3018 = vmatpush1.msra.mxu0 %v2269
  %3019 = vmatprep.subr.mxu0 %v2268
  %3020 = vmatpush1.msra.mxu0 %v2267
  %3021 = vmatprep.subr.mxu0 %v2266
  %3022 = vmatpush1.msra.mxu0 %v2265
  %3023 = vmatprep.subr.mxu0 %v2264
  %3024 = vmatpush1.msra.mxu0 %v2263
  %3025 = vmatprep.subr.mxu0 %v2262
  %3026 = vmatpush1.msra.mxu0 %v2261
  %3027 = vmatprep.subr.mxu0 0.0
  %3028 = vmatpush2.msra.mxu0 0.0
  %3029 = vmatprep.subr.mxu0 0.0
  %3030 = vmatpush2.msra.mxu0 0.0
  %3031 = vmatprep.subr.mxu0 0.0
  %3032 = vmatpush2.msra.mxu0 0.0
  %3033 = vmatprep.subr.mxu0 0.0
  %3034 = vmatpush2.msra.mxu0 0.0
  %3035 = vmatprep.subr.mxu0 0.0
  %3036 = vmatpush2.msra.mxu0 0.0
  %3037 = vmatprep.subr.mxu0 0.0
  %3038 = vmatpush2.msra.mxu0 0.0
  %3039 = vmatprep.subr.mxu0 0.0
  %3040 = vmatpush2.msra.mxu0 0.0
  %3041 = vmatprep.subr.mxu0 0.0
  %3042 = vmatpush2.msra.mxu0 0.0
  %3043 = vmatprep.subr.mxu0 0.0
  %3044 = vmatpush2.msra.mxu0 0.0
  %3045 = vmatprep.subr.mxu0 0.0
  %3046 = vmatpush2.msra.mxu0 0.0
  %3047 = vmatprep.subr.mxu0 0.0
  %3048 = vmatpush2.msra.mxu0 0.0
  %3049 = vmatprep.subr.mxu0 0.0
  %3050 = vmatpush2.msra.mxu0 0.0
  %3051 = vmatprep.subr.mxu0 0.0
  %3052 = vmatpush2.msra.mxu0 0.0
  %3053 = vmatprep.subr.mxu0 0.0
  %3054 = vmatpush2.msra.mxu0 0.0
  %3055 = vmatprep.subr.mxu0 0.0
  %3056 = vmatpush2.msra.mxu0 0.0
  %3057 = vmatprep.subr.mxu0 0.0
  %3058 = vmatpush2.msra.mxu0 0.0
  %3059 = vmatprep.mubr.f32.mxu0 0.0
  %3060 = vmatmul.mubr.f32.gmra.mxu0 %v2993
  %v3061 = vpop.f32.mrf.mxu0
  %v3062 = vadd.f32 %v2367, %v3061
  %v3063 = vpop.f32.mrf.mxu0
  %v3064 = vadd.f32 %v2371, %v3063
  %3065 = vdwg.mxu0
  %v3066 = vadd.f32 %v2911, %v2982
  %v3067 = vxor.u32 %v3066, 2147483648
  %v3068 = vmul.f32 %v3067, 1.442695
  %v3069 = vpow.pop %v3068
  %v3070 = vadd.f32 %v3069, 1.0
  %v3071 = vrcp.pop %v3070
  %v3072 = vmul.f32 1.0, %v3071
  %v3073 = vmul.f32 %v3072, %v2984
  %v3075 = vrot.slane %v2911, 1
  %v3077 = vadd.f32 %v3075, %v3073
  %v3078 = vtanh.pop %v3077
  %v3079 = vsub.f32 1.0, %v3072
  %3081 = vrot.lane.b32.xlu0 %v3078, 64
  %v3082 = vpop.permute.xlu0 %3081
  %v3084 = vmul.f32 %v3079, %v3082
  %v3085 = vmul.f32 %v3072, %v2879
  %v3086 = vadd.f32 %v3084, %v3085
  %v3087 = vadd.f32 %v2912, %v3062
  %v3088 = vxor.u32 %v3087, 2147483648
  %v3089 = vmul.f32 %v3088, 1.442695
  %v3090 = vpow.pop %v3089
  %v3091 = vadd.f32 %v3090, 1.0
  %v3092 = vrcp.pop %v3091
  %v3093 = vmul.f32 1.0, %v3092
  %v3094 = vmul.f32 %v3093, %v3064
  %v3096 = vrot.slane %v2912, 1
  %v3098 = vadd.f32 %v3096, %v3094
  %v3099 = vtanh.pop %v3098
  %v3100 = vsub.f32 1.0, %v3093
  %3102 = vrot.lane.b32.xlu0 %v3099, 64
  %v3103 = vpop.permute.xlu0 %3102
  %v3105 = vmul.f32 %v3100, %v3103
  %v3106 = vmul.f32 %v3093, %v2900
  %v3107 = vadd.f32 %v3105, %v3106
  %v3109 = vlaneseq
  %v3110 = vshrl.u32 %v3109, 7
  %v3111 = vsub.s32 0, %v3110
  %v3112 = vrot.slane %v3086, %v3111
  %3113 = vrot.lane.b32.xlu0 %v3112, 64
  %v3114 = vpop.permute.xlu0 %3113
  %3116 = vst.msk [vmem:[#allocation4 + $0x3] sm:$0x1] %vm544, %v3114
  %3117 = vst.msk [vmem:[#allocation4 + $0x4] sm:$0x1] %vm546, %v3107
  %v3118 = vld [vmem:[%s1175] ss:$8 sm:$0x3]
  %v3119 = vld [vmem:[%s1177] ss:$8 sm:$0x3]
  %v3120 = vsel %vm195, %v3114, 0
  %3122 = vmatprep.subr.mxu0 0.0
  %3123 = vmatpush1.msra.mxu0 0.0
  %3124 = vmatprep.subr.mxu0 0.0
  %3125 = vmatpush1.msra.mxu0 0.0
  %3126 = vmatprep.subr.mxu0 0.0
  %3127 = vmatpush1.msra.mxu0 0.0
  %3128 = vmatprep.subr.mxu0 0.0
  %3129 = vmatpush1.msra.mxu0 0.0
  %3130 = vmatprep.subr.mxu0 0.0
  %3131 = vmatpush1.msra.mxu0 0.0
  %3132 = vmatprep.subr.mxu0 0.0
  %3133 = vmatpush1.msra.mxu0 0.0
  %3134 = vmatprep.subr.mxu0 0.0
  %3135 = vmatpush1.msra.mxu0 0.0
  %3136 = vmatprep.subr.mxu0 0.0
  %3137 = vmatpush1.msra.mxu0 0.0
  %3138 = vmatprep.subr.mxu0 %v2260
  %3139 = vmatpush1.msra.mxu0 %v2259
  %3140 = vmatprep.subr.mxu0 %v2258
  %3141 = vmatpush1.msra.mxu0 %v2257
  %3142 = vmatprep.subr.mxu0 %v2256
  %3143 = vmatpush1.msra.mxu0 %v2255
  %3144 = vmatprep.subr.mxu0 %v2254
  %3145 = vmatpush1.msra.mxu0 %v2253
  %3146 = vmatprep.subr.mxu0 %v2252
  %3147 = vmatpush1.msra.mxu0 %v2251
  %3148 = vmatprep.subr.mxu0 %v2250
  %3149 = vmatpush1.msra.mxu0 %v2249
  %3150 = vmatprep.subr.mxu0 %v2248
  %3151 = vmatpush1.msra.mxu0 %v2247
  %3152 = vmatprep.subr.mxu0 %v2246
  %3153 = vmatpush1.msra.mxu0 %v2245
  %3154 = vmatprep.subr.mxu0 0.0
  %3155 = vmatpush2.msra.mxu0 0.0
  %3156 = vmatprep.subr.mxu0 0.0
  %3157 = vmatpush2.msra.mxu0 0.0
  %3158 = vmatprep.subr.mxu0 0.0
  %3159 = vmatpush2.msra.mxu0 0.0
  %3160 = vmatprep.subr.mxu0 0.0
  %3161 = vmatpush2.msra.mxu0 0.0
  %3162 = vmatprep.subr.mxu0 0.0
  %3163 = vmatpush2.msra.mxu0 0.0
  %3164 = vmatprep.subr.mxu0 0.0
  %3165 = vmatpush2.msra.mxu0 0.0
  %3166 = vmatprep.subr.mxu0 0.0
  %3167 = vmatpush2.msra.mxu0 0.0
  %3168 = vmatprep.subr.mxu0 0.0
  %3169 = vmatpush2.msra.mxu0 0.0
  %3170 = vmatprep.subr.mxu0 0.0
  %3171 = vmatpush2.msra.mxu0 0.0
  %3172 = vmatprep.subr.mxu0 0.0
  %3173 = vmatpush2.msra.mxu0 0.0
  %3174 = vmatprep.subr.mxu0 0.0
  %3175 = vmatpush2.msra.mxu0 0.0
  %3176 = vmatprep.subr.mxu0 0.0
  %3177 = vmatpush2.msra.mxu0 0.0
  %3178 = vmatprep.subr.mxu0 0.0
  %3179 = vmatpush2.msra.mxu0 0.0
  %3180 = vmatprep.subr.mxu0 0.0
  %3181 = vmatpush2.msra.mxu0 0.0
  %3182 = vmatprep.subr.mxu0 0.0
  %3183 = vmatpush2.msra.mxu0 0.0
  %3184 = vmatprep.subr.mxu0 0.0
  %3185 = vmatpush2.msra.mxu0 0.0
  %3186 = vmatprep.mubr.f32.mxu0 0.0
  %3187 = vmatmul.mubr.f32.gmra.mxu0 %v3120
  %v3188 = vpop.f32.mrf.mxu0
  %v3189 = vadd.f32 %v2285, %v3188
  %v3190 = vpop.f32.mrf.mxu0
  %v3191 = vadd.f32 %v2289, %v3190
  %3192 = vdwg.mxu0
  %v3194 = vlaneseq
  %v3195 = vshrl.u32 %v3194, 7
  %v3196 = vsub.s32 0, %v3195
  %v3197 = vrot.slane %v3107, %v3196
  %3198 = vrot.lane.b32.xlu0 %v3197, 64
  %v3199 = vpop.permute.xlu0 %3198
  %v3200 = vsel %vm195, %v3199, 0
  %3202 = vmatprep.subr.mxu0 0.0
  %3203 = vmatpush1.msra.mxu0 0.0
  %3204 = vmatprep.subr.mxu0 0.0
  %3205 = vmatpush1.msra.mxu0 0.0
  %3206 = vmatprep.subr.mxu0 0.0
  %3207 = vmatpush1.msra.mxu0 0.0
  %3208 = vmatprep.subr.mxu0 0.0
  %3209 = vmatpush1.msra.mxu0 0.0
  %3210 = vmatprep.subr.mxu0 0.0
  %3211 = vmatpush1.msra.mxu0 0.0
  %3212 = vmatprep.subr.mxu0 0.0
  %3213 = vmatpush1.msra.mxu0 0.0
  %3214 = vmatprep.subr.mxu0 0.0
  %3215 = vmatpush1.msra.mxu0 0.0
  %3216 = vmatprep.subr.mxu0 0.0
  %3217 = vmatpush1.msra.mxu0 0.0
  %3218 = vmatprep.subr.mxu0 %v2276
  %3219 = vmatpush1.msra.mxu0 %v2275
  %3220 = vmatprep.subr.mxu0 %v2274
  %3221 = vmatpush1.msra.mxu0 %v2273
  %3222 = vmatprep.subr.mxu0 %v2272
  %3223 = vmatpush1.msra.mxu0 %v2271
  %3224 = vmatprep.subr.mxu0 %v2270
  %3225 = vmatpush1.msra.mxu0 %v2269
  %3226 = vmatprep.subr.mxu0 %v2268
  %3227 = vmatpush1.msra.mxu0 %v2267
  %3228 = vmatprep.subr.mxu0 %v2266
  %3229 = vmatpush1.msra.mxu0 %v2265
  %3230 = vmatprep.subr.mxu0 %v2264
  %3231 = vmatpush1.msra.mxu0 %v2263
  %3232 = vmatprep.subr.mxu0 %v2262
  %3233 = vmatpush1.msra.mxu0 %v2261
  %3234 = vmatprep.subr.mxu0 0.0
  %3235 = vmatpush2.msra.mxu0 0.0
  %3236 = vmatprep.subr.mxu0 0.0
  %3237 = vmatpush2.msra.mxu0 0.0
  %3238 = vmatprep.subr.mxu0 0.0
  %3239 = vmatpush2.msra.mxu0 0.0
  %3240 = vmatprep.subr.mxu0 0.0
  %3241 = vmatpush2.msra.mxu0 0.0
  %3242 = vmatprep.subr.mxu0 0.0
  %3243 = vmatpush2.msra.mxu0 0.0
  %3244 = vmatprep.subr.mxu0 0.0
  %3245 = vmatpush2.msra.mxu0 0.0
  %3246 = vmatprep.subr.mxu0 0.0
  %3247 = vmatpush2.msra.mxu0 0.0
  %3248 = vmatprep.subr.mxu0 0.0
  %3249 = vmatpush2.msra.mxu0 0.0
  %3250 = vmatprep.subr.mxu0 0.0
  %3251 = vmatpush2.msra.mxu0 0.0
  %3252 = vmatprep.subr.mxu0 0.0
  %3253 = vmatpush2.msra.mxu0 0.0
  %3254 = vmatprep.subr.mxu0 0.0
  %3255 = vmatpush2.msra.mxu0 0.0
  %3256 = vmatprep.subr.mxu0 0.0
  %3257 = vmatpush2.msra.mxu0 0.0
  %3258 = vmatprep.subr.mxu0 0.0
  %3259 = vmatpush2.msra.mxu0 0.0
  %3260 = vmatprep.subr.mxu0 0.0
  %3261 = vmatpush2.msra.mxu0 0.0
  %3262 = vmatprep.subr.mxu0 0.0
  %3263 = vmatpush2.msra.mxu0 0.0
  %3264 = vmatprep.subr.mxu0 0.0
  %3265 = vmatpush2.msra.mxu0 0.0
  %3266 = vmatprep.mubr.f32.mxu0 0.0
  %3267 = vmatmul.mubr.f32.gmra.mxu0 %v3200
  %v3268 = vpop.f32.mrf.mxu0
  %v3269 = vadd.f32 %v2367, %v3268
  %v3270 = vpop.f32.mrf.mxu0
  %v3271 = vadd.f32 %v2371, %v3270
  %3272 = vdwg.mxu0
  %v3273 = vadd.f32 %v3118, %v3189
  %v3274 = vxor.u32 %v3273, 2147483648
  %v3275 = vmul.f32 %v3274, 1.442695
  %v3276 = vpow.pop %v3275
  %v3277 = vadd.f32 %v3276, 1.0
  %v3278 = vrcp.pop %v3277
  %v3279 = vmul.f32 1.0, %v3278
  %v3280 = vmul.f32 %v3279, %v3191
  %v3282 = vrot.slane %v3118, 1
  %v3284 = vadd.f32 %v3282, %v3280
  %v3285 = vtanh.pop %v3284
  %v3286 = vsub.f32 1.0, %v3279
  %3288 = vrot.lane.b32.xlu0 %v3285, 64
  %v3289 = vpop.permute.xlu0 %3288
  %v3291 = vmul.f32 %v3286, %v3289
  %v3292 = vmul.f32 %v3279, %v3086
  %v3293 = vadd.f32 %v3291, %v3292
  %v3294 = vadd.f32 %v3119, %v3269
  %v3295 = vxor.u32 %v3294, 2147483648
  %v3296 = vmul.f32 %v3295, 1.442695
  %v3297 = vpow.pop %v3296
  %v3298 = vadd.f32 %v3297, 1.0
  %v3299 = vrcp.pop %v3298
  %v3300 = vmul.f32 1.0, %v3299
  %v3301 = vmul.f32 %v3300, %v3271
  %v3303 = vrot.slane %v3119, 1
  %v3305 = vadd.f32 %v3303, %v3301
  %v3306 = vtanh.pop %v3305
  %v3307 = vsub.f32 1.0, %v3300
  %3309 = vrot.lane.b32.xlu0 %v3306, 64
  %v3310 = vpop.permute.xlu0 %3309
  %v3312 = vmul.f32 %v3307, %v3310
  %v3313 = vmul.f32 %v3300, %v3107
  %v3314 = vadd.f32 %v3312, %v3313
  %v3316 = vlaneseq
  %v3317 = vshrl.u32 %v3316, 7
  %v3318 = vsub.s32 0, %v3317
  %v3319 = vrot.slane %v3293, %v3318
  %3320 = vrot.lane.b32.xlu0 %v3319, 64
  %v3321 = vpop.permute.xlu0 %3320
  %3323 = vst.msk [vmem:[#allocation4 + $0x4] sm:$0x1] %vm544, %v3321
  %3324 = vst.msk [vmem:[#allocation4 + $0x3] sm:$0x1] %vm546, %v3314
  %v3325 = vld [vmem:[%s1384] ss:$8 sm:$0x3]
  %v3326 = vld [vmem:[%s1386] ss:$8 sm:$0x3]
  %v3327 = vsel %vm195, %v3321, 0
  %3329 = vmatprep.subr.mxu0 0.0
  %3330 = vmatpush1.msra.mxu0 0.0
  %3331 = vmatprep.subr.mxu0 0.0
  %3332 = vmatpush1.msra.mxu0 0.0
  %3333 = vmatprep.subr.mxu0 0.0
  %3334 = vmatpush1.msra.mxu0 0.0
  %3335 = vmatprep.subr.mxu0 0.0
  %3336 = vmatpush1.msra.mxu0 0.0
  %3337 = vmatprep.subr.mxu0 0.0
  %3338 = vmatpush1.msra.mxu0 0.0
  %3339 = vmatprep.subr.mxu0 0.0
  %3340 = vmatpush1.msra.mxu0 0.0
  %3341 = vmatprep.subr.mxu0 0.0
  %3342 = vmatpush1.msra.mxu0 0.0
  %3343 = vmatprep.subr.mxu0 0.0
  %3344 = vmatpush1.msra.mxu0 0.0
  %3345 = vmatprep.subr.mxu0 %v2260
  %3346 = vmatpush1.msra.mxu0 %v2259
  %3347 = vmatprep.subr.mxu0 %v2258
  %3348 = vmatpush1.msra.mxu0 %v2257
  %3349 = vmatprep.subr.mxu0 %v2256
  %3350 = vmatpush1.msra.mxu0 %v2255
  %3351 = vmatprep.subr.mxu0 %v2254
  %3352 = vmatpush1.msra.mxu0 %v2253
  %3353 = vmatprep.subr.mxu0 %v2252
  %3354 = vmatpush1.msra.mxu0 %v2251
  %3355 = vmatprep.subr.mxu0 %v2250
  %3356 = vmatpush1.msra.mxu0 %v2249
  %3357 = vmatprep.subr.mxu0 %v2248
  %3358 = vmatpush1.msra.mxu0 %v2247
  %3359 = vmatprep.subr.mxu0 %v2246
  %3360 = vmatpush1.msra.mxu0 %v2245
  %3361 = vmatprep.subr.mxu0 0.0
  %3362 = vmatpush2.msra.mxu0 0.0
  %3363 = vmatprep.subr.mxu0 0.0
  %3364 = vmatpush2.msra.mxu0 0.0
  %3365 = vmatprep.subr.mxu0 0.0
  %3366 = vmatpush2.msra.mxu0 0.0
  %3367 = vmatprep.subr.mxu0 0.0
  %3368 = vmatpush2.msra.mxu0 0.0
  %3369 = vmatprep.subr.mxu0 0.0
  %3370 = vmatpush2.msra.mxu0 0.0
  %3371 = vmatprep.subr.mxu0 0.0
  %3372 = vmatpush2.msra.mxu0 0.0
  %3373 = vmatprep.subr.mxu0 0.0
  %3374 = vmatpush2.msra.mxu0 0.0
  %3375 = vmatprep.subr.mxu0 0.0
  %3376 = vmatpush2.msra.mxu0 0.0
  %3377 = vmatprep.subr.mxu0 0.0
  %3378 = vmatpush2.msra.mxu0 0.0
  %3379 = vmatprep.subr.mxu0 0.0
  %3380 = vmatpush2.msra.mxu0 0.0
  %3381 = vmatprep.subr.mxu0 0.0
  %3382 = vmatpush2.msra.mxu0 0.0
  %3383 = vmatprep.subr.mxu0 0.0
  %3384 = vmatpush2.msra.mxu0 0.0
  %3385 = vmatprep.subr.mxu0 0.0
  %3386 = vmatpush2.msra.mxu0 0.0
  %3387 = vmatprep.subr.mxu0 0.0
  %3388 = vmatpush2.msra.mxu0 0.0
  %3389 = vmatprep.subr.mxu0 0.0
  %3390 = vmatpush2.msra.mxu0 0.0
  %3391 = vmatprep.subr.mxu0 0.0
  %3392 = vmatpush2.msra.mxu0 0.0
  %3393 = vmatprep.mubr.f32.mxu0 0.0
  %3394 = vmatmul.mubr.f32.gmra.mxu0 %v3327
  %v3395 = vpop.f32.mrf.mxu0
  %v3396 = vadd.f32 %v2285, %v3395
  %v3397 = vpop.f32.mrf.mxu0
  %v3398 = vadd.f32 %v2289, %v3397
  %3399 = vdwg.mxu0
  %v3401 = vlaneseq
  %v3402 = vshrl.u32 %v3401, 7
  %v3403 = vsub.s32 0, %v3402
  %v3404 = vrot.slane %v3314, %v3403
  %3405 = vrot.lane.b32.xlu0 %v3404, 64
  %v3406 = vpop.permute.xlu0 %3405
  %v3407 = vsel %vm195, %v3406, 0
  %3409 = vmatprep.subr.mxu0 0.0
  %3410 = vmatpush1.msra.mxu0 0.0
  %3411 = vmatprep.subr.mxu0 0.0
  %3412 = vmatpush1.msra.mxu0 0.0
  %3413 = vmatprep.subr.mxu0 0.0
  %3414 = vmatpush1.msra.mxu0 0.0
  %3415 = vmatprep.subr.mxu0 0.0
  %3416 = vmatpush1.msra.mxu0 0.0
  %3417 = vmatprep.subr.mxu0 0.0
  %3418 = vmatpush1.msra.mxu0 0.0
  %3419 = vmatprep.subr.mxu0 0.0
  %3420 = vmatpush1.msra.mxu0 0.0
  %3421 = vmatprep.subr.mxu0 0.0
  %3422 = vmatpush1.msra.mxu0 0.0
  %3423 = vmatprep.subr.mxu0 0.0
  %3424 = vmatpush1.msra.mxu0 0.0
  %3425 = vmatprep.subr.mxu0 %v2276
  %3426 = vmatpush1.msra.mxu0 %v2275
  %3427 = vmatprep.subr.mxu0 %v2274
  %3428 = vmatpush1.msra.mxu0 %v2273
  %3429 = vmatprep.subr.mxu0 %v2272
  %3430 = vmatpush1.msra.mxu0 %v2271
  %3431 = vmatprep.subr.mxu0 %v2270
  %3432 = vmatpush1.msra.mxu0 %v2269
  %3433 = vmatprep.subr.mxu0 %v2268
  %3434 = vmatpush1.msra.mxu0 %v2267
  %3435 = vmatprep.subr.mxu0 %v2266
  %3436 = vmatpush1.msra.mxu0 %v2265
  %3437 = vmatprep.subr.mxu0 %v2264
  %3438 = vmatpush1.msra.mxu0 %v2263
  %3439 = vmatprep.subr.mxu0 %v2262
  %3440 = vmatpush1.msra.mxu0 %v2261
  %3441 = vmatprep.subr.mxu0 0.0
  %3442 = vmatpush2.msra.mxu0 0.0
  %3443 = vmatprep.subr.mxu0 0.0
  %3444 = vmatpush2.msra.mxu0 0.0
  %3445 = vmatprep.subr.mxu0 0.0
  %3446 = vmatpush2.msra.mxu0 0.0
  %3447 = vmatprep.subr.mxu0 0.0
  %3448 = vmatpush2.msra.mxu0 0.0
  %3449 = vmatprep.subr.mxu0 0.0
  %3450 = vmatpush2.msra.mxu0 0.0
  %3451 = vmatprep.subr.mxu0 0.0
  %3452 = vmatpush2.msra.mxu0 0.0
  %3453 = vmatprep.subr.mxu0 0.0
  %3454 = vmatpush2.msra.mxu0 0.0
  %3455 = vmatprep.subr.mxu0 0.0
  %3456 = vmatpush2.msra.mxu0 0.0
  %3457 = vmatprep.subr.mxu0 0.0
  %3458 = vmatpush2.msra.mxu0 0.0
  %3459 = vmatprep.subr.mxu0 0.0
  %3460 = vmatpush2.msra.mxu0 0.0
  %3461 = vmatprep.subr.mxu0 0.0
  %3462 = vmatpush2.msra.mxu0 0.0
  %3463 = vmatprep.subr.mxu0 0.0
  %3464 = vmatpush2.msra.mxu0 0.0
  %3465 = vmatprep.subr.mxu0 0.0
  %3466 = vmatpush2.msra.mxu0 0.0
  %3467 = vmatprep.subr.mxu0 0.0
  %3468 = vmatpush2.msra.mxu0 0.0
  %3469 = vmatprep.subr.mxu0 0.0
  %3470 = vmatpush2.msra.mxu0 0.0
  %3471 = vmatprep.subr.mxu0 0.0
  %3472 = vmatpush2.msra.mxu0 0.0
  %3473 = vmatprep.mubr.f32.mxu0 0.0
  %3474 = vmatmul.mubr.f32.gmra.mxu0 %v3407
  %v3475 = vpop.f32.mrf.mxu0
  %v3476 = vadd.f32 %v2367, %v3475
  %v3477 = vpop.f32.mrf.mxu0
  %v3478 = vadd.f32 %v2371, %v3477
  %3479 = vdwg.mxu0
  %v3480 = vadd.f32 %v3325, %v3396
  %v3481 = vxor.u32 %v3480, 2147483648
  %v3482 = vmul.f32 %v3481, 1.442695
  %v3483 = vpow.pop %v3482
  %v3484 = vadd.f32 %v3483, 1.0
  %v3485 = vrcp.pop %v3484
  %v3486 = vmul.f32 1.0, %v3485
  %v3487 = vmul.f32 %v3486, %v3398
  %v3489 = vrot.slane %v3325, 1
  %v3491 = vadd.f32 %v3489, %v3487
  %v3492 = vtanh.pop %v3491
  %v3493 = vsub.f32 1.0, %v3486
  %3495 = vrot.lane.b32.xlu0 %v3492, 64
  %v3496 = vpop.permute.xlu0 %3495
  %v3498 = vmul.f32 %v3493, %v3496
  %v3499 = vmul.f32 %v3486, %v3293
  %v3500 = vadd.f32 %v3498, %v3499
  %v3501 = vadd.f32 %v3326, %v3476
  %v3502 = vxor.u32 %v3501, 2147483648
  %v3503 = vmul.f32 %v3502, 1.442695
  %v3504 = vpow.pop %v3503
  %v3505 = vadd.f32 %v3504, 1.0
  %v3506 = vrcp.pop %v3505
  %v3507 = vmul.f32 1.0, %v3506
  %v3508 = vmul.f32 %v3507, %v3478
  %v3510 = vrot.slane %v3326, 1
  %v3512 = vadd.f32 %v3510, %v3508
  %v3513 = vtanh.pop %v3512
  %v3514 = vsub.f32 1.0, %v3507
  %3516 = vrot.lane.b32.xlu0 %v3513, 64
  %v3517 = vpop.permute.xlu0 %3516
  %v3519 = vmul.f32 %v3514, %v3517
  %v3520 = vmul.f32 %v3507, %v3314
  %v3521 = vadd.f32 %v3519, %v3520
  %v3523 = vlaneseq
  %v3524 = vshrl.u32 %v3523, 7
  %v3525 = vsub.s32 0, %v3524
  %v3526 = vrot.slane %v3500, %v3525
  %3527 = vrot.lane.b32.xlu0 %v3526, 64
  %v3528 = vpop.permute.xlu0 %3527
  %3530 = vst.msk [vmem:[#allocation4 + $0x5] sm:$0x1] %vm544, %v3528
  %3531 = vst.msk [vmem:[#allocation4 + $0x2] sm:$0x1] %vm546, %v3521
  %v3532 = vld [vmem:[%s1593] ss:$8 sm:$0x3]
  %v3533 = vld [vmem:[%s1595] ss:$8 sm:$0x3]
  %v3534 = vsel %vm195, %v3528, 0
  %3536 = vmatprep.subr.mxu0 0.0
  %3537 = vmatpush1.msra.mxu0 0.0
  %3538 = vmatprep.subr.mxu0 0.0
  %3539 = vmatpush1.msra.mxu0 0.0
  %3540 = vmatprep.subr.mxu0 0.0
  %3541 = vmatpush1.msra.mxu0 0.0
  %3542 = vmatprep.subr.mxu0 0.0
  %3543 = vmatpush1.msra.mxu0 0.0
  %3544 = vmatprep.subr.mxu0 0.0
  %3545 = vmatpush1.msra.mxu0 0.0
  %3546 = vmatprep.subr.mxu0 0.0
  %3547 = vmatpush1.msra.mxu0 0.0
  %3548 = vmatprep.subr.mxu0 0.0
  %3549 = vmatpush1.msra.mxu0 0.0
  %3550 = vmatprep.subr.mxu0 0.0
  %3551 = vmatpush1.msra.mxu0 0.0
  %3552 = vmatprep.subr.mxu0 %v2260
  %3553 = vmatpush1.msra.mxu0 %v2259
  %3554 = vmatprep.subr.mxu0 %v2258
  %3555 = vmatpush1.msra.mxu0 %v2257
  %3556 = vmatprep.subr.mxu0 %v2256
  %3557 = vmatpush1.msra.mxu0 %v2255
  %3558 = vmatprep.subr.mxu0 %v2254
  %3559 = vmatpush1.msra.mxu0 %v2253
  %3560 = vmatprep.subr.mxu0 %v2252
  %3561 = vmatpush1.msra.mxu0 %v2251
  %3562 = vmatprep.subr.mxu0 %v2250
  %3563 = vmatpush1.msra.mxu0 %v2249
  %3564 = vmatprep.subr.mxu0 %v2248
  %3565 = vmatpush1.msra.mxu0 %v2247
  %3566 = vmatprep.subr.mxu0 %v2246
  %3567 = vmatpush1.msra.mxu0 %v2245
  %3568 = vmatprep.subr.mxu0 0.0
  %3569 = vmatpush2.msra.mxu0 0.0
  %3570 = vmatprep.subr.mxu0 0.0
  %3571 = vmatpush2.msra.mxu0 0.0
  %3572 = vmatprep.subr.mxu0 0.0
  %3573 = vmatpush2.msra.mxu0 0.0
  %3574 = vmatprep.subr.mxu0 0.0
  %3575 = vmatpush2.msra.mxu0 0.0
  %3576 = vmatprep.subr.mxu0 0.0
  %3577 = vmatpush2.msra.mxu0 0.0
  %3578 = vmatprep.subr.mxu0 0.0
  %3579 = vmatpush2.msra.mxu0 0.0
  %3580 = vmatprep.subr.mxu0 0.0
  %3581 = vmatpush2.msra.mxu0 0.0
  %3582 = vmatprep.subr.mxu0 0.0
  %3583 = vmatpush2.msra.mxu0 0.0
  %3584 = vmatprep.subr.mxu0 0.0
  %3585 = vmatpush2.msra.mxu0 0.0
  %3586 = vmatprep.subr.mxu0 0.0
  %3587 = vmatpush2.msra.mxu0 0.0
  %3588 = vmatprep.subr.mxu0 0.0
  %3589 = vmatpush2.msra.mxu0 0.0
  %3590 = vmatprep.subr.mxu0 0.0
  %3591 = vmatpush2.msra.mxu0 0.0
  %3592 = vmatprep.subr.mxu0 0.0
  %3593 = vmatpush2.msra.mxu0 0.0
  %3594 = vmatprep.subr.mxu0 0.0
  %3595 = vmatpush2.msra.mxu0 0.0
  %3596 = vmatprep.subr.mxu0 0.0
  %3597 = vmatpush2.msra.mxu0 0.0
  %3598 = vmatprep.subr.mxu0 0.0
  %3599 = vmatpush2.msra.mxu0 0.0
  %3600 = vmatprep.mubr.f32.mxu0 0.0
  %3601 = vmatmul.mubr.f32.gmra.mxu0 %v3534
  %v3602 = vpop.f32.mrf.mxu0
  %v3603 = vadd.f32 %v2285, %v3602
  %v3604 = vpop.f32.mrf.mxu0
  %v3605 = vadd.f32 %v2289, %v3604
  %3606 = vdwg.mxu0
  %v3608 = vlaneseq
  %v3609 = vshrl.u32 %v3608, 7
  %v3610 = vsub.s32 0, %v3609
  %v3611 = vrot.slane %v3521, %v3610
  %3612 = vrot.lane.b32.xlu0 %v3611, 64
  %v3613 = vpop.permute.xlu0 %3612
  %v3614 = vsel %vm195, %v3613, 0
  %3616 = vmatprep.subr.mxu0 0.0
  %3617 = vmatpush1.msra.mxu0 0.0
  %3618 = vmatprep.subr.mxu0 0.0
  %3619 = vmatpush1.msra.mxu0 0.0
  %3620 = vmatprep.subr.mxu0 0.0
  %3621 = vmatpush1.msra.mxu0 0.0
  %3622 = vmatprep.subr.mxu0 0.0
  %3623 = vmatpush1.msra.mxu0 0.0
  %3624 = vmatprep.subr.mxu0 0.0
  %3625 = vmatpush1.msra.mxu0 0.0
  %3626 = vmatprep.subr.mxu0 0.0
  %3627 = vmatpush1.msra.mxu0 0.0
  %3628 = vmatprep.subr.mxu0 0.0
  %3629 = vmatpush1.msra.mxu0 0.0
  %3630 = vmatprep.subr.mxu0 0.0
  %3631 = vmatpush1.msra.mxu0 0.0
  %3632 = vmatprep.subr.mxu0 %v2276
  %3633 = vmatpush1.msra.mxu0 %v2275
  %3634 = vmatprep.subr.mxu0 %v2274
  %3635 = vmatpush1.msra.mxu0 %v2273
  %3636 = vmatprep.subr.mxu0 %v2272
  %3637 = vmatpush1.msra.mxu0 %v2271
  %3638 = vmatprep.subr.mxu0 %v2270
  %3639 = vmatpush1.msra.mxu0 %v2269
  %3640 = vmatprep.subr.mxu0 %v2268
  %3641 = vmatpush1.msra.mxu0 %v2267
  %3642 = vmatprep.subr.mxu0 %v2266
  %3643 = vmatpush1.msra.mxu0 %v2265
  %3644 = vmatprep.subr.mxu0 %v2264
  %3645 = vmatpush1.msra.mxu0 %v2263
  %3646 = vmatprep.subr.mxu0 %v2262
  %3647 = vmatpush1.msra.mxu0 %v2261
  %3648 = vmatprep.subr.mxu0 0.0
  %3649 = vmatpush2.msra.mxu0 0.0
  %3650 = vmatprep.subr.mxu0 0.0
  %3651 = vmatpush2.msra.mxu0 0.0
  %3652 = vmatprep.subr.mxu0 0.0
  %3653 = vmatpush2.msra.mxu0 0.0
  %3654 = vmatprep.subr.mxu0 0.0
  %3655 = vmatpush2.msra.mxu0 0.0
  %3656 = vmatprep.subr.mxu0 0.0
  %3657 = vmatpush2.msra.mxu0 0.0
  %3658 = vmatprep.subr.mxu0 0.0
  %3659 = vmatpush2.msra.mxu0 0.0
  %3660 = vmatprep.subr.mxu0 0.0
  %3661 = vmatpush2.msra.mxu0 0.0
  %3662 = vmatprep.subr.mxu0 0.0
  %3663 = vmatpush2.msra.mxu0 0.0
  %3664 = vmatprep.subr.mxu0 0.0
  %3665 = vmatpush2.msra.mxu0 0.0
  %3666 = vmatprep.subr.mxu0 0.0
  %3667 = vmatpush2.msra.mxu0 0.0
  %3668 = vmatprep.subr.mxu0 0.0
  %3669 = vmatpush2.msra.mxu0 0.0
  %3670 = vmatprep.subr.mxu0 0.0
  %3671 = vmatpush2.msra.mxu0 0.0
  %3672 = vmatprep.subr.mxu0 0.0
  %3673 = vmatpush2.msra.mxu0 0.0
  %3674 = vmatprep.subr.mxu0 0.0
  %3675 = vmatpush2.msra.mxu0 0.0
  %3676 = vmatprep.subr.mxu0 0.0
  %3677 = vmatpush2.msra.mxu0 0.0
  %3678 = vmatprep.subr.mxu0 0.0
  %3679 = vmatpush2.msra.mxu0 0.0
  %3680 = vmatprep.mubr.f32.mxu0 0.0
  %3681 = vmatmul.mubr.f32.gmra.mxu0 %v3614
  %v3682 = vpop.f32.mrf.mxu0
  %v3683 = vadd.f32 %v2367, %v3682
  %v3684 = vpop.f32.mrf.mxu0
  %v3685 = vadd.f32 %v2371, %v3684
  %3686 = vdwg.mxu0
  %v3687 = vadd.f32 %v3532, %v3603
  %v3688 = vxor.u32 %v3687, 2147483648
  %v3689 = vmul.f32 %v3688, 1.442695
  %v3690 = vpow.pop %v3689
  %v3691 = vadd.f32 %v3690, 1.0
  %v3692 = vrcp.pop %v3691
  %v3693 = vmul.f32 1.0, %v3692
  %v3694 = vmul.f32 %v3693, %v3605
  %v3696 = vrot.slane %v3532, 1
  %v3698 = vadd.f32 %v3696, %v3694
  %v3699 = vtanh.pop %v3698
  %v3700 = vsub.f32 1.0, %v3693
  %3702 = vrot.lane.b32.xlu0 %v3699, 64
  %v3703 = vpop.permute.xlu0 %3702
  %v3705 = vmul.f32 %v3700, %v3703
  %v3706 = vmul.f32 %v3693, %v3500
  %v3707 = vadd.f32 %v3705, %v3706
  %v3708 = vadd.f32 %v3533, %v3683
  %v3709 = vxor.u32 %v3708, 2147483648
  %v3710 = vmul.f32 %v3709, 1.442695
  %v3711 = vpow.pop %v3710
  %v3712 = vadd.f32 %v3711, 1.0
  %v3713 = vrcp.pop %v3712
  %v3714 = vmul.f32 1.0, %v3713
  %v3715 = vmul.f32 %v3714, %v3685
  %v3717 = vrot.slane %v3533, 1
  %v3719 = vadd.f32 %v3717, %v3715
  %v3720 = vtanh.pop %v3719
  %v3721 = vsub.f32 1.0, %v3714
  %3723 = vrot.lane.b32.xlu0 %v3720, 64
  %v3724 = vpop.permute.xlu0 %3723
  %v3726 = vmul.f32 %v3721, %v3724
  %v3727 = vmul.f32 %v3714, %v3521
  %v3728 = vadd.f32 %v3726, %v3727
  %v3730 = vlaneseq
  %v3731 = vshrl.u32 %v3730, 7
  %v3732 = vsub.s32 0, %v3731
  %v3733 = vrot.slane %v3707, %v3732
  %3734 = vrot.lane.b32.xlu0 %v3733, 64
  %v3735 = vpop.permute.xlu0 %3734
  %3737 = vst.msk [vmem:[#allocation4 + $0x6] sm:$0x1] %vm544, %v3735
  %3738 = vst.msk [vmem:[#allocation4 + $0x1] sm:$0x1] %vm546, %v3728
  %v3739 = vld [vmem:[%s1802] ss:$8 sm:$0x3]
  %v3740 = vld [vmem:[#allocation3] ss:$8 sm:$0x3]
  %v3741 = vsel %vm195, %v3735, 0
  %3743 = vmatprep.subr.mxu0 0.0
  %3744 = vmatpush1.msra.mxu0 0.0
  %3745 = vmatprep.subr.mxu0 0.0
  %3746 = vmatpush1.msra.mxu0 0.0
  %3747 = vmatprep.subr.mxu0 0.0
  %3748 = vmatpush1.msra.mxu0 0.0
  %3749 = vmatprep.subr.mxu0 0.0
  %3750 = vmatpush1.msra.mxu0 0.0
  %3751 = vmatprep.subr.mxu0 0.0
  %3752 = vmatpush1.msra.mxu0 0.0
  %3753 = vmatprep.subr.mxu0 0.0
  %3754 = vmatpush1.msra.mxu0 0.0
  %3755 = vmatprep.subr.mxu0 0.0
  %3756 = vmatpush1.msra.mxu0 0.0
  %3757 = vmatprep.subr.mxu0 0.0
  %3758 = vmatpush1.msra.mxu0 0.0
  %3759 = vmatprep.subr.mxu0 %v2260
  %3760 = vmatpush1.msra.mxu0 %v2259
  %3761 = vmatprep.subr.mxu0 %v2258
  %3762 = vmatpush1.msra.mxu0 %v2257
  %3763 = vmatprep.subr.mxu0 %v2256
  %3764 = vmatpush1.msra.mxu0 %v2255
  %3765 = vmatprep.subr.mxu0 %v2254
  %3766 = vmatpush1.msra.mxu0 %v2253
  %3767 = vmatprep.subr.mxu0 %v2252
  %3768 = vmatpush1.msra.mxu0 %v2251
  %3769 = vmatprep.subr.mxu0 %v2250
  %3770 = vmatpush1.msra.mxu0 %v2249
  %3771 = vmatprep.subr.mxu0 %v2248
  %3772 = vmatpush1.msra.mxu0 %v2247
  %3773 = vmatprep.subr.mxu0 %v2246
  %3774 = vmatpush1.msra.mxu0 %v2245
  %3775 = vmatprep.subr.mxu0 0.0
  %3776 = vmatpush2.msra.mxu0 0.0
  %3777 = vmatprep.subr.mxu0 0.0
  %3778 = vmatpush2.msra.mxu0 0.0
  %3779 = vmatprep.subr.mxu0 0.0
  %3780 = vmatpush2.msra.mxu0 0.0
  %3781 = vmatprep.subr.mxu0 0.0
  %3782 = vmatpush2.msra.mxu0 0.0
  %3783 = vmatprep.subr.mxu0 0.0
  %3784 = vmatpush2.msra.mxu0 0.0
  %3785 = vmatprep.subr.mxu0 0.0
  %3786 = vmatpush2.msra.mxu0 0.0
  %3787 = vmatprep.subr.mxu0 0.0
  %3788 = vmatpush2.msra.mxu0 0.0
  %3789 = vmatprep.subr.mxu0 0.0
  %3790 = vmatpush2.msra.mxu0 0.0
  %3791 = vmatprep.subr.mxu0 0.0
  %3792 = vmatpush2.msra.mxu0 0.0
  %3793 = vmatprep.subr.mxu0 0.0
  %3794 = vmatpush2.msra.mxu0 0.0
  %3795 = vmatprep.subr.mxu0 0.0
  %3796 = vmatpush2.msra.mxu0 0.0
  %3797 = vmatprep.subr.mxu0 0.0
  %3798 = vmatpush2.msra.mxu0 0.0
  %3799 = vmatprep.subr.mxu0 0.0
  %3800 = vmatpush2.msra.mxu0 0.0
  %3801 = vmatprep.subr.mxu0 0.0
  %3802 = vmatpush2.msra.mxu0 0.0
  %3803 = vmatprep.subr.mxu0 0.0
  %3804 = vmatpush2.msra.mxu0 0.0
  %3805 = vmatprep.subr.mxu0 0.0
  %3806 = vmatpush2.msra.mxu0 0.0
  %3807 = vmatprep.mubr.f32.mxu0 0.0
  %3808 = vmatmul.mubr.f32.gmra.mxu0 %v3741
  %v3809 = vpop.f32.mrf.mxu0
  %v3810 = vadd.f32 %v2285, %v3809
  %v3811 = vpop.f32.mrf.mxu0
  %v3812 = vadd.f32 %v2289, %v3811
  %3813 = vdwg.mxu0
  %v3815 = vlaneseq
  %v3816 = vshrl.u32 %v3815, 7
  %v3817 = vsub.s32 0, %v3816
  %v3818 = vrot.slane %v3728, %v3817
  %3819 = vrot.lane.b32.xlu0 %v3818, 64
  %v3820 = vpop.permute.xlu0 %3819
  %v3821 = vsel %vm195, %v3820, 0
  %3823 = vmatprep.subr.mxu0 0.0
  %3824 = vmatpush1.msra.mxu0 0.0
  %3825 = vmatprep.subr.mxu0 0.0
  %3826 = vmatpush1.msra.mxu0 0.0
  %3827 = vmatprep.subr.mxu0 0.0
  %3828 = vmatpush1.msra.mxu0 0.0
  %3829 = vmatprep.subr.mxu0 0.0
  %3830 = vmatpush1.msra.mxu0 0.0
  %3831 = vmatprep.subr.mxu0 0.0
  %3832 = vmatpush1.msra.mxu0 0.0
  %3833 = vmatprep.subr.mxu0 0.0
  %3834 = vmatpush1.msra.mxu0 0.0
  %3835 = vmatprep.subr.mxu0 0.0
  %3836 = vmatpush1.msra.mxu0 0.0
  %3837 = vmatprep.subr.mxu0 0.0
  %3838 = vmatpush1.msra.mxu0 0.0
  %3839 = vmatprep.subr.mxu0 %v2276
  %3840 = vmatpush1.msra.mxu0 %v2275
  %3841 = vmatprep.subr.mxu0 %v2274
  %3842 = vmatpush1.msra.mxu0 %v2273
  %3843 = vmatprep.subr.mxu0 %v2272
  %3844 = vmatpush1.msra.mxu0 %v2271
  %3845 = vmatprep.subr.mxu0 %v2270
  %3846 = vmatpush1.msra.mxu0 %v2269
  %3847 = vmatprep.subr.mxu0 %v2268
  %3848 = vmatpush1.msra.mxu0 %v2267
  %3849 = vmatprep.subr.mxu0 %v2266
  %3850 = vmatpush1.msra.mxu0 %v2265
  %3851 = vmatprep.subr.mxu0 %v2264
  %3852 = vmatpush1.msra.mxu0 %v2263
  %3853 = vmatprep.subr.mxu0 %v2262
  %3854 = vmatpush1.msra.mxu0 %v2261
  %3855 = vmatprep.subr.mxu0 0.0
  %3856 = vmatpush2.msra.mxu0 0.0
  %3857 = vmatprep.subr.mxu0 0.0
  %3858 = vmatpush2.msra.mxu0 0.0
  %3859 = vmatprep.subr.mxu0 0.0
  %3860 = vmatpush2.msra.mxu0 0.0
  %3861 = vmatprep.subr.mxu0 0.0
  %3862 = vmatpush2.msra.mxu0 0.0
  %3863 = vmatprep.subr.mxu0 0.0
  %3864 = vmatpush2.msra.mxu0 0.0
  %3865 = vmatprep.subr.mxu0 0.0
  %3866 = vmatpush2.msra.mxu0 0.0
  %3867 = vmatprep.subr.mxu0 0.0
  %3868 = vmatpush2.msra.mxu0 0.0
  %3869 = vmatprep.subr.mxu0 0.0
  %3870 = vmatpush2.msra.mxu0 0.0
  %3871 = vmatprep.subr.mxu0 0.0
  %3872 = vmatpush2.msra.mxu0 0.0
  %3873 = vmatprep.subr.mxu0 0.0
  %3874 = vmatpush2.msra.mxu0 0.0
  %3875 = vmatprep.subr.mxu0 0.0
  %3876 = vmatpush2.msra.mxu0 0.0
  %3877 = vmatprep.subr.mxu0 0.0
  %3878 = vmatpush2.msra.mxu0 0.0
  %3879 = vmatprep.subr.mxu0 0.0
  %3880 = vmatpush2.msra.mxu0 0.0
  %3881 = vmatprep.subr.mxu0 0.0
  %3882 = vmatpush2.msra.mxu0 0.0
  %3883 = vmatprep.subr.mxu0 0.0
  %3884 = vmatpush2.msra.mxu0 0.0
  %3885 = vmatprep.subr.mxu0 0.0
  %3886 = vmatpush2.msra.mxu0 0.0
  %3887 = vmatprep.mubr.f32.mxu0 0.0
  %3888 = vmatmul.mubr.f32.gmra.mxu0 %v3821
  %v3889 = vpop.f32.mrf.mxu0
  %v3890 = vadd.f32 %v2367, %v3889
  %v3891 = vpop.f32.mrf.mxu0
  %v3892 = vadd.f32 %v2371, %v3891
  %3893 = vdwg.mxu0
  %v3894 = vadd.f32 %v3739, %v3810
  %v3895 = vxor.u32 %v3894, 2147483648
  %v3896 = vmul.f32 %v3895, 1.442695
  %v3897 = vpow.pop %v3896
  %v3898 = vadd.f32 %v3897, 1.0
  %v3899 = vrcp.pop %v3898
  %v3900 = vmul.f32 1.0, %v3899
  %v3901 = vmul.f32 %v3900, %v3812
  %v3903 = vrot.slane %v3739, 1
  %v3905 = vadd.f32 %v3903, %v3901
  %v3906 = vtanh.pop %v3905
  %v3907 = vsub.f32 1.0, %v3900
  %3909 = vrot.lane.b32.xlu0 %v3906, 64
  %v3910 = vpop.permute.xlu0 %3909
  %v3912 = vmul.f32 %v3907, %v3910
  %v3913 = vmul.f32 %v3900, %v3707
  %v3914 = vadd.f32 %v3912, %v3913
  %v3915 = vadd.f32 %v3740, %v3890
  %v3916 = vxor.u32 %v3915, 2147483648
  %v3917 = vmul.f32 %v3916, 1.442695
  %v3918 = vpow.pop %v3917
  %v3919 = vadd.f32 %v3918, 1.0
  %v3920 = vrcp.pop %v3919
  %v3921 = vmul.f32 1.0, %v3920
  %v3922 = vmul.f32 %v3921, %v3892
  %v3924 = vrot.slane %v3740, 1
  %v3926 = vadd.f32 %v3924, %v3922
  %v3927 = vtanh.pop %v3926
  %v3928 = vsub.f32 1.0, %v3921
  %3930 = vrot.lane.b32.xlu0 %v3927, 64
  %v3931 = vpop.permute.xlu0 %3930
  %v3933 = vmul.f32 %v3928, %v3931
  %v3934 = vmul.f32 %v3921, %v3728
  %v3935 = vadd.f32 %v3933, %v3934
  %v3937 = vlaneseq
  %v3938 = vshrl.u32 %v3937, 7
  %v3939 = vsub.s32 0, %v3938
  %v3940 = vrot.slane %v3914, %v3939
  %3941 = vrot.lane.b32.xlu0 %v3940, 64
  %v3942 = vpop.permute.xlu0 %3941
  %3944 = vst.msk [vmem:[#allocation4 + $0x7] sm:$0x1] %vm544, %v3942
  %3945 = vst.msk [vmem:[#allocation4] sm:$0x1] %vm546, %v3935
  %v3946 = vld [vmem:[#allocation4] sm:$0xff]
  %v3947 = vld [vmem:[%s17] sm:$0xff]
  %v3948 = vld [vmem:[%s17 + $0x8] sm:$0xff]
  %v3949 = vld [vmem:[%s17 + $0x10] sm:$0xff]
  %v3950 = vld [vmem:[%s17 + $0x18] sm:$0xff]
  %v3951 = vld [vmem:[%s17 + $0x20] sm:$0xff]
  %v3952 = vld [vmem:[%s17 + $0x28] sm:$0xff]
  %v3953 = vld [vmem:[%s17 + $0x30] sm:$0xff]
  %v3954 = vld [vmem:[%s17 + $0x38] sm:$0xff]
  %v3955 = vld [vmem:[%s17 + $0x40] sm:$0xff]
  %v3956 = vld [vmem:[%s17 + $0x48] sm:$0xff]
  %v3957 = vld [vmem:[%s17 + $0x50] sm:$0xff]
  %v3958 = vld [vmem:[%s17 + $0x58] sm:$0xff]
  %v3959 = vld [vmem:[%s17 + $0x60] sm:$0xff]
  %v3960 = vld [vmem:[%s17 + $0x68] sm:$0xff]
  %v3961 = vld [vmem:[%s17 + $0x70] sm:$0xff]
  %v3962 = vld [vmem:[%s17 + $0x78] sm:$0xff]
  %v3963 = vld [vmem:[%s17 + $0x80] sm:$0xff]
  %v3964 = vld [vmem:[%s17 + $0x88] sm:$0xff]
  %v3965 = vld [vmem:[%s17 + $0x90] sm:$0xff]
  %v3966 = vld [vmem:[%s17 + $0x98] sm:$0xff]
  %v3967 = vld [vmem:[%s17 + $0xa0] sm:$0xff]
  %v3968 = vld [vmem:[%s17 + $0xa8] sm:$0xff]
  %v3969 = vld [vmem:[%s17 + $0xb0] sm:$0xff]
  %v3970 = vld [vmem:[%s17 + $0xb8] sm:$0xff]
  %v3971 = vld [vmem:[%s17 + $0xc0] sm:$0xff]
  %v3972 = vld [vmem:[%s17 + $0xc8] sm:$0xff]
  %v3973 = vld [vmem:[%s17 + $0xd0] sm:$0xff]
  %v3974 = vld [vmem:[%s17 + $0xd8] sm:$0xff]
  %v3975 = vld [vmem:[%s17 + $0xe0] sm:$0xff]
  %v3976 = vld [vmem:[%s17 + $0xe8] sm:$0xff]
  %v3977 = vld [vmem:[%s17 + $0xf0] sm:$0xff]
  %v3978 = vld [vmem:[%s17 + $0xf8] sm:$0xff]
  %v3979 = vld [vmem:[%s19] sm:$0x3]
  %v3981 = vlaneseq
  %v3982 = vshrl.u32 %v3981, 7
  %v3983 = vsub.s32 0, %v3982
  %v3984 = vrot.slane %v3979, %v3983
  %v3985 = vlaneseq
  %v3986 = vshrl.u32 %v3985, 7
  %v3987 = vsub.s32 1, %v3986
  %v3988 = vrot.slane %v3979, %v3987
  %3991 = vmatprep.subr.mxu0 %v3978
  %3992 = vmatpush1.msra.mxu0 %v3977
  %3993 = vmatprep.subr.mxu0 %v3976
  %3994 = vmatpush1.msra.mxu0 %v3975
  %3995 = vmatprep.subr.mxu0 %v3974
  %3996 = vmatpush1.msra.mxu0 %v3973
  %3997 = vmatprep.subr.mxu0 %v3972
  %3998 = vmatpush1.msra.mxu0 %v3971
  %3999 = vmatprep.subr.mxu0 %v3970
  %4000 = vmatpush1.msra.mxu0 %v3969
  %4001 = vmatprep.subr.mxu0 %v3968
  %4002 = vmatpush1.msra.mxu0 %v3967
  %4003 = vmatprep.subr.mxu0 %v3966
  %4004 = vmatpush1.msra.mxu0 %v3965
  %4005 = vmatprep.subr.mxu0 %v3964
  %4006 = vmatpush1.msra.mxu0 %v3963
  %4007 = vmatprep.subr.mxu0 %v3962
  %4008 = vmatpush1.msra.mxu0 %v3961
  %4009 = vmatprep.subr.mxu0 %v3960
  %4010 = vmatpush1.msra.mxu0 %v3959
  %4011 = vmatprep.subr.mxu0 %v3958
  %4012 = vmatpush1.msra.mxu0 %v3957
  %4013 = vmatprep.subr.mxu0 %v3956
  %4014 = vmatpush1.msra.mxu0 %v3955
  %4015 = vmatprep.subr.mxu0 %v3954
  %4016 = vmatpush1.msra.mxu0 %v3953
  %4017 = vmatprep.subr.mxu0 %v3952
  %4018 = vmatpush1.msra.mxu0 %v3951
  %4019 = vmatprep.subr.mxu0 %v3950
  %4020 = vmatpush1.msra.mxu0 %v3949
  %4021 = vmatprep.subr.mxu0 %v3948
  %4022 = vmatpush1.msra.mxu0 %v3947
  %4023 = vmatprep.subr.mxu0 0.0
  %4024 = vmatpush2.msra.mxu0 0.0
  %4025 = vmatprep.subr.mxu0 0.0
  %4026 = vmatpush2.msra.mxu0 0.0
  %4027 = vmatprep.subr.mxu0 0.0
  %4028 = vmatpush2.msra.mxu0 0.0
  %4029 = vmatprep.subr.mxu0 0.0
  %4030 = vmatpush2.msra.mxu0 0.0
  %4031 = vmatprep.subr.mxu0 0.0
  %4032 = vmatpush2.msra.mxu0 0.0
  %4033 = vmatprep.subr.mxu0 0.0
  %4034 = vmatpush2.msra.mxu0 0.0
  %4035 = vmatprep.subr.mxu0 0.0
  %4036 = vmatpush2.msra.mxu0 0.0
  %4037 = vmatprep.subr.mxu0 0.0
  %4038 = vmatpush2.msra.mxu0 0.0
  %4039 = vmatprep.subr.mxu0 0.0
  %4040 = vmatpush2.msra.mxu0 0.0
  %4041 = vmatprep.subr.mxu0 0.0
  %4042 = vmatpush2.msra.mxu0 0.0
  %4043 = vmatprep.subr.mxu0 0.0
  %4044 = vmatpush2.msra.mxu0 0.0
  %4045 = vmatprep.subr.mxu0 0.0
  %4046 = vmatpush2.msra.mxu0 0.0
  %4047 = vmatprep.subr.mxu0 0.0
  %4048 = vmatpush2.msra.mxu0 0.0
  %4049 = vmatprep.subr.mxu0 0.0
  %4050 = vmatpush2.msra.mxu0 0.0
  %4051 = vmatprep.subr.mxu0 0.0
  %4052 = vmatpush2.msra.mxu0 0.0
  %4053 = vmatprep.subr.mxu0 0.0
  %4054 = vmatpush2.msra.mxu0 0.0
  %4055 = vmatprep.mubr.f32.mxu0 0.0
  %4056 = vmatmul.mubr.f32.gmra.mxu0 %v3946
  %v4057 = vpop.f32.mrf.mxu0
  %v4058 = vadd.f32 %v3984, %v4057
  %v4059 = vpop.f32.mrf.mxu0
  %v4060 = vadd.f32 %v3988, %v4059
  %4061 = vdwg.mxu0
  %4062 = vst [vmem:[#allocation2] sm:$0xff] %v4058
  %4063 = vst.msk [vmem:[#allocation2 + $0x8] sm:$0xff] %vm195, %v4060
  %v4064 = vld [vmem:[%s21] sm:$0xff]
  %v4065 = vld [vmem:[%s21 + $0x8] sm:$0xff]
  %v4066 = vld [vmem:[%s21 + $0x10] sm:$0xff]
  %v4067 = vld [vmem:[%s21 + $0x18] sm:$0xff]
  %v4068 = vld [vmem:[%s21 + $0x20] sm:$0xff]
  %v4069 = vld [vmem:[%s21 + $0x28] sm:$0xff]
  %v4070 = vld [vmem:[%s21 + $0x30] sm:$0xff]
  %v4071 = vld [vmem:[%s21 + $0x38] sm:$0xff]
  %v4072 = vld [vmem:[%s21 + $0x40] sm:$0xff]
  %v4073 = vld [vmem:[%s21 + $0x48] sm:$0xff]
  %v4074 = vld [vmem:[%s21 + $0x50] sm:$0xff]
  %v4075 = vld [vmem:[%s21 + $0x58] sm:$0xff]
  %v4076 = vld [vmem:[%s21 + $0x60] sm:$0xff]
  %v4077 = vld [vmem:[%s21 + $0x68] sm:$0xff]
  %v4078 = vld [vmem:[%s21 + $0x70] sm:$0xff]
  %v4079 = vld [vmem:[%s21 + $0x78] sm:$0xff]
  %v4080 = vld [vmem:[%s21 + $0x80] sm:$0xff]
  %v4081 = vld [vmem:[%s21 + $0x88] sm:$0xff]
  %v4082 = vld [vmem:[%s21 + $0x90] sm:$0xff]
  %v4083 = vld [vmem:[%s21 + $0x98] sm:$0xff]
  %v4084 = vld [vmem:[%s21 + $0xa0] sm:$0xff]
  %v4085 = vld [vmem:[%s21 + $0xa8] sm:$0xff]
  %v4086 = vld [vmem:[%s21 + $0xb0] sm:$0xff]
  %v4087 = vld [vmem:[%s21 + $0xb8] sm:$0xff]
  %v4088 = vld [vmem:[%s21 + $0xc0] sm:$0xff]
  %v4089 = vld [vmem:[%s21 + $0xc8] sm:$0xff]
  %v4090 = vld [vmem:[%s21 + $0xd0] sm:$0xff]
  %v4091 = vld [vmem:[%s21 + $0xd8] sm:$0xff]
  %v4092 = vld [vmem:[%s21 + $0xe0] sm:$0xff]
  %v4093 = vld [vmem:[%s21 + $0xe8] sm:$0xff]
  %v4094 = vld [vmem:[%s21 + $0xf0] sm:$0xff]
  %v4095 = vld [vmem:[%s21 + $0xf8] sm:$0xff]
  %v4096 = vld [vmem:[%s23] sm:$0x3]
  %v4098 = vlaneseq
  %v4099 = vshrl.u32 %v4098, 7
  %v4100 = vsub.s32 0, %v4099
  %v4101 = vrot.slane %v4096, %v4100
  %v4102 = vlaneseq
  %v4103 = vshrl.u32 %v4102, 7
  %v4104 = vsub.s32 1, %v4103
  %v4105 = vrot.slane %v4096, %v4104
  %4108 = vmatprep.subr.mxu0 %v4095
  %4109 = vmatpush1.msra.mxu0 %v4094
  %4110 = vmatprep.subr.mxu0 %v4093
  %4111 = vmatpush1.msra.mxu0 %v4092
  %4112 = vmatprep.subr.mxu0 %v4091
  %4113 = vmatpush1.msra.mxu0 %v4090
  %4114 = vmatprep.subr.mxu0 %v4089
  %4115 = vmatpush1.msra.mxu0 %v4088
  %4116 = vmatprep.subr.mxu0 %v4087
  %4117 = vmatpush1.msra.mxu0 %v4086
  %4118 = vmatprep.subr.mxu0 %v4085
  %4119 = vmatpush1.msra.mxu0 %v4084
  %4120 = vmatprep.subr.mxu0 %v4083
  %4121 = vmatpush1.msra.mxu0 %v4082
  %4122 = vmatprep.subr.mxu0 %v4081
  %4123 = vmatpush1.msra.mxu0 %v4080
  %4124 = vmatprep.subr.mxu0 %v4079
  %4125 = vmatpush1.msra.mxu0 %v4078
  %4126 = vmatprep.subr.mxu0 %v4077
  %4127 = vmatpush1.msra.mxu0 %v4076
  %4128 = vmatprep.subr.mxu0 %v4075
  %4129 = vmatpush1.msra.mxu0 %v4074
  %4130 = vmatprep.subr.mxu0 %v4073
  %4131 = vmatpush1.msra.mxu0 %v4072
  %4132 = vmatprep.subr.mxu0 %v4071
  %4133 = vmatpush1.msra.mxu0 %v4070
  %4134 = vmatprep.subr.mxu0 %v4069
  %4135 = vmatpush1.msra.mxu0 %v4068
  %4136 = vmatprep.subr.mxu0 %v4067
  %4137 = vmatpush1.msra.mxu0 %v4066
  %4138 = vmatprep.subr.mxu0 %v4065
  %4139 = vmatpush1.msra.mxu0 %v4064
  %4140 = vmatprep.subr.mxu0 0.0
  %4141 = vmatpush2.msra.mxu0 0.0
  %4142 = vmatprep.subr.mxu0 0.0
  %4143 = vmatpush2.msra.mxu0 0.0
  %4144 = vmatprep.subr.mxu0 0.0
  %4145 = vmatpush2.msra.mxu0 0.0
  %4146 = vmatprep.subr.mxu0 0.0
  %4147 = vmatpush2.msra.mxu0 0.0
  %4148 = vmatprep.subr.mxu0 0.0
  %4149 = vmatpush2.msra.mxu0 0.0
  %4150 = vmatprep.subr.mxu0 0.0
  %4151 = vmatpush2.msra.mxu0 0.0
  %4152 = vmatprep.subr.mxu0 0.0
  %4153 = vmatpush2.msra.mxu0 0.0
  %4154 = vmatprep.subr.mxu0 0.0
  %4155 = vmatpush2.msra.mxu0 0.0
  %4156 = vmatprep.subr.mxu0 0.0
  %4157 = vmatpush2.msra.mxu0 0.0
  %4158 = vmatprep.subr.mxu0 0.0
  %4159 = vmatpush2.msra.mxu0 0.0
  %4160 = vmatprep.subr.mxu0 0.0
  %4161 = vmatpush2.msra.mxu0 0.0
  %4162 = vmatprep.subr.mxu0 0.0
  %4163 = vmatpush2.msra.mxu0 0.0
  %4164 = vmatprep.subr.mxu0 0.0
  %4165 = vmatpush2.msra.mxu0 0.0
  %4166 = vmatprep.subr.mxu0 0.0
  %4167 = vmatpush2.msra.mxu0 0.0
  %4168 = vmatprep.subr.mxu0 0.0
  %4169 = vmatpush2.msra.mxu0 0.0
  %4170 = vmatprep.subr.mxu0 0.0
  %4171 = vmatpush2.msra.mxu0 0.0
  %4172 = vmatprep.mubr.f32.mxu0 0.0
  %4173 = vmatmul.mubr.f32.gmra.mxu0 %v3946
  %v4174 = vpop.f32.mrf.mxu0
  %v4175 = vadd.f32 %v4101, %v4174
  %v4176 = vpop.f32.mrf.mxu0
  %v4177 = vadd.f32 %v4105, %v4176
  %4178 = vdwg.mxu0
  %4179 = vst [vmem:[#allocation3] sm:$0xff] %v4175
  %4180 = vst.msk [vmem:[#allocation3 + $0x8] sm:$0xff] %vm195, %v4177
  %v4181 = vld [vmem:[%s18] sm:$0xff]
  %v4182 = vld [vmem:[%s18 + $0x8] sm:$0xff]
  %v4183 = vld [vmem:[%s18 + $0x10] sm:$0xff]
  %v4184 = vld [vmem:[%s18 + $0x18] sm:$0xff]
  %v4185 = vld [vmem:[%s18 + $0x20] sm:$0xff]
  %v4186 = vld [vmem:[%s18 + $0x28] sm:$0xff]
  %v4187 = vld [vmem:[%s18 + $0x30] sm:$0xff]
  %v4188 = vld [vmem:[%s18 + $0x38] sm:$0xff]
  %v4189 = vld [vmem:[%s18 + $0x40] sm:$0xff]
  %v4190 = vld [vmem:[%s18 + $0x48] sm:$0xff]
  %v4191 = vld [vmem:[%s18 + $0x50] sm:$0xff]
  %v4192 = vld [vmem:[%s18 + $0x58] sm:$0xff]
  %v4193 = vld [vmem:[%s18 + $0x60] sm:$0xff]
  %v4194 = vld [vmem:[%s18 + $0x68] sm:$0xff]
  %v4195 = vld [vmem:[%s18 + $0x70] sm:$0xff]
  %v4196 = vld [vmem:[%s18 + $0x78] sm:$0xff]
  %v4197 = vld [vmem:[%s22] sm:$0xff]
  %v4198 = vld [vmem:[%s22 + $0x8] sm:$0xff]
  %v4199 = vld [vmem:[%s22 + $0x10] sm:$0xff]
  %v4200 = vld [vmem:[%s22 + $0x18] sm:$0xff]
  %v4201 = vld [vmem:[%s22 + $0x20] sm:$0xff]
  %v4202 = vld [vmem:[%s22 + $0x28] sm:$0xff]
  %v4203 = vld [vmem:[%s22 + $0x30] sm:$0xff]
  %v4204 = vld [vmem:[%s22 + $0x38] sm:$0xff]
  %v4205 = vld [vmem:[%s22 + $0x40] sm:$0xff]
  %v4206 = vld [vmem:[%s22 + $0x48] sm:$0xff]
  %v4207 = vld [vmem:[%s22 + $0x50] sm:$0xff]
  %v4208 = vld [vmem:[%s22 + $0x58] sm:$0xff]
  %v4209 = vld [vmem:[%s22 + $0x60] sm:$0xff]
  %v4210 = vld [vmem:[%s22 + $0x68] sm:$0xff]
  %v4211 = vld [vmem:[%s22 + $0x70] sm:$0xff]
  %v4212 = vld [vmem:[%s22 + $0x78] sm:$0xff]
  %v4213 = vld [vmem:[%s20] sm:$0x3]
  %v4214 = vld [vmem:[%s24] sm:$0x3]
  %v4215 = vld [vmem:[#allocation2] ss:$8 sm:$0x3]
  %v4216 = vld [vmem:[%s325] ss:$8 sm:$0x3]
  %v4218 = vlaneseq
  %v4219 = vshrl.u32 %v4218, 7
  %v4220 = vsub.s32 0, %v4219
  %v4221 = vrot.slane %v4213, %v4220
  %v4222 = vlaneseq
  %v4223 = vshrl.u32 %v4222, 7
  %v4224 = vsub.s32 1, %v4223
  %v4225 = vrot.slane %v4213, %v4224
  %4228 = vmatprep.subr.mxu0 0.0
  %4229 = vmatpush1.msra.mxu0 0.0
  %4230 = vmatprep.subr.mxu0 0.0
  %4231 = vmatpush1.msra.mxu0 0.0
  %4232 = vmatprep.subr.mxu0 0.0
  %4233 = vmatpush1.msra.mxu0 0.0
  %4234 = vmatprep.subr.mxu0 0.0
  %4235 = vmatpush1.msra.mxu0 0.0
  %4236 = vmatprep.subr.mxu0 0.0
  %4237 = vmatpush1.msra.mxu0 0.0
  %4238 = vmatprep.subr.mxu0 0.0
  %4239 = vmatpush1.msra.mxu0 0.0
  %4240 = vmatprep.subr.mxu0 0.0
  %4241 = vmatpush1.msra.mxu0 0.0
  %4242 = vmatprep.subr.mxu0 0.0
  %4243 = vmatpush1.msra.mxu0 0.0
  %4244 = vmatprep.subr.mxu0 %v4196
  %4245 = vmatpush1.msra.mxu0 %v4195
  %4246 = vmatprep.subr.mxu0 %v4194
  %4247 = vmatpush1.msra.mxu0 %v4193
  %4248 = vmatprep.subr.mxu0 %v4192
  %4249 = vmatpush1.msra.mxu0 %v4191
  %4250 = vmatprep.subr.mxu0 %v4190
  %4251 = vmatpush1.msra.mxu0 %v4189
  %4252 = vmatprep.subr.mxu0 %v4188
  %4253 = vmatpush1.msra.mxu0 %v4187
  %4254 = vmatprep.subr.mxu0 %v4186
  %4255 = vmatpush1.msra.mxu0 %v4185
  %4256 = vmatprep.subr.mxu0 %v4184
  %4257 = vmatpush1.msra.mxu0 %v4183
  %4258 = vmatprep.subr.mxu0 %v4182
  %4259 = vmatpush1.msra.mxu0 %v4181
  %4260 = vmatprep.subr.mxu0 0.0
  %4261 = vmatpush2.msra.mxu0 0.0
  %4262 = vmatprep.subr.mxu0 0.0
  %4263 = vmatpush2.msra.mxu0 0.0
  %4264 = vmatprep.subr.mxu0 0.0
  %4265 = vmatpush2.msra.mxu0 0.0
  %4266 = vmatprep.subr.mxu0 0.0
  %4267 = vmatpush2.msra.mxu0 0.0
  %4268 = vmatprep.subr.mxu0 0.0
  %4269 = vmatpush2.msra.mxu0 0.0
  %4270 = vmatprep.subr.mxu0 0.0
  %4271 = vmatpush2.msra.mxu0 0.0
  %4272 = vmatprep.subr.mxu0 0.0
  %4273 = vmatpush2.msra.mxu0 0.0
  %4274 = vmatprep.subr.mxu0 0.0
  %4275 = vmatpush2.msra.mxu0 0.0
  %4276 = vmatprep.subr.mxu0 0.0
  %4277 = vmatpush2.msra.mxu0 0.0
  %4278 = vmatprep.subr.mxu0 0.0
  %4279 = vmatpush2.msra.mxu0 0.0
  %4280 = vmatprep.subr.mxu0 0.0
  %4281 = vmatpush2.msra.mxu0 0.0
  %4282 = vmatprep.subr.mxu0 0.0
  %4283 = vmatpush2.msra.mxu0 0.0
  %4284 = vmatprep.subr.mxu0 0.0
  %4285 = vmatpush2.msra.mxu0 0.0
  %4286 = vmatprep.subr.mxu0 0.0
  %4287 = vmatpush2.msra.mxu0 0.0
  %4288 = vmatprep.subr.mxu0 0.0
  %4289 = vmatpush2.msra.mxu0 0.0
  %4290 = vmatprep.subr.mxu0 0.0
  %4291 = vmatpush2.msra.mxu0 0.0
  %4292 = vmatprep.mubr.f32.mxu0 0.0
  %4293 = vmatmul.mubr.f32.gmra.mxu0 %v339
  %v4294 = vpop.f32.mrf.mxu0
  %v4295 = vadd.f32 %v4221, %v4294
  %v4296 = vpop.f32.mrf.mxu0
  %v4297 = vadd.f32 %v4225, %v4296
  %4298 = vdwg.mxu0
  %v4300 = vlaneseq
  %v4301 = vshrl.u32 %v4300, 7
  %v4302 = vsub.s32 0, %v4301
  %v4303 = vrot.slane %v4214, %v4302
  %v4304 = vlaneseq
  %v4305 = vshrl.u32 %v4304, 7
  %v4306 = vsub.s32 1, %v4305
  %v4307 = vrot.slane %v4214, %v4306
  %4310 = vmatprep.subr.mxu0 0.0
  %4311 = vmatpush1.msra.mxu0 0.0
  %4312 = vmatprep.subr.mxu0 0.0
  %4313 = vmatpush1.msra.mxu0 0.0
  %4314 = vmatprep.subr.mxu0 0.0
  %4315 = vmatpush1.msra.mxu0 0.0
  %4316 = vmatprep.subr.mxu0 0.0
  %4317 = vmatpush1.msra.mxu0 0.0
  %4318 = vmatprep.subr.mxu0 0.0
  %4319 = vmatpush1.msra.mxu0 0.0
  %4320 = vmatprep.subr.mxu0 0.0
  %4321 = vmatpush1.msra.mxu0 0.0
  %4322 = vmatprep.subr.mxu0 0.0
  %4323 = vmatpush1.msra.mxu0 0.0
  %4324 = vmatprep.subr.mxu0 0.0
  %4325 = vmatpush1.msra.mxu0 0.0
  %4326 = vmatprep.subr.mxu0 %v4212
  %4327 = vmatpush1.msra.mxu0 %v4211
  %4328 = vmatprep.subr.mxu0 %v4210
  %4329 = vmatpush1.msra.mxu0 %v4209
  %4330 = vmatprep.subr.mxu0 %v4208
  %4331 = vmatpush1.msra.mxu0 %v4207
  %4332 = vmatprep.subr.mxu0 %v4206
  %4333 = vmatpush1.msra.mxu0 %v4205
  %4334 = vmatprep.subr.mxu0 %v4204
  %4335 = vmatpush1.msra.mxu0 %v4203
  %4336 = vmatprep.subr.mxu0 %v4202
  %4337 = vmatpush1.msra.mxu0 %v4201
  %4338 = vmatprep.subr.mxu0 %v4200
  %4339 = vmatpush1.msra.mxu0 %v4199
  %4340 = vmatprep.subr.mxu0 %v4198
  %4341 = vmatpush1.msra.mxu0 %v4197
  %4342 = vmatprep.subr.mxu0 0.0
  %4343 = vmatpush2.msra.mxu0 0.0
  %4344 = vmatprep.subr.mxu0 0.0
  %4345 = vmatpush2.msra.mxu0 0.0
  %4346 = vmatprep.subr.mxu0 0.0
  %4347 = vmatpush2.msra.mxu0 0.0
  %4348 = vmatprep.subr.mxu0 0.0
  %4349 = vmatpush2.msra.mxu0 0.0
  %4350 = vmatprep.subr.mxu0 0.0
  %4351 = vmatpush2.msra.mxu0 0.0
  %4352 = vmatprep.subr.mxu0 0.0
  %4353 = vmatpush2.msra.mxu0 0.0
  %4354 = vmatprep.subr.mxu0 0.0
  %4355 = vmatpush2.msra.mxu0 0.0
  %4356 = vmatprep.subr.mxu0 0.0
  %4357 = vmatpush2.msra.mxu0 0.0
  %4358 = vmatprep.subr.mxu0 0.0
  %4359 = vmatpush2.msra.mxu0 0.0
  %4360 = vmatprep.subr.mxu0 0.0
  %4361 = vmatpush2.msra.mxu0 0.0
  %4362 = vmatprep.subr.mxu0 0.0
  %4363 = vmatpush2.msra.mxu0 0.0
  %4364 = vmatprep.subr.mxu0 0.0
  %4365 = vmatpush2.msra.mxu0 0.0
  %4366 = vmatprep.subr.mxu0 0.0
  %4367 = vmatpush2.msra.mxu0 0.0
  %4368 = vmatprep.subr.mxu0 0.0
  %4369 = vmatpush2.msra.mxu0 0.0
  %4370 = vmatprep.subr.mxu0 0.0
  %4371 = vmatpush2.msra.mxu0 0.0
  %4372 = vmatprep.subr.mxu0 0.0
  %4373 = vmatpush2.msra.mxu0 0.0
  %4374 = vmatprep.mubr.f32.mxu0 0.0
  %4375 = vmatmul.mubr.f32.gmra.mxu0 %v339
  %v4376 = vpop.f32.mrf.mxu0
  %v4377 = vadd.f32 %v4303, %v4376
  %v4378 = vpop.f32.mrf.mxu0
  %v4379 = vadd.f32 %v4307, %v4378
  %4380 = vdwg.mxu0
  %v4381 = vadd.f32 %v4215, %v4295
  %v4382 = vxor.u32 %v4381, 2147483648
  %v4383 = vmul.f32 %v4382, 1.442695
  %v4384 = vpow.pop %v4383
  %v4385 = vadd.f32 %v4384, 1.0
  %v4386 = vrcp.pop %v4385
  %v4387 = vmul.f32 1.0, %v4386
  %v4388 = vmul.f32 %v4387, %v4297
  %v4390 = vrot.slane %v4215, 1
  %v4392 = vadd.f32 %v4390, %v4388
  %v4393 = vtanh.pop %v4392
  %v4394 = vsub.f32 1.0, %v4387
  %4396 = vrot.lane.b32.xlu0 %v4393, 64
  %v4397 = vpop.permute.xlu0 %4396
  %v4399 = vmul.f32 %v4394, %v4397
  %v4400 = vmul.f32 %v4387, 0.0
  %v4401 = vadd.f32 %v4399, %v4400
  %v4402 = vadd.f32 %v4216, %v4377
  %v4403 = vxor.u32 %v4402, 2147483648
  %v4404 = vmul.f32 %v4403, 1.442695
  %v4405 = vpow.pop %v4404
  %v4406 = vadd.f32 %v4405, 1.0
  %v4407 = vrcp.pop %v4406
  %v4408 = vmul.f32 1.0, %v4407
  %v4409 = vmul.f32 %v4408, %v4379
  %v4411 = vrot.slane %v4216, 1
  %v4413 = vadd.f32 %v4411, %v4409
  %v4414 = vtanh.pop %v4413
  %v4415 = vsub.f32 1.0, %v4408
  %4417 = vrot.lane.b32.xlu0 %v4414, 64
  %v4418 = vpop.permute.xlu0 %4417
  %v4420 = vmul.f32 %v4415, %v4418
  %v4421 = vmul.f32 %v4408, 0.0
  %v4422 = vadd.f32 %v4420, %v4421
  %v4424 = vlaneseq
  %v4425 = vshrl.u32 %v4424, 7
  %v4426 = vsub.s32 0, %v4425
  %v4427 = vrot.slane %v4401, %v4426
  %4428 = vrot.lane.b32.xlu0 %v4427, 64
  %v4429 = vpop.permute.xlu0 %4428
  %4431 = vst.msk [vmem:[#allocation4] sm:$0x1] %vm544, %v4429
  %4432 = vst.msk [vmem:[#allocation4 + $0x7] sm:$0x1] %vm546, %v4422
  %v4433 = vld [vmem:[%s548] ss:$8 sm:$0x3]
  %v4434 = vld [vmem:[%s550] ss:$8 sm:$0x3]
  %v4435 = vsel %vm195, %v4429, 0
  %4437 = vmatprep.subr.mxu0 0.0
  %4438 = vmatpush1.msra.mxu0 0.0
  %4439 = vmatprep.subr.mxu0 0.0
  %4440 = vmatpush1.msra.mxu0 0.0
  %4441 = vmatprep.subr.mxu0 0.0
  %4442 = vmatpush1.msra.mxu0 0.0
  %4443 = vmatprep.subr.mxu0 0.0
  %4444 = vmatpush1.msra.mxu0 0.0
  %4445 = vmatprep.subr.mxu0 0.0
  %4446 = vmatpush1.msra.mxu0 0.0
  %4447 = vmatprep.subr.mxu0 0.0
  %4448 = vmatpush1.msra.mxu0 0.0
  %4449 = vmatprep.subr.mxu0 0.0
  %4450 = vmatpush1.msra.mxu0 0.0
  %4451 = vmatprep.subr.mxu0 0.0
  %4452 = vmatpush1.msra.mxu0 0.0
  %4453 = vmatprep.subr.mxu0 %v4196
  %4454 = vmatpush1.msra.mxu0 %v4195
  %4455 = vmatprep.subr.mxu0 %v4194
  %4456 = vmatpush1.msra.mxu0 %v4193
  %4457 = vmatprep.subr.mxu0 %v4192
  %4458 = vmatpush1.msra.mxu0 %v4191
  %4459 = vmatprep.subr.mxu0 %v4190
  %4460 = vmatpush1.msra.mxu0 %v4189
  %4461 = vmatprep.subr.mxu0 %v4188
  %4462 = vmatpush1.msra.mxu0 %v4187
  %4463 = vmatprep.subr.mxu0 %v4186
  %4464 = vmatpush1.msra.mxu0 %v4185
  %4465 = vmatprep.subr.mxu0 %v4184
  %4466 = vmatpush1.msra.mxu0 %v4183
  %4467 = vmatprep.subr.mxu0 %v4182
  %4468 = vmatpush1.msra.mxu0 %v4181
  %4469 = vmatprep.subr.mxu0 0.0
  %4470 = vmatpush2.msra.mxu0 0.0
  %4471 = vmatprep.subr.mxu0 0.0
  %4472 = vmatpush2.msra.mxu0 0.0
  %4473 = vmatprep.subr.mxu0 0.0
  %4474 = vmatpush2.msra.mxu0 0.0
  %4475 = vmatprep.subr.mxu0 0.0
  %4476 = vmatpush2.msra.mxu0 0.0
  %4477 = vmatprep.subr.mxu0 0.0
  %4478 = vmatpush2.msra.mxu0 0.0
  %4479 = vmatprep.subr.mxu0 0.0
  %4480 = vmatpush2.msra.mxu0 0.0
  %4481 = vmatprep.subr.mxu0 0.0
  %4482 = vmatpush2.msra.mxu0 0.0
  %4483 = vmatprep.subr.mxu0 0.0
  %4484 = vmatpush2.msra.mxu0 0.0
  %4485 = vmatprep.subr.mxu0 0.0
  %4486 = vmatpush2.msra.mxu0 0.0
  %4487 = vmatprep.subr.mxu0 0.0
  %4488 = vmatpush2.msra.mxu0 0.0
  %4489 = vmatprep.subr.mxu0 0.0
  %4490 = vmatpush2.msra.mxu0 0.0
  %4491 = vmatprep.subr.mxu0 0.0
  %4492 = vmatpush2.msra.mxu0 0.0
  %4493 = vmatprep.subr.mxu0 0.0
  %4494 = vmatpush2.msra.mxu0 0.0
  %4495 = vmatprep.subr.mxu0 0.0
  %4496 = vmatpush2.msra.mxu0 0.0
  %4497 = vmatprep.subr.mxu0 0.0
  %4498 = vmatpush2.msra.mxu0 0.0
  %4499 = vmatprep.subr.mxu0 0.0
  %4500 = vmatpush2.msra.mxu0 0.0
  %4501 = vmatprep.mubr.f32.mxu0 0.0
  %4502 = vmatmul.mubr.f32.gmra.mxu0 %v4435
  %v4503 = vpop.f32.mrf.mxu0
  %v4504 = vadd.f32 %v4221, %v4503
  %v4505 = vpop.f32.mrf.mxu0
  %v4506 = vadd.f32 %v4225, %v4505
  %4507 = vdwg.mxu0
  %v4509 = vlaneseq
  %v4510 = vshrl.u32 %v4509, 7
  %v4511 = vsub.s32 0, %v4510
  %v4512 = vrot.slane %v4422, %v4511
  %4513 = vrot.lane.b32.xlu0 %v4512, 64
  %v4514 = vpop.permute.xlu0 %4513
  %v4515 = vsel %vm195, %v4514, 0
  %4517 = vmatprep.subr.mxu0 0.0
  %4518 = vmatpush1.msra.mxu0 0.0
  %4519 = vmatprep.subr.mxu0 0.0
  %4520 = vmatpush1.msra.mxu0 0.0
  %4521 = vmatprep.subr.mxu0 0.0
  %4522 = vmatpush1.msra.mxu0 0.0
  %4523 = vmatprep.subr.mxu0 0.0
  %4524 = vmatpush1.msra.mxu0 0.0
  %4525 = vmatprep.subr.mxu0 0.0
  %4526 = vmatpush1.msra.mxu0 0.0
  %4527 = vmatprep.subr.mxu0 0.0
  %4528 = vmatpush1.msra.mxu0 0.0
  %4529 = vmatprep.subr.mxu0 0.0
  %4530 = vmatpush1.msra.mxu0 0.0
  %4531 = vmatprep.subr.mxu0 0.0
  %4532 = vmatpush1.msra.mxu0 0.0
  %4533 = vmatprep.subr.mxu0 %v4212
  %4534 = vmatpush1.msra.mxu0 %v4211
  %4535 = vmatprep.subr.mxu0 %v4210
  %4536 = vmatpush1.msra.mxu0 %v4209
  %4537 = vmatprep.subr.mxu0 %v4208
  %4538 = vmatpush1.msra.mxu0 %v4207
  %4539 = vmatprep.subr.mxu0 %v4206
  %4540 = vmatpush1.msra.mxu0 %v4205
  %4541 = vmatprep.subr.mxu0 %v4204
  %4542 = vmatpush1.msra.mxu0 %v4203
  %4543 = vmatprep.subr.mxu0 %v4202
  %4544 = vmatpush1.msra.mxu0 %v4201
  %4545 = vmatprep.subr.mxu0 %v4200
  %4546 = vmatpush1.msra.mxu0 %v4199
  %4547 = vmatprep.subr.mxu0 %v4198
  %4548 = vmatpush1.msra.mxu0 %v4197
  %4549 = vmatprep.subr.mxu0 0.0
  %4550 = vmatpush2.msra.mxu0 0.0
  %4551 = vmatprep.subr.mxu0 0.0
  %4552 = vmatpush2.msra.mxu0 0.0
  %4553 = vmatprep.subr.mxu0 0.0
  %4554 = vmatpush2.msra.mxu0 0.0
  %4555 = vmatprep.subr.mxu0 0.0
  %4556 = vmatpush2.msra.mxu0 0.0
  %4557 = vmatprep.subr.mxu0 0.0
  %4558 = vmatpush2.msra.mxu0 0.0
  %4559 = vmatprep.subr.mxu0 0.0
  %4560 = vmatpush2.msra.mxu0 0.0
  %4561 = vmatprep.subr.mxu0 0.0
  %4562 = vmatpush2.msra.mxu0 0.0
  %4563 = vmatprep.subr.mxu0 0.0
  %4564 = vmatpush2.msra.mxu0 0.0
  %4565 = vmatprep.subr.mxu0 0.0
  %4566 = vmatpush2.msra.mxu0 0.0
  %4567 = vmatprep.subr.mxu0 0.0
  %4568 = vmatpush2.msra.mxu0 0.0
  %4569 = vmatprep.subr.mxu0 0.0
  %4570 = vmatpush2.msra.mxu0 0.0
  %4571 = vmatprep.subr.mxu0 0.0
  %4572 = vmatpush2.msra.mxu0 0.0
  %4573 = vmatprep.subr.mxu0 0.0
  %4574 = vmatpush2.msra.mxu0 0.0
  %4575 = vmatprep.subr.mxu0 0.0
  %4576 = vmatpush2.msra.mxu0 0.0
  %4577 = vmatprep.subr.mxu0 0.0
  %4578 = vmatpush2.msra.mxu0 0.0
  %4579 = vmatprep.subr.mxu0 0.0
  %4580 = vmatpush2.msra.mxu0 0.0
  %4581 = vmatprep.mubr.f32.mxu0 0.0
  %4582 = vmatmul.mubr.f32.gmra.mxu0 %v4515
  %v4583 = vpop.f32.mrf.mxu0
  %v4584 = vadd.f32 %v4303, %v4583
  %v4585 = vpop.f32.mrf.mxu0
  %v4586 = vadd.f32 %v4307, %v4585
  %4587 = vdwg.mxu0
  %v4588 = vadd.f32 %v4433, %v4504
  %v4589 = vxor.u32 %v4588, 2147483648
  %v4590 = vmul.f32 %v4589, 1.442695
  %v4591 = vpow.pop %v4590
  %v4592 = vadd.f32 %v4591, 1.0
  %v4593 = vrcp.pop %v4592
  %v4594 = vmul.f32 1.0, %v4593
  %v4595 = vmul.f32 %v4594, %v4506
  %v4597 = vrot.slane %v4433, 1
  %v4599 = vadd.f32 %v4597, %v4595
  %v4600 = vtanh.pop %v4599
  %v4601 = vsub.f32 1.0, %v4594
  %4603 = vrot.lane.b32.xlu0 %v4600, 64
  %v4604 = vpop.permute.xlu0 %4603
  %v4606 = vmul.f32 %v4601, %v4604
  %v4607 = vmul.f32 %v4594, %v4401
  %v4608 = vadd.f32 %v4606, %v4607
  %v4609 = vadd.f32 %v4434, %v4584
  %v4610 = vxor.u32 %v4609, 2147483648
  %v4611 = vmul.f32 %v4610, 1.442695
  %v4612 = vpow.pop %v4611
  %v4613 = vadd.f32 %v4612, 1.0
  %v4614 = vrcp.pop %v4613
  %v4615 = vmul.f32 1.0, %v4614
  %v4616 = vmul.f32 %v4615, %v4586
  %v4618 = vrot.slane %v4434, 1
  %v4620 = vadd.f32 %v4618, %v4616
  %v4621 = vtanh.pop %v4620
  %v4622 = vsub.f32 1.0, %v4615
  %4624 = vrot.lane.b32.xlu0 %v4621, 64
  %v4625 = vpop.permute.xlu0 %4624
  %v4627 = vmul.f32 %v4622, %v4625
  %v4628 = vmul.f32 %v4615, %v4422
  %v4629 = vadd.f32 %v4627, %v4628
  %v4631 = vlaneseq
  %v4632 = vshrl.u32 %v4631, 7
  %v4633 = vsub.s32 0, %v4632
  %v4634 = vrot.slane %v4608, %v4633
  %4635 = vrot.lane.b32.xlu0 %v4634, 64
  %v4636 = vpop.permute.xlu0 %4635
  %4638 = vst.msk [vmem:[#allocation4 + $0x1] sm:$0x1] %vm544, %v4636
  %4639 = vst.msk [vmem:[#allocation4 + $0x6] sm:$0x1] %vm546, %v4629
  %v4640 = vld [vmem:[%s757] ss:$8 sm:$0x3]
  %v4641 = vld [vmem:[%s759] ss:$8 sm:$0x3]
  %v4642 = vsel %vm195, %v4636, 0
  %4644 = vmatprep.subr.mxu0 0.0
  %4645 = vmatpush1.msra.mxu0 0.0
  %4646 = vmatprep.subr.mxu0 0.0
  %4647 = vmatpush1.msra.mxu0 0.0
  %4648 = vmatprep.subr.mxu0 0.0
  %4649 = vmatpush1.msra.mxu0 0.0
  %4650 = vmatprep.subr.mxu0 0.0
  %4651 = vmatpush1.msra.mxu0 0.0
  %4652 = vmatprep.subr.mxu0 0.0
  %4653 = vmatpush1.msra.mxu0 0.0
  %4654 = vmatprep.subr.mxu0 0.0
  %4655 = vmatpush1.msra.mxu0 0.0
  %4656 = vmatprep.subr.mxu0 0.0
  %4657 = vmatpush1.msra.mxu0 0.0
  %4658 = vmatprep.subr.mxu0 0.0
  %4659 = vmatpush1.msra.mxu0 0.0
  %4660 = vmatprep.subr.mxu0 %v4196
  %4661 = vmatpush1.msra.mxu0 %v4195
  %4662 = vmatprep.subr.mxu0 %v4194
  %4663 = vmatpush1.msra.mxu0 %v4193
  %4664 = vmatprep.subr.mxu0 %v4192
  %4665 = vmatpush1.msra.mxu0 %v4191
  %4666 = vmatprep.subr.mxu0 %v4190
  %4667 = vmatpush1.msra.mxu0 %v4189
  %4668 = vmatprep.subr.mxu0 %v4188
  %4669 = vmatpush1.msra.mxu0 %v4187
  %4670 = vmatprep.subr.mxu0 %v4186
  %4671 = vmatpush1.msra.mxu0 %v4185
  %4672 = vmatprep.subr.mxu0 %v4184
  %4673 = vmatpush1.msra.mxu0 %v4183
  %4674 = vmatprep.subr.mxu0 %v4182
  %4675 = vmatpush1.msra.mxu0 %v4181
  %4676 = vmatprep.subr.mxu0 0.0
  %4677 = vmatpush2.msra.mxu0 0.0
  %4678 = vmatprep.subr.mxu0 0.0
  %4679 = vmatpush2.msra.mxu0 0.0
  %4680 = vmatprep.subr.mxu0 0.0
  %4681 = vmatpush2.msra.mxu0 0.0
  %4682 = vmatprep.subr.mxu0 0.0
  %4683 = vmatpush2.msra.mxu0 0.0
  %4684 = vmatprep.subr.mxu0 0.0
  %4685 = vmatpush2.msra.mxu0 0.0
  %4686 = vmatprep.subr.mxu0 0.0
  %4687 = vmatpush2.msra.mxu0 0.0
  %4688 = vmatprep.subr.mxu0 0.0
  %4689 = vmatpush2.msra.mxu0 0.0
  %4690 = vmatprep.subr.mxu0 0.0
  %4691 = vmatpush2.msra.mxu0 0.0
  %4692 = vmatprep.subr.mxu0 0.0
  %4693 = vmatpush2.msra.mxu0 0.0
  %4694 = vmatprep.subr.mxu0 0.0
  %4695 = vmatpush2.msra.mxu0 0.0
  %4696 = vmatprep.subr.mxu0 0.0
  %4697 = vmatpush2.msra.mxu0 0.0
  %4698 = vmatprep.subr.mxu0 0.0
  %4699 = vmatpush2.msra.mxu0 0.0
  %4700 = vmatprep.subr.mxu0 0.0
  %4701 = vmatpush2.msra.mxu0 0.0
  %4702 = vmatprep.subr.mxu0 0.0
  %4703 = vmatpush2.msra.mxu0 0.0
  %4704 = vmatprep.subr.mxu0 0.0
  %4705 = vmatpush2.msra.mxu0 0.0
  %4706 = vmatprep.subr.mxu0 0.0
  %4707 = vmatpush2.msra.mxu0 0.0
  %4708 = vmatprep.mubr.f32.mxu0 0.0
  %4709 = vmatmul.mubr.f32.gmra.mxu0 %v4642
  %v4710 = vpop.f32.mrf.mxu0
  %v4711 = vadd.f32 %v4221, %v4710
  %v4712 = vpop.f32.mrf.mxu0
  %v4713 = vadd.f32 %v4225, %v4712
  %4714 = vdwg.mxu0
  %v4716 = vlaneseq
  %v4717 = vshrl.u32 %v4716, 7
  %v4718 = vsub.s32 0, %v4717
  %v4719 = vrot.slane %v4629, %v4718
  %4720 = vrot.lane.b32.xlu0 %v4719, 64
  %v4721 = vpop.permute.xlu0 %4720
  %v4722 = vsel %vm195, %v4721, 0
  %4724 = vmatprep.subr.mxu0 0.0
  %4725 = vmatpush1.msra.mxu0 0.0
  %4726 = vmatprep.subr.mxu0 0.0
  %4727 = vmatpush1.msra.mxu0 0.0
  %4728 = vmatprep.subr.mxu0 0.0
  %4729 = vmatpush1.msra.mxu0 0.0
  %4730 = vmatprep.subr.mxu0 0.0
  %4731 = vmatpush1.msra.mxu0 0.0
  %4732 = vmatprep.subr.mxu0 0.0
  %4733 = vmatpush1.msra.mxu0 0.0
  %4734 = vmatprep.subr.mxu0 0.0
  %4735 = vmatpush1.msra.mxu0 0.0
  %4736 = vmatprep.subr.mxu0 0.0
  %4737 = vmatpush1.msra.mxu0 0.0
  %4738 = vmatprep.subr.mxu0 0.0
  %4739 = vmatpush1.msra.mxu0 0.0
  %4740 = vmatprep.subr.mxu0 %v4212
  %4741 = vmatpush1.msra.mxu0 %v4211
  %4742 = vmatprep.subr.mxu0 %v4210
  %4743 = vmatpush1.msra.mxu0 %v4209
  %4744 = vmatprep.subr.mxu0 %v4208
  %4745 = vmatpush1.msra.mxu0 %v4207
  %4746 = vmatprep.subr.mxu0 %v4206
  %4747 = vmatpush1.msra.mxu0 %v4205
  %4748 = vmatprep.subr.mxu0 %v4204
  %4749 = vmatpush1.msra.mxu0 %v4203
  %4750 = vmatprep.subr.mxu0 %v4202
  %4751 = vmatpush1.msra.mxu0 %v4201
  %4752 = vmatprep.subr.mxu0 %v4200
  %4753 = vmatpush1.msra.mxu0 %v4199
  %4754 = vmatprep.subr.mxu0 %v4198
  %4755 = vmatpush1.msra.mxu0 %v4197
  %4756 = vmatprep.subr.mxu0 0.0
  %4757 = vmatpush2.msra.mxu0 0.0
  %4758 = vmatprep.subr.mxu0 0.0
  %4759 = vmatpush2.msra.mxu0 0.0
  %4760 = vmatprep.subr.mxu0 0.0
  %4761 = vmatpush2.msra.mxu0 0.0
  %4762 = vmatprep.subr.mxu0 0.0
  %4763 = vmatpush2.msra.mxu0 0.0
  %4764 = vmatprep.subr.mxu0 0.0
  %4765 = vmatpush2.msra.mxu0 0.0
  %4766 = vmatprep.subr.mxu0 0.0
  %4767 = vmatpush2.msra.mxu0 0.0
  %4768 = vmatprep.subr.mxu0 0.0
  %4769 = vmatpush2.msra.mxu0 0.0
  %4770 = vmatprep.subr.mxu0 0.0
  %4771 = vmatpush2.msra.mxu0 0.0
  %4772 = vmatprep.subr.mxu0 0.0
  %4773 = vmatpush2.msra.mxu0 0.0
  %4774 = vmatprep.subr.mxu0 0.0
  %4775 = vmatpush2.msra.mxu0 0.0
  %4776 = vmatprep.subr.mxu0 0.0
  %4777 = vmatpush2.msra.mxu0 0.0
  %4778 = vmatprep.subr.mxu0 0.0
  %4779 = vmatpush2.msra.mxu0 0.0
  %4780 = vmatprep.subr.mxu0 0.0
  %4781 = vmatpush2.msra.mxu0 0.0
  %4782 = vmatprep.subr.mxu0 0.0
  %4783 = vmatpush2.msra.mxu0 0.0
  %4784 = vmatprep.subr.mxu0 0.0
  %4785 = vmatpush2.msra.mxu0 0.0
  %4786 = vmatprep.subr.mxu0 0.0
  %4787 = vmatpush2.msra.mxu0 0.0
  %4788 = vmatprep.mubr.f32.mxu0 0.0
  %4789 = vmatmul.mubr.f32.gmra.mxu0 %v4722
  %v4790 = vpop.f32.mrf.mxu0
  %v4791 = vadd.f32 %v4303, %v4790
  %v4792 = vpop.f32.mrf.mxu0
  %v4793 = vadd.f32 %v4307, %v4792
  %4794 = vdwg.mxu0
  %v4795 = vadd.f32 %v4640, %v4711
  %v4796 = vxor.u32 %v4795, 2147483648
  %v4797 = vmul.f32 %v4796, 1.442695
  %v4798 = vpow.pop %v4797
  %v4799 = vadd.f32 %v4798, 1.0
  %v4800 = vrcp.pop %v4799
  %v4801 = vmul.f32 1.0, %v4800
  %v4802 = vmul.f32 %v4801, %v4713
  %v4804 = vrot.slane %v4640, 1
  %v4806 = vadd.f32 %v4804, %v4802
  %v4807 = vtanh.pop %v4806
  %v4808 = vsub.f32 1.0, %v4801
  %4810 = vrot.lane.b32.xlu0 %v4807, 64
  %v4811 = vpop.permute.xlu0 %4810
  %v4813 = vmul.f32 %v4808, %v4811
  %v4814 = vmul.f32 %v4801, %v4608
  %v4815 = vadd.f32 %v4813, %v4814
  %v4816 = vadd.f32 %v4641, %v4791
  %v4817 = vxor.u32 %v4816, 2147483648
  %v4818 = vmul.f32 %v4817, 1.442695
  %v4819 = vpow.pop %v4818
  %v4820 = vadd.f32 %v4819, 1.0
  %v4821 = vrcp.pop %v4820
  %v4822 = vmul.f32 1.0, %v4821
  %v4823 = vmul.f32 %v4822, %v4793
  %v4825 = vrot.slane %v4641, 1
  %v4827 = vadd.f32 %v4825, %v4823
  %v4828 = vtanh.pop %v4827
  %v4829 = vsub.f32 1.0, %v4822
  %4831 = vrot.lane.b32.xlu0 %v4828, 64
  %v4832 = vpop.permute.xlu0 %4831
  %v4834 = vmul.f32 %v4829, %v4832
  %v4835 = vmul.f32 %v4822, %v4629
  %v4836 = vadd.f32 %v4834, %v4835
  %v4838 = vlaneseq
  %v4839 = vshrl.u32 %v4838, 7
  %v4840 = vsub.s32 0, %v4839
  %v4841 = vrot.slane %v4815, %v4840
  %4842 = vrot.lane.b32.xlu0 %v4841, 64
  %v4843 = vpop.permute.xlu0 %4842
  %4845 = vst.msk [vmem:[#allocation4 + $0x2] sm:$0x1] %vm544, %v4843
  %4846 = vst.msk [vmem:[#allocation4 + $0x5] sm:$0x1] %vm546, %v4836
  %v4847 = vld [vmem:[%s966] ss:$8 sm:$0x3]
  %v4848 = vld [vmem:[%s968] ss:$8 sm:$0x3]
  %v4849 = vsel %vm195, %v4843, 0
  %4851 = vmatprep.subr.mxu0 0.0
  %4852 = vmatpush1.msra.mxu0 0.0
  %4853 = vmatprep.subr.mxu0 0.0
  %4854 = vmatpush1.msra.mxu0 0.0
  %4855 = vmatprep.subr.mxu0 0.0
  %4856 = vmatpush1.msra.mxu0 0.0
  %4857 = vmatprep.subr.mxu0 0.0
  %4858 = vmatpush1.msra.mxu0 0.0
  %4859 = vmatprep.subr.mxu0 0.0
  %4860 = vmatpush1.msra.mxu0 0.0
  %4861 = vmatprep.subr.mxu0 0.0
  %4862 = vmatpush1.msra.mxu0 0.0
  %4863 = vmatprep.subr.mxu0 0.0
  %4864 = vmatpush1.msra.mxu0 0.0
  %4865 = vmatprep.subr.mxu0 0.0
  %4866 = vmatpush1.msra.mxu0 0.0
  %4867 = vmatprep.subr.mxu0 %v4196
  %4868 = vmatpush1.msra.mxu0 %v4195
  %4869 = vmatprep.subr.mxu0 %v4194
  %4870 = vmatpush1.msra.mxu0 %v4193
  %4871 = vmatprep.subr.mxu0 %v4192
  %4872 = vmatpush1.msra.mxu0 %v4191
  %4873 = vmatprep.subr.mxu0 %v4190
  %4874 = vmatpush1.msra.mxu0 %v4189
  %4875 = vmatprep.subr.mxu0 %v4188
  %4876 = vmatpush1.msra.mxu0 %v4187
  %4877 = vmatprep.subr.mxu0 %v4186
  %4878 = vmatpush1.msra.mxu0 %v4185
  %4879 = vmatprep.subr.mxu0 %v4184
  %4880 = vmatpush1.msra.mxu0 %v4183
  %4881 = vmatprep.subr.mxu0 %v4182
  %4882 = vmatpush1.msra.mxu0 %v4181
  %4883 = vmatprep.subr.mxu0 0.0
  %4884 = vmatpush2.msra.mxu0 0.0
  %4885 = vmatprep.subr.mxu0 0.0
  %4886 = vmatpush2.msra.mxu0 0.0
  %4887 = vmatprep.subr.mxu0 0.0
  %4888 = vmatpush2.msra.mxu0 0.0
  %4889 = vmatprep.subr.mxu0 0.0
  %4890 = vmatpush2.msra.mxu0 0.0
  %4891 = vmatprep.subr.mxu0 0.0
  %4892 = vmatpush2.msra.mxu0 0.0
  %4893 = vmatprep.subr.mxu0 0.0
  %4894 = vmatpush2.msra.mxu0 0.0
  %4895 = vmatprep.subr.mxu0 0.0
  %4896 = vmatpush2.msra.mxu0 0.0
  %4897 = vmatprep.subr.mxu0 0.0
  %4898 = vmatpush2.msra.mxu0 0.0
  %4899 = vmatprep.subr.mxu0 0.0
  %4900 = vmatpush2.msra.mxu0 0.0
  %4901 = vmatprep.subr.mxu0 0.0
  %4902 = vmatpush2.msra.mxu0 0.0
  %4903 = vmatprep.subr.mxu0 0.0
  %4904 = vmatpush2.msra.mxu0 0.0
  %4905 = vmatprep.subr.mxu0 0.0
  %4906 = vmatpush2.msra.mxu0 0.0
  %4907 = vmatprep.subr.mxu0 0.0
  %4908 = vmatpush2.msra.mxu0 0.0
  %4909 = vmatprep.subr.mxu0 0.0
  %4910 = vmatpush2.msra.mxu0 0.0
  %4911 = vmatprep.subr.mxu0 0.0
  %4912 = vmatpush2.msra.mxu0 0.0
  %4913 = vmatprep.subr.mxu0 0.0
  %4914 = vmatpush2.msra.mxu0 0.0
  %4915 = vmatprep.mubr.f32.mxu0 0.0
  %4916 = vmatmul.mubr.f32.gmra.mxu0 %v4849
  %v4917 = vpop.f32.mrf.mxu0
  %v4918 = vadd.f32 %v4221, %v4917
  %v4919 = vpop.f32.mrf.mxu0
  %v4920 = vadd.f32 %v4225, %v4919
  %4921 = vdwg.mxu0
  %v4923 = vlaneseq
  %v4924 = vshrl.u32 %v4923, 7
  %v4925 = vsub.s32 0, %v4924
  %v4926 = vrot.slane %v4836, %v4925
  %4927 = vrot.lane.b32.xlu0 %v4926, 64
  %v4928 = vpop.permute.xlu0 %4927
  %v4929 = vsel %vm195, %v4928, 0
  %4931 = vmatprep.subr.mxu0 0.0
  %4932 = vmatpush1.msra.mxu0 0.0
  %4933 = vmatprep.subr.mxu0 0.0
  %4934 = vmatpush1.msra.mxu0 0.0
  %4935 = vmatprep.subr.mxu0 0.0
  %4936 = vmatpush1.msra.mxu0 0.0
  %4937 = vmatprep.subr.mxu0 0.0
  %4938 = vmatpush1.msra.mxu0 0.0
  %4939 = vmatprep.subr.mxu0 0.0
  %4940 = vmatpush1.msra.mxu0 0.0
  %4941 = vmatprep.subr.mxu0 0.0
  %4942 = vmatpush1.msra.mxu0 0.0
  %4943 = vmatprep.subr.mxu0 0.0
  %4944 = vmatpush1.msra.mxu0 0.0
  %4945 = vmatprep.subr.mxu0 0.0
  %4946 = vmatpush1.msra.mxu0 0.0
  %4947 = vmatprep.subr.mxu0 %v4212
  %4948 = vmatpush1.msra.mxu0 %v4211
  %4949 = vmatprep.subr.mxu0 %v4210
  %4950 = vmatpush1.msra.mxu0 %v4209
  %4951 = vmatprep.subr.mxu0 %v4208
  %4952 = vmatpush1.msra.mxu0 %v4207
  %4953 = vmatprep.subr.mxu0 %v4206
  %4954 = vmatpush1.msra.mxu0 %v4205
  %4955 = vmatprep.subr.mxu0 %v4204
  %4956 = vmatpush1.msra.mxu0 %v4203
  %4957 = vmatprep.subr.mxu0 %v4202
  %4958 = vmatpush1.msra.mxu0 %v4201
  %4959 = vmatprep.subr.mxu0 %v4200
  %4960 = vmatpush1.msra.mxu0 %v4199
  %4961 = vmatprep.subr.mxu0 %v4198
  %4962 = vmatpush1.msra.mxu0 %v4197
  %4963 = vmatprep.subr.mxu0 0.0
  %4964 = vmatpush2.msra.mxu0 0.0
  %4965 = vmatprep.subr.mxu0 0.0
  %4966 = vmatpush2.msra.mxu0 0.0
  %4967 = vmatprep.subr.mxu0 0.0
  %4968 = vmatpush2.msra.mxu0 0.0
  %4969 = vmatprep.subr.mxu0 0.0
  %4970 = vmatpush2.msra.mxu0 0.0
  %4971 = vmatprep.subr.mxu0 0.0
  %4972 = vmatpush2.msra.mxu0 0.0
  %4973 = vmatprep.subr.mxu0 0.0
  %4974 = vmatpush2.msra.mxu0 0.0
  %4975 = vmatprep.subr.mxu0 0.0
  %4976 = vmatpush2.msra.mxu0 0.0
  %4977 = vmatprep.subr.mxu0 0.0
  %4978 = vmatpush2.msra.mxu0 0.0
  %4979 = vmatprep.subr.mxu0 0.0
  %4980 = vmatpush2.msra.mxu0 0.0
  %4981 = vmatprep.subr.mxu0 0.0
  %4982 = vmatpush2.msra.mxu0 0.0
  %4983 = vmatprep.subr.mxu0 0.0
  %4984 = vmatpush2.msra.mxu0 0.0
  %4985 = vmatprep.subr.mxu0 0.0
  %4986 = vmatpush2.msra.mxu0 0.0
  %4987 = vmatprep.subr.mxu0 0.0
  %4988 = vmatpush2.msra.mxu0 0.0
  %4989 = vmatprep.subr.mxu0 0.0
  %4990 = vmatpush2.msra.mxu0 0.0
  %4991 = vmatprep.subr.mxu0 0.0
  %4992 = vmatpush2.msra.mxu0 0.0
  %4993 = vmatprep.subr.mxu0 0.0
  %4994 = vmatpush2.msra.mxu0 0.0
  %4995 = vmatprep.mubr.f32.mxu0 0.0
  %4996 = vmatmul.mubr.f32.gmra.mxu0 %v4929
  %v4997 = vpop.f32.mrf.mxu0
  %v4998 = vadd.f32 %v4303, %v4997
  %v4999 = vpop.f32.mrf.mxu0
  %v5000 = vadd.f32 %v4307, %v4999
  %5001 = vdwg.mxu0
  %v5002 = vadd.f32 %v4847, %v4918
  %v5003 = vxor.u32 %v5002, 2147483648
  %v5004 = vmul.f32 %v5003, 1.442695
  %v5005 = vpow.pop %v5004
  %v5006 = vadd.f32 %v5005, 1.0
  %v5007 = vrcp.pop %v5006
  %v5008 = vmul.f32 1.0, %v5007
  %v5009 = vmul.f32 %v5008, %v4920
  %v5011 = vrot.slane %v4847, 1
  %v5013 = vadd.f32 %v5011, %v5009
  %v5014 = vtanh.pop %v5013
  %v5015 = vsub.f32 1.0, %v5008
  %5017 = vrot.lane.b32.xlu0 %v5014, 64
  %v5018 = vpop.permute.xlu0 %5017
  %v5020 = vmul.f32 %v5015, %v5018
  %v5021 = vmul.f32 %v5008, %v4815
  %v5022 = vadd.f32 %v5020, %v5021
  %v5023 = vadd.f32 %v4848, %v4998
  %v5024 = vxor.u32 %v5023, 2147483648
  %v5025 = vmul.f32 %v5024, 1.442695
  %v5026 = vpow.pop %v5025
  %v5027 = vadd.f32 %v5026, 1.0
  %v5028 = vrcp.pop %v5027
  %v5029 = vmul.f32 1.0, %v5028
  %v5030 = vmul.f32 %v5029, %v5000
  %v5032 = vrot.slane %v4848, 1
  %v5034 = vadd.f32 %v5032, %v5030
  %v5035 = vtanh.pop %v5034
  %v5036 = vsub.f32 1.0, %v5029
  %5038 = vrot.lane.b32.xlu0 %v5035, 64
  %v5039 = vpop.permute.xlu0 %5038
  %v5041 = vmul.f32 %v5036, %v5039
  %v5042 = vmul.f32 %v5029, %v4836
  %v5043 = vadd.f32 %v5041, %v5042
  %v5045 = vlaneseq
  %v5046 = vshrl.u32 %v5045, 7
  %v5047 = vsub.s32 0, %v5046
  %v5048 = vrot.slane %v5022, %v5047
  %5049 = vrot.lane.b32.xlu0 %v5048, 64
  %v5050 = vpop.permute.xlu0 %5049
  %5052 = vst.msk [vmem:[#allocation4 + $0x3] sm:$0x1] %vm544, %v5050
  %5053 = vst.msk [vmem:[#allocation4 + $0x4] sm:$0x1] %vm546, %v5043
  %v5054 = vld [vmem:[%s1175] ss:$8 sm:$0x3]
  %v5055 = vld [vmem:[%s1177] ss:$8 sm:$0x3]
  %v5056 = vsel %vm195, %v5050, 0
  %5058 = vmatprep.subr.mxu0 0.0
  %5059 = vmatpush1.msra.mxu0 0.0
  %5060 = vmatprep.subr.mxu0 0.0
  %5061 = vmatpush1.msra.mxu0 0.0
  %5062 = vmatprep.subr.mxu0 0.0
  %5063 = vmatpush1.msra.mxu0 0.0
  %5064 = vmatprep.subr.mxu0 0.0
  %5065 = vmatpush1.msra.mxu0 0.0
  %5066 = vmatprep.subr.mxu0 0.0
  %5067 = vmatpush1.msra.mxu0 0.0
  %5068 = vmatprep.subr.mxu0 0.0
  %5069 = vmatpush1.msra.mxu0 0.0
  %5070 = vmatprep.subr.mxu0 0.0
  %5071 = vmatpush1.msra.mxu0 0.0
  %5072 = vmatprep.subr.mxu0 0.0
  %5073 = vmatpush1.msra.mxu0 0.0
  %5074 = vmatprep.subr.mxu0 %v4196
  %5075 = vmatpush1.msra.mxu0 %v4195
  %5076 = vmatprep.subr.mxu0 %v4194
  %5077 = vmatpush1.msra.mxu0 %v4193
  %5078 = vmatprep.subr.mxu0 %v4192
  %5079 = vmatpush1.msra.mxu0 %v4191
  %5080 = vmatprep.subr.mxu0 %v4190
  %5081 = vmatpush1.msra.mxu0 %v4189
  %5082 = vmatprep.subr.mxu0 %v4188
  %5083 = vmatpush1.msra.mxu0 %v4187
  %5084 = vmatprep.subr.mxu0 %v4186
  %5085 = vmatpush1.msra.mxu0 %v4185
  %5086 = vmatprep.subr.mxu0 %v4184
  %5087 = vmatpush1.msra.mxu0 %v4183
  %5088 = vmatprep.subr.mxu0 %v4182
  %5089 = vmatpush1.msra.mxu0 %v4181
  %5090 = vmatprep.subr.mxu0 0.0
  %5091 = vmatpush2.msra.mxu0 0.0
  %5092 = vmatprep.subr.mxu0 0.0
  %5093 = vmatpush2.msra.mxu0 0.0
  %5094 = vmatprep.subr.mxu0 0.0
  %5095 = vmatpush2.msra.mxu0 0.0
  %5096 = vmatprep.subr.mxu0 0.0
  %5097 = vmatpush2.msra.mxu0 0.0
  %5098 = vmatprep.subr.mxu0 0.0
  %5099 = vmatpush2.msra.mxu0 0.0
  %5100 = vmatprep.subr.mxu0 0.0
  %5101 = vmatpush2.msra.mxu0 0.0
  %5102 = vmatprep.subr.mxu0 0.0
  %5103 = vmatpush2.msra.mxu0 0.0
  %5104 = vmatprep.subr.mxu0 0.0
  %5105 = vmatpush2.msra.mxu0 0.0
  %5106 = vmatprep.subr.mxu0 0.0
  %5107 = vmatpush2.msra.mxu0 0.0
  %5108 = vmatprep.subr.mxu0 0.0
  %5109 = vmatpush2.msra.mxu0 0.0
  %5110 = vmatprep.subr.mxu0 0.0
  %5111 = vmatpush2.msra.mxu0 0.0
  %5112 = vmatprep.subr.mxu0 0.0
  %5113 = vmatpush2.msra.mxu0 0.0
  %5114 = vmatprep.subr.mxu0 0.0
  %5115 = vmatpush2.msra.mxu0 0.0
  %5116 = vmatprep.subr.mxu0 0.0
  %5117 = vmatpush2.msra.mxu0 0.0
  %5118 = vmatprep.subr.mxu0 0.0
  %5119 = vmatpush2.msra.mxu0 0.0
  %5120 = vmatprep.subr.mxu0 0.0
  %5121 = vmatpush2.msra.mxu0 0.0
  %5122 = vmatprep.mubr.f32.mxu0 0.0
  %5123 = vmatmul.mubr.f32.gmra.mxu0 %v5056
  %v5124 = vpop.f32.mrf.mxu0
  %v5125 = vadd.f32 %v4221, %v5124
  %v5126 = vpop.f32.mrf.mxu0
  %v5127 = vadd.f32 %v4225, %v5126
  %5128 = vdwg.mxu0
  %v5130 = vlaneseq
  %v5131 = vshrl.u32 %v5130, 7
  %v5132 = vsub.s32 0, %v5131
  %v5133 = vrot.slane %v5043, %v5132
  %5134 = vrot.lane.b32.xlu0 %v5133, 64
  %v5135 = vpop.permute.xlu0 %5134
  %v5136 = vsel %vm195, %v5135, 0
  %5138 = vmatprep.subr.mxu0 0.0
  %5139 = vmatpush1.msra.mxu0 0.0
  %5140 = vmatprep.subr.mxu0 0.0
  %5141 = vmatpush1.msra.mxu0 0.0
  %5142 = vmatprep.subr.mxu0 0.0
  %5143 = vmatpush1.msra.mxu0 0.0
  %5144 = vmatprep.subr.mxu0 0.0
  %5145 = vmatpush1.msra.mxu0 0.0
  %5146 = vmatprep.subr.mxu0 0.0
  %5147 = vmatpush1.msra.mxu0 0.0
  %5148 = vmatprep.subr.mxu0 0.0
  %5149 = vmatpush1.msra.mxu0 0.0
  %5150 = vmatprep.subr.mxu0 0.0
  %5151 = vmatpush1.msra.mxu0 0.0
  %5152 = vmatprep.subr.mxu0 0.0
  %5153 = vmatpush1.msra.mxu0 0.0
  %5154 = vmatprep.subr.mxu0 %v4212
  %5155 = vmatpush1.msra.mxu0 %v4211
  %5156 = vmatprep.subr.mxu0 %v4210
  %5157 = vmatpush1.msra.mxu0 %v4209
  %5158 = vmatprep.subr.mxu0 %v4208
  %5159 = vmatpush1.msra.mxu0 %v4207
  %5160 = vmatprep.subr.mxu0 %v4206
  %5161 = vmatpush1.msra.mxu0 %v4205
  %5162 = vmatprep.subr.mxu0 %v4204
  %5163 = vmatpush1.msra.mxu0 %v4203
  %5164 = vmatprep.subr.mxu0 %v4202
  %5165 = vmatpush1.msra.mxu0 %v4201
  %5166 = vmatprep.subr.mxu0 %v4200
  %5167 = vmatpush1.msra.mxu0 %v4199
  %5168 = vmatprep.subr.mxu0 %v4198
  %5169 = vmatpush1.msra.mxu0 %v4197
  %5170 = vmatprep.subr.mxu0 0.0
  %5171 = vmatpush2.msra.mxu0 0.0
  %5172 = vmatprep.subr.mxu0 0.0
  %5173 = vmatpush2.msra.mxu0 0.0
  %5174 = vmatprep.subr.mxu0 0.0
  %5175 = vmatpush2.msra.mxu0 0.0
  %5176 = vmatprep.subr.mxu0 0.0
  %5177 = vmatpush2.msra.mxu0 0.0
  %5178 = vmatprep.subr.mxu0 0.0
  %5179 = vmatpush2.msra.mxu0 0.0
  %5180 = vmatprep.subr.mxu0 0.0
  %5181 = vmatpush2.msra.mxu0 0.0
  %5182 = vmatprep.subr.mxu0 0.0
  %5183 = vmatpush2.msra.mxu0 0.0
  %5184 = vmatprep.subr.mxu0 0.0
  %5185 = vmatpush2.msra.mxu0 0.0
  %5186 = vmatprep.subr.mxu0 0.0
  %5187 = vmatpush2.msra.mxu0 0.0
  %5188 = vmatprep.subr.mxu0 0.0
  %5189 = vmatpush2.msra.mxu0 0.0
  %5190 = vmatprep.subr.mxu0 0.0
  %5191 = vmatpush2.msra.mxu0 0.0
  %5192 = vmatprep.subr.mxu0 0.0
  %5193 = vmatpush2.msra.mxu0 0.0
  %5194 = vmatprep.subr.mxu0 0.0
  %5195 = vmatpush2.msra.mxu0 0.0
  %5196 = vmatprep.subr.mxu0 0.0
  %5197 = vmatpush2.msra.mxu0 0.0
  %5198 = vmatprep.subr.mxu0 0.0
  %5199 = vmatpush2.msra.mxu0 0.0
  %5200 = vmatprep.subr.mxu0 0.0
  %5201 = vmatpush2.msra.mxu0 0.0
  %5202 = vmatprep.mubr.f32.mxu0 0.0
  %5203 = vmatmul.mubr.f32.gmra.mxu0 %v5136
  %v5204 = vpop.f32.mrf.mxu0
  %v5205 = vadd.f32 %v4303, %v5204
  %v5206 = vpop.f32.mrf.mxu0
  %v5207 = vadd.f32 %v4307, %v5206
  %5208 = vdwg.mxu0
  %v5209 = vadd.f32 %v5054, %v5125
  %v5210 = vxor.u32 %v5209, 2147483648
  %v5211 = vmul.f32 %v5210, 1.442695
  %v5212 = vpow.pop %v5211
  %v5213 = vadd.f32 %v5212, 1.0
  %v5214 = vrcp.pop %v5213
  %v5215 = vmul.f32 1.0, %v5214
  %v5216 = vmul.f32 %v5215, %v5127
  %v5218 = vrot.slane %v5054, 1
  %v5220 = vadd.f32 %v5218, %v5216
  %v5221 = vtanh.pop %v5220
  %v5222 = vsub.f32 1.0, %v5215
  %5224 = vrot.lane.b32.xlu0 %v5221, 64
  %v5225 = vpop.permute.xlu0 %5224
  %v5227 = vmul.f32 %v5222, %v5225
  %v5228 = vmul.f32 %v5215, %v5022
  %v5229 = vadd.f32 %v5227, %v5228
  %v5230 = vadd.f32 %v5055, %v5205
  %v5231 = vxor.u32 %v5230, 2147483648
  %v5232 = vmul.f32 %v5231, 1.442695
  %v5233 = vpow.pop %v5232
  %v5234 = vadd.f32 %v5233, 1.0
  %v5235 = vrcp.pop %v5234
  %v5236 = vmul.f32 1.0, %v5235
  %v5237 = vmul.f32 %v5236, %v5207
  %v5239 = vrot.slane %v5055, 1
  %v5241 = vadd.f32 %v5239, %v5237
  %v5242 = vtanh.pop %v5241
  %v5243 = vsub.f32 1.0, %v5236
  %5245 = vrot.lane.b32.xlu0 %v5242, 64
  %v5246 = vpop.permute.xlu0 %5245
  %v5248 = vmul.f32 %v5243, %v5246
  %v5249 = vmul.f32 %v5236, %v5043
  %v5250 = vadd.f32 %v5248, %v5249
  %v5252 = vlaneseq
  %v5253 = vshrl.u32 %v5252, 7
  %v5254 = vsub.s32 0, %v5253
  %v5255 = vrot.slane %v5229, %v5254
  %5256 = vrot.lane.b32.xlu0 %v5255, 64
  %v5257 = vpop.permute.xlu0 %5256
  %5259 = vst.msk [vmem:[#allocation4 + $0x4] sm:$0x1] %vm544, %v5257
  %5260 = vst.msk [vmem:[#allocation4 + $0x3] sm:$0x1] %vm546, %v5250
  %v5261 = vld [vmem:[%s1384] ss:$8 sm:$0x3]
  %v5262 = vld [vmem:[%s1386] ss:$8 sm:$0x3]
  %v5263 = vsel %vm195, %v5257, 0
  %5265 = vmatprep.subr.mxu0 0.0
  %5266 = vmatpush1.msra.mxu0 0.0
  %5267 = vmatprep.subr.mxu0 0.0
  %5268 = vmatpush1.msra.mxu0 0.0
  %5269 = vmatprep.subr.mxu0 0.0
  %5270 = vmatpush1.msra.mxu0 0.0
  %5271 = vmatprep.subr.mxu0 0.0
  %5272 = vmatpush1.msra.mxu0 0.0
  %5273 = vmatprep.subr.mxu0 0.0
  %5274 = vmatpush1.msra.mxu0 0.0
  %5275 = vmatprep.subr.mxu0 0.0
  %5276 = vmatpush1.msra.mxu0 0.0
  %5277 = vmatprep.subr.mxu0 0.0
  %5278 = vmatpush1.msra.mxu0 0.0
  %5279 = vmatprep.subr.mxu0 0.0
  %5280 = vmatpush1.msra.mxu0 0.0
  %5281 = vmatprep.subr.mxu0 %v4196
  %5282 = vmatpush1.msra.mxu0 %v4195
  %5283 = vmatprep.subr.mxu0 %v4194
  %5284 = vmatpush1.msra.mxu0 %v4193
  %5285 = vmatprep.subr.mxu0 %v4192
  %5286 = vmatpush1.msra.mxu0 %v4191
  %5287 = vmatprep.subr.mxu0 %v4190
  %5288 = vmatpush1.msra.mxu0 %v4189
  %5289 = vmatprep.subr.mxu0 %v4188
  %5290 = vmatpush1.msra.mxu0 %v4187
  %5291 = vmatprep.subr.mxu0 %v4186
  %5292 = vmatpush1.msra.mxu0 %v4185
  %5293 = vmatprep.subr.mxu0 %v4184
  %5294 = vmatpush1.msra.mxu0 %v4183
  %5295 = vmatprep.subr.mxu0 %v4182
  %5296 = vmatpush1.msra.mxu0 %v4181
  %5297 = vmatprep.subr.mxu0 0.0
  %5298 = vmatpush2.msra.mxu0 0.0
  %5299 = vmatprep.subr.mxu0 0.0
  %5300 = vmatpush2.msra.mxu0 0.0
  %5301 = vmatprep.subr.mxu0 0.0
  %5302 = vmatpush2.msra.mxu0 0.0
  %5303 = vmatprep.subr.mxu0 0.0
  %5304 = vmatpush2.msra.mxu0 0.0
  %5305 = vmatprep.subr.mxu0 0.0
  %5306 = vmatpush2.msra.mxu0 0.0
  %5307 = vmatprep.subr.mxu0 0.0
  %5308 = vmatpush2.msra.mxu0 0.0
  %5309 = vmatprep.subr.mxu0 0.0
  %5310 = vmatpush2.msra.mxu0 0.0
  %5311 = vmatprep.subr.mxu0 0.0
  %5312 = vmatpush2.msra.mxu0 0.0
  %5313 = vmatprep.subr.mxu0 0.0
  %5314 = vmatpush2.msra.mxu0 0.0
  %5315 = vmatprep.subr.mxu0 0.0
  %5316 = vmatpush2.msra.mxu0 0.0
  %5317 = vmatprep.subr.mxu0 0.0
  %5318 = vmatpush2.msra.mxu0 0.0
  %5319 = vmatprep.subr.mxu0 0.0
  %5320 = vmatpush2.msra.mxu0 0.0
  %5321 = vmatprep.subr.mxu0 0.0
  %5322 = vmatpush2.msra.mxu0 0.0
  %5323 = vmatprep.subr.mxu0 0.0
  %5324 = vmatpush2.msra.mxu0 0.0
  %5325 = vmatprep.subr.mxu0 0.0
  %5326 = vmatpush2.msra.mxu0 0.0
  %5327 = vmatprep.subr.mxu0 0.0
  %5328 = vmatpush2.msra.mxu0 0.0
  %5329 = vmatprep.mubr.f32.mxu0 0.0
  %5330 = vmatmul.mubr.f32.gmra.mxu0 %v5263
  %v5331 = vpop.f32.mrf.mxu0
  %v5332 = vadd.f32 %v4221, %v5331
  %v5333 = vpop.f32.mrf.mxu0
  %v5334 = vadd.f32 %v4225, %v5333
  %5335 = vdwg.mxu0
  %v5337 = vlaneseq
  %v5338 = vshrl.u32 %v5337, 7
  %v5339 = vsub.s32 0, %v5338
  %v5340 = vrot.slane %v5250, %v5339
  %5341 = vrot.lane.b32.xlu0 %v5340, 64
  %v5342 = vpop.permute.xlu0 %5341
  %v5343 = vsel %vm195, %v5342, 0
  %5345 = vmatprep.subr.mxu0 0.0
  %5346 = vmatpush1.msra.mxu0 0.0
  %5347 = vmatprep.subr.mxu0 0.0
  %5348 = vmatpush1.msra.mxu0 0.0
  %5349 = vmatprep.subr.mxu0 0.0
  %5350 = vmatpush1.msra.mxu0 0.0
  %5351 = vmatprep.subr.mxu0 0.0
  %5352 = vmatpush1.msra.mxu0 0.0
  %5353 = vmatprep.subr.mxu0 0.0
  %5354 = vmatpush1.msra.mxu0 0.0
  %5355 = vmatprep.subr.mxu0 0.0
  %5356 = vmatpush1.msra.mxu0 0.0
  %5357 = vmatprep.subr.mxu0 0.0
  %5358 = vmatpush1.msra.mxu0 0.0
  %5359 = vmatprep.subr.mxu0 0.0
  %5360 = vmatpush1.msra.mxu0 0.0
  %5361 = vmatprep.subr.mxu0 %v4212
  %5362 = vmatpush1.msra.mxu0 %v4211
  %5363 = vmatprep.subr.mxu0 %v4210
  %5364 = vmatpush1.msra.mxu0 %v4209
  %5365 = vmatprep.subr.mxu0 %v4208
  %5366 = vmatpush1.msra.mxu0 %v4207
  %5367 = vmatprep.subr.mxu0 %v4206
  %5368 = vmatpush1.msra.mxu0 %v4205
  %5369 = vmatprep.subr.mxu0 %v4204
  %5370 = vmatpush1.msra.mxu0 %v4203
  %5371 = vmatprep.subr.mxu0 %v4202
  %5372 = vmatpush1.msra.mxu0 %v4201
  %5373 = vmatprep.subr.mxu0 %v4200
  %5374 = vmatpush1.msra.mxu0 %v4199
  %5375 = vmatprep.subr.mxu0 %v4198
  %5376 = vmatpush1.msra.mxu0 %v4197
  %5377 = vmatprep.subr.mxu0 0.0
  %5378 = vmatpush2.msra.mxu0 0.0
  %5379 = vmatprep.subr.mxu0 0.0
  %5380 = vmatpush2.msra.mxu0 0.0
  %5381 = vmatprep.subr.mxu0 0.0
  %5382 = vmatpush2.msra.mxu0 0.0
  %5383 = vmatprep.subr.mxu0 0.0
  %5384 = vmatpush2.msra.mxu0 0.0
  %5385 = vmatprep.subr.mxu0 0.0
  %5386 = vmatpush2.msra.mxu0 0.0
  %5387 = vmatprep.subr.mxu0 0.0
  %5388 = vmatpush2.msra.mxu0 0.0
  %5389 = vmatprep.subr.mxu0 0.0
  %5390 = vmatpush2.msra.mxu0 0.0
  %5391 = vmatprep.subr.mxu0 0.0
  %5392 = vmatpush2.msra.mxu0 0.0
  %5393 = vmatprep.subr.mxu0 0.0
  %5394 = vmatpush2.msra.mxu0 0.0
  %5395 = vmatprep.subr.mxu0 0.0
  %5396 = vmatpush2.msra.mxu0 0.0
  %5397 = vmatprep.subr.mxu0 0.0
  %5398 = vmatpush2.msra.mxu0 0.0
  %5399 = vmatprep.subr.mxu0 0.0
  %5400 = vmatpush2.msra.mxu0 0.0
  %5401 = vmatprep.subr.mxu0 0.0
  %5402 = vmatpush2.msra.mxu0 0.0
  %5403 = vmatprep.subr.mxu0 0.0
  %5404 = vmatpush2.msra.mxu0 0.0
  %5405 = vmatprep.subr.mxu0 0.0
  %5406 = vmatpush2.msra.mxu0 0.0
  %5407 = vmatprep.subr.mxu0 0.0
  %5408 = vmatpush2.msra.mxu0 0.0
  %5409 = vmatprep.mubr.f32.mxu0 0.0
  %5410 = vmatmul.mubr.f32.gmra.mxu0 %v5343
  %v5411 = vpop.f32.mrf.mxu0
  %v5412 = vadd.f32 %v4303, %v5411
  %v5413 = vpop.f32.mrf.mxu0
  %v5414 = vadd.f32 %v4307, %v5413
  %5415 = vdwg.mxu0
  %v5416 = vadd.f32 %v5261, %v5332
  %v5417 = vxor.u32 %v5416, 2147483648
  %v5418 = vmul.f32 %v5417, 1.442695
  %v5419 = vpow.pop %v5418
  %v5420 = vadd.f32 %v5419, 1.0
  %v5421 = vrcp.pop %v5420
  %v5422 = vmul.f32 1.0, %v5421
  %v5423 = vmul.f32 %v5422, %v5334
  %v5425 = vrot.slane %v5261, 1
  %v5427 = vadd.f32 %v5425, %v5423
  %v5428 = vtanh.pop %v5427
  %v5429 = vsub.f32 1.0, %v5422
  %5431 = vrot.lane.b32.xlu0 %v5428, 64
  %v5432 = vpop.permute.xlu0 %5431
  %v5434 = vmul.f32 %v5429, %v5432
  %v5435 = vmul.f32 %v5422, %v5229
  %v5436 = vadd.f32 %v5434, %v5435
  %v5437 = vadd.f32 %v5262, %v5412
  %v5438 = vxor.u32 %v5437, 2147483648
  %v5439 = vmul.f32 %v5438, 1.442695
  %v5440 = vpow.pop %v5439
  %v5441 = vadd.f32 %v5440, 1.0
  %v5442 = vrcp.pop %v5441
  %v5443 = vmul.f32 1.0, %v5442
  %v5444 = vmul.f32 %v5443, %v5414
  %v5446 = vrot.slane %v5262, 1
  %v5448 = vadd.f32 %v5446, %v5444
  %v5449 = vtanh.pop %v5448
  %v5450 = vsub.f32 1.0, %v5443
  %5452 = vrot.lane.b32.xlu0 %v5449, 64
  %v5453 = vpop.permute.xlu0 %5452
  %v5455 = vmul.f32 %v5450, %v5453
  %v5456 = vmul.f32 %v5443, %v5250
  %v5457 = vadd.f32 %v5455, %v5456
  %v5459 = vlaneseq
  %v5460 = vshrl.u32 %v5459, 7
  %v5461 = vsub.s32 0, %v5460
  %v5462 = vrot.slane %v5436, %v5461
  %5463 = vrot.lane.b32.xlu0 %v5462, 64
  %v5464 = vpop.permute.xlu0 %5463
  %5466 = vst.msk [vmem:[#allocation4 + $0x5] sm:$0x1] %vm544, %v5464
  %5467 = vst.msk [vmem:[#allocation4 + $0x2] sm:$0x1] %vm546, %v5457
  %v5468 = vld [vmem:[%s1593] ss:$8 sm:$0x3]
  %v5469 = vld [vmem:[%s1595] ss:$8 sm:$0x3]
  %v5470 = vsel %vm195, %v5464, 0
  %5472 = vmatprep.subr.mxu0 0.0
  %5473 = vmatpush1.msra.mxu0 0.0
  %5474 = vmatprep.subr.mxu0 0.0
  %5475 = vmatpush1.msra.mxu0 0.0
  %5476 = vmatprep.subr.mxu0 0.0
  %5477 = vmatpush1.msra.mxu0 0.0
  %5478 = vmatprep.subr.mxu0 0.0
  %5479 = vmatpush1.msra.mxu0 0.0
  %5480 = vmatprep.subr.mxu0 0.0
  %5481 = vmatpush1.msra.mxu0 0.0
  %5482 = vmatprep.subr.mxu0 0.0
  %5483 = vmatpush1.msra.mxu0 0.0
  %5484 = vmatprep.subr.mxu0 0.0
  %5485 = vmatpush1.msra.mxu0 0.0
  %5486 = vmatprep.subr.mxu0 0.0
  %5487 = vmatpush1.msra.mxu0 0.0
  %5488 = vmatprep.subr.mxu0 %v4196
  %5489 = vmatpush1.msra.mxu0 %v4195
  %5490 = vmatprep.subr.mxu0 %v4194
  %5491 = vmatpush1.msra.mxu0 %v4193
  %5492 = vmatprep.subr.mxu0 %v4192
  %5493 = vmatpush1.msra.mxu0 %v4191
  %5494 = vmatprep.subr.mxu0 %v4190
  %5495 = vmatpush1.msra.mxu0 %v4189
  %5496 = vmatprep.subr.mxu0 %v4188
  %5497 = vmatpush1.msra.mxu0 %v4187
  %5498 = vmatprep.subr.mxu0 %v4186
  %5499 = vmatpush1.msra.mxu0 %v4185
  %5500 = vmatprep.subr.mxu0 %v4184
  %5501 = vmatpush1.msra.mxu0 %v4183
  %5502 = vmatprep.subr.mxu0 %v4182
  %5503 = vmatpush1.msra.mxu0 %v4181
  %5504 = vmatprep.subr.mxu0 0.0
  %5505 = vmatpush2.msra.mxu0 0.0
  %5506 = vmatprep.subr.mxu0 0.0
  %5507 = vmatpush2.msra.mxu0 0.0
  %5508 = vmatprep.subr.mxu0 0.0
  %5509 = vmatpush2.msra.mxu0 0.0
  %5510 = vmatprep.subr.mxu0 0.0
  %5511 = vmatpush2.msra.mxu0 0.0
  %5512 = vmatprep.subr.mxu0 0.0
  %5513 = vmatpush2.msra.mxu0 0.0
  %5514 = vmatprep.subr.mxu0 0.0
  %5515 = vmatpush2.msra.mxu0 0.0
  %5516 = vmatprep.subr.mxu0 0.0
  %5517 = vmatpush2.msra.mxu0 0.0
  %5518 = vmatprep.subr.mxu0 0.0
  %5519 = vmatpush2.msra.mxu0 0.0
  %5520 = vmatprep.subr.mxu0 0.0
  %5521 = vmatpush2.msra.mxu0 0.0
  %5522 = vmatprep.subr.mxu0 0.0
  %5523 = vmatpush2.msra.mxu0 0.0
  %5524 = vmatprep.subr.mxu0 0.0
  %5525 = vmatpush2.msra.mxu0 0.0
  %5526 = vmatprep.subr.mxu0 0.0
  %5527 = vmatpush2.msra.mxu0 0.0
  %5528 = vmatprep.subr.mxu0 0.0
  %5529 = vmatpush2.msra.mxu0 0.0
  %5530 = vmatprep.subr.mxu0 0.0
  %5531 = vmatpush2.msra.mxu0 0.0
  %5532 = vmatprep.subr.mxu0 0.0
  %5533 = vmatpush2.msra.mxu0 0.0
  %5534 = vmatprep.subr.mxu0 0.0
  %5535 = vmatpush2.msra.mxu0 0.0
  %5536 = vmatprep.mubr.f32.mxu0 0.0
  %5537 = vmatmul.mubr.f32.gmra.mxu0 %v5470
  %v5538 = vpop.f32.mrf.mxu0
  %v5539 = vadd.f32 %v4221, %v5538
  %v5540 = vpop.f32.mrf.mxu0
  %v5541 = vadd.f32 %v4225, %v5540
  %5542 = vdwg.mxu0
  %v5544 = vlaneseq
  %v5545 = vshrl.u32 %v5544, 7
  %v5546 = vsub.s32 0, %v5545
  %v5547 = vrot.slane %v5457, %v5546
  %5548 = vrot.lane.b32.xlu0 %v5547, 64
  %v5549 = vpop.permute.xlu0 %5548
  %v5550 = vsel %vm195, %v5549, 0
  %5552 = vmatprep.subr.mxu0 0.0
  %5553 = vmatpush1.msra.mxu0 0.0
  %5554 = vmatprep.subr.mxu0 0.0
  %5555 = vmatpush1.msra.mxu0 0.0
  %5556 = vmatprep.subr.mxu0 0.0
  %5557 = vmatpush1.msra.mxu0 0.0
  %5558 = vmatprep.subr.mxu0 0.0
  %5559 = vmatpush1.msra.mxu0 0.0
  %5560 = vmatprep.subr.mxu0 0.0
  %5561 = vmatpush1.msra.mxu0 0.0
  %5562 = vmatprep.subr.mxu0 0.0
  %5563 = vmatpush1.msra.mxu0 0.0
  %5564 = vmatprep.subr.mxu0 0.0
  %5565 = vmatpush1.msra.mxu0 0.0
  %5566 = vmatprep.subr.mxu0 0.0
  %5567 = vmatpush1.msra.mxu0 0.0
  %5568 = vmatprep.subr.mxu0 %v4212
  %5569 = vmatpush1.msra.mxu0 %v4211
  %5570 = vmatprep.subr.mxu0 %v4210
  %5571 = vmatpush1.msra.mxu0 %v4209
  %5572 = vmatprep.subr.mxu0 %v4208
  %5573 = vmatpush1.msra.mxu0 %v4207
  %5574 = vmatprep.subr.mxu0 %v4206
  %5575 = vmatpush1.msra.mxu0 %v4205
  %5576 = vmatprep.subr.mxu0 %v4204
  %5577 = vmatpush1.msra.mxu0 %v4203
  %5578 = vmatprep.subr.mxu0 %v4202
  %5579 = vmatpush1.msra.mxu0 %v4201
  %5580 = vmatprep.subr.mxu0 %v4200
  %5581 = vmatpush1.msra.mxu0 %v4199
  %5582 = vmatprep.subr.mxu0 %v4198
  %5583 = vmatpush1.msra.mxu0 %v4197
  %5584 = vmatprep.subr.mxu0 0.0
  %5585 = vmatpush2.msra.mxu0 0.0
  %5586 = vmatprep.subr.mxu0 0.0
  %5587 = vmatpush2.msra.mxu0 0.0
  %5588 = vmatprep.subr.mxu0 0.0
  %5589 = vmatpush2.msra.mxu0 0.0
  %5590 = vmatprep.subr.mxu0 0.0
  %5591 = vmatpush2.msra.mxu0 0.0
  %5592 = vmatprep.subr.mxu0 0.0
  %5593 = vmatpush2.msra.mxu0 0.0
  %5594 = vmatprep.subr.mxu0 0.0
  %5595 = vmatpush2.msra.mxu0 0.0
  %5596 = vmatprep.subr.mxu0 0.0
  %5597 = vmatpush2.msra.mxu0 0.0
  %5598 = vmatprep.subr.mxu0 0.0
  %5599 = vmatpush2.msra.mxu0 0.0
  %5600 = vmatprep.subr.mxu0 0.0
  %5601 = vmatpush2.msra.mxu0 0.0
  %5602 = vmatprep.subr.mxu0 0.0
  %5603 = vmatpush2.msra.mxu0 0.0
  %5604 = vmatprep.subr.mxu0 0.0
  %5605 = vmatpush2.msra.mxu0 0.0
  %5606 = vmatprep.subr.mxu0 0.0
  %5607 = vmatpush2.msra.mxu0 0.0
  %5608 = vmatprep.subr.mxu0 0.0
  %5609 = vmatpush2.msra.mxu0 0.0
  %5610 = vmatprep.subr.mxu0 0.0
  %5611 = vmatpush2.msra.mxu0 0.0
  %5612 = vmatprep.subr.mxu0 0.0
  %5613 = vmatpush2.msra.mxu0 0.0
  %5614 = vmatprep.subr.mxu0 0.0
  %5615 = vmatpush2.msra.mxu0 0.0
  %5616 = vmatprep.mubr.f32.mxu0 0.0
  %5617 = vmatmul.mubr.f32.gmra.mxu0 %v5550
  %v5618 = vpop.f32.mrf.mxu0
  %v5619 = vadd.f32 %v4303, %v5618
  %v5620 = vpop.f32.mrf.mxu0
  %v5621 = vadd.f32 %v4307, %v5620
  %5622 = vdwg.mxu0
  %v5623 = vadd.f32 %v5468, %v5539
  %v5624 = vxor.u32 %v5623, 2147483648
  %v5625 = vmul.f32 %v5624, 1.442695
  %v5626 = vpow.pop %v5625
  %v5627 = vadd.f32 %v5626, 1.0
  %v5628 = vrcp.pop %v5627
  %v5629 = vmul.f32 1.0, %v5628
  %v5630 = vmul.f32 %v5629, %v5541
  %v5632 = vrot.slane %v5468, 1
  %v5634 = vadd.f32 %v5632, %v5630
  %v5635 = vtanh.pop %v5634
  %v5636 = vsub.f32 1.0, %v5629
  %5638 = vrot.lane.b32.xlu0 %v5635, 64
  %v5639 = vpop.permute.xlu0 %5638
  %v5641 = vmul.f32 %v5636, %v5639
  %v5642 = vmul.f32 %v5629, %v5436
  %v5643 = vadd.f32 %v5641, %v5642
  %v5644 = vadd.f32 %v5469, %v5619
  %v5645 = vxor.u32 %v5644, 2147483648
  %v5646 = vmul.f32 %v5645, 1.442695
  %v5647 = vpow.pop %v5646
  %v5648 = vadd.f32 %v5647, 1.0
  %v5649 = vrcp.pop %v5648
  %v5650 = vmul.f32 1.0, %v5649
  %v5651 = vmul.f32 %v5650, %v5621
  %v5653 = vrot.slane %v5469, 1
  %v5655 = vadd.f32 %v5653, %v5651
  %v5656 = vtanh.pop %v5655
  %v5657 = vsub.f32 1.0, %v5650
  %5659 = vrot.lane.b32.xlu0 %v5656, 64
  %v5660 = vpop.permute.xlu0 %5659
  %v5662 = vmul.f32 %v5657, %v5660
  %v5663 = vmul.f32 %v5650, %v5457
  %v5664 = vadd.f32 %v5662, %v5663
  %v5666 = vlaneseq
  %v5667 = vshrl.u32 %v5666, 7
  %v5668 = vsub.s32 0, %v5667
  %v5669 = vrot.slane %v5643, %v5668
  %5670 = vrot.lane.b32.xlu0 %v5669, 64
  %v5671 = vpop.permute.xlu0 %5670
  %5673 = vst.msk [vmem:[#allocation4 + $0x6] sm:$0x1] %vm544, %v5671
  %5674 = vst.msk [vmem:[#allocation4 + $0x1] sm:$0x1] %vm546, %v5664
  %v5675 = vld [vmem:[%s1802] ss:$8 sm:$0x3]
  %v5676 = vld [vmem:[#allocation3] ss:$8 sm:$0x3]
  %v5677 = vsel %vm195, %v5671, 0
  %5679 = vmatprep.subr.mxu0 0.0
  %5680 = vmatpush1.msra.mxu0 0.0
  %5681 = vmatprep.subr.mxu0 0.0
  %5682 = vmatpush1.msra.mxu0 0.0
  %5683 = vmatprep.subr.mxu0 0.0
  %5684 = vmatpush1.msra.mxu0 0.0
  %5685 = vmatprep.subr.mxu0 0.0
  %5686 = vmatpush1.msra.mxu0 0.0
  %5687 = vmatprep.subr.mxu0 0.0
  %5688 = vmatpush1.msra.mxu0 0.0
  %5689 = vmatprep.subr.mxu0 0.0
  %5690 = vmatpush1.msra.mxu0 0.0
  %5691 = vmatprep.subr.mxu0 0.0
  %5692 = vmatpush1.msra.mxu0 0.0
  %5693 = vmatprep.subr.mxu0 0.0
  %5694 = vmatpush1.msra.mxu0 0.0
  %5695 = vmatprep.subr.mxu0 %v4196
  %5696 = vmatpush1.msra.mxu0 %v4195
  %5697 = vmatprep.subr.mxu0 %v4194
  %5698 = vmatpush1.msra.mxu0 %v4193
  %5699 = vmatprep.subr.mxu0 %v4192
  %5700 = vmatpush1.msra.mxu0 %v4191
  %5701 = vmatprep.subr.mxu0 %v4190
  %5702 = vmatpush1.msra.mxu0 %v4189
  %5703 = vmatprep.subr.mxu0 %v4188
  %5704 = vmatpush1.msra.mxu0 %v4187
  %5705 = vmatprep.subr.mxu0 %v4186
  %5706 = vmatpush1.msra.mxu0 %v4185
  %5707 = vmatprep.subr.mxu0 %v4184
  %5708 = vmatpush1.msra.mxu0 %v4183
  %5709 = vmatprep.subr.mxu0 %v4182
  %5710 = vmatpush1.msra.mxu0 %v4181
  %5711 = vmatprep.subr.mxu0 0.0
  %5712 = vmatpush2.msra.mxu0 0.0
  %5713 = vmatprep.subr.mxu0 0.0
  %5714 = vmatpush2.msra.mxu0 0.0
  %5715 = vmatprep.subr.mxu0 0.0
  %5716 = vmatpush2.msra.mxu0 0.0
  %5717 = vmatprep.subr.mxu0 0.0
  %5718 = vmatpush2.msra.mxu0 0.0
  %5719 = vmatprep.subr.mxu0 0.0
  %5720 = vmatpush2.msra.mxu0 0.0
  %5721 = vmatprep.subr.mxu0 0.0
  %5722 = vmatpush2.msra.mxu0 0.0
  %5723 = vmatprep.subr.mxu0 0.0
  %5724 = vmatpush2.msra.mxu0 0.0
  %5725 = vmatprep.subr.mxu0 0.0
  %5726 = vmatpush2.msra.mxu0 0.0
  %5727 = vmatprep.subr.mxu0 0.0
  %5728 = vmatpush2.msra.mxu0 0.0
  %5729 = vmatprep.subr.mxu0 0.0
  %5730 = vmatpush2.msra.mxu0 0.0
  %5731 = vmatprep.subr.mxu0 0.0
  %5732 = vmatpush2.msra.mxu0 0.0
  %5733 = vmatprep.subr.mxu0 0.0
  %5734 = vmatpush2.msra.mxu0 0.0
  %5735 = vmatprep.subr.mxu0 0.0
  %5736 = vmatpush2.msra.mxu0 0.0
  %5737 = vmatprep.subr.mxu0 0.0
  %5738 = vmatpush2.msra.mxu0 0.0
  %5739 = vmatprep.subr.mxu0 0.0
  %5740 = vmatpush2.msra.mxu0 0.0
  %5741 = vmatprep.subr.mxu0 0.0
  %5742 = vmatpush2.msra.mxu0 0.0
  %5743 = vmatprep.mubr.f32.mxu0 0.0
  %5744 = vmatmul.mubr.f32.gmra.mxu0 %v5677
  %v5745 = vpop.f32.mrf.mxu0
  %v5746 = vadd.f32 %v4221, %v5745
  %v5747 = vpop.f32.mrf.mxu0
  %v5748 = vadd.f32 %v4225, %v5747
  %5749 = vdwg.mxu0
  %v5751 = vlaneseq
  %v5752 = vshrl.u32 %v5751, 7
  %v5753 = vsub.s32 0, %v5752
  %v5754 = vrot.slane %v5664, %v5753
  %5755 = vrot.lane.b32.xlu0 %v5754, 64
  %v5756 = vpop.permute.xlu0 %5755
  %v5757 = vsel %vm195, %v5756, 0
  %5759 = vmatprep.subr.mxu0 0.0
  %5760 = vmatpush1.msra.mxu0 0.0
  %5761 = vmatprep.subr.mxu0 0.0
  %5762 = vmatpush1.msra.mxu0 0.0
  %5763 = vmatprep.subr.mxu0 0.0
  %5764 = vmatpush1.msra.mxu0 0.0
  %5765 = vmatprep.subr.mxu0 0.0
  %5766 = vmatpush1.msra.mxu0 0.0
  %5767 = vmatprep.subr.mxu0 0.0
  %5768 = vmatpush1.msra.mxu0 0.0
  %5769 = vmatprep.subr.mxu0 0.0
  %5770 = vmatpush1.msra.mxu0 0.0
  %5771 = vmatprep.subr.mxu0 0.0
  %5772 = vmatpush1.msra.mxu0 0.0
  %5773 = vmatprep.subr.mxu0 0.0
  %5774 = vmatpush1.msra.mxu0 0.0
  %5775 = vmatprep.subr.mxu0 %v4212
  %5776 = vmatpush1.msra.mxu0 %v4211
  %5777 = vmatprep.subr.mxu0 %v4210
  %5778 = vmatpush1.msra.mxu0 %v4209
  %5779 = vmatprep.subr.mxu0 %v4208
  %5780 = vmatpush1.msra.mxu0 %v4207
  %5781 = vmatprep.subr.mxu0 %v4206
  %5782 = vmatpush1.msra.mxu0 %v4205
  %5783 = vmatprep.subr.mxu0 %v4204
  %5784 = vmatpush1.msra.mxu0 %v4203
  %5785 = vmatprep.subr.mxu0 %v4202
  %5786 = vmatpush1.msra.mxu0 %v4201
  %5787 = vmatprep.subr.mxu0 %v4200
  %5788 = vmatpush1.msra.mxu0 %v4199
  %5789 = vmatprep.subr.mxu0 %v4198
  %5790 = vmatpush1.msra.mxu0 %v4197
  %5791 = vmatprep.subr.mxu0 0.0
  %5792 = vmatpush2.msra.mxu0 0.0
  %5793 = vmatprep.subr.mxu0 0.0
  %5794 = vmatpush2.msra.mxu0 0.0
  %5795 = vmatprep.subr.mxu0 0.0
  %5796 = vmatpush2.msra.mxu0 0.0
  %5797 = vmatprep.subr.mxu0 0.0
  %5798 = vmatpush2.msra.mxu0 0.0
  %5799 = vmatprep.subr.mxu0 0.0
  %5800 = vmatpush2.msra.mxu0 0.0
  %5801 = vmatprep.subr.mxu0 0.0
  %5802 = vmatpush2.msra.mxu0 0.0
  %5803 = vmatprep.subr.mxu0 0.0
  %5804 = vmatpush2.msra.mxu0 0.0
  %5805 = vmatprep.subr.mxu0 0.0
  %5806 = vmatpush2.msra.mxu0 0.0
  %5807 = vmatprep.subr.mxu0 0.0
  %5808 = vmatpush2.msra.mxu0 0.0
  %5809 = vmatprep.subr.mxu0 0.0
  %5810 = vmatpush2.msra.mxu0 0.0
  %5811 = vmatprep.subr.mxu0 0.0
  %5812 = vmatpush2.msra.mxu0 0.0
  %5813 = vmatprep.subr.mxu0 0.0
  %5814 = vmatpush2.msra.mxu0 0.0
  %5815 = vmatprep.subr.mxu0 0.0
  %5816 = vmatpush2.msra.mxu0 0.0
  %5817 = vmatprep.subr.mxu0 0.0
  %5818 = vmatpush2.msra.mxu0 0.0
  %5819 = vmatprep.subr.mxu0 0.0
  %5820 = vmatpush2.msra.mxu0 0.0
  %5821 = vmatprep.subr.mxu0 0.0
  %5822 = vmatpush2.msra.mxu0 0.0
  %5823 = vmatprep.mubr.f32.mxu0 0.0
  %5824 = vmatmul.mubr.f32.gmra.mxu0 %v5757
  %v5825 = vpop.f32.mrf.mxu0
  %v5826 = vadd.f32 %v4303, %v5825
  %v5827 = vpop.f32.mrf.mxu0
  %v5828 = vadd.f32 %v4307, %v5827
  %5829 = vdwg.mxu0
  %v5830 = vadd.f32 %v5675, %v5746
  %v5831 = vxor.u32 %v5830, 2147483648
  %v5832 = vmul.f32 %v5831, 1.442695
  %v5833 = vpow.pop %v5832
  %v5834 = vadd.f32 %v5833, 1.0
  %v5835 = vrcp.pop %v5834
  %v5836 = vmul.f32 1.0, %v5835
  %v5837 = vmul.f32 %v5836, %v5748
  %v5839 = vrot.slane %v5675, 1
  %v5841 = vadd.f32 %v5839, %v5837
  %v5842 = vtanh.pop %v5841
  %v5843 = vsub.f32 1.0, %v5836
  %5845 = vrot.lane.b32.xlu0 %v5842, 64
  %v5846 = vpop.permute.xlu0 %5845
  %v5848 = vmul.f32 %v5843, %v5846
  %v5849 = vmul.f32 %v5836, %v5643
  %v5850 = vadd.f32 %v5848, %v5849
  %v5851 = vadd.f32 %v5676, %v5826
  %v5852 = vxor.u32 %v5851, 2147483648
  %v5853 = vmul.f32 %v5852, 1.442695
  %v5854 = vpow.pop %v5853
  %v5855 = vadd.f32 %v5854, 1.0
  %v5856 = vrcp.pop %v5855
  %v5857 = vmul.f32 1.0, %v5856
  %v5858 = vmul.f32 %v5857, %v5828
  %v5860 = vrot.slane %v5676, 1
  %v5862 = vadd.f32 %v5860, %v5858
  %v5863 = vtanh.pop %v5862
  %v5864 = vsub.f32 1.0, %v5857
  %5866 = vrot.lane.b32.xlu0 %v5863, 64
  %v5867 = vpop.permute.xlu0 %5866
  %v5869 = vmul.f32 %v5864, %v5867
  %v5870 = vmul.f32 %v5857, %v5664
  %v5871 = vadd.f32 %v5869, %v5870
  %v5873 = vlaneseq
  %v5874 = vshrl.u32 %v5873, 7
  %v5875 = vsub.s32 0, %v5874
  %v5876 = vrot.slane %v5850, %v5875
  %5877 = vrot.lane.b32.xlu0 %v5876, 64
  %v5878 = vpop.permute.xlu0 %5877
  %5880 = vst.msk [vmem:[#allocation4 + $0x7] sm:$0x1] %vm544, %v5878
  %5881 = vst.msk [vmem:[#allocation4] sm:$0x1] %vm546, %v5871
  %v5882 = vld [vmem:[#allocation4] sm:$0xff]
  %v5883 = vld [vmem:[%s25] sm:$0x3f]
  %v5884 = vld [vmem:[%s26] sm:$0x3f]
  %5886 = vset.pattern.permute.xlu0 0
  %5887 = vperm.xlu0 %5886, %v5884
  %v5888 = vpop.permute.xlu0 %5887
  %5890 = vmatprep.subr.mxu0 0.0
  %5891 = vmatpush1.xpose.msra.mxu0 0.0
  %5892 = vmatprep.subr.mxu0 0.0
  %5893 = vmatpush1.xpose.msra.mxu0 0.0
  %5894 = vmatprep.subr.mxu0 0.0
  %5895 = vmatpush1.xpose.msra.mxu0 0.0
  %5896 = vmatprep.subr.mxu0 0.0
  %5897 = vmatpush1.xpose.msra.mxu0 0.0
  %5898 = vmatprep.subr.mxu0 0.0
  %5899 = vmatpush1.xpose.msra.mxu0 0.0
  %5900 = vmatprep.subr.mxu0 0.0
  %5901 = vmatpush1.xpose.msra.mxu0 0.0
  %5902 = vmatprep.subr.mxu0 0.0
  %5903 = vmatpush1.xpose.msra.mxu0 0.0
  %5904 = vmatprep.subr.mxu0 0.0
  %5905 = vmatpush1.xpose.msra.mxu0 0.0
  %5906 = vmatprep.subr.mxu0 0.0
  %5907 = vmatpush1.xpose.msra.mxu0 0.0
  %5908 = vmatprep.subr.mxu0 0.0
  %5909 = vmatpush1.xpose.msra.mxu0 0.0
  %5910 = vmatprep.subr.mxu0 0.0
  %5911 = vmatpush1.xpose.msra.mxu0 0.0
  %5912 = vmatprep.subr.mxu0 0.0
  %5913 = vmatpush1.xpose.msra.mxu0 0.0
  %5914 = vmatprep.subr.mxu0 0.0
  %5915 = vmatpush1.xpose.msra.mxu0 0.0
  %5916 = vmatprep.subr.mxu0 0.0
  %5917 = vmatpush1.xpose.msra.mxu0 0.0
  %5918 = vmatprep.subr.mxu0 0.0
  %5919 = vmatpush1.xpose.msra.mxu0 0.0
  %5920 = vmatprep.subr.mxu0 0.0
  %5921 = vmatpush1.xpose.msra.mxu0 %v5882
  %5922 = vmatprep.subr.mxu0 0.0
  %5923 = vmatpush2.xpose.msra.mxu0 0.0
  %5924 = vmatprep.subr.mxu0 0.0
  %5925 = vmatpush2.xpose.msra.mxu0 0.0
  %5926 = vmatprep.subr.mxu0 0.0
  %5927 = vmatpush2.xpose.msra.mxu0 0.0
  %5928 = vmatprep.subr.mxu0 0.0
  %5929 = vmatpush2.xpose.msra.mxu0 0.0
  %5930 = vmatprep.subr.mxu0 0.0
  %5931 = vmatpush2.xpose.msra.mxu0 0.0
  %5932 = vmatprep.subr.mxu0 0.0
  %5933 = vmatpush2.xpose.msra.mxu0 0.0
  %5934 = vmatprep.subr.mxu0 0.0
  %5935 = vmatpush2.xpose.msra.mxu0 0.0
  %5936 = vmatprep.subr.mxu0 0.0
  %5937 = vmatpush2.xpose.msra.mxu0 0.0
  %5938 = vmatprep.subr.mxu0 0.0
  %5939 = vmatpush2.xpose.msra.mxu0 0.0
  %5940 = vmatprep.subr.mxu0 0.0
  %5941 = vmatpush2.xpose.msra.mxu0 0.0
  %5942 = vmatprep.subr.mxu0 0.0
  %5943 = vmatpush2.xpose.msra.mxu0 0.0
  %5944 = vmatprep.subr.mxu0 0.0
  %5945 = vmatpush2.xpose.msra.mxu0 0.0
  %5946 = vmatprep.subr.mxu0 0.0
  %5947 = vmatpush2.xpose.msra.mxu0 0.0
  %5948 = vmatprep.subr.mxu0 0.0
  %5949 = vmatpush2.xpose.msra.mxu0 0.0
  %5950 = vmatprep.subr.mxu0 0.0
  %5951 = vmatpush2.xpose.msra.mxu0 0.0
  %5952 = vmatprep.subr.mxu0 0.0
  %5953 = vmatpush2.xpose.msra.mxu0 0.0
  %5954 = vmatprep.mubr.f32.mxu0 0.0
  %5955 = vmatmul.mubr.f32.gmra.mxu0 %v5883
  %v5956 = vpop.f32.mrf.mxu0
  %v5957 = vadd.f32 %v5888, %v5956
  %v5958 = vpop.f32.mrf.mxu0
  %5959 = vdwg.mxu0
  %vm5960 = vcmask 62464
  %5961 = vst.msk [vmem:[%s27] sm:$0x3f] %vm5960, %v5957
  // Predicated region
  $region110: #{ms_tcn2_gru_forward.7} parent=0 // pred_check
    _
  $region111: #{ms_tcn2_gru_forward.7} parent=0 // pred_check_branch
    %5963 = sbr.rel (0) target = $region113
  $region112: #{ms_tcn2_gru_forward.7} parent=0 // pred_region
    _
  $region113: #{ms_tcn2_gru_forward.7} parent=0 // pred_fallthru
    _
  // Predicated region
  $region114: #{ms_tcn2_gru_forward.7} parent=0 // pred_check
    _
  $region115: #{ms_tcn2_gru_forward.7} parent=0 // pred_check_branch
    %5965 = sbr.rel (0) target = $region117
  $region116: #{ms_tcn2_gru_forward.7} parent=0 // pred_region
    _
  $region117: #{ms_tcn2_gru_forward.7} parent=0 // pred_fallthru
    _

</llo_original>
